<compile_context>
chip_gen: v7x
topology: tpu7x:2x2x1
jax: 0.10.0
libtpu: 0.0.40
codegen_flags: <defaults>
</compile_context>

<pallas_src>
import functools

import numpy as np
import jax
import jax.numpy as jnp
from jax import lax
from jax.experimental import pallas as pl
from jax.experimental.pallas import tpu as pltpu

F32 = jnp.float32
_VMEM = pl.BlockSpec(memory_space=pltpu.MemorySpace.VMEM)

CONV_K, CONV_S, CONV_P = 6, 4, 1          # conv1d_decode hyper-params (kernel, stride, pad)
HEAD_HIDDEN = 128                         # nn.Linear(4*num_patch, 128)
_GATE_ORDER = (0, 1, 3, 2)                # kernel gate slots [i, f, o, g] in PyTorch order (i,f,g,o)


# ----------------------------------------------------------------------------
# math helpers
# ----------------------------------------------------------------------------
def _erf_poly(x, recip):
    # Abramowitz & Stegun 7.1.26 (max abs err ~1.5e-7); matches torch exact-erf GELU
    # to f32 precision.  `recip` lets the kernel route the divide to the EUP.
    a1, a2, a3, a4, a5 = 0.254829592, -0.284496736, 1.421413741, -1.453152027, 1.061405429
    p = 0.3275911
    s = jnp.where(x >= 0.0, 1.0, -1.0)
    ax = jnp.abs(x)
    t = recip(1.0 + p * ax)
    poly = ((((a5 * t + a4) * t + a3) * t + a2) * t + a1) * t
    return s * (1.0 - poly * jnp.exp(-ax * ax))


def _gelu_kernel(x):
    # PyTorch nn.GELU() default = exact erf GELU; divide runs on the otherwise idle EUP.
    return 0.5 * x * (1.0 + _erf_poly(x * 0.7071067811865476,
                                      lambda v: pl.reciprocal(v, approx=True)))


def _gelu_ref(x):
    return 0.5 * x * (1.0 + _erf_poly(x * 0.7071067811865476, lambda v: 1.0 / v))


def _ln_rows(x, g, b, eps=1e-5):
    # Row-wise LayerNorm over the last (lane) axis of a 2-D slab; g, b are (1, D).
    mu = jnp.mean(x, axis=-1, keepdims=True)
    var = jnp.mean(jnp.square(x - mu), axis=-1, keepdims=True)
    return (x - mu) * lax.rsqrt(var + eps) * g + b


# ----------------------------------------------------------------------------
# The single fused kernel
# ----------------------------------------------------------------------------
def _mlp_mixer_kernel(xt_ref, lstm_ref, perm_ref, ln_ref,
                      tw1_ref, tw2_ref, cw1_ref, cw2_ref,
                      c1w_ref, c1s_ref, c1b_ref,
                      c2w_ref, c2s_ref, c2b_ref,
                      head_ref, clf_ref,
                      out_ref,
                      xproj_ref, hbuf_ref,
                      *, B, C, T, H, N, D, depth, tok, ch, L1, L2, KS):
    HH = 2 * H                                    # == D (bidirectional hidden width)

    # ---------------- LSTM patch embedding (bidirectional, fused) -------------
    # Input projections for ALL T steps and BOTH directions hoisted into matmuls.
    # xt is time-major (row = t*B + b); perm[0] time-reverses it for the backward
    # direction; biases are folded in once (outside the recurrence).
    xt = xt_ref[...]                                              # (T*B, C)
    wf = lstm_ref[0:C, :]                                         # (C, 8H) fwd input proj
    wb = lstm_ref[C:2 * C, :]                                     # (C, 8H) bwd input proj
    whh = lstm_ref[2 * C:2 * C + HH, :]                           # (2H, 8H) hidden proj
    bias = lstm_ref[2 * C + HH:2 * C + HH + 1, :]                 # (1, 8H)
    xrev = jnp.dot(perm_ref[0], xt, preferred_element_type=F32)   # x[b, :, T-1-t]
    xproj_ref[...] = (jnp.dot(xt, wf, preferred_element_type=F32)
                      + jnp.dot(xrev, wb, preferred_element_type=F32) + bias)

    # Recurrence, fully unrolled (T static).  Gate columns ordered [i, f, o, g] so one
    # sigmoid covers the first 3*HH lanes.  One (B, 2H) store per step -- no per-row
    # scatter stores.
    h_cat = jnp.zeros((B, HH), F32)               # [h_fwd | h_bwd]
    c_cat = jnp.zeros((B, HH), F32)
    for t in range(T):
        g = (jnp.dot(h_cat, whh, preferred_element_type=F32)
             + xproj_ref[t * B:(t + 1) * B, :])                   # (B, 8H)
        sig = jax.nn.sigmoid(g[:, 0:3 * HH])                      # i, f, o in one EUP pass
        i_g = sig[:, 0:HH]
        f_g = sig[:, HH:2 * HH]
        o_g = sig[:, 2 * HH:3 * HH]
        g_g = jnp.tanh(g[:, 3 * HH:4 * HH])
        c_cat = f_g * c_cat + i_g * g_g
        h_cat = o_g * jnp.tanh(c_cat)
        hbuf_ref[t * B:(t + 1) * B, :] = h_cat                    # step-major hidden buffer

    # Step-major (T*B, 2H) -> mixer layout (B*N, D) with two MXU permutations:
    # forward half uses step t = n, backward half uses step t = T-1-n.
    hbuf = hbuf_ref[...]
    x_f = jnp.dot(perm_ref[1], hbuf, preferred_element_type=F32)
    x_b = jnp.dot(perm_ref[2], hbuf, preferred_element_type=F32)
    lane = lax.broadcasted_iota(jnp.int32, (B * N, D), 1)
    x = jnp.where(lane < H, x_f, x_b)             # (B*N, D) resident activation slab

    # ---------------- Mixer blocks (unrolled over depth) ----------------------
    lnp = ln_ref[...]                             # (4*depth + 2, D)
    for blk in range(depth):
        r = 4 * blk
        # token mix: block-diagonal batch-folded weights, biases pre-broadcast
        xn = _ln_rows(x, lnp[r:r + 1, :], lnp[r + 1:r + 2, :])
        tw1p = tw1_ref[blk]                                        # (B*tok, B*N + D)
        u = (jnp.dot(tw1p[:, 0:B * N], xn, preferred_element_type=F32)
             + tw1p[:, B * N:B * N + D])
        u = _gelu_kernel(u)
        tw2p = tw2_ref[blk]                                        # (B*N, B*tok + D)
        x = x + (jnp.dot(tw2p[:, 0:B * tok], u, preferred_element_type=F32)
                 + tw2p[:, B * tok:B * tok + D])
        # channel mix: plain 2-D dots with M = B*N, bias row appended to the weight
        xn2 = _ln_rows(x, lnp[r + 2:r + 3, :], lnp[r + 3:r + 4, :])
        cw1p = cw1_ref[blk]                                        # (D + 1, ch)
        u2 = jnp.dot(xn2, cw1p[0:D, :], preferred_element_type=F32) + cw1p[D:D + 1, :]
        u2 = _gelu_kernel(u2)
        cw2p = cw2_ref[blk]                                        # (ch + 1, D)
        x = x + jnp.dot(u2, cw2p[0:ch, :], preferred_element_type=F32) + cw2p[ch:ch + 1, :]

    r = 4 * depth
    x = _ln_rows(x, lnp[r:r + 1, :], lnp[r + 1:r + 2, :])          # final LayerNorm

    # ---------------- conv1d_decode: Conv1d(N,2N,6,4,1)+ReLU ; Conv1d(2N,4N,6,4,1)+ReLU
    # Each conv = sum_k W_k(block-diag over batch) @ (x @ Sel_k); all K gathers fused
    # into ONE matmul (Sel matrices concatenated along columns) and all K channel
    # contractions fused into ONE matmul (W_k stacked along rows); the per-tap results
    # are the K diagonal blocks, accumulated with static slice-adds (bias pre-loaded).
    R1 = B * 2 * N
    z1 = jnp.dot(x, c1s_ref[...], preferred_element_type=F32)      # (B*N,    K*L1)
    cv1 = jnp.dot(c1w_ref[...], z1, preferred_element_type=F32)    # (K*B*2N, K*L1)
    c1 = c1b_ref[...]                                              # (B*2N, L1) bias slab
    for k in range(KS):
        c1 = c1 + cv1[k * R1:(k + 1) * R1, k * L1:(k + 1) * L1]
    c1 = jnp.maximum(c1, 0.0)

    R2 = B * 4 * N
    z2 = jnp.dot(c1, c2s_ref[...], preferred_element_type=F32)     # (B*2N,   K*L2)
    cv2 = jnp.dot(c2w_ref[...], z2, preferred_element_type=F32)    # (K*B*4N, K*L2)
    c2 = c2b_ref[...]                                              # (B*4N, L2) bias slab
    for k in range(KS):
        c2 = c2 + cv2[k * R2:(k + 1) * R2, k * L2:(k + 1) * L2]
    c2 = jnp.maximum(c2, 0.0)

    # ---------------- mean over conv length + mlp_head + main_clf -------------
    m = jnp.mean(c2, axis=1, keepdims=True)                        # (B*4N, 1)
    headp = head_ref[...]                                          # (B*128, B*4N + 1)
    h1 = jnp.dot(headp[:, 0:R2], m, preferred_element_type=F32) + headp[:, R2:R2 + 1]
    h1 = jnp.maximum(h1, 0.0)                                      # Dropout = identity
    clfp = clf_ref[...]                                            # (B*nc, B*128 + 1)
    BH = B * HEAD_HIDDEN
    out_ref[...] = (jnp.dot(clfp[:, 0:BH], h1, preferred_element_type=F32)
                    + clfp[:, BH:BH + 1])                          # (B*nc, 1)


# ----------------------------------------------------------------------------
# wrapper: single pallas_call, host glue = one transpose
# ----------------------------------------------------------------------------
def mlp_mixer_forward(x, packed):
    B, C, T = x.shape
    d = packed['dims']
    N, D, depth = d['num_patch'], d['dim'], d['depth']
    H = D // 2
    tok, ch = d['token_dim'], d['channel_dim']
    L1, L2, n_cls = d['L1'], d['L2'], d['num_classes']
    assert T == N, 'sequence length must equal num_patch'
    assert B == d['batch'], 'packed params were built for a different batch size'

    # Only host-side glue: one transpose to time-major rows (t, b); the reshape is a
    # contiguous view.  Direction pairing / time reversal happens in-kernel via perms.
    xt = jnp.transpose(x, (2, 0, 1)).reshape(T * B, C).astype(F32)

    inputs = [xt, packed['lstm_w'], packed['perms'], packed['ln_all'],
              packed['tw1b'], packed['tw2b'], packed['cw1b'], packed['cw2b'],
              packed['conv1_w'], packed['conv1_sel'], packed['conv1_b'],
              packed['conv2_w'], packed['conv2_sel'], packed['conv2_b'],
              packed['headp'], packed['clfp']]

    kernel = functools.partial(_mlp_mixer_kernel, B=B, C=C, T=T, H=H, N=N, D=D,
                               depth=depth, tok=tok, ch=ch, L1=L1, L2=L2, KS=CONV_K)

    # Single grid point / single TensorCore: latency-bound at these tiny shapes.
    # TODO(synk): on v7x a leading batch grid axis with dimension_semantics=("parallel",)
    # would engage the second TensorCore if the batch grows.
    out_col = pl.pallas_call(
        kernel,
        out_shape=jax.ShapeDtypeStruct((B * n_cls, 1), F32),
        in_specs=[_VMEM] * len(inputs),
        out_specs=_VMEM,
        scratch_shapes=[pltpu.VMEM((T * B, 8 * H), F32),   # hoisted LSTM gate projections
                        pltpu.VMEM((T * B, 2 * H), F32)],  # step-major hidden states
    )(*inputs)
    return out_col.reshape(B, n_cls)


# ----------------------------------------------------------------------------
# parameters: synthetic PyTorch-layout weights + packing into kernel layout
# ----------------------------------------------------------------------------
def init_params(key, in_channels, dim, num_classes, num_patch, depth, token_dim, channel_dim):
    """Synthetic parameters in native PyTorch layouts (LSTM biases pre-summed ih+hh)."""
    H = dim // 2
    keys = jax.random.split(key, 256)
    it = iter(keys)

    def w(shape, scale=0.05):
        return (scale * jax.random.normal(next(it), shape)).astype(F32)

    params = dict(
        lstm=dict(wih_f=w((4 * H, in_channels)), whh_f=w((4 * H, H)), b_f=w((4 * H,)),
                  wih_b=w((4 * H, in_channels)), whh_b=w((4 * H, H)), b_b=w((4 * H,))),
        blocks=[dict(ln1_g=jnp.ones((dim,), F32), ln1_b=jnp.zeros((dim,), F32),
                     tw1=w((token_dim, num_patch)), tb1=w((token_dim,)),
                     tw2=w((num_patch, token_dim)), tb2=w((num_patch,)),
                     ln2_g=jnp.ones((dim,), F32), ln2_b=jnp.zeros((dim,), F32),
                     cw1=w((channel_dim, dim)), cb1=w((channel_dim,)),
                     cw2=w((dim, channel_dim)), cb2=w((dim,)))
                for _ in range(depth)],
        ln_g=jnp.ones((dim,), F32), ln_b=jnp.zeros((dim,), F32),
        conv1_w=w((2 * num_patch, num_patch, CONV_K)), conv1_b=w((2 * num_patch,)),
        conv2_w=w((4 * num_patch, 2 * num_patch, CONV_K)), conv2_b=w((4 * num_patch,)),
        head_w=w((HEAD_HIDDEN, 4 * num_patch)), head_b=w((HEAD_HIDDEN,)),
        clf_w=w((num_classes, HEAD_HIDDEN)), clf_b=w((num_classes,)),
    )
    return params


def _conv_out_len(L, k=CONV_K, s=CONV_S, p=CONV_P):
    return (L + 2 * p - k) // s + 1


def _conv_select_cat(L_in, L_out, k=CONV_K, s=CONV_S, p=CONV_P):
    # sel[src, kk*L_out + l] = 1 where src = l*s - p + kk (out-of-range == zero padding)
    g = np.zeros((L_in, k * L_out), np.float32)
    for kk in range(k):
        for l in range(L_out):
            src = l * s - p + kk
            if 0 <= src < L_in:
                g[src, kk * L_out + l] = 1.0
    return g


def _blockdiag(mat, B):
    return np.kron(np.eye(B, dtype=np.float32), np.asarray(mat, np.float32))


def _row_bias(vec, B, width):
    # per-output-row bias tiled over batch and pre-broadcast to `width` lanes
    v = np.tile(np.asarray(vec, np.float32), B)[:, None]
    return np.repeat(v, width, axis=1)


def _place_gates(m4h, direction, H):
    # m4h: (R, 4H) columns in PyTorch gate order [i, f, g, o]; output (R, 8H) with the
    # kernel layout [i_f,i_b, f_f,f_b, o_f,o_b, g_f,g_b] and only `direction` filled.
    m4h = np.asarray(m4h, np.float32)
    out = np.zeros((m4h.shape[0], 8 * H), np.float32)
    off = 0 if direction == 'f' else 1
    for slot, gate in enumerate(_GATE_ORDER):
        out[:, (2 * slot + off) * H:(2 * slot + off + 1) * H] = m4h[:, gate * H:(gate + 1) * H]
    return out


def pack_params(params, batch, in_channels, dim, num_classes, num_patch, depth,
                token_dim, channel_dim):
    """Re-pack PyTorch-layout params into the kernel's fused / block-diagonal layout."""
    H = dim // 2
    B, N, D, C, T = batch, num_patch, dim, in_channels, num_patch

    # --- LSTM: one slab [Wf ; Wb ; Whh ; bias], gate columns [i, f, o, g] interleaved
    #     by direction at H granularity ---
    l = params['lstm']
    wf = _place_gates(np.asarray(l['wih_f']).T, 'f', H)                       # (C, 8H)
    wb = _place_gates(np.asarray(l['wih_b']).T, 'b', H)                       # (C, 8H)
    whh = np.concatenate([_place_gates(np.asarray(l['whh_f']).T, 'f', H),
                          _place_gates(np.asarray(l['whh_b']).T, 'b', H)], axis=0)   # (2H, 8H)
    bias = (_place_gates(np.asarray(l['b_f'])[None, :], 'f', H)
            + _place_gates(np.asarray(l['b_b'])[None, :], 'b', H))            # (1, 8H)
    lstm_w = np.concatenate([wf, wb, whh, bias], axis=0)                       # (2C+2H+1, 8H)

    # --- permutations: [input time-reversal, step-major->mixer fwd, ... bwd] ---
    p_rev = np.zeros((T * B, T * B), np.float32)
    p_fwd = np.zeros((B * N, T * B), np.float32)
    p_bwd = np.zeros((B * N, T * B), np.float32)
    for t in range(T):
        for b in range(B):
            p_rev[t * B + b, (T - 1 - t) * B + b] = 1.0
    for b in range(B):
        for n in range(N):
            p_fwd[b * N + n, n * B + b] = 1.0
            p_bwd[b * N + n, (T - 1 - n) * B + b] = 1.0
    perms = np.stack([p_rev, p_fwd, p_bwd], axis=0)

    # --- LayerNorm params: rows [ln1_g, ln1_b, ln2_g, ln2_b] per block + final [g, b] ---
    ln_rows = []
    for bp in params['blocks']:
        ln_rows += [bp['ln1_g'], bp['ln1_b'], bp['ln2_g'], bp['ln2_b']]
    ln_rows += [params['ln_g'], params['ln_b']]
    ln_all = np.stack([np.asarray(r, np.float32) for r in ln_rows], axis=0)

    # --- mixer weights, biases pre-broadcast & concatenated into the weight slabs ---
    tw1b, tw2b, cw1b, cw2b = [], [], [], []
    for bp in params['blocks']:
        tw1b.append(np.concatenate([_blockdiag(bp['tw1'], B),
                                    _row_bias(bp['tb1'], B, D)], axis=1))      # (B*tok, B*N+D)
        tw2b.append(np.concatenate([_blockdiag(bp['tw2'], B),
                                    _row_bias(bp['tb2'], B, D)], axis=1))      # (B*N, B*tok+D)
        cw1b.append(np.concatenate([np.asarray(bp['cw1'], np.float32).T,
                                    np.asarray(bp['cb1'], np.float32)[None, :]], axis=0))  # (D+1, ch)
        cw2b.append(np.concatenate([np.asarray(bp['cw2'], np.float32).T,
                                    np.asarray(bp['cb2'], np.float32)[None, :]], axis=0))  # (ch+1, D)

    # --- conv1d_decode: stacked per-tap block-diag weights + concatenated selections ---
    L1 = _conv_out_len(D)
    L2 = _conv_out_len(L1)
    assert L1 >= 1 and L2 >= 1, 'conv1d_decode output length must be positive'
    c1w = np.asarray(params['conv1_w'], np.float32)
    c2w = np.asarray(params['conv2_w'], np.float32)
    conv1_w = np.concatenate([_blockdiag(c1w[:, :, k], B) for k in range(CONV_K)], axis=0)
    conv2_w = np.concatenate([_blockdiag(c2w[:, :, k], B) for k in range(CONV_K)], axis=0)
    conv1_sel = _conv_select_cat(D, L1)
    conv2_sel = _conv_select_cat(L1, L2)
    conv1_b = _row_bias(params['conv1_b'], B, L1)
    conv2_b = _row_bias(params['conv2_b'], B, L2)

    # --- head / classifier: block-diag weights with bias column appended ---
    headp = np.concatenate([_blockdiag(params['head_w'], B),
                            np.tile(np.asarray(params['head_b'], np.float32), B)[:, None]],
                           axis=1)
    clfp = np.concatenate([_blockdiag(params['clf_w'], B),
                           np.tile(np.asarray(params['clf_b'], np.float32), B)[:, None]],
                          axis=1)

    packed = dict(
        lstm_w=jnp.asarray(lstm_w), perms=jnp.asarray(perms), ln_all=jnp.asarray(ln_all),
        tw1b=jnp.asarray(np.stack(tw1b, 0)), tw2b=jnp.asarray(np.stack(tw2b, 0)),
        cw1b=jnp.asarray(np.stack(cw1b, 0)), cw2b=jnp.asarray(np.stack(cw2b, 0)),
        conv1_w=jnp.asarray(conv1_w), conv1_sel=jnp.asarray(conv1_sel),
        conv1_b=jnp.asarray(conv1_b),
        conv2_w=jnp.asarray(conv2_w), conv2_sel=jnp.asarray(conv2_sel),
        conv2_b=jnp.asarray(conv2_b),
        headp=jnp.asarray(headp), clfp=jnp.asarray(clfp),
        dims=dict(batch=B, num_patch=N, dim=D, depth=depth, num_classes=num_classes,
                  token_dim=token_dim, channel_dim=channel_dim, L1=L1, L2=L2),
    )
    return packed


# ----------------------------------------------------------------------------
# pure-JAX reference (mirrors the PyTorch module) -- used only for verification
# ----------------------------------------------------------------------------
def reference_forward(x, params):
    B, C, T = x.shape
    l = params['lstm']
    H = l['whh_f'].shape[1]

    def run_dir(xs, wih, whh, bias):
        h = jnp.zeros((B, H), F32)
        c = jnp.zeros((B, H), F32)
        outs = []
        for t in range(xs.shape[0]):
            gates = xs[t] @ wih.T + h @ whh.T + bias
            i = jax.nn.sigmoid(gates[:, 0:H])
            f = jax.nn.sigmoid(gates[:, H:2 * H])
            g = jnp.tanh(gates[:, 2 * H:3 * H])
            o = jax.nn.sigmoid(gates[:, 3 * H:4 * H])
            c = f * c + i * g
            h = o * jnp.tanh(c)
            outs.append(h)
        return jnp.stack(outs, axis=0)                            # (T, B, H)

    xt = jnp.transpose(x, (2, 0, 1)).astype(F32)                  # (T, B, C)
    of = run_dir(xt, l['wih_f'], l['whh_f'], l['b_f'])
    ob = run_dir(xt[::-1], l['wih_b'], l['whh_b'], l['b_b'])[::-1]
    h = jnp.transpose(jnp.concatenate([of, ob], axis=-1), (1, 0, 2))   # (B, N, D)

    def ln(z, g, b):
        mu = z.mean(-1, keepdims=True)
        var = jnp.square(z - mu).mean(-1, keepdims=True)
        return (z - mu) / jnp.sqrt(var + 1e-5) * g + b

    for bp in params['blocks']:
        y = ln(h, bp['ln1_g'], bp['ln1_b'])
        y = jnp.einsum('bnd,tn->btd', y, bp['tw1']) + bp['tb1'][None, :, None]
        y = _gelu_ref(y)
        h = h + jnp.einsum('btd,nt->bnd', y, bp['tw2']) + bp['tb2'][None, :, None]
        y2 = ln(h, bp['ln2_g'], bp['ln2_b'])
        y2 = jnp.einsum('bnd,cd->bnc', y2, bp['cw1']) + bp['cb1']
        y2 = _gelu_ref(y2)
        h = h + jnp.einsum('bnc,dc->bnd', y2, bp['cw2']) + bp['cb2']
    h = ln(h, params['ln_g'], params['ln_b'])

    def conv1d(z, wt, bias):
        zp = jnp.pad(z, ((0, 0), (0, 0), (CONV_P, CONV_P)))
        Lout = _conv_out_len(z.shape[-1])
        cols = jnp.stack([zp[:, :, i * CONV_S:i * CONV_S + CONV_K] for i in range(Lout)],
                         axis=1)                                  # (B, Lout, Cin, K)
        return jnp.einsum('blck,ock->bol', cols, wt) + bias[None, :, None]

    c1 = jax.nn.relu(conv1d(h, params['conv1_w'], params['conv1_b']))
    c2 = jax.nn.relu(conv1d(c1, params['conv2_w'], params['conv2_b']))
    m = c2.mean(axis=2)
    hh = jax.nn.relu(m @ params['head_w'].T + params['head_b'])
    return hh @ params['clf_w'].T + params['clf_b']


if __name__ == "__main__":
    # MLPMixer(in_channels=4, dim=32, num_classes=3, num_patch=16, depth=2,
    #          token_dim=8, channel_dim=64, dropout=0.2)   -- inference mode
    in_channels, dim, num_classes = 4, 32, 3
    num_patch, depth, token_dim, channel_dim = 16, 2, 8, 64
    B = 2

    key = jax.random.PRNGKey(0)
    kx, kp = jax.random.split(key)
    x = jax.random.normal(kx, (B, in_channels, num_patch), dtype=F32)   # (b, c, t)

    params = init_params(kp, in_channels, dim, num_classes, num_patch,
                         depth, token_dim, channel_dim)
    packed = pack_params(params, B, in_channels, dim, num_classes, num_patch,
                         depth, token_dim, channel_dim)

    # TODO(synk): nn.Dropout layers are inference identities; exact erf in GELU is an
    # A&S polynomial approximation (~1.5e-7 abs err) and the kernel uses the EUP approx
    # reciprocal inside it; LSTM (hn, cn) are unused.
    fwd = jax.jit(lambda xx: mlp_mixer_forward(xx, packed))
    out = fwd(x)
    jax.block_until_ready(out)
    assert out.shape == (B, num_classes)

    # sanity check against a straightforward pure-JAX mirror of the PyTorch module
    # (tolerance covers the in-kernel approx reciprocal vs exact divide in the ref)
    with jax.default_matmul_precision('highest'):
        ref = jax.jit(lambda xx: reference_forward(xx, params))(x)
    jax.block_until_ready(ref)
    assert jnp.allclose(out, ref, atol=2e-3, rtol=2e-2), (
        'fused kernel deviates from reference', np.asarray(out), np.asarray(ref))

    print("KERNEL_OK")
</pallas_src>

<mosaic_0001>
module attributes {stable_mosaic.version = 11 : i64} {
  func.func @_mlp_mixer_kernel(%arg0: memref<32x4xf32, #tpu.memory_space<vmem>>, %arg1: memref<41x128xf32, #tpu.memory_space<vmem>>, %arg2: memref<3x32x32xf32, #tpu.memory_space<vmem>>, %arg3: memref<10x32xf32, #tpu.memory_space<vmem>>, %arg4: memref<2x16x64xf32, #tpu.memory_space<vmem>>, %arg5: memref<2x32x48xf32, #tpu.memory_space<vmem>>, %arg6: memref<2x33x64xf32, #tpu.memory_space<vmem>>, %arg7: memref<2x65x32xf32, #tpu.memory_space<vmem>>, %arg8: memref<384x32xf32, #tpu.memory_space<vmem>>, %arg9: memref<32x48xf32, #tpu.memory_space<vmem>>, %arg10: memref<64x8xf32, #tpu.memory_space<vmem>>, %arg11: memref<768x64xf32, #tpu.memory_space<vmem>>, %arg12: memref<8x12xf32, #tpu.memory_space<vmem>>, %arg13: memref<128x2xf32, #tpu.memory_space<vmem>>, %arg14: memref<256x129xf32, #tpu.memory_space<vmem>>, %arg15: memref<6x257xf32, #tpu.memory_space<vmem>>, %arg16: memref<6x1xf32, #tpu.memory_space<vmem>>, %arg17: memref<32x128xf32, #tpu.memory_space<vmem>>, %arg18: memref<32x32xf32, #tpu.memory_space<vmem>>) attributes {dimension_semantics = [], scalar_prefetch = 0 : i64, scratch_operands = 2 : i64, tpu.core_type = #tpu.core_type<tc>} {
    %c0 = arith.constant 0 : index
    %c0_0 = arith.constant 0 : index
    %0 = vector.load %arg0[%c0, %c0_0] : memref<32x4xf32, #tpu.memory_space<vmem>>, vector<32x4xf32>
    %c0_1 = arith.constant 0 : index
    %c0_2 = arith.constant 0 : index
    %1 = vector.load %arg1[%c0_1, %c0_2] : memref<41x128xf32, #tpu.memory_space<vmem>>, vector<4x128xf32>
    %c4 = arith.constant 4 : index
    %c0_3 = arith.constant 0 : index
    %2 = vector.load %arg1[%c4, %c0_3] : memref<41x128xf32, #tpu.memory_space<vmem>>, vector<4x128xf32>
    %c8 = arith.constant 8 : index
    %c0_4 = arith.constant 0 : index
    %3 = vector.load %arg1[%c8, %c0_4] : memref<41x128xf32, #tpu.memory_space<vmem>>, vector<32x128xf32>
    %c40 = arith.constant 40 : index
    %c0_5 = arith.constant 0 : index
    %4 = vector.load %arg1[%c40, %c0_5] : memref<41x128xf32, #tpu.memory_space<vmem>>, vector<1x128xf32>
    %c0_6 = arith.constant 0 : index
    %c0_7 = arith.constant 0 : index
    %c0_8 = arith.constant 0 : index
    %5 = vector.load %arg2[%c0_6, %c0_7, %c0_8] : memref<3x32x32xf32, #tpu.memory_space<vmem>>, vector<1x32x32xf32>
    %6 = vector.shape_cast %5 : vector<1x32x32xf32> to vector<32x32xf32>
    %cst = arith.constant dense<0.000000e+00> : vector<32x4xf32>
    %7 = tpu.matmul %6, %0, %cst {dimension_numbers = #tpu.dot_dimension_numbers<[1], [0], [0], [1], [0, 0, 1, 1], [], []>} : vector<32x32xf32>, vector<32x4xf32>, vector<32x4xf32> -> vector<32x4xf32>
    %cst_9 = arith.constant dense<0.000000e+00> : vector<32x128xf32>
    %8 = tpu.matmul %0, %1, %cst_9 {dimension_numbers = #tpu.dot_dimension_numbers<[1], [0], [0], [1], [0, 0, 1, 1], [], []>} : vector<32x4xf32>, vector<4x128xf32>, vector<32x128xf32> -> vector<32x128xf32>
    %cst_10 = arith.constant dense<0.000000e+00> : vector<32x128xf32>
    %9 = tpu.matmul %7, %2, %cst_10 {dimension_numbers = #tpu.dot_dimension_numbers<[1], [0], [0], [1], [0, 0, 1, 1], [], []>} : vector<32x4xf32>, vector<4x128xf32>, vector<32x128xf32> -> vector<32x128xf32>
    %10 = arith.addf %8, %9 : vector<32x128xf32>
    %11 = vector.broadcast %4 : vector<1x128xf32> to vector<32x128xf32>
    %12 = arith.addf %10, %11 : vector<32x128xf32>
    %c0_11 = arith.constant 0 : index
    %c0_12 = arith.constant 0 : index
    %13 = vector.load %arg17[%c0_11, %c0_12] : memref<32x128xf32, #tpu.memory_space<vmem>>, vector<32x128xf32>
    tpu.vector_store %arg17[%c0_11, %c0_12], %12 {strides = array<i32>} : memref<32x128xf32, #tpu.memory_space<vmem>>, vector<32x128xf32>,
    %cst_13 = arith.constant 0.000000e+00 : f32
    %14 = vector.broadcast %cst_13 : f32 to vector<2x32xf32>
    %cst_14 = arith.constant 0.000000e+00 : f32
    %15 = vector.broadcast %cst_14 : f32 to vector<2x32xf32>
    %cst_15 = arith.constant dense<0.000000e+00> : vector<2x128xf32>
    %16 = tpu.matmul %14, %3, %cst_15 {dimension_numbers = #tpu.dot_dimension_numbers<[1], [0], [0], [1], [0, 0, 1, 1], [], []>} : vector<2x32xf32>, vector<32x128xf32>, vector<2x128xf32> -> vector<2x128xf32>
    %c0_16 = arith.constant 0 : index
    %c0_17 = arith.constant 0 : index
    %17 = vector.load %arg17[%c0_16, %c0_17] : memref<32x128xf32, #tpu.memory_space<vmem>>, vector<2x128xf32>
    %18 = arith.addf %16, %17 : vector<2x128xf32>
    %19 = vector.extract_strided_slice %18 {offsets = [0, 0], sizes = [2, 96], strides = [1, 1]} : vector<2x128xf32> to vector<2x96xf32>
    %20 = arith.negf %19 : vector<2x96xf32>
    %21 = math.exp %20 : vector<2x96xf32>
    %cst_18 = arith.constant 1.000000e+00 : f32
    %22 = vector.broadcast %cst_18 : f32 to vector<2x96xf32>
    %23 = arith.addf %22, %21 : vector<2x96xf32>
    %24 = arith.divf %22, %23 : vector<2x96xf32>
    %25 = vector.extract_strided_slice %24 {offsets = [0, 0], sizes = [2, 32], strides = [1, 1]} : vector<2x96xf32> to vector<2x32xf32>
    %26 = vector.extract_strided_slice %24 {offsets = [0, 32], sizes = [2, 32], strides = [1, 1]} : vector<2x96xf32> to vector<2x32xf32>
    %27 = vector.extract_strided_slice %24 {offsets = [0, 64], sizes = [2, 32], strides = [1, 1]} : vector<2x96xf32> to vector<2x32xf32>
    %28 = vector.extract_strided_slice %18 {offsets = [0, 96], sizes = [2, 32], strides = [1, 1]} : vector<2x128xf32> to vector<2x32xf32>
    %29 = math.tanh %28 : vector<2x32xf32>
    %30 = arith.mulf %26, %15 : vector<2x32xf32>
    %31 = arith.mulf %25, %29 : vector<2x32xf32>
    %32 = arith.addf %30, %31 : vector<2x32xf32>
    %33 = math.tanh %32 : vector<2x32xf32>
    %34 = arith.mulf %27, %33 : vector<2x32xf32>
    %c0_19 = arith.constant 0 : index
    %c0_20 = arith.constant 0 : index
    %35 = vector.load %arg18[%c0_19, %c0_20] : memref<32x32xf32, #tpu.memory_space<vmem>>, vector<2x32xf32>
    tpu.vector_store %arg18[%c0_19, %c0_20], %34 {strides = array<i32>} : memref<32x32xf32, #tpu.memory_space<vmem>>, vector<2x32xf32>,
    %cst_21 = arith.constant dense<0.000000e+00> : vector<2x128xf32>
    %36 = tpu.matmul %34, %3, %cst_21 {dimension_numbers = #tpu.dot_dimension_numbers<[1], [0], [0], [1], [0, 0, 1, 1], [], []>} : vector<2x32xf32>, vector<32x128xf32>, vector<2x128xf32> -> vector<2x128xf32>
    %c2 = arith.constant 2 : index
    %c0_22 = arith.constant 0 : index
    %37 = vector.load %arg17[%c2, %c0_22] : memref<32x128xf32, #tpu.memory_space<vmem>>, vector<2x128xf32>
    %38 = arith.addf %36, %37 : vector<2x128xf32>
    %39 = vector.extract_strided_slice %38 {offsets = [0, 0], sizes = [2, 96], strides = [1, 1]} : vector<2x128xf32> to vector<2x96xf32>
    %40 = arith.negf %39 : vector<2x96xf32>
    %41 = math.exp %40 : vector<2x96xf32>
    %cst_23 = arith.constant 1.000000e+00 : f32
    %42 = vector.broadcast %cst_23 : f32 to vector<2x96xf32>
    %43 = arith.addf %42, %41 : vector<2x96xf32>
    %44 = arith.divf %42, %43 : vector<2x96xf32>
    %45 = vector.extract_strided_slice %44 {offsets = [0, 0], sizes = [2, 32], strides = [1, 1]} : vector<2x96xf32> to vector<2x32xf32>
    %46 = vector.extract_strided_slice %44 {offsets = [0, 32], sizes = [2, 32], strides = [1, 1]} : vector<2x96xf32> to vector<2x32xf32>
    %47 = vector.extract_strided_slice %44 {offsets = [0, 64], sizes = [2, 32], strides = [1, 1]} : vector<2x96xf32> to vector<2x32xf32>
    %48 = vector.extract_strided_slice %38 {offsets = [0, 96], sizes = [2, 32], strides = [1, 1]} : vector<2x128xf32> to vector<2x32xf32>
    %49 = math.tanh %48 : vector<2x32xf32>
    %50 = arith.mulf %46, %32 : vector<2x32xf32>
    %51 = arith.mulf %45, %49 : vector<2x32xf32>
    %52 = arith.addf %50, %51 : vector<2x32xf32>
    %53 = math.tanh %52 : vector<2x32xf32>
    %54 = arith.mulf %47, %53 : vector<2x32xf32>
    %c2_24 = arith.constant 2 : index
    %c0_25 = arith.constant 0 : index
    %55 = vector.load %arg18[%c2_24, %c0_25] : memref<32x32xf32, #tpu.memory_space<vmem>>, vector<2x32xf32>
    tpu.vector_store %arg18[%c2_24, %c0_25], %54 {strides = array<i32>} : memref<32x32xf32, #tpu.memory_space<vmem>>, vector<2x32xf32>,
    %cst_26 = arith.constant dense<0.000000e+00> : vector<2x128xf32>
    %56 = tpu.matmul %54, %3, %cst_26 {dimension_numbers = #tpu.dot_dimension_numbers<[1], [0], [0], [1], [0, 0, 1, 1], [], []>} : vector<2x32xf32>, vector<32x128xf32>, vector<2x128xf32> -> vector<2x128xf32>
    %c4_27 = arith.constant 4 : index
    %c0_28 = arith.constant 0 : index
    %57 = vector.load %arg17[%c4_27, %c0_28] : memref<32x128xf32, #tpu.memory_space<vmem>>, vector<2x128xf32>
    %58 = arith.addf %56, %57 : vector<2x128xf32>
    %59 = vector.extract_strided_slice %58 {offsets = [0, 0], sizes = [2, 96], strides = [1, 1]} : vector<2x128xf32> to vector<2x96xf32>
    %60 = arith.negf %59 : vector<2x96xf32>
    %61 = math.exp %60 : vector<2x96xf32>
    %cst_29 = arith.constant 1.000000e+00 : f32
    %62 = vector.broadcast %cst_29 : f32 to vector<2x96xf32>
    %63 = arith.addf %62, %61 : vector<2x96xf32>
    %64 = arith.divf %62, %63 : vector<2x96xf32>
    %65 = vector.extract_strided_slice %64 {offsets = [0, 0], sizes = [2, 32], strides = [1, 1]} : vector<2x96xf32> to vector<2x32xf32>
    %66 = vector.extract_strided_slice %64 {offsets = [0, 32], sizes = [2, 32], strides = [1, 1]} : vector<2x96xf32> to vector<2x32xf32>
    %67 = vector.extract_strided_slice %64 {offsets = [0, 64], sizes = [2, 32], strides = [1, 1]} : vector<2x96xf32> to vector<2x32xf32>
    %68 = vector.extract_strided_slice %58 {offsets = [0, 96], sizes = [2, 32], strides = [1, 1]} : vector<2x128xf32> to vector<2x32xf32>
    %69 = math.tanh %68 : vector<2x32xf32>
    %70 = arith.mulf %66, %52 : vector<2x32xf32>
    %71 = arith.mulf %65, %69 : vector<2x32xf32>
    %72 = arith.addf %70, %71 : vector<2x32xf32>
    %73 = math.tanh %72 : vector<2x32xf32>
    %74 = arith.mulf %67, %73 : vector<2x32xf32>
    %c4_30 = arith.constant 4 : index
    %c0_31 = arith.constant 0 : index
    %75 = vector.load %arg18[%c4_30, %c0_31] : memref<32x32xf32, #tpu.memory_space<vmem>>, vector<2x32xf32>
    tpu.vector_store %arg18[%c4_30, %c0_31], %74 {strides = array<i32>} : memref<32x32xf32, #tpu.memory_space<vmem>>, vector<2x32xf32>,
    %cst_32 = arith.constant dense<0.000000e+00> : vector<2x128xf32>
    %76 = tpu.matmul %74, %3, %cst_32 {dimension_numbers = #tpu.dot_dimension_numbers<[1], [0], [0], [1], [0, 0, 1, 1], [], []>} : vector<2x32xf32>, vector<32x128xf32>, vector<2x128xf32> -> vector<2x128xf32>
    %c6 = arith.constant 6 : index
    %c0_33 = arith.constant 0 : index
    %77 = vector.load %arg17[%c6, %c0_33] : memref<32x128xf32, #tpu.memory_space<vmem>>, vector<2x128xf32>
    %78 = arith.addf %76, %77 : vector<2x128xf32>
    %79 = vector.extract_strided_slice %78 {offsets = [0, 0], sizes = [2, 96], strides = [1, 1]} : vector<2x128xf32> to vector<2x96xf32>
    %80 = arith.negf %79 : vector<2x96xf32>
    %81 = math.exp %80 : vector<2x96xf32>
    %cst_34 = arith.constant 1.000000e+00 : f32
    %82 = vector.broadcast %cst_34 : f32 to vector<2x96xf32>
    %83 = arith.addf %82, %81 : vector<2x96xf32>
    %84 = arith.divf %82, %83 : vector<2x96xf32>
    %85 = vector.extract_strided_slice %84 {offsets = [0, 0], sizes = [2, 32], strides = [1, 1]} : vector<2x96xf32> to vector<2x32xf32>
    %86 = vector.extract_strided_slice %84 {offsets = [0, 32], sizes = [2, 32], strides = [1, 1]} : vector<2x96xf32> to vector<2x32xf32>
    %87 = vector.extract_strided_slice %84 {offsets = [0, 64], sizes = [2, 32], strides = [1, 1]} : vector<2x96xf32> to vector<2x32xf32>
    %88 = vector.extract_strided_slice %78 {offsets = [0, 96], sizes = [2, 32], strides = [1, 1]} : vector<2x128xf32> to vector<2x32xf32>
    %89 = math.tanh %88 : vector<2x32xf32>
    %90 = arith.mulf %86, %72 : vector<2x32xf32>
    %91 = arith.mulf %85, %89 : vector<2x32xf32>
    %92 = arith.addf %90, %91 : vector<2x32xf32>
    %93 = math.tanh %92 : vector<2x32xf32>
    %94 = arith.mulf %87, %93 : vector<2x32xf32>
    %c6_35 = arith.constant 6 : index
    %c0_36 = arith.constant 0 : index
    %95 = vector.load %arg18[%c6_35, %c0_36] : memref<32x32xf32, #tpu.memory_space<vmem>>, vector<2x32xf32>
    tpu.vector_store %arg18[%c6_35, %c0_36], %94 {strides = array<i32>} : memref<32x32xf32, #tpu.memory_space<vmem>>, vector<2x32xf32>,
    %cst_37 = arith.constant dense<0.000000e+00> : vector<2x128xf32>
    %96 = tpu.matmul %94, %3, %cst_37 {dimension_numbers = #tpu.dot_dimension_numbers<[1], [0], [0], [1], [0, 0, 1, 1], [], []>} : vector<2x32xf32>, vector<32x128xf32>, vector<2x128xf32> -> vector<2x128xf32>
    %c8_38 = arith.constant 8 : index
    %c0_39 = arith.constant 0 : index
    %97 = vector.load %arg17[%c8_38, %c0_39] : memref<32x128xf32, #tpu.memory_space<vmem>>, vector<2x128xf32>
    %98 = arith.addf %96, %97 : vector<2x128xf32>
    %99 = vector.extract_strided_slice %98 {offsets = [0, 0], sizes = [2, 96], strides = [1, 1]} : vector<2x128xf32> to vector<2x96xf32>
    %100 = arith.negf %99 : vector<2x96xf32>
    %101 = math.exp %100 : vector<2x96xf32>
    %cst_40 = arith.constant 1.000000e+00 : f32
    %102 = vector.broadcast %cst_40 : f32 to vector<2x96xf32>
    %103 = arith.addf %102, %101 : vector<2x96xf32>
    %104 = arith.divf %102, %103 : vector<2x96xf32>
    %105 = vector.extract_strided_slice %104 {offsets = [0, 0], sizes = [2, 32], strides = [1, 1]} : vector<2x96xf32> to vector<2x32xf32>
    %106 = vector.extract_strided_slice %104 {offsets = [0, 32], sizes = [2, 32], strides = [1, 1]} : vector<2x96xf32> to vector<2x32xf32>
    %107 = vector.extract_strided_slice %104 {offsets = [0, 64], sizes = [2, 32], strides = [1, 1]} : vector<2x96xf32> to vector<2x32xf32>
    %108 = vector.extract_strided_slice %98 {offsets = [0, 96], sizes = [2, 32], strides = [1, 1]} : vector<2x128xf32> to vector<2x32xf32>
    %109 = math.tanh %108 : vector<2x32xf32>
    %110 = arith.mulf %106, %92 : vector<2x32xf32>
    %111 = arith.mulf %105, %109 : vector<2x32xf32>
    %112 = arith.addf %110, %111 : vector<2x32xf32>
    %113 = math.tanh %112 : vector<2x32xf32>
    %114 = arith.mulf %107, %113 : vector<2x32xf32>
    %c8_41 = arith.constant 8 : index
    %c0_42 = arith.constant 0 : index
    %115 = vector.load %arg18[%c8_41, %c0_42] : memref<32x32xf32, #tpu.memory_space<vmem>>, vector<2x32xf32>
    tpu.vector_store %arg18[%c8_41, %c0_42], %114 {strides = array<i32>} : memref<32x32xf32, #tpu.memory_space<vmem>>, vector<2x32xf32>,
    %cst_43 = arith.constant dense<0.000000e+00> : vector<2x128xf32>
    %116 = tpu.matmul %114, %3, %cst_43 {dimension_numbers = #tpu.dot_dimension_numbers<[1], [0], [0], [1], [0, 0, 1, 1], [], []>} : vector<2x32xf32>, vector<32x128xf32>, vector<2x128xf32> -> vector<2x128xf32>
    %c10 = arith.constant 10 : index
    %c0_44 = arith.constant 0 : index
    %117 = vector.load %arg17[%c10, %c0_44] : memref<32x128xf32, #tpu.memory_space<vmem>>, vector<2x128xf32>
    %118 = arith.addf %116, %117 : vector<2x128xf32>
    %119 = vector.extract_strided_slice %118 {offsets = [0, 0], sizes = [2, 96], strides = [1, 1]} : vector<2x128xf32> to vector<2x96xf32>
    %120 = arith.negf %119 : vector<2x96xf32>
    %121 = math.exp %120 : vector<2x96xf32>
    %cst_45 = arith.constant 1.000000e+00 : f32
    %122 = vector.broadcast %cst_45 : f32 to vector<2x96xf32>
    %123 = arith.addf %122, %121 : vector<2x96xf32>
    %124 = arith.divf %122, %123 : vector<2x96xf32>
    %125 = vector.extract_strided_slice %124 {offsets = [0, 0], sizes = [2, 32], strides = [1, 1]} : vector<2x96xf32> to vector<2x32xf32>
    %126 = vector.extract_strided_slice %124 {offsets = [0, 32], sizes = [2, 32], strides = [1, 1]} : vector<2x96xf32> to vector<2x32xf32>
    %127 = vector.extract_strided_slice %124 {offsets = [0, 64], sizes = [2, 32], strides = [1, 1]} : vector<2x96xf32> to vector<2x32xf32>
    %128 = vector.extract_strided_slice %118 {offsets = [0, 96], sizes = [2, 32], strides = [1, 1]} : vector<2x128xf32> to vector<2x32xf32>
    %129 = math.tanh %128 : vector<2x32xf32>
    %130 = arith.mulf %126, %112 : vector<2x32xf32>
    %131 = arith.mulf %125, %129 : vector<2x32xf32>
    %132 = arith.addf %130, %131 : vector<2x32xf32>
    %133 = math.tanh %132 : vector<2x32xf32>
    %134 = arith.mulf %127, %133 : vector<2x32xf32>
    %c10_46 = arith.constant 10 : index
    %c0_47 = arith.constant 0 : index
    %135 = vector.load %arg18[%c10_46, %c0_47] : memref<32x32xf32, #tpu.memory_space<vmem>>, vector<2x32xf32>
    tpu.vector_store %arg18[%c10_46, %c0_47], %134 {strides = array<i32>} : memref<32x32xf32, #tpu.memory_space<vmem>>, vector<2x32xf32>,
    %cst_48 = arith.constant dense<0.000000e+00> : vector<2x128xf32>
    %136 = tpu.matmul %134, %3, %cst_48 {dimension_numbers = #tpu.dot_dimension_numbers<[1], [0], [0], [1], [0, 0, 1, 1], [], []>} : vector<2x32xf32>, vector<32x128xf32>, vector<2x128xf32> -> vector<2x128xf32>
    %c12 = arith.constant 12 : index
    %c0_49 = arith.constant 0 : index
    %137 = vector.load %arg17[%c12, %c0_49] : memref<32x128xf32, #tpu.memory_space<vmem>>, vector<2x128xf32>
    %138 = arith.addf %136, %137 : vector<2x128xf32>
    %139 = vector.extract_strided_slice %138 {offsets = [0, 0], sizes = [2, 96], strides = [1, 1]} : vector<2x128xf32> to vector<2x96xf32>
    %140 = arith.negf %139 : vector<2x96xf32>
    %141 = math.exp %140 : vector<2x96xf32>
    %cst_50 = arith.constant 1.000000e+00 : f32
    %142 = vector.broadcast %cst_50 : f32 to vector<2x96xf32>
    %143 = arith.addf %142, %141 : vector<2x96xf32>
    %144 = arith.divf %142, %143 : vector<2x96xf32>
    %145 = vector.extract_strided_slice %144 {offsets = [0, 0], sizes = [2, 32], strides = [1, 1]} : vector<2x96xf32> to vector<2x32xf32>
    %146 = vector.extract_strided_slice %144 {offsets = [0, 32], sizes = [2, 32], strides = [1, 1]} : vector<2x96xf32> to vector<2x32xf32>
    %147 = vector.extract_strided_slice %144 {offsets = [0, 64], sizes = [2, 32], strides = [1, 1]} : vector<2x96xf32> to vector<2x32xf32>
    %148 = vector.extract_strided_slice %138 {offsets = [0, 96], sizes = [2, 32], strides = [1, 1]} : vector<2x128xf32> to vector<2x32xf32>
    %149 = math.tanh %148 : vector<2x32xf32>
    %150 = arith.mulf %146, %132 : vector<2x32xf32>
    %151 = arith.mulf %145, %149 : vector<2x32xf32>
    %152 = arith.addf %150, %151 : vector<2x32xf32>
    %153 = math.tanh %152 : vector<2x32xf32>
    %154 = arith.mulf %147, %153 : vector<2x32xf32>
    %c12_51 = arith.constant 12 : index
    %c0_52 = arith.constant 0 : index
    %155 = vector.load %arg18[%c12_51, %c0_52] : memref<32x32xf32, #tpu.memory_space<vmem>>, vector<2x32xf32>
    tpu.vector_store %arg18[%c12_51, %c0_52], %154 {strides = array<i32>} : memref<32x32xf32, #tpu.memory_space<vmem>>, vector<2x32xf32>,
    %cst_53 = arith.constant dense<0.000000e+00> : vector<2x128xf32>
    %156 = tpu.matmul %154, %3, %cst_53 {dimension_numbers = #tpu.dot_dimension_numbers<[1], [0], [0], [1], [0, 0, 1, 1], [], []>} : vector<2x32xf32>, vector<32x128xf32>, vector<2x128xf32> -> vector<2x128xf32>
    %c14 = arith.constant 14 : index
    %c0_54 = arith.constant 0 : index
    %157 = vector.load %arg17[%c14, %c0_54] : memref<32x128xf32, #tpu.memory_space<vmem>>, vector<2x128xf32>
    %158 = arith.addf %156, %157 : vector<2x128xf32>
    %159 = vector.extract_strided_slice %158 {offsets = [0, 0], sizes = [2, 96], strides = [1, 1]} : vector<2x128xf32> to vector<2x96xf32>
    %160 = arith.negf %159 : vector<2x96xf32>
    %161 = math.exp %160 : vector<2x96xf32>
    %cst_55 = arith.constant 1.000000e+00 : f32
    %162 = vector.broadcast %cst_55 : f32 to vector<2x96xf32>
    %163 = arith.addf %162, %161 : vector<2x96xf32>
    %164 = arith.divf %162, %163 : vector<2x96xf32>
    %165 = vector.extract_strided_slice %164 {offsets = [0, 0], sizes = [2, 32], strides = [1, 1]} : vector<2x96xf32> to vector<2x32xf32>
    %166 = vector.extract_strided_slice %164 {offsets = [0, 32], sizes = [2, 32], strides = [1, 1]} : vector<2x96xf32> to vector<2x32xf32>
    %167 = vector.extract_strided_slice %164 {offsets = [0, 64], sizes = [2, 32], strides = [1, 1]} : vector<2x96xf32> to vector<2x32xf32>
    %168 = vector.extract_strided_slice %158 {offsets = [0, 96], sizes = [2, 32], strides = [1, 1]} : vector<2x128xf32> to vector<2x32xf32>
    %169 = math.tanh %168 : vector<2x32xf32>
    %170 = arith.mulf %166, %152 : vector<2x32xf32>
    %171 = arith.mulf %165, %169 : vector<2x32xf32>
    %172 = arith.addf %170, %171 : vector<2x32xf32>
    %173 = math.tanh %172 : vector<2x32xf32>
    %174 = arith.mulf %167, %173 : vector<2x32xf32>
    %c14_56 = arith.constant 14 : index
    %c0_57 = arith.constant 0 : index
    %175 = vector.load %arg18[%c14_56, %c0_57] : memref<32x32xf32, #tpu.memory_space<vmem>>, vector<2x32xf32>
    tpu.vector_store %arg18[%c14_56, %c0_57], %174 {strides = array<i32>} : memref<32x32xf32, #tpu.memory_space<vmem>>, vector<2x32xf32>,
    %cst_58 = arith.constant dense<0.000000e+00> : vector<2x128xf32>
    %176 = tpu.matmul %174, %3, %cst_58 {dimension_numbers = #tpu.dot_dimension_numbers<[1], [0], [0], [1], [0, 0, 1, 1], [], []>} : vector<2x32xf32>, vector<32x128xf32>, vector<2x128xf32> -> vector<2x128xf32>
    %c16 = arith.constant 16 : index
    %c0_59 = arith.constant 0 : index
    %177 = vector.load %arg17[%c16, %c0_59] : memref<32x128xf32, #tpu.memory_space<vmem>>, vector<2x128xf32>
    %178 = arith.addf %176, %177 : vector<2x128xf32>
    %179 = vector.extract_strided_slice %178 {offsets = [0, 0], sizes = [2, 96], strides = [1, 1]} : vector<2x128xf32> to vector<2x96xf32>
    %180 = arith.negf %179 : vector<2x96xf32>
    %181 = math.exp %180 : vector<2x96xf32>
    %cst_60 = arith.constant 1.000000e+00 : f32
    %182 = vector.broadcast %cst_60 : f32 to vector<2x96xf32>
    %183 = arith.addf %182, %181 : vector<2x96xf32>
    %184 = arith.divf %182, %183 : vector<2x96xf32>
    %185 = vector.extract_strided_slice %184 {offsets = [0, 0], sizes = [2, 32], strides = [1, 1]} : vector<2x96xf32> to vector<2x32xf32>
    %186 = vector.extract_strided_slice %184 {offsets = [0, 32], sizes = [2, 32], strides = [1, 1]} : vector<2x96xf32> to vector<2x32xf32>
    %187 = vector.extract_strided_slice %184 {offsets = [0, 64], sizes = [2, 32], strides = [1, 1]} : vector<2x96xf32> to vector<2x32xf32>
    %188 = vector.extract_strided_slice %178 {offsets = [0, 96], sizes = [2, 32], strides = [1, 1]} : vector<2x128xf32> to vector<2x32xf32>
    %189 = math.tanh %188 : vector<2x32xf32>
    %190 = arith.mulf %186, %172 : vector<2x32xf32>
    %191 = arith.mulf %185, %189 : vector<2x32xf32>
    %192 = arith.addf %190, %191 : vector<2x32xf32>
    %193 = math.tanh %192 : vector<2x32xf32>
    %194 = arith.mulf %187, %193 : vector<2x32xf32>
    %c16_61 = arith.constant 16 : index
    %c0_62 = arith.constant 0 : index
    %195 = vector.load %arg18[%c16_61, %c0_62] : memref<32x32xf32, #tpu.memory_space<vmem>>, vector<2x32xf32>
    tpu.vector_store %arg18[%c16_61, %c0_62], %194 {strides = array<i32>} : memref<32x32xf32, #tpu.memory_space<vmem>>, vector<2x32xf32>,
    %cst_63 = arith.constant dense<0.000000e+00> : vector<2x128xf32>
    %196 = tpu.matmul %194, %3, %cst_63 {dimension_numbers = #tpu.dot_dimension_numbers<[1], [0], [0], [1], [0, 0, 1, 1], [], []>} : vector<2x32xf32>, vector<32x128xf32>, vector<2x128xf32> -> vector<2x128xf32>
    %c18 = arith.constant 18 : index
    %c0_64 = arith.constant 0 : index
    %197 = vector.load %arg17[%c18, %c0_64] : memref<32x128xf32, #tpu.memory_space<vmem>>, vector<2x128xf32>
    %198 = arith.addf %196, %197 : vector<2x128xf32>
    %199 = vector.extract_strided_slice %198 {offsets = [0, 0], sizes = [2, 96], strides = [1, 1]} : vector<2x128xf32> to vector<2x96xf32>
    %200 = arith.negf %199 : vector<2x96xf32>
    %201 = math.exp %200 : vector<2x96xf32>
    %cst_65 = arith.constant 1.000000e+00 : f32
    %202 = vector.broadcast %cst_65 : f32 to vector<2x96xf32>
    %203 = arith.addf %202, %201 : vector<2x96xf32>
    %204 = arith.divf %202, %203 : vector<2x96xf32>
    %205 = vector.extract_strided_slice %204 {offsets = [0, 0], sizes = [2, 32], strides = [1, 1]} : vector<2x96xf32> to vector<2x32xf32>
    %206 = vector.extract_strided_slice %204 {offsets = [0, 32], sizes = [2, 32], strides = [1, 1]} : vector<2x96xf32> to vector<2x32xf32>
    %207 = vector.extract_strided_slice %204 {offsets = [0, 64], sizes = [2, 32], strides = [1, 1]} : vector<2x96xf32> to vector<2x32xf32>
    %208 = vector.extract_strided_slice %198 {offsets = [0, 96], sizes = [2, 32], strides = [1, 1]} : vector<2x128xf32> to vector<2x32xf32>
    %209 = math.tanh %208 : vector<2x32xf32>
    %210 = arith.mulf %206, %192 : vector<2x32xf32>
    %211 = arith.mulf %205, %209 : vector<2x32xf32>
    %212 = arith.addf %210, %211 : vector<2x32xf32>
    %213 = math.tanh %212 : vector<2x32xf32>
    %214 = arith.mulf %207, %213 : vector<2x32xf32>
    %c18_66 = arith.constant 18 : index
    %c0_67 = arith.constant 0 : index
    %215 = vector.load %arg18[%c18_66, %c0_67] : memref<32x32xf32, #tpu.memory_space<vmem>>, vector<2x32xf32>
    tpu.vector_store %arg18[%c18_66, %c0_67], %214 {strides = array<i32>} : memref<32x32xf32, #tpu.memory_space<vmem>>, vector<2x32xf32>,
    %cst_68 = arith.constant dense<0.000000e+00> : vector<2x128xf32>
    %216 = tpu.matmul %214, %3, %cst_68 {dimension_numbers = #tpu.dot_dimension_numbers<[1], [0], [0], [1], [0, 0, 1, 1], [], []>} : vector<2x32xf32>, vector<32x128xf32>, vector<2x128xf32> -> vector<2x128xf32>
    %c20 = arith.constant 20 : index
    %c0_69 = arith.constant 0 : index
    %217 = vector.load %arg17[%c20, %c0_69] : memref<32x128xf32, #tpu.memory_space<vmem>>, vector<2x128xf32>
    %218 = arith.addf %216, %217 : vector<2x128xf32>
    %219 = vector.extract_strided_slice %218 {offsets = [0, 0], sizes = [2, 96], strides = [1, 1]} : vector<2x128xf32> to vector<2x96xf32>
    %220 = arith.negf %219 : vector<2x96xf32>
    %221 = math.exp %220 : vector<2x96xf32>
    %cst_70 = arith.constant 1.000000e+00 : f32
    %222 = vector.broadcast %cst_70 : f32 to vector<2x96xf32>
    %223 = arith.addf %222, %221 : vector<2x96xf32>
    %224 = arith.divf %222, %223 : vector<2x96xf32>
    %225 = vector.extract_strided_slice %224 {offsets = [0, 0], sizes = [2, 32], strides = [1, 1]} : vector<2x96xf32> to vector<2x32xf32>
    %226 = vector.extract_strided_slice %224 {offsets = [0, 32], sizes = [2, 32], strides = [1, 1]} : vector<2x96xf32> to vector<2x32xf32>
    %227 = vector.extract_strided_slice %224 {offsets = [0, 64], sizes = [2, 32], strides = [1, 1]} : vector<2x96xf32> to vector<2x32xf32>
    %228 = vector.extract_strided_slice %218 {offsets = [0, 96], sizes = [2, 32], strides = [1, 1]} : vector<2x128xf32> to vector<2x32xf32>
    %229 = math.tanh %228 : vector<2x32xf32>
    %230 = arith.mulf %226, %212 : vector<2x32xf32>
    %231 = arith.mulf %225, %229 : vector<2x32xf32>
    %232 = arith.addf %230, %231 : vector<2x32xf32>
    %233 = math.tanh %232 : vector<2x32xf32>
    %234 = arith.mulf %227, %233 : vector<2x32xf32>
    %c20_71 = arith.constant 20 : index
    %c0_72 = arith.constant 0 : index
    %235 = vector.load %arg18[%c20_71, %c0_72] : memref<32x32xf32, #tpu.memory_space<vmem>>, vector<2x32xf32>
    tpu.vector_store %arg18[%c20_71, %c0_72], %234 {strides = array<i32>} : memref<32x32xf32, #tpu.memory_space<vmem>>, vector<2x32xf32>,
    %cst_73 = arith.constant dense<0.000000e+00> : vector<2x128xf32>
    %236 = tpu.matmul %234, %3, %cst_73 {dimension_numbers = #tpu.dot_dimension_numbers<[1], [0], [0], [1], [0, 0, 1, 1], [], []>} : vector<2x32xf32>, vector<32x128xf32>, vector<2x128xf32> -> vector<2x128xf32>
    %c22 = arith.constant 22 : index
    %c0_74 = arith.constant 0 : index
    %237 = vector.load %arg17[%c22, %c0_74] : memref<32x128xf32, #tpu.memory_space<vmem>>, vector<2x128xf32>
    %238 = arith.addf %236, %237 : vector<2x128xf32>
    %239 = vector.extract_strided_slice %238 {offsets = [0, 0], sizes = [2, 96], strides = [1, 1]} : vector<2x128xf32> to vector<2x96xf32>
    %240 = arith.negf %239 : vector<2x96xf32>
    %241 = math.exp %240 : vector<2x96xf32>
    %cst_75 = arith.constant 1.000000e+00 : f32
    %242 = vector.broadcast %cst_75 : f32 to vector<2x96xf32>
    %243 = arith.addf %242, %241 : vector<2x96xf32>
    %244 = arith.divf %242, %243 : vector<2x96xf32>
    %245 = vector.extract_strided_slice %244 {offsets = [0, 0], sizes = [2, 32], strides = [1, 1]} : vector<2x96xf32> to vector<2x32xf32>
    %246 = vector.extract_strided_slice %244 {offsets = [0, 32], sizes = [2, 32], strides = [1, 1]} : vector<2x96xf32> to vector<2x32xf32>
    %247 = vector.extract_strided_slice %244 {offsets = [0, 64], sizes = [2, 32], strides = [1, 1]} : vector<2x96xf32> to vector<2x32xf32>
    %248 = vector.extract_strided_slice %238 {offsets = [0, 96], sizes = [2, 32], strides = [1, 1]} : vector<2x128xf32> to vector<2x32xf32>
    %249 = math.tanh %248 : vector<2x32xf32>
    %250 = arith.mulf %246, %232 : vector<2x32xf32>
    %251 = arith.mulf %245, %249 : vector<2x32xf32>
    %252 = arith.addf %250, %251 : vector<2x32xf32>
    %253 = math.tanh %252 : vector<2x32xf32>
    %254 = arith.mulf %247, %253 : vector<2x32xf32>
    %c22_76 = arith.constant 22 : index
    %c0_77 = arith.constant 0 : index
    %255 = vector.load %arg18[%c22_76, %c0_77] : memref<32x32xf32, #tpu.memory_space<vmem>>, vector<2x32xf32>
    tpu.vector_store %arg18[%c22_76, %c0_77], %254 {strides = array<i32>} : memref<32x32xf32, #tpu.memory_space<vmem>>, vector<2x32xf32>,
    %cst_78 = arith.constant dense<0.000000e+00> : vector<2x128xf32>
    %256 = tpu.matmul %254, %3, %cst_78 {dimension_numbers = #tpu.dot_dimension_numbers<[1], [0], [0], [1], [0, 0, 1, 1], [], []>} : vector<2x32xf32>, vector<32x128xf32>, vector<2x128xf32> -> vector<2x128xf32>
    %c24 = arith.constant 24 : index
    %c0_79 = arith.constant 0 : index
    %257 = vector.load %arg17[%c24, %c0_79] : memref<32x128xf32, #tpu.memory_space<vmem>>, vector<2x128xf32>
    %258 = arith.addf %256, %257 : vector<2x128xf32>
    %259 = vector.extract_strided_slice %258 {offsets = [0, 0], sizes = [2, 96], strides = [1, 1]} : vector<2x128xf32> to vector<2x96xf32>
    %260 = arith.negf %259 : vector<2x96xf32>
    %261 = math.exp %260 : vector<2x96xf32>
    %cst_80 = arith.constant 1.000000e+00 : f32
    %262 = vector.broadcast %cst_80 : f32 to vector<2x96xf32>
    %263 = arith.addf %262, %261 : vector<2x96xf32>
    %264 = arith.divf %262, %263 : vector<2x96xf32>
    %265 = vector.extract_strided_slice %264 {offsets = [0, 0], sizes = [2, 32], strides = [1, 1]} : vector<2x96xf32> to vector<2x32xf32>
    %266 = vector.extract_strided_slice %264 {offsets = [0, 32], sizes = [2, 32], strides = [1, 1]} : vector<2x96xf32> to vector<2x32xf32>
    %267 = vector.extract_strided_slice %264 {offsets = [0, 64], sizes = [2, 32], strides = [1, 1]} : vector<2x96xf32> to vector<2x32xf32>
    %268 = vector.extract_strided_slice %258 {offsets = [0, 96], sizes = [2, 32], strides = [1, 1]} : vector<2x128xf32> to vector<2x32xf32>
    %269 = math.tanh %268 : vector<2x32xf32>
    %270 = arith.mulf %266, %252 : vector<2x32xf32>
    %271 = arith.mulf %265, %269 : vector<2x32xf32>
    %272 = arith.addf %270, %271 : vector<2x32xf32>
    %273 = math.tanh %272 : vector<2x32xf32>
    %274 = arith.mulf %267, %273 : vector<2x32xf32>
    %c24_81 = arith.constant 24 : index
    %c0_82 = arith.constant 0 : index
    %275 = vector.load %arg18[%c24_81, %c0_82] : memref<32x32xf32, #tpu.memory_space<vmem>>, vector<2x32xf32>
    tpu.vector_store %arg18[%c24_81, %c0_82], %274 {strides = array<i32>} : memref<32x32xf32, #tpu.memory_space<vmem>>, vector<2x32xf32>,
    %cst_83 = arith.constant dense<0.000000e+00> : vector<2x128xf32>
    %276 = tpu.matmul %274, %3, %cst_83 {dimension_numbers = #tpu.dot_dimension_numbers<[1], [0], [0], [1], [0, 0, 1, 1], [], []>} : vector<2x32xf32>, vector<32x128xf32>, vector<2x128xf32> -> vector<2x128xf32>
    %c26 = arith.constant 26 : index
    %c0_84 = arith.constant 0 : index
    %277 = vector.load %arg17[%c26, %c0_84] : memref<32x128xf32, #tpu.memory_space<vmem>>, vector<2x128xf32>
    %278 = arith.addf %276, %277 : vector<2x128xf32>
    %279 = vector.extract_strided_slice %278 {offsets = [0, 0], sizes = [2, 96], strides = [1, 1]} : vector<2x128xf32> to vector<2x96xf32>
    %280 = arith.negf %279 : vector<2x96xf32>
    %281 = math.exp %280 : vector<2x96xf32>
    %cst_85 = arith.constant 1.000000e+00 : f32
    %282 = vector.broadcast %cst_85 : f32 to vector<2x96xf32>
    %283 = arith.addf %282, %281 : vector<2x96xf32>
    %284 = arith.divf %282, %283 : vector<2x96xf32>
    %285 = vector.extract_strided_slice %284 {offsets = [0, 0], sizes = [2, 32], strides = [1, 1]} : vector<2x96xf32> to vector<2x32xf32>
    %286 = vector.extract_strided_slice %284 {offsets = [0, 32], sizes = [2, 32], strides = [1, 1]} : vector<2x96xf32> to vector<2x32xf32>
    %287 = vector.extract_strided_slice %284 {offsets = [0, 64], sizes = [2, 32], strides = [1, 1]} : vector<2x96xf32> to vector<2x32xf32>
    %288 = vector.extract_strided_slice %278 {offsets = [0, 96], sizes = [2, 32], strides = [1, 1]} : vector<2x128xf32> to vector<2x32xf32>
    %289 = math.tanh %288 : vector<2x32xf32>
    %290 = arith.mulf %286, %272 : vector<2x32xf32>
    %291 = arith.mulf %285, %289 : vector<2x32xf32>
    %292 = arith.addf %290, %291 : vector<2x32xf32>
    %293 = math.tanh %292 : vector<2x32xf32>
    %294 = arith.mulf %287, %293 : vector<2x32xf32>
    %c26_86 = arith.constant 26 : index
    %c0_87 = arith.constant 0 : index
    %295 = vector.load %arg18[%c26_86, %c0_87] : memref<32x32xf32, #tpu.memory_space<vmem>>, vector<2x32xf32>
    tpu.vector_store %arg18[%c26_86, %c0_87], %294 {strides = array<i32>} : memref<32x32xf32, #tpu.memory_space<vmem>>, vector<2x32xf32>,
    %cst_88 = arith.constant dense<0.000000e+00> : vector<2x128xf32>
    %296 = tpu.matmul %294, %3, %cst_88 {dimension_numbers = #tpu.dot_dimension_numbers<[1], [0], [0], [1], [0, 0, 1, 1], [], []>} : vector<2x32xf32>, vector<32x128xf32>, vector<2x128xf32> -> vector<2x128xf32>
    %c28 = arith.constant 28 : index
    %c0_89 = arith.constant 0 : index
    %297 = vector.load %arg17[%c28, %c0_89] : memref<32x128xf32, #tpu.memory_space<vmem>>, vector<2x128xf32>
    %298 = arith.addf %296, %297 : vector<2x128xf32>
    %299 = vector.extract_strided_slice %298 {offsets = [0, 0], sizes = [2, 96], strides = [1, 1]} : vector<2x128xf32> to vector<2x96xf32>
    %300 = arith.negf %299 : vector<2x96xf32>
    %301 = math.exp %300 : vector<2x96xf32>
    %cst_90 = arith.constant 1.000000e+00 : f32
    %302 = vector.broadcast %cst_90 : f32 to vector<2x96xf32>
    %303 = arith.addf %302, %301 : vector<2x96xf32>
    %304 = arith.divf %302, %303 : vector<2x96xf32>
    %305 = vector.extract_strided_slice %304 {offsets = [0, 0], sizes = [2, 32], strides = [1, 1]} : vector<2x96xf32> to vector<2x32xf32>
    %306 = vector.extract_strided_slice %304 {offsets = [0, 32], sizes = [2, 32], strides = [1, 1]} : vector<2x96xf32> to vector<2x32xf32>
    %307 = vector.extract_strided_slice %304 {offsets = [0, 64], sizes = [2, 32], strides = [1, 1]} : vector<2x96xf32> to vector<2x32xf32>
    %308 = vector.extract_strided_slice %298 {offsets = [0, 96], sizes = [2, 32], strides = [1, 1]} : vector<2x128xf32> to vector<2x32xf32>
    %309 = math.tanh %308 : vector<2x32xf32>
    %310 = arith.mulf %306, %292 : vector<2x32xf32>
    %311 = arith.mulf %305, %309 : vector<2x32xf32>
    %312 = arith.addf %310, %311 : vector<2x32xf32>
    %313 = math.tanh %312 : vector<2x32xf32>
    %314 = arith.mulf %307, %313 : vector<2x32xf32>
    %c28_91 = arith.constant 28 : index
    %c0_92 = arith.constant 0 : index
    %315 = vector.load %arg18[%c28_91, %c0_92] : memref<32x32xf32, #tpu.memory_space<vmem>>, vector<2x32xf32>
    tpu.vector_store %arg18[%c28_91, %c0_92], %314 {strides = array<i32>} : memref<32x32xf32, #tpu.memory_space<vmem>>, vector<2x32xf32>,
    %cst_93 = arith.constant dense<0.000000e+00> : vector<2x128xf32>
    %316 = tpu.matmul %314, %3, %cst_93 {dimension_numbers = #tpu.dot_dimension_numbers<[1], [0], [0], [1], [0, 0, 1, 1], [], []>} : vector<2x32xf32>, vector<32x128xf32>, vector<2x128xf32> -> vector<2x128xf32>
    %c30 = arith.constant 30 : index
    %c0_94 = arith.constant 0 : index
    %317 = vector.load %arg17[%c30, %c0_94] : memref<32x128xf32, #tpu.memory_space<vmem>>, vector<2x128xf32>
    %318 = arith.addf %316, %317 : vector<2x128xf32>
    %319 = vector.extract_strided_slice %318 {offsets = [0, 0], sizes = [2, 96], strides = [1, 1]} : vector<2x128xf32> to vector<2x96xf32>
    %320 = arith.negf %319 : vector<2x96xf32>
    %321 = math.exp %320 : vector<2x96xf32>
    %cst_95 = arith.constant 1.000000e+00 : f32
    %322 = vector.broadcast %cst_95 : f32 to vector<2x96xf32>
    %323 = arith.addf %322, %321 : vector<2x96xf32>
    %324 = arith.divf %322, %323 : vector<2x96xf32>
    %325 = vector.extract_strided_slice %324 {offsets = [0, 0], sizes = [2, 32], strides = [1, 1]} : vector<2x96xf32> to vector<2x32xf32>
    %326 = vector.extract_strided_slice %324 {offsets = [0, 32], sizes = [2, 32], strides = [1, 1]} : vector<2x96xf32> to vector<2x32xf32>
    %327 = vector.extract_strided_slice %324 {offsets = [0, 64], sizes = [2, 32], strides = [1, 1]} : vector<2x96xf32> to vector<2x32xf32>
    %328 = vector.extract_strided_slice %318 {offsets = [0, 96], sizes = [2, 32], strides = [1, 1]} : vector<2x128xf32> to vector<2x32xf32>
    %329 = math.tanh %328 : vector<2x32xf32>
    %330 = arith.mulf %326, %312 : vector<2x32xf32>
    %331 = arith.mulf %325, %329 : vector<2x32xf32>
    %332 = arith.addf %330, %331 : vector<2x32xf32>
    %333 = math.tanh %332 : vector<2x32xf32>
    %334 = arith.mulf %327, %333 : vector<2x32xf32>
    %c30_96 = arith.constant 30 : index
    %c0_97 = arith.constant 0 : index
    %335 = vector.load %arg18[%c30_96, %c0_97] : memref<32x32xf32, #tpu.memory_space<vmem>>, vector<2x32xf32>
    tpu.vector_store %arg18[%c30_96, %c0_97], %334 {strides = array<i32>} : memref<32x32xf32, #tpu.memory_space<vmem>>, vector<2x32xf32>,
    %c0_98 = arith.constant 0 : index
    %c0_99 = arith.constant 0 : index
    %336 = vector.load %arg18[%c0_98, %c0_99] : memref<32x32xf32, #tpu.memory_space<vmem>>, vector<32x32xf32>
    %c1 = arith.constant 1 : index
    %c0_100 = arith.constant 0 : index
    %c0_101 = arith.constant 0 : index
    %337 = vector.load %arg2[%c1, %c0_100, %c0_101] : memref<3x32x32xf32, #tpu.memory_space<vmem>>, vector<1x32x32xf32>
    %338 = vector.shape_cast %337 : vector<1x32x32xf32> to vector<32x32xf32>
    %cst_102 = arith.constant dense<0.000000e+00> : vector<32x32xf32>
    %339 = tpu.matmul %338, %336, %cst_102 {dimension_numbers = #tpu.dot_dimension_numbers<[1], [0], [0], [1], [0, 0, 1, 1], [], []>} : vector<32x32xf32>, vector<32x32xf32>, vector<32x32xf32> -> vector<32x32xf32>
    %c2_103 = arith.constant 2 : index
    %c0_104 = arith.constant 0 : index
    %c0_105 = arith.constant 0 : index
    %340 = vector.load %arg2[%c2_103, %c0_104, %c0_105] : memref<3x32x32xf32, #tpu.memory_space<vmem>>, vector<1x32x32xf32>
    %341 = vector.shape_cast %340 : vector<1x32x32xf32> to vector<32x32xf32>
    %cst_106 = arith.constant dense<0.000000e+00> : vector<32x32xf32>
    %342 = tpu.matmul %341, %336, %cst_106 {dimension_numbers = #tpu.dot_dimension_numbers<[1], [0], [0], [1], [0, 0, 1, 1], [], []>} : vector<32x32xf32>, vector<32x32xf32>, vector<32x32xf32> -> vector<32x32xf32>
    %343 = tpu.iota {dimensions = array<i32: 1>} : vector<32x32xi32>
    %c16_i32 = arith.constant 16 : i32
    %344 = vector.broadcast %c16_i32 : i32 to vector<32x32xi32>
    %345 = arith.cmpi slt, %343, %344 : vector<32x32xi32>
    %346 = arith.select %345, %339, %342 : vector<32x32xi1>, vector<32x32xf32>
    %c0_107 = arith.constant 0 : index
    %c0_108 = arith.constant 0 : index
    %347 = vector.load %arg3[%c0_107, %c0_108] : memref<10x32xf32, #tpu.memory_space<vmem>>, vector<10x32xf32>
    %348 = vector.extract_strided_slice %347 {offsets = [0, 0], sizes = [1, 32], strides = [1, 1]} : vector<10x32xf32> to vector<1x32xf32>
    %349 = vector.extract_strided_slice %347 {offsets = [1, 0], sizes = [1, 32], strides = [1, 1]} : vector<10x32xf32> to vector<1x32xf32>
    %cst_109 = arith.constant dense<0.000000e+00> : vector<32xf32>
    %350 = vector.multi_reduction <add>, %346, %cst_109 [1] : vector<32x32xf32> to vector<32xf32>
    %351 = vector.shape_cast %350 : vector<32xf32> to vector<32x1xf32>
    %cst_110 = arith.constant 3.200000e+01 : f32
    %352 = vector.broadcast %cst_110 : f32 to vector<32x1xf32>
    %353 = arith.divf %351, %352 : vector<32x1xf32>
    %354 = vector.broadcast %353 : vector<32x1xf32> to vector<32x32xf32>
    %355 = arith.subf %346, %354 : vector<32x32xf32>
    %356 = arith.mulf %355, %355 : vector<32x32xf32>
    %cst_111 = arith.constant dense<0.000000e+00> : vector<32xf32>
    %357 = vector.multi_reduction <add>, %356, %cst_111 [1] : vector<32x32xf32> to vector<32xf32>
    %358 = vector.shape_cast %357 : vector<32xf32> to vector<32x1xf32>
    %cst_112 = arith.constant 3.200000e+01 : f32
    %359 = vector.broadcast %cst_112 : f32 to vector<32x1xf32>
    %360 = arith.divf %358, %359 : vector<32x1xf32>
    %361 = vector.broadcast %353 : vector<32x1xf32> to vector<32x32xf32>
    %362 = arith.subf %346, %361 : vector<32x32xf32>
    %cst_113 = arith.constant 9.99999974E-6 : f32
    %363 = vector.broadcast %cst_113 : f32 to vector<32x1xf32>
    %364 = arith.addf %360, %363 : vector<32x1xf32>
    %365 = math.rsqrt %364 : vector<32x1xf32>
    %366 = vector.broadcast %365 : vector<32x1xf32> to vector<32x32xf32>
    %367 = arith.mulf %362, %366 : vector<32x32xf32>
    %368 = vector.broadcast %348 : vector<1x32xf32> to vector<32x32xf32>
    %369 = arith.mulf %367, %368 : vector<32x32xf32>
    %370 = vector.broadcast %349 : vector<1x32xf32> to vector<32x32xf32>
    %371 = arith.addf %369, %370 : vector<32x32xf32>
    %c0_114 = arith.constant 0 : index
    %c0_115 = arith.constant 0 : index
    %c0_116 = arith.constant 0 : index
    %372 = vector.load %arg4[%c0_114, %c0_115, %c0_116] : memref<2x16x64xf32, #tpu.memory_space<vmem>>, vector<1x16x64xf32>
    %373 = vector.shape_cast %372 : vector<1x16x64xf32> to vector<16x64xf32>
    %374 = vector.extract_strided_slice %373 {offsets = [0, 0], sizes = [16, 32], strides = [1, 1]} : vector<16x64xf32> to vector<16x32xf32>
    %cst_117 = arith.constant dense<0.000000e+00> : vector<16x32xf32>
    %375 = tpu.matmul %374, %371, %cst_117 {dimension_numbers = #tpu.dot_dimension_numbers<[1], [0], [0], [1], [0, 0, 1, 1], [], []>} : vector<16x32xf32>, vector<32x32xf32>, vector<16x32xf32> -> vector<16x32xf32>
    %376 = vector.extract_strided_slice %373 {offsets = [0, 32], sizes = [16, 32], strides = [1, 1]} : vector<16x64xf32> to vector<16x32xf32>
    %377 = arith.addf %375, %376 : vector<16x32xf32>
    %cst_118 = arith.constant 5.000000e-01 : f32
    %378 = vector.broadcast %cst_118 : f32 to vector<16x32xf32>
    %379 = arith.mulf %378, %377 : vector<16x32xf32>
    %cst_119 = arith.constant 0.707106769 : f32
    %380 = vector.broadcast %cst_119 : f32 to vector<16x32xf32>
    %381 = arith.mulf %377, %380 : vector<16x32xf32>
    %cst_120 = arith.constant 0.000000e+00 : f32
    %382 = vector.broadcast %cst_120 : f32 to vector<16x32xf32>
    %383 = arith.cmpf oge, %381, %382 : vector<16x32xf32>
    %cst_121 = arith.constant 1.000000e+00 : f32
    %cst_122 = arith.constant -1.000000e+00 : f32
    %384 = vector.broadcast %cst_121 : f32 to vector<16x32xf32>
    %385 = vector.broadcast %cst_122 : f32 to vector<16x32xf32>
    %386 = arith.select %383, %384, %385 : vector<16x32xi1>, vector<16x32xf32>
    %387 = math.absf %381 : vector<16x32xf32>
    %cst_123 = arith.constant 0.327591091 : f32
    %388 = vector.broadcast %cst_123 : f32 to vector<16x32xf32>
    %389 = arith.mulf %388, %387 : vector<16x32xf32>
    %cst_124 = arith.constant 1.000000e+00 : f32
    %390 = vector.broadcast %cst_124 : f32 to vector<16x32xf32>
    %391 = arith.addf %390, %389 : vector<16x32xf32>
    %392 = tpu.reciprocal %391 {approx = true} : vector<16x32xf32> -> vector<16x32xf32>
    %cst_125 = arith.constant 1.06140542 : f32
    %393 = vector.broadcast %cst_125 : f32 to vector<16x32xf32>
    %394 = arith.mulf %393, %392 : vector<16x32xf32>
    %cst_126 = arith.constant -1.45315206 : f32
    %395 = vector.broadcast %cst_126 : f32 to vector<16x32xf32>
    %396 = arith.addf %394, %395 : vector<16x32xf32>
    %397 = arith.mulf %396, %392 : vector<16x32xf32>
    %cst_127 = arith.constant 1.42141378 : f32
    %398 = vector.broadcast %cst_127 : f32 to vector<16x32xf32>
    %399 = arith.addf %397, %398 : vector<16x32xf32>
    %400 = arith.mulf %399, %392 : vector<16x32xf32>
    %cst_128 = arith.constant -0.284496725 : f32
    %401 = vector.broadcast %cst_128 : f32 to vector<16x32xf32>
    %402 = arith.addf %400, %401 : vector<16x32xf32>
    %403 = arith.mulf %402, %392 : vector<16x32xf32>
    %cst_129 = arith.constant 0.254829586 : f32
    %404 = vector.broadcast %cst_129 : f32 to vector<16x32xf32>
    %405 = arith.addf %403, %404 : vector<16x32xf32>
    %406 = arith.mulf %405, %392 : vector<16x32xf32>
    %cst_130 = arith.constant 0.000000e+00 : f32
    %407 = vector.broadcast %cst_130 : f32 to vector<16x32xf32>
    %408 = arith.subf %407, %387 : vector<16x32xf32>
    %409 = arith.mulf %408, %387 : vector<16x32xf32>
    %410 = math.exp %409 : vector<16x32xf32>
    %411 = arith.mulf %406, %410 : vector<16x32xf32>
    %cst_131 = arith.constant 1.000000e+00 : f32
    %412 = vector.broadcast %cst_131 : f32 to vector<16x32xf32>
    %413 = arith.subf %412, %411 : vector<16x32xf32>
    %414 = arith.mulf %386, %413 : vector<16x32xf32>
    %cst_132 = arith.constant 1.000000e+00 : f32
    %415 = vector.broadcast %cst_132 : f32 to vector<16x32xf32>
    %416 = arith.addf %415, %414 : vector<16x32xf32>
    %417 = arith.mulf %379, %416 : vector<16x32xf32>
    %c0_133 = arith.constant 0 : index
    %c0_134 = arith.constant 0 : index
    %c0_135 = arith.constant 0 : index
    %418 = vector.load %arg5[%c0_133, %c0_134, %c0_135] : memref<2x32x48xf32, #tpu.memory_space<vmem>>, vector<1x32x48xf32>
    %419 = vector.shape_cast %418 : vector<1x32x48xf32> to vector<32x48xf32>
    %420 = vector.extract_strided_slice %419 {offsets = [0, 0], sizes = [32, 16], strides = [1, 1]} : vector<32x48xf32> to vector<32x16xf32>
    %cst_136 = arith.constant dense<0.000000e+00> : vector<32x32xf32>
    %421 = tpu.matmul %420, %417, %cst_136 {dimension_numbers = #tpu.dot_dimension_numbers<[1], [0], [0], [1], [0, 0, 1, 1], [], []>} : vector<32x16xf32>, vector<16x32xf32>, vector<32x32xf32> -> vector<32x32xf32>
    %422 = vector.extract_strided_slice %419 {offsets = [0, 16], sizes = [32, 32], strides = [1, 1]} : vector<32x48xf32> to vector<32x32xf32>
    %423 = arith.addf %421, %422 : vector<32x32xf32>
    %424 = arith.addf %346, %423 : vector<32x32xf32>
    %425 = vector.extract_strided_slice %347 {offsets = [2, 0], sizes = [1, 32], strides = [1, 1]} : vector<10x32xf32> to vector<1x32xf32>
    %426 = vector.extract_strided_slice %347 {offsets = [3, 0], sizes = [1, 32], strides = [1, 1]} : vector<10x32xf32> to vector<1x32xf32>
    %cst_137 = arith.constant dense<0.000000e+00> : vector<32xf32>
    %427 = vector.multi_reduction <add>, %424, %cst_137 [1] : vector<32x32xf32> to vector<32xf32>
    %428 = vector.shape_cast %427 : vector<32xf32> to vector<32x1xf32>
    %cst_138 = arith.constant 3.200000e+01 : f32
    %429 = vector.broadcast %cst_138 : f32 to vector<32x1xf32>
    %430 = arith.divf %428, %429 : vector<32x1xf32>
    %431 = vector.broadcast %430 : vector<32x1xf32> to vector<32x32xf32>
    %432 = arith.subf %424, %431 : vector<32x32xf32>
    %433 = arith.mulf %432, %432 : vector<32x32xf32>
    %cst_139 = arith.constant dense<0.000000e+00> : vector<32xf32>
    %434 = vector.multi_reduction <add>, %433, %cst_139 [1] : vector<32x32xf32> to vector<32xf32>
    %435 = vector.shape_cast %434 : vector<32xf32> to vector<32x1xf32>
    %cst_140 = arith.constant 3.200000e+01 : f32
    %436 = vector.broadcast %cst_140 : f32 to vector<32x1xf32>
    %437 = arith.divf %435, %436 : vector<32x1xf32>
    %438 = vector.broadcast %430 : vector<32x1xf32> to vector<32x32xf32>
    %439 = arith.subf %424, %438 : vector<32x32xf32>
    %cst_141 = arith.constant 9.99999974E-6 : f32
    %440 = vector.broadcast %cst_141 : f32 to vector<32x1xf32>
    %441 = arith.addf %437, %440 : vector<32x1xf32>
    %442 = math.rsqrt %441 : vector<32x1xf32>
    %443 = vector.broadcast %442 : vector<32x1xf32> to vector<32x32xf32>
    %444 = arith.mulf %439, %443 : vector<32x32xf32>
    %445 = vector.broadcast %425 : vector<1x32xf32> to vector<32x32xf32>
    %446 = arith.mulf %444, %445 : vector<32x32xf32>
    %447 = vector.broadcast %426 : vector<1x32xf32> to vector<32x32xf32>
    %448 = arith.addf %446, %447 : vector<32x32xf32>
    %c0_142 = arith.constant 0 : index
    %c0_143 = arith.constant 0 : index
    %c0_144 = arith.constant 0 : index
    %449 = vector.load %arg6[%c0_142, %c0_143, %c0_144] : memref<2x33x64xf32, #tpu.memory_space<vmem>>, vector<1x33x64xf32>
    %450 = vector.shape_cast %449 : vector<1x33x64xf32> to vector<33x64xf32>
    %451 = vector.extract_strided_slice %450 {offsets = [0, 0], sizes = [32, 64], strides = [1, 1]} : vector<33x64xf32> to vector<32x64xf32>
    %cst_145 = arith.constant dense<0.000000e+00> : vector<32x64xf32>
    %452 = tpu.matmul %448, %451, %cst_145 {dimension_numbers = #tpu.dot_dimension_numbers<[1], [0], [0], [1], [0, 0, 1, 1], [], []>} : vector<32x32xf32>, vector<32x64xf32>, vector<32x64xf32> -> vector<32x64xf32>
    %453 = vector.extract_strided_slice %450 {offsets = [32, 0], sizes = [1, 64], strides = [1, 1]} : vector<33x64xf32> to vector<1x64xf32>
    %454 = vector.broadcast %453 : vector<1x64xf32> to vector<32x64xf32>
    %455 = arith.addf %452, %454 : vector<32x64xf32>
    %cst_146 = arith.constant 5.000000e-01 : f32
    %456 = vector.broadcast %cst_146 : f32 to vector<32x64xf32>
    %457 = arith.mulf %456, %455 : vector<32x64xf32>
    %cst_147 = arith.constant 0.707106769 : f32
    %458 = vector.broadcast %cst_147 : f32 to vector<32x64xf32>
    %459 = arith.mulf %455, %458 : vector<32x64xf32>
    %cst_148 = arith.constant 0.000000e+00 : f32
    %460 = vector.broadcast %cst_148 : f32 to vector<32x64xf32>
    %461 = arith.cmpf oge, %459, %460 : vector<32x64xf32>
    %cst_149 = arith.constant 1.000000e+00 : f32
    %cst_150 = arith.constant -1.000000e+00 : f32
    %462 = vector.broadcast %cst_149 : f32 to vector<32x64xf32>
    %463 = vector.broadcast %cst_150 : f32 to vector<32x64xf32>
    %464 = arith.select %461, %462, %463 : vector<32x64xi1>, vector<32x64xf32>
    %465 = math.absf %459 : vector<32x64xf32>
    %cst_151 = arith.constant 0.327591091 : f32
    %466 = vector.broadcast %cst_151 : f32 to vector<32x64xf32>
    %467 = arith.mulf %466, %465 : vector<32x64xf32>
    %cst_152 = arith.constant 1.000000e+00 : f32
    %468 = vector.broadcast %cst_152 : f32 to vector<32x64xf32>
    %469 = arith.addf %468, %467 : vector<32x64xf32>
    %470 = tpu.reciprocal %469 {approx = true} : vector<32x64xf32> -> vector<32x64xf32>
    %cst_153 = arith.constant 1.06140542 : f32
    %471 = vector.broadcast %cst_153 : f32 to vector<32x64xf32>
    %472 = arith.mulf %471, %470 : vector<32x64xf32>
    %cst_154 = arith.constant -1.45315206 : f32
    %473 = vector.broadcast %cst_154 : f32 to vector<32x64xf32>
    %474 = arith.addf %472, %473 : vector<32x64xf32>
    %475 = arith.mulf %474, %470 : vector<32x64xf32>
    %cst_155 = arith.constant 1.42141378 : f32
    %476 = vector.broadcast %cst_155 : f32 to vector<32x64xf32>
    %477 = arith.addf %475, %476 : vector<32x64xf32>
    %478 = arith.mulf %477, %470 : vector<32x64xf32>
    %cst_156 = arith.constant -0.284496725 : f32
    %479 = vector.broadcast %cst_156 : f32 to vector<32x64xf32>
    %480 = arith.addf %478, %479 : vector<32x64xf32>
    %481 = arith.mulf %480, %470 : vector<32x64xf32>
    %cst_157 = arith.constant 0.254829586 : f32
    %482 = vector.broadcast %cst_157 : f32 to vector<32x64xf32>
    %483 = arith.addf %481, %482 : vector<32x64xf32>
    %484 = arith.mulf %483, %470 : vector<32x64xf32>
    %cst_158 = arith.constant 0.000000e+00 : f32
    %485 = vector.broadcast %cst_158 : f32 to vector<32x64xf32>
    %486 = arith.subf %485, %465 : vector<32x64xf32>
    %487 = arith.mulf %486, %465 : vector<32x64xf32>
    %488 = math.exp %487 : vector<32x64xf32>
    %489 = arith.mulf %484, %488 : vector<32x64xf32>
    %cst_159 = arith.constant 1.000000e+00 : f32
    %490 = vector.broadcast %cst_159 : f32 to vector<32x64xf32>
    %491 = arith.subf %490, %489 : vector<32x64xf32>
    %492 = arith.mulf %464, %491 : vector<32x64xf32>
    %cst_160 = arith.constant 1.000000e+00 : f32
    %493 = vector.broadcast %cst_160 : f32 to vector<32x64xf32>
    %494 = arith.addf %493, %492 : vector<32x64xf32>
    %495 = arith.mulf %457, %494 : vector<32x64xf32>
    %c0_161 = arith.constant 0 : index
    %c0_162 = arith.constant 0 : index
    %c0_163 = arith.constant 0 : index
    %496 = vector.load %arg7[%c0_161, %c0_162, %c0_163] : memref<2x65x32xf32, #tpu.memory_space<vmem>>, vector<1x65x32xf32>
    %497 = vector.shape_cast %496 : vector<1x65x32xf32> to vector<65x32xf32>
    %498 = vector.extract_strided_slice %497 {offsets = [0, 0], sizes = [64, 32], strides = [1, 1]} : vector<65x32xf32> to vector<64x32xf32>
    %cst_164 = arith.constant dense<0.000000e+00> : vector<32x32xf32>
    %499 = tpu.matmul %495, %498, %cst_164 {dimension_numbers = #tpu.dot_dimension_numbers<[1], [0], [0], [1], [0, 0, 1, 1], [], []>} : vector<32x64xf32>, vector<64x32xf32>, vector<32x32xf32> -> vector<32x32xf32>
    %500 = arith.addf %424, %499 : vector<32x32xf32>
    %501 = vector.extract_strided_slice %497 {offsets = [64, 0], sizes = [1, 32], strides = [1, 1]} : vector<65x32xf32> to vector<1x32xf32>
    %502 = vector.broadcast %501 : vector<1x32xf32> to vector<32x32xf32>
    %503 = arith.addf %500, %502 : vector<32x32xf32>
    %504 = vector.extract_strided_slice %347 {offsets = [4, 0], sizes = [1, 32], strides = [1, 1]} : vector<10x32xf32> to vector<1x32xf32>
    %505 = vector.extract_strided_slice %347 {offsets = [5, 0], sizes = [1, 32], strides = [1, 1]} : vector<10x32xf32> to vector<1x32xf32>
    %cst_165 = arith.constant dense<0.000000e+00> : vector<32xf32>
    %506 = vector.multi_reduction <add>, %503, %cst_165 [1] : vector<32x32xf32> to vector<32xf32>
    %507 = vector.shape_cast %506 : vector<32xf32> to vector<32x1xf32>
    %cst_166 = arith.constant 3.200000e+01 : f32
    %508 = vector.broadcast %cst_166 : f32 to vector<32x1xf32>
    %509 = arith.divf %507, %508 : vector<32x1xf32>
    %510 = vector.broadcast %509 : vector<32x1xf32> to vector<32x32xf32>
    %511 = arith.subf %503, %510 : vector<32x32xf32>
    %512 = arith.mulf %511, %511 : vector<32x32xf32>
    %cst_167 = arith.constant dense<0.000000e+00> : vector<32xf32>
    %513 = vector.multi_reduction <add>, %512, %cst_167 [1] : vector<32x32xf32> to vector<32xf32>
    %514 = vector.shape_cast %513 : vector<32xf32> to vector<32x1xf32>
    %cst_168 = arith.constant 3.200000e+01 : f32
    %515 = vector.broadcast %cst_168 : f32 to vector<32x1xf32>
    %516 = arith.divf %514, %515 : vector<32x1xf32>
    %517 = vector.broadcast %509 : vector<32x1xf32> to vector<32x32xf32>
    %518 = arith.subf %503, %517 : vector<32x32xf32>
    %cst_169 = arith.constant 9.99999974E-6 : f32
    %519 = vector.broadcast %cst_169 : f32 to vector<32x1xf32>
    %520 = arith.addf %516, %519 : vector<32x1xf32>
    %521 = math.rsqrt %520 : vector<32x1xf32>
    %522 = vector.broadcast %521 : vector<32x1xf32> to vector<32x32xf32>
    %523 = arith.mulf %518, %522 : vector<32x32xf32>
    %524 = vector.broadcast %504 : vector<1x32xf32> to vector<32x32xf32>
    %525 = arith.mulf %523, %524 : vector<32x32xf32>
    %526 = vector.broadcast %505 : vector<1x32xf32> to vector<32x32xf32>
    %527 = arith.addf %525, %526 : vector<32x32xf32>
    %c1_170 = arith.constant 1 : index
    %c0_171 = arith.constant 0 : index
    %c0_172 = arith.constant 0 : index
    %528 = vector.load %arg4[%c1_170, %c0_171, %c0_172] : memref<2x16x64xf32, #tpu.memory_space<vmem>>, vector<1x16x64xf32>
    %529 = vector.shape_cast %528 : vector<1x16x64xf32> to vector<16x64xf32>
    %530 = vector.extract_strided_slice %529 {offsets = [0, 0], sizes = [16, 32], strides = [1, 1]} : vector<16x64xf32> to vector<16x32xf32>
    %cst_173 = arith.constant dense<0.000000e+00> : vector<16x32xf32>
    %531 = tpu.matmul %530, %527, %cst_173 {dimension_numbers = #tpu.dot_dimension_numbers<[1], [0], [0], [1], [0, 0, 1, 1], [], []>} : vector<16x32xf32>, vector<32x32xf32>, vector<16x32xf32> -> vector<16x32xf32>
    %532 = vector.extract_strided_slice %529 {offsets = [0, 32], sizes = [16, 32], strides = [1, 1]} : vector<16x64xf32> to vector<16x32xf32>
    %533 = arith.addf %531, %532 : vector<16x32xf32>
    %cst_174 = arith.constant 5.000000e-01 : f32
    %534 = vector.broadcast %cst_174 : f32 to vector<16x32xf32>
    %535 = arith.mulf %534, %533 : vector<16x32xf32>
    %cst_175 = arith.constant 0.707106769 : f32
    %536 = vector.broadcast %cst_175 : f32 to vector<16x32xf32>
    %537 = arith.mulf %533, %536 : vector<16x32xf32>
    %cst_176 = arith.constant 0.000000e+00 : f32
    %538 = vector.broadcast %cst_176 : f32 to vector<16x32xf32>
    %539 = arith.cmpf oge, %537, %538 : vector<16x32xf32>
    %cst_177 = arith.constant 1.000000e+00 : f32
    %cst_178 = arith.constant -1.000000e+00 : f32
    %540 = vector.broadcast %cst_177 : f32 to vector<16x32xf32>
    %541 = vector.broadcast %cst_178 : f32 to vector<16x32xf32>
    %542 = arith.select %539, %540, %541 : vector<16x32xi1>, vector<16x32xf32>
    %543 = math.absf %537 : vector<16x32xf32>
    %cst_179 = arith.constant 0.327591091 : f32
    %544 = vector.broadcast %cst_179 : f32 to vector<16x32xf32>
    %545 = arith.mulf %544, %543 : vector<16x32xf32>
    %cst_180 = arith.constant 1.000000e+00 : f32
    %546 = vector.broadcast %cst_180 : f32 to vector<16x32xf32>
    %547 = arith.addf %546, %545 : vector<16x32xf32>
    %548 = tpu.reciprocal %547 {approx = true} : vector<16x32xf32> -> vector<16x32xf32>
    %cst_181 = arith.constant 1.06140542 : f32
    %549 = vector.broadcast %cst_181 : f32 to vector<16x32xf32>
    %550 = arith.mulf %549, %548 : vector<16x32xf32>
    %cst_182 = arith.constant -1.45315206 : f32
    %551 = vector.broadcast %cst_182 : f32 to vector<16x32xf32>
    %552 = arith.addf %550, %551 : vector<16x32xf32>
    %553 = arith.mulf %552, %548 : vector<16x32xf32>
    %cst_183 = arith.constant 1.42141378 : f32
    %554 = vector.broadcast %cst_183 : f32 to vector<16x32xf32>
    %555 = arith.addf %553, %554 : vector<16x32xf32>
    %556 = arith.mulf %555, %548 : vector<16x32xf32>
    %cst_184 = arith.constant -0.284496725 : f32
    %557 = vector.broadcast %cst_184 : f32 to vector<16x32xf32>
    %558 = arith.addf %556, %557 : vector<16x32xf32>
    %559 = arith.mulf %558, %548 : vector<16x32xf32>
    %cst_185 = arith.constant 0.254829586 : f32
    %560 = vector.broadcast %cst_185 : f32 to vector<16x32xf32>
    %561 = arith.addf %559, %560 : vector<16x32xf32>
    %562 = arith.mulf %561, %548 : vector<16x32xf32>
    %cst_186 = arith.constant 0.000000e+00 : f32
    %563 = vector.broadcast %cst_186 : f32 to vector<16x32xf32>
    %564 = arith.subf %563, %543 : vector<16x32xf32>
    %565 = arith.mulf %564, %543 : vector<16x32xf32>
    %566 = math.exp %565 : vector<16x32xf32>
    %567 = arith.mulf %562, %566 : vector<16x32xf32>
    %cst_187 = arith.constant 1.000000e+00 : f32
    %568 = vector.broadcast %cst_187 : f32 to vector<16x32xf32>
    %569 = arith.subf %568, %567 : vector<16x32xf32>
    %570 = arith.mulf %542, %569 : vector<16x32xf32>
    %cst_188 = arith.constant 1.000000e+00 : f32
    %571 = vector.broadcast %cst_188 : f32 to vector<16x32xf32>
    %572 = arith.addf %571, %570 : vector<16x32xf32>
    %573 = arith.mulf %535, %572 : vector<16x32xf32>
    %c1_189 = arith.constant 1 : index
    %c0_190 = arith.constant 0 : index
    %c0_191 = arith.constant 0 : index
    %574 = vector.load %arg5[%c1_189, %c0_190, %c0_191] : memref<2x32x48xf32, #tpu.memory_space<vmem>>, vector<1x32x48xf32>
    %575 = vector.shape_cast %574 : vector<1x32x48xf32> to vector<32x48xf32>
    %576 = vector.extract_strided_slice %575 {offsets = [0, 0], sizes = [32, 16], strides = [1, 1]} : vector<32x48xf32> to vector<32x16xf32>
    %cst_192 = arith.constant dense<0.000000e+00> : vector<32x32xf32>
    %577 = tpu.matmul %576, %573, %cst_192 {dimension_numbers = #tpu.dot_dimension_numbers<[1], [0], [0], [1], [0, 0, 1, 1], [], []>} : vector<32x16xf32>, vector<16x32xf32>, vector<32x32xf32> -> vector<32x32xf32>
    %578 = vector.extract_strided_slice %575 {offsets = [0, 16], sizes = [32, 32], strides = [1, 1]} : vector<32x48xf32> to vector<32x32xf32>
    %579 = arith.addf %577, %578 : vector<32x32xf32>
    %580 = arith.addf %503, %579 : vector<32x32xf32>
    %581 = vector.extract_strided_slice %347 {offsets = [6, 0], sizes = [1, 32], strides = [1, 1]} : vector<10x32xf32> to vector<1x32xf32>
    %582 = vector.extract_strided_slice %347 {offsets = [7, 0], sizes = [1, 32], strides = [1, 1]} : vector<10x32xf32> to vector<1x32xf32>
    %cst_193 = arith.constant dense<0.000000e+00> : vector<32xf32>
    %583 = vector.multi_reduction <add>, %580, %cst_193 [1] : vector<32x32xf32> to vector<32xf32>
    %584 = vector.shape_cast %583 : vector<32xf32> to vector<32x1xf32>
    %cst_194 = arith.constant 3.200000e+01 : f32
    %585 = vector.broadcast %cst_194 : f32 to vector<32x1xf32>
    %586 = arith.divf %584, %585 : vector<32x1xf32>
    %587 = vector.broadcast %586 : vector<32x1xf32> to vector<32x32xf32>
    %588 = arith.subf %580, %587 : vector<32x32xf32>
    %589 = arith.mulf %588, %588 : vector<32x32xf32>
    %cst_195 = arith.constant dense<0.000000e+00> : vector<32xf32>
    %590 = vector.multi_reduction <add>, %589, %cst_195 [1] : vector<32x32xf32> to vector<32xf32>
    %591 = vector.shape_cast %590 : vector<32xf32> to vector<32x1xf32>
    %cst_196 = arith.constant 3.200000e+01 : f32
    %592 = vector.broadcast %cst_196 : f32 to vector<32x1xf32>
    %593 = arith.divf %591, %592 : vector<32x1xf32>
    %594 = vector.broadcast %586 : vector<32x1xf32> to vector<32x32xf32>
    %595 = arith.subf %580, %594 : vector<32x32xf32>
    %cst_197 = arith.constant 9.99999974E-6 : f32
    %596 = vector.broadcast %cst_197 : f32 to vector<32x1xf32>
    %597 = arith.addf %593, %596 : vector<32x1xf32>
    %598 = math.rsqrt %597 : vector<32x1xf32>
    %599 = vector.broadcast %598 : vector<32x1xf32> to vector<32x32xf32>
    %600 = arith.mulf %595, %599 : vector<32x32xf32>
    %601 = vector.broadcast %581 : vector<1x32xf32> to vector<32x32xf32>
    %602 = arith.mulf %600, %601 : vector<32x32xf32>
    %603 = vector.broadcast %582 : vector<1x32xf32> to vector<32x32xf32>
    %604 = arith.addf %602, %603 : vector<32x32xf32>
    %c1_198 = arith.constant 1 : index
    %c0_199 = arith.constant 0 : index
    %c0_200 = arith.constant 0 : index
    %605 = vector.load %arg6[%c1_198, %c0_199, %c0_200] : memref<2x33x64xf32, #tpu.memory_space<vmem>>, vector<1x33x64xf32>
    %606 = vector.shape_cast %605 : vector<1x33x64xf32> to vector<33x64xf32>
    %607 = vector.extract_strided_slice %606 {offsets = [0, 0], sizes = [32, 64], strides = [1, 1]} : vector<33x64xf32> to vector<32x64xf32>
    %cst_201 = arith.constant dense<0.000000e+00> : vector<32x64xf32>
    %608 = tpu.matmul %604, %607, %cst_201 {dimension_numbers = #tpu.dot_dimension_numbers<[1], [0], [0], [1], [0, 0, 1, 1], [], []>} : vector<32x32xf32>, vector<32x64xf32>, vector<32x64xf32> -> vector<32x64xf32>
    %609 = vector.extract_strided_slice %606 {offsets = [32, 0], sizes = [1, 64], strides = [1, 1]} : vector<33x64xf32> to vector<1x64xf32>
    %610 = vector.broadcast %609 : vector<1x64xf32> to vector<32x64xf32>
    %611 = arith.addf %608, %610 : vector<32x64xf32>
    %cst_202 = arith.constant 5.000000e-01 : f32
    %612 = vector.broadcast %cst_202 : f32 to vector<32x64xf32>
    %613 = arith.mulf %612, %611 : vector<32x64xf32>
    %cst_203 = arith.constant 0.707106769 : f32
    %614 = vector.broadcast %cst_203 : f32 to vector<32x64xf32>
    %615 = arith.mulf %611, %614 : vector<32x64xf32>
    %cst_204 = arith.constant 0.000000e+00 : f32
    %616 = vector.broadcast %cst_204 : f32 to vector<32x64xf32>
    %617 = arith.cmpf oge, %615, %616 : vector<32x64xf32>
    %cst_205 = arith.constant 1.000000e+00 : f32
    %cst_206 = arith.constant -1.000000e+00 : f32
    %618 = vector.broadcast %cst_205 : f32 to vector<32x64xf32>
    %619 = vector.broadcast %cst_206 : f32 to vector<32x64xf32>
    %620 = arith.select %617, %618, %619 : vector<32x64xi1>, vector<32x64xf32>
    %621 = math.absf %615 : vector<32x64xf32>
    %cst_207 = arith.constant 0.327591091 : f32
    %622 = vector.broadcast %cst_207 : f32 to vector<32x64xf32>
    %623 = arith.mulf %622, %621 : vector<32x64xf32>
    %cst_208 = arith.constant 1.000000e+00 : f32
    %624 = vector.broadcast %cst_208 : f32 to vector<32x64xf32>
    %625 = arith.addf %624, %623 : vector<32x64xf32>
    %626 = tpu.reciprocal %625 {approx = true} : vector<32x64xf32> -> vector<32x64xf32>
    %cst_209 = arith.constant 1.06140542 : f32
    %627 = vector.broadcast %cst_209 : f32 to vector<32x64xf32>
    %628 = arith.mulf %627, %626 : vector<32x64xf32>
    %cst_210 = arith.constant -1.45315206 : f32
    %629 = vector.broadcast %cst_210 : f32 to vector<32x64xf32>
    %630 = arith.addf %628, %629 : vector<32x64xf32>
    %631 = arith.mulf %630, %626 : vector<32x64xf32>
    %cst_211 = arith.constant 1.42141378 : f32
    %632 = vector.broadcast %cst_211 : f32 to vector<32x64xf32>
    %633 = arith.addf %631, %632 : vector<32x64xf32>
    %634 = arith.mulf %633, %626 : vector<32x64xf32>
    %cst_212 = arith.constant -0.284496725 : f32
    %635 = vector.broadcast %cst_212 : f32 to vector<32x64xf32>
    %636 = arith.addf %634, %635 : vector<32x64xf32>
    %637 = arith.mulf %636, %626 : vector<32x64xf32>
    %cst_213 = arith.constant 0.254829586 : f32
    %638 = vector.broadcast %cst_213 : f32 to vector<32x64xf32>
    %639 = arith.addf %637, %638 : vector<32x64xf32>
    %640 = arith.mulf %639, %626 : vector<32x64xf32>
    %cst_214 = arith.constant 0.000000e+00 : f32
    %641 = vector.broadcast %cst_214 : f32 to vector<32x64xf32>
    %642 = arith.subf %641, %621 : vector<32x64xf32>
    %643 = arith.mulf %642, %621 : vector<32x64xf32>
    %644 = math.exp %643 : vector<32x64xf32>
    %645 = arith.mulf %640, %644 : vector<32x64xf32>
    %cst_215 = arith.constant 1.000000e+00 : f32
    %646 = vector.broadcast %cst_215 : f32 to vector<32x64xf32>
    %647 = arith.subf %646, %645 : vector<32x64xf32>
    %648 = arith.mulf %620, %647 : vector<32x64xf32>
    %cst_216 = arith.constant 1.000000e+00 : f32
    %649 = vector.broadcast %cst_216 : f32 to vector<32x64xf32>
    %650 = arith.addf %649, %648 : vector<32x64xf32>
    %651 = arith.mulf %613, %650 : vector<32x64xf32>
    %c1_217 = arith.constant 1 : index
    %c0_218 = arith.constant 0 : index
    %c0_219 = arith.constant 0 : index
    %652 = vector.load %arg7[%c1_217, %c0_218, %c0_219] : memref<2x65x32xf32, #tpu.memory_space<vmem>>, vector<1x65x32xf32>
    %653 = vector.shape_cast %652 : vector<1x65x32xf32> to vector<65x32xf32>
    %654 = vector.extract_strided_slice %653 {offsets = [0, 0], sizes = [64, 32], strides = [1, 1]} : vector<65x32xf32> to vector<64x32xf32>
    %cst_220 = arith.constant dense<0.000000e+00> : vector<32x32xf32>
    %655 = tpu.matmul %651, %654, %cst_220 {dimension_numbers = #tpu.dot_dimension_numbers<[1], [0], [0], [1], [0, 0, 1, 1], [], []>} : vector<32x64xf32>, vector<64x32xf32>, vector<32x32xf32> -> vector<32x32xf32>
    %656 = arith.addf %580, %655 : vector<32x32xf32>
    %657 = vector.extract_strided_slice %653 {offsets = [64, 0], sizes = [1, 32], strides = [1, 1]} : vector<65x32xf32> to vector<1x32xf32>
    %658 = vector.broadcast %657 : vector<1x32xf32> to vector<32x32xf32>
    %659 = arith.addf %656, %658 : vector<32x32xf32>
    %660 = vector.extract_strided_slice %347 {offsets = [8, 0], sizes = [1, 32], strides = [1, 1]} : vector<10x32xf32> to vector<1x32xf32>
    %661 = vector.extract_strided_slice %347 {offsets = [9, 0], sizes = [1, 32], strides = [1, 1]} : vector<10x32xf32> to vector<1x32xf32>
    %cst_221 = arith.constant dense<0.000000e+00> : vector<32xf32>
    %662 = vector.multi_reduction <add>, %659, %cst_221 [1] : vector<32x32xf32> to vector<32xf32>
    %663 = vector.shape_cast %662 : vector<32xf32> to vector<32x1xf32>
    %cst_222 = arith.constant 3.200000e+01 : f32
    %664 = vector.broadcast %cst_222 : f32 to vector<32x1xf32>
    %665 = arith.divf %663, %664 : vector<32x1xf32>
    %666 = vector.broadcast %665 : vector<32x1xf32> to vector<32x32xf32>
    %667 = arith.subf %659, %666 : vector<32x32xf32>
    %668 = arith.mulf %667, %667 : vector<32x32xf32>
    %cst_223 = arith.constant dense<0.000000e+00> : vector<32xf32>
    %669 = vector.multi_reduction <add>, %668, %cst_223 [1] : vector<32x32xf32> to vector<32xf32>
    %670 = vector.shape_cast %669 : vector<32xf32> to vector<32x1xf32>
    %cst_224 = arith.constant 3.200000e+01 : f32
    %671 = vector.broadcast %cst_224 : f32 to vector<32x1xf32>
    %672 = arith.divf %670, %671 : vector<32x1xf32>
    %673 = vector.broadcast %665 : vector<32x1xf32> to vector<32x32xf32>
    %674 = arith.subf %659, %673 : vector<32x32xf32>
    %cst_225 = arith.constant 9.99999974E-6 : f32
    %675 = vector.broadcast %cst_225 : f32 to vector<32x1xf32>
    %676 = arith.addf %672, %675 : vector<32x1xf32>
    %677 = math.rsqrt %676 : vector<32x1xf32>
    %678 = vector.broadcast %677 : vector<32x1xf32> to vector<32x32xf32>
    %679 = arith.mulf %674, %678 : vector<32x32xf32>
    %680 = vector.broadcast %660 : vector<1x32xf32> to vector<32x32xf32>
    %681 = arith.mulf %679, %680 : vector<32x32xf32>
    %682 = vector.broadcast %661 : vector<1x32xf32> to vector<32x32xf32>
    %683 = arith.addf %681, %682 : vector<32x32xf32>
    %c0_226 = arith.constant 0 : index
    %c0_227 = arith.constant 0 : index
    %684 = vector.load %arg9[%c0_226, %c0_227] : memref<32x48xf32, #tpu.memory_space<vmem>>, vector<32x48xf32>
    %cst_228 = arith.constant dense<0.000000e+00> : vector<32x48xf32>
    %685 = tpu.matmul %683, %684, %cst_228 {dimension_numbers = #tpu.dot_dimension_numbers<[1], [0], [0], [1], [0, 0, 1, 1], [], []>} : vector<32x32xf32>, vector<32x48xf32>, vector<32x48xf32> -> vector<32x48xf32>
    %c0_229 = arith.constant 0 : index
    %c0_230 = arith.constant 0 : index
    %686 = vector.load %arg8[%c0_229, %c0_230] : memref<384x32xf32, #tpu.memory_space<vmem>>, vector<384x32xf32>
    %cst_231 = arith.constant dense<0.000000e+00> : vector<384x48xf32>
    %687 = tpu.matmul %686, %685, %cst_231 {dimension_numbers = #tpu.dot_dimension_numbers<[1], [0], [0], [1], [0, 0, 1, 1], [], []>} : vector<384x32xf32>, vector<32x48xf32>, vector<384x48xf32> -> vector<384x48xf32>
    %c0_232 = arith.constant 0 : index
    %c0_233 = arith.constant 0 : index
    %688 = vector.load %arg10[%c0_232, %c0_233] : memref<64x8xf32, #tpu.memory_space<vmem>>, vector<64x8xf32>
    %689 = vector.extract_strided_slice %687 {offsets = [0, 0], sizes = [64, 8], strides = [1, 1]} : vector<384x48xf32> to vector<64x8xf32>
    %690 = arith.addf %688, %689 : vector<64x8xf32>
    %691 = vector.extract_strided_slice %687 {offsets = [64, 8], sizes = [64, 8], strides = [1, 1]} : vector<384x48xf32> to vector<64x8xf32>
    %692 = arith.addf %690, %691 : vector<64x8xf32>
    %693 = vector.extract_strided_slice %687 {offsets = [128, 16], sizes = [64, 8], strides = [1, 1]} : vector<384x48xf32> to vector<64x8xf32>
    %694 = arith.addf %692, %693 : vector<64x8xf32>
    %695 = vector.extract_strided_slice %687 {offsets = [192, 24], sizes = [64, 8], strides = [1, 1]} : vector<384x48xf32> to vector<64x8xf32>
    %696 = arith.addf %694, %695 : vector<64x8xf32>
    %697 = vector.extract_strided_slice %687 {offsets = [256, 32], sizes = [64, 8], strides = [1, 1]} : vector<384x48xf32> to vector<64x8xf32>
    %698 = arith.addf %696, %697 : vector<64x8xf32>
    %699 = vector.extract_strided_slice %687 {offsets = [320, 40], sizes = [64, 8], strides = [1, 1]} : vector<384x48xf32> to vector<64x8xf32>
    %700 = arith.addf %698, %699 : vector<64x8xf32>
    %cst_234 = arith.constant 0.000000e+00 : f32
    %701 = vector.broadcast %cst_234 : f32 to vector<64x8xf32>
    %702 = arith.maximumf %700, %701 : vector<64x8xf32>
    %c0_235 = arith.constant 0 : index
    %c0_236 = arith.constant 0 : index
    %703 = vector.load %arg12[%c0_235, %c0_236] : memref<8x12xf32, #tpu.memory_space<vmem>>, vector<8x12xf32>
    %cst_237 = arith.constant dense<0.000000e+00> : vector<64x12xf32>
    %704 = tpu.matmul %702, %703, %cst_237 {dimension_numbers = #tpu.dot_dimension_numbers<[1], [0], [0], [1], [0, 0, 1, 1], [], []>} : vector<64x8xf32>, vector<8x12xf32>, vector<64x12xf32> -> vector<64x12xf32>
    %c0_238 = arith.constant 0 : index
    %c0_239 = arith.constant 0 : index
    %705 = vector.load %arg11[%c0_238, %c0_239] : memref<768x64xf32, #tpu.memory_space<vmem>>, vector<768x64xf32>
    %cst_240 = arith.constant dense<0.000000e+00> : vector<768x12xf32>
    %706 = tpu.matmul %705, %704, %cst_240 {dimension_numbers = #tpu.dot_dimension_numbers<[1], [0], [0], [1], [0, 0, 1, 1], [], []>} : vector<768x64xf32>, vector<64x12xf32>, vector<768x12xf32> -> vector<768x12xf32>
    %c0_241 = arith.constant 0 : index
    %c0_242 = arith.constant 0 : index
    %707 = vector.load %arg13[%c0_241, %c0_242] : memref<128x2xf32, #tpu.memory_space<vmem>>, vector<128x2xf32>
    %708 = vector.extract_strided_slice %706 {offsets = [0, 0], sizes = [128, 2], strides = [1, 1]} : vector<768x12xf32> to vector<128x2xf32>
    %709 = arith.addf %707, %708 : vector<128x2xf32>
    %710 = vector.extract_strided_slice %706 {offsets = [128, 2], sizes = [128, 2], strides = [1, 1]} : vector<768x12xf32> to vector<128x2xf32>
    %711 = arith.addf %709, %710 : vector<128x2xf32>
    %712 = vector.extract_strided_slice %706 {offsets = [256, 4], sizes = [128, 2], strides = [1, 1]} : vector<768x12xf32> to vector<128x2xf32>
    %713 = arith.addf %711, %712 : vector<128x2xf32>
    %714 = vector.extract_strided_slice %706 {offsets = [384, 6], sizes = [128, 2], strides = [1, 1]} : vector<768x12xf32> to vector<128x2xf32>
    %715 = arith.addf %713, %714 : vector<128x2xf32>
    %716 = vector.extract_strided_slice %706 {offsets = [512, 8], sizes = [128, 2], strides = [1, 1]} : vector<768x12xf32> to vector<128x2xf32>
    %717 = arith.addf %715, %716 : vector<128x2xf32>
    %718 = vector.extract_strided_slice %706 {offsets = [640, 10], sizes = [128, 2], strides = [1, 1]} : vector<768x12xf32> to vector<128x2xf32>
    %719 = arith.addf %717, %718 : vector<128x2xf32>
    %cst_243 = arith.constant 0.000000e+00 : f32
    %720 = vector.broadcast %cst_243 : f32 to vector<128x2xf32>
    %721 = arith.maximumf %719, %720 : vector<128x2xf32>
    %cst_244 = arith.constant dense<0.000000e+00> : vector<128xf32>
    %722 = vector.multi_reduction <add>, %721, %cst_244 [1] : vector<128x2xf32> to vector<128xf32>
    %723 = vector.shape_cast %722 : vector<128xf32> to vector<128x1xf32>
    %cst_245 = arith.constant 2.000000e+00 : f32
    %724 = vector.broadcast %cst_245 : f32 to vector<128x1xf32>
    %725 = arith.divf %723, %724 : vector<128x1xf32>
    %c0_246 = arith.constant 0 : index
    %c0_247 = arith.constant 0 : index
    %726 = vector.load %arg14[%c0_246, %c0_247] : memref<256x129xf32, #tpu.memory_space<vmem>>, vector<256x129xf32>
    %727 = vector.extract_strided_slice %726 {offsets = [0, 0], sizes = [256, 128], strides = [1, 1]} : vector<256x129xf32> to vector<256x128xf32>
    %cst_248 = arith.constant dense<0.000000e+00> : vector<256x1xf32>
    %728 = tpu.matmul %727, %725, %cst_248 {dimension_numbers = #tpu.dot_dimension_numbers<[1], [0], [0], [1], [0, 0, 1, 1], [], []>} : vector<256x128xf32>, vector<128x1xf32>, vector<256x1xf32> -> vector<256x1xf32>
    %729 = vector.extract_strided_slice %726 {offsets = [0, 128], sizes = [256, 1], strides = [1, 1]} : vector<256x129xf32> to vector<256x1xf32>
    %730 = arith.addf %728, %729 : vector<256x1xf32>
    %cst_249 = arith.constant 0.000000e+00 : f32
    %731 = vector.broadcast %cst_249 : f32 to vector<256x1xf32>
    %732 = arith.maximumf %730, %731 : vector<256x1xf32>
    %c0_250 = arith.constant 0 : index
    %c0_251 = arith.constant 0 : index
    %733 = vector.load %arg15[%c0_250, %c0_251] : memref<6x257xf32, #tpu.memory_space<vmem>>, vector<6x257xf32>
    %734 = vector.extract_strided_slice %733 {offsets = [0, 0], sizes = [6, 256], strides = [1, 1]} : vector<6x257xf32> to vector<6x256xf32>
    %cst_252 = arith.constant dense<0.000000e+00> : vector<6x1xf32>
    %735 = tpu.matmul %734, %732, %cst_252 {dimension_numbers = #tpu.dot_dimension_numbers<[1], [0], [0], [1], [0, 0, 1, 1], [], []>} : vector<6x256xf32>, vector<256x1xf32>, vector<6x1xf32> -> vector<6x1xf32>
    %736 = vector.extract_strided_slice %733 {offsets = [0, 256], sizes = [6, 1], strides = [1, 1]} : vector<6x257xf32> to vector<6x1xf32>
    %737 = arith.addf %735, %736 : vector<6x1xf32>
    %c0_253 = arith.constant 0 : index
    %c0_254 = arith.constant 0 : index
    %738 = vector.load %arg16[%c0_253, %c0_254] : memref<6x1xf32, #tpu.memory_space<vmem>>, vector<6x1xf32>
    tpu.vector_store %arg16[%c0_253, %c0_254], %737 {strides = array<i32>} : memref<6x1xf32, #tpu.memory_space<vmem>>, vector<6x1xf32>,
    return
  }
}

</mosaic_0001>

<llo_original>
// kernel: _lambda_.1
$region0: #{_lambda_.1}
  #allocation0 [shape = 'u32[]', space=smem, size = 0x4, offset = 0x4, fixed_abs, tag = 'smem constant byte address 0x4 - core index']
  #allocation1 [shape = 'u32[144,128]{1,0:T(1,128)}', space=vmem, size = 0x12000, scoped, tag = 'internal scratch']
  #allocation2 [shape = 'f32[32,128]{1,0:T(8,128)}', space=vmem, size = 0x4000, scoped, tag = 'scratch operand']
  #allocation3 [shape = 'f32[32,32]{1,0:T(8,128)}', space=vmem, size = 0x4000, scoped, tag = 'scratch operand']
  %s0 = inlined_call_operand.vmem [shape: f32[32,4], index: 0, kind: input, shape index: {}]
  %s1 = inlined_call_operand.hbm [shape: f32[41,128], index: 1, kind: input, shape index: {}]
  %s2 = inlined_call_operand.hbm [shape: f32[3,32,32], index: 2, kind: input, shape index: {}]
  %s3 = inlined_call_operand.hbm [shape: f32[10,32], index: 3, kind: input, shape index: {}]
  %s4 = inlined_call_operand.hbm [shape: f32[2,16,64], index: 4, kind: input, shape index: {}]
  %s5 = inlined_call_operand.hbm [shape: f32[2,32,48], index: 5, kind: input, shape index: {}]
  %s6 = inlined_call_operand.hbm [shape: f32[2,33,64], index: 6, kind: input, shape index: {}]
  %s7 = inlined_call_operand.hbm [shape: f32[2,65,32], index: 7, kind: input, shape index: {}]
  %s8 = inlined_call_operand.hbm [shape: f32[384,32], index: 8, kind: input, shape index: {}]
  %s9 = inlined_call_operand.hbm [shape: f32[32,48], index: 9, kind: input, shape index: {}]
  %s10 = inlined_call_operand.vmem [shape: f32[64,8], index: 10, kind: input, shape index: {}]
  %s11 = inlined_call_operand.hbm [shape: f32[768,64], index: 11, kind: input, shape index: {}]
  %s12 = inlined_call_operand.vmem [shape: f32[8,12], index: 12, kind: input, shape index: {}]
  %s13 = inlined_call_operand.hbm [shape: f32[128,2], index: 13, kind: input, shape index: {}]
  %s14 = inlined_call_operand.hbm [shape: f32[256,129], index: 14, kind: input, shape index: {}]
  %s15 = inlined_call_operand.vmem [shape: f32[6,257], index: 15, kind: input, shape index: {}]
  %s16 = inlined_call_operand.vmem [shape: f32[6,1], index: 16, kind: output, shape index: {}]
  %s17 = sld [smem:[#allocation0]]
  $region122: #{_lambda_.1} parent=0
    _
  %s19 = ssub.s32 1, %s17
  %s20 = scalar_select 0, %s19, %s17
  $region1: #{_lambda_.1} parent=0
    #allocation4 [shape = 'u8[24576]{0}', space=vmem, size = 0x6000, scoped, tag = 'input window, operand 1, single buffered']
    #allocation5 [shape = 's32[1]{0}', space=sflag, size = 0x4, scoped, tag = 'scoped memory for _lambda_.1']
    #allocation6 [shape = 'u8[49152]{0}', space=vmem, size = 0xc000, scoped, tag = 'input window, operand 2, single buffered']
    #allocation7 [shape = 's32[1]{0}', space=sflag, size = 0x4, scoped, tag = 'scoped memory for _lambda_.1']
    #allocation8 [shape = 'u8[8192]{0}', space=vmem, size = 0x2000, scoped, tag = 'input window, operand 3, single buffered']
    #allocation9 [shape = 'u8[16384]{0}', space=vmem, size = 0x4000, scoped, tag = 'input window, operand 4, single buffered']
    #allocation10 [shape = 's32[1]{0}', space=sflag, size = 0x4, scoped, tag = 'scoped memory for _lambda_.1']
    #allocation11 [shape = 'u8[32768]{0}', space=vmem, size = 0x8000, scoped, tag = 'input window, operand 5, single buffered']
    #allocation12 [shape = 'u8[40960]{0}', space=vmem, size = 0xa000, scoped, tag = 'input window, operand 6, single buffered']
    #allocation13 [shape = 's32[1]{0}', space=sflag, size = 0x4, scoped, tag = 'scoped memory for _lambda_.1']
    #allocation14 [shape = 'u8[73728]{0}', space=vmem, size = 0x12000, scoped, tag = 'input window, operand 7, single buffered']
    #allocation15 [shape = 'u8[196608]{0}', space=vmem, size = 0x30000, scoped, tag = 'input window, operand 8, single buffered']
    #allocation16 [shape = 's32[1]{0}', space=sflag, size = 0x4, scoped, tag = 'scoped memory for _lambda_.1']
    #allocation17 [shape = 'u8[16384]{0}', space=vmem, size = 0x4000, scoped, tag = 'input window, operand 9, single buffered']
    #allocation18 [shape = 'u8[393216]{0}', space=vmem, size = 0x60000, scoped, tag = 'input window, operand 11, single buffered']
    #allocation19 [shape = 's32[1]{0}', space=sflag, size = 0x4, scoped, tag = 'scoped memory for _lambda_.1']
    #allocation20 [shape = 'u8[65536]{0}', space=vmem, size = 0x10000, scoped, tag = 'input window, operand 13, single buffered']
    #allocation21 [shape = 'u8[262144]{0}', space=vmem, size = 0x40000, scoped, tag = 'input window, operand 14, single buffered']
    #allocation22 [shape = 's32[1]{0}', space=sflag, size = 0x4, scoped, tag = 'scoped memory for _lambda_.1']
    %21 = vsyncpa [#allocation5], 0
    %22 = vsyncpa [#allocation7], 0
    %23 = vsyncpa [#allocation10], 0
    %24 = vsyncpa [#allocation13], 0
    %25 = vsyncpa [#allocation16], 0
    %26 = vsyncpa [#allocation19], 0
    %27 = vsyncpa [#allocation22], 0
    // Predicated region
    $region2: #{_lambda_.1} parent=1 // pred_check
      _
    $region3: #{_lambda_.1} parent=1 // pred_check_branch
      %29 = sbr.rel (0) target = $region5
    $region4: #{_lambda_.1} parent=1 // pred_region
      _
    $region5: #{_lambda_.1} parent=1 // pred_fallthru
      _
    // Predicated region
    $region6: #{_lambda_.1} parent=1 // pred_check
      _
    $region7: #{_lambda_.1} parent=1 // pred_check_branch
      %31 = sbr.rel (0) target = $region9
    $region8: #{_lambda_.1} parent=1 // pred_region
      %s33 = ssub.s32 768, 768
      %34 = vsyncadd [#allocation5], %s33
      %s35 = sshll.u32 [#allocation4], 4
      %s36 = int_to_ptr.vmem [resolvable:$true] %s35
      %41 = dma.hbm_to_vmem [thread:$0]  %s1, 768, %s36, [#allocation5], 128, 128, 8
    $region9: #{_lambda_.1} parent=1 // pred_fallthru
      _
    // Predicated region
    $region10: #{_lambda_.1} parent=1 // pred_check
      _
    $region11: #{_lambda_.1} parent=1 // pred_check_branch
      %43 = sbr.rel (0) target = $region13
    $region12: #{_lambda_.1} parent=1 // pred_region
      %s45 = ssub.s32 1536, 1536
      %46 = vsyncadd [#allocation7], %s45
      %s47 = sshll.u32 [#allocation6], 4
      %s48 = int_to_ptr.vmem [resolvable:$true] %s47
      %53 = dma.hbm_to_vmem [thread:$0]  %s2, 1536, %s48, [#allocation7], 128, 128, 8
    $region13: #{_lambda_.1} parent=1 // pred_fallthru
      _
    // Predicated region
    $region14: #{_lambda_.1} parent=1 // pred_check
      _
    $region15: #{_lambda_.1} parent=1 // pred_check_branch
      %55 = sbr.rel (0) target = $region17
    $region16: #{_lambda_.1} parent=1 // pred_region
      %s57 = ssub.s32 256, 256
      %58 = vsyncadd [#allocation7], %s57
      %s59 = sshll.u32 [#allocation8], 4
      %s60 = int_to_ptr.vmem [resolvable:$true] %s59
      %65 = dma.hbm_to_vmem [thread:$0]  %s3, 256, %s60, [#allocation7], 128, 128, 8
    $region17: #{_lambda_.1} parent=1 // pred_fallthru
      _
    // Predicated region
    $region18: #{_lambda_.1} parent=1 // pred_check
      _
    $region19: #{_lambda_.1} parent=1 // pred_check_branch
      %67 = sbr.rel (0) target = $region21
    $region20: #{_lambda_.1} parent=1 // pred_region
      %s69 = ssub.s32 512, 512
      %70 = vsyncadd [#allocation10], %s69
      %s71 = sshll.u32 [#allocation9], 4
      %s72 = int_to_ptr.vmem [resolvable:$true] %s71
      %77 = dma.hbm_to_vmem [thread:$0]  %s4, 512, %s72, [#allocation10], 128, 128, 8
    $region21: #{_lambda_.1} parent=1 // pred_fallthru
      _
    // Predicated region
    $region22: #{_lambda_.1} parent=1 // pred_check
      _
    $region23: #{_lambda_.1} parent=1 // pred_check_branch
      %79 = sbr.rel (0) target = $region25
    $region24: #{_lambda_.1} parent=1 // pred_region
      %s81 = ssub.s32 1024, 1024
      %82 = vsyncadd [#allocation10], %s81
      %s83 = sshll.u32 [#allocation11], 4
      %s84 = int_to_ptr.vmem [resolvable:$true] %s83
      %89 = dma.hbm_to_vmem [thread:$0]  %s5, 1024, %s84, [#allocation10], 128, 128, 8
    $region25: #{_lambda_.1} parent=1 // pred_fallthru
      _
    // Predicated region
    $region26: #{_lambda_.1} parent=1 // pred_check
      _
    $region27: #{_lambda_.1} parent=1 // pred_check_branch
      %91 = sbr.rel (0) target = $region29
    $region28: #{_lambda_.1} parent=1 // pred_region
      %s93 = ssub.s32 1280, 1280
      %94 = vsyncadd [#allocation13], %s93
      %s95 = sshll.u32 [#allocation12], 4
      %s96 = int_to_ptr.vmem [resolvable:$true] %s95
      %101 = dma.hbm_to_vmem [thread:$0]  %s6, 1280, %s96, [#allocation13], 128, 128, 8
    $region29: #{_lambda_.1} parent=1 // pred_fallthru
      _
    // Predicated region
    $region30: #{_lambda_.1} parent=1 // pred_check
      _
    $region31: #{_lambda_.1} parent=1 // pred_check_branch
      %103 = sbr.rel (0) target = $region33
    $region32: #{_lambda_.1} parent=1 // pred_region
      %s105 = ssub.s32 2304, 2304
      %106 = vsyncadd [#allocation13], %s105
      %s107 = sshll.u32 [#allocation14], 4
      %s108 = int_to_ptr.vmem [resolvable:$true] %s107
      %113 = dma.hbm_to_vmem [thread:$0]  %s7, 2304, %s108, [#allocation13], 128, 128, 8
    $region33: #{_lambda_.1} parent=1 // pred_fallthru
      _
    // Predicated region
    $region34: #{_lambda_.1} parent=1 // pred_check
      _
    $region35: #{_lambda_.1} parent=1 // pred_check_branch
      %115 = sbr.rel (0) target = $region37
    $region36: #{_lambda_.1} parent=1 // pred_region
      %s117 = ssub.s32 6144, 6144
      %118 = vsyncadd [#allocation16], %s117
      %s119 = sshll.u32 [#allocation15], 4
      %s120 = int_to_ptr.vmem [resolvable:$true] %s119
      %125 = dma.hbm_to_vmem [thread:$0]  %s8, 6144, %s120, [#allocation16], 128, 128, 8
    $region37: #{_lambda_.1} parent=1 // pred_fallthru
      _
    // Predicated region
    $region38: #{_lambda_.1} parent=1 // pred_check
      _
    $region39: #{_lambda_.1} parent=1 // pred_check_branch
      %127 = sbr.rel (0) target = $region41
    $region40: #{_lambda_.1} parent=1 // pred_region
      %s129 = ssub.s32 512, 512
      %130 = vsyncadd [#allocation16], %s129
      %s131 = sshll.u32 [#allocation17], 4
      %s132 = int_to_ptr.vmem [resolvable:$true] %s131
      %137 = dma.hbm_to_vmem [thread:$0]  %s9, 512, %s132, [#allocation16], 128, 128, 8
    $region41: #{_lambda_.1} parent=1 // pred_fallthru
      _
    // Predicated region
    $region42: #{_lambda_.1} parent=1 // pred_check
      _
    $region43: #{_lambda_.1} parent=1 // pred_check_branch
      %139 = sbr.rel (0) target = $region45
    $region44: #{_lambda_.1} parent=1 // pred_region
      _
    $region45: #{_lambda_.1} parent=1 // pred_fallthru
      _
    // Predicated region
    $region46: #{_lambda_.1} parent=1 // pred_check
      _
    $region47: #{_lambda_.1} parent=1 // pred_check_branch
      %141 = sbr.rel (0) target = $region49
    $region48: #{_lambda_.1} parent=1 // pred_region
      %s143 = ssub.s32 12288, 12288
      %144 = vsyncadd [#allocation19], %s143
      %s145 = sshll.u32 [#allocation18], 4
      %s146 = int_to_ptr.vmem [resolvable:$true] %s145
      %151 = dma.hbm_to_vmem [thread:$0]  %s11, 12288, %s146, [#allocation19], 128, 128, 8
    $region49: #{_lambda_.1} parent=1 // pred_fallthru
      _
    // Predicated region
    $region50: #{_lambda_.1} parent=1 // pred_check
      _
    $region51: #{_lambda_.1} parent=1 // pred_check_branch
      %153 = sbr.rel (0) target = $region53
    $region52: #{_lambda_.1} parent=1 // pred_region
      _
    $region53: #{_lambda_.1} parent=1 // pred_fallthru
      _
    // Predicated region
    $region54: #{_lambda_.1} parent=1 // pred_check
      _
    $region55: #{_lambda_.1} parent=1 // pred_check_branch
      %155 = sbr.rel (0) target = $region57
    $region56: #{_lambda_.1} parent=1 // pred_region
      %s157 = ssub.s32 2048, 2048
      %158 = vsyncadd [#allocation19], %s157
      %s159 = sshll.u32 [#allocation20], 4
      %s160 = int_to_ptr.vmem [resolvable:$true] %s159
      %165 = dma.hbm_to_vmem [thread:$0]  %s13, 2048, %s160, [#allocation19], 128, 128, 8
    $region57: #{_lambda_.1} parent=1 // pred_fallthru
      _
    // Predicated region
    $region58: #{_lambda_.1} parent=1 // pred_check
      _
    $region59: #{_lambda_.1} parent=1 // pred_check_branch
      %167 = sbr.rel (0) target = $region61
    $region60: #{_lambda_.1} parent=1 // pred_region
      %s169 = ssub.s32 8192, 8192
      %170 = vsyncadd [#allocation22], %s169
      %s171 = sshll.u32 [#allocation21], 4
      %s172 = int_to_ptr.vmem [resolvable:$true] %s171
      %177 = dma.hbm_to_vmem [thread:$0]  %s14, 8192, %s172, [#allocation22], 256, 256, 16
    $region61: #{_lambda_.1} parent=1 // pred_fallthru
      _
    // Predicated region
    $region62: #{_lambda_.1} parent=1 // pred_check
      _
    $region63: #{_lambda_.1} parent=1 // pred_check_branch
      %179 = sbr.rel (0) target = $region65
    $region64: #{_lambda_.1} parent=1 // pred_region
      _
    $region65: #{_lambda_.1} parent=1 // pred_fallthru
      _
    // Predicated region
    $region66: #{_lambda_.1} parent=1 // pred_check
      _
    $region67: #{_lambda_.1} parent=1 // pred_check_branch
      %181 = sbr.rel (0) target = $region69
    $region68: #{_lambda_.1} parent=1 // pred_region
      %182 = dma.done [#allocation5], 768
    $region69: #{_lambda_.1} parent=1 // pred_fallthru
      _
    // Predicated region
    $region70: #{_lambda_.1} parent=1 // pred_check
      _
    $region71: #{_lambda_.1} parent=1 // pred_check_branch
      %184 = sbr.rel (0) target = $region73
    $region72: #{_lambda_.1} parent=1 // pred_region
      %185 = dma.done [#allocation7], 1536
    $region73: #{_lambda_.1} parent=1 // pred_fallthru
      _
    // Predicated region
    $region74: #{_lambda_.1} parent=1 // pred_check
      _
    $region75: #{_lambda_.1} parent=1 // pred_check_branch
      %187 = sbr.rel (0) target = $region77
    $region76: #{_lambda_.1} parent=1 // pred_region
      %188 = dma.done [#allocation7], 256
    $region77: #{_lambda_.1} parent=1 // pred_fallthru
      _
    // Predicated region
    $region78: #{_lambda_.1} parent=1 // pred_check
      _
    $region79: #{_lambda_.1} parent=1 // pred_check_branch
      %190 = sbr.rel (0) target = $region81
    $region80: #{_lambda_.1} parent=1 // pred_region
      %191 = dma.done [#allocation10], 512
    $region81: #{_lambda_.1} parent=1 // pred_fallthru
      _
    // Predicated region
    $region82: #{_lambda_.1} parent=1 // pred_check
      _
    $region83: #{_lambda_.1} parent=1 // pred_check_branch
      %193 = sbr.rel (0) target = $region85
    $region84: #{_lambda_.1} parent=1 // pred_region
      %194 = dma.done [#allocation10], 1024
    $region85: #{_lambda_.1} parent=1 // pred_fallthru
      _
    // Predicated region
    $region86: #{_lambda_.1} parent=1 // pred_check
      _
    $region87: #{_lambda_.1} parent=1 // pred_check_branch
      %196 = sbr.rel (0) target = $region89
    $region88: #{_lambda_.1} parent=1 // pred_region
      %197 = dma.done [#allocation13], 1280
    $region89: #{_lambda_.1} parent=1 // pred_fallthru
      _
    // Predicated region
    $region90: #{_lambda_.1} parent=1 // pred_check
      _
    $region91: #{_lambda_.1} parent=1 // pred_check_branch
      %199 = sbr.rel (0) target = $region93
    $region92: #{_lambda_.1} parent=1 // pred_region
      %200 = dma.done [#allocation13], 2304
    $region93: #{_lambda_.1} parent=1 // pred_fallthru
      _
    // Predicated region
    $region94: #{_lambda_.1} parent=1 // pred_check
      _
    $region95: #{_lambda_.1} parent=1 // pred_check_branch
      %202 = sbr.rel (0) target = $region97
    $region96: #{_lambda_.1} parent=1 // pred_region
      %203 = dma.done [#allocation16], 6144
    $region97: #{_lambda_.1} parent=1 // pred_fallthru
      _
    // Predicated region
    $region98: #{_lambda_.1} parent=1 // pred_check
      _
    $region99: #{_lambda_.1} parent=1 // pred_check_branch
      %205 = sbr.rel (0) target = $region101
    $region100: #{_lambda_.1} parent=1 // pred_region
      %206 = dma.done [#allocation16], 512
    $region101: #{_lambda_.1} parent=1 // pred_fallthru
      _
    // Predicated region
    $region102: #{_lambda_.1} parent=1 // pred_check
      _
    $region103: #{_lambda_.1} parent=1 // pred_check_branch
      %208 = sbr.rel (0) target = $region105
    $region104: #{_lambda_.1} parent=1 // pred_region
      %209 = dma.done [#allocation19], 12288
    $region105: #{_lambda_.1} parent=1 // pred_fallthru
      _
    // Predicated region
    $region106: #{_lambda_.1} parent=1 // pred_check
      _
    $region107: #{_lambda_.1} parent=1 // pred_check_branch
      %211 = sbr.rel (0) target = $region109
    $region108: #{_lambda_.1} parent=1 // pred_region
      %212 = dma.done [#allocation19], 2048
    $region109: #{_lambda_.1} parent=1 // pred_fallthru
      _
    // Predicated region
    $region110: #{_lambda_.1} parent=1 // pred_check
      _
    $region111: #{_lambda_.1} parent=1 // pred_check_branch
      %214 = sbr.rel (0) target = $region113
    $region112: #{_lambda_.1} parent=1 // pred_region
      %215 = dma.done [#allocation22], 8192
    $region113: #{_lambda_.1} parent=1 // pred_fallthru
      _
    %v216 = vld [vmem:[%s0] sm:$0xff]
    %v217 = vld [vmem:[%s0 + $0x8] sm:$0xff]
    %v218 = vld [vmem:[%s0 + $0x10] sm:$0xff]
    %v219 = vld [vmem:[%s0 + $0x18] sm:$0xff]
    %v220 = vld [vmem:[#allocation4] sm:$0xf]
    %v221 = vld [vmem:[#allocation4 + $0x4] sm:$0xf]
    %v222 = vld [vmem:[#allocation4 + $0x8] sm:$0xff]
    %v223 = vld [vmem:[#allocation4 + $0x10] sm:$0xff]
    %v224 = vld [vmem:[#allocation4 + $0x18] sm:$0xff]
    %v225 = vld [vmem:[#allocation4 + $0x20] sm:$0xff]
    %v226 = vld [vmem:[#allocation4 + $0x28] sm:$0x1]
    %v227 = vld [vmem:[#allocation6] sm:$0xff]
    %v228 = vld [vmem:[#allocation6 + $0x8] sm:$0xff]
    %v229 = vld [vmem:[#allocation6 + $0x10] sm:$0xff]
    %v230 = vld [vmem:[#allocation6 + $0x18] sm:$0xff]
    %vm231 = vcmask 261120
    %v233 = vsel %vm231, %v227, 0
    %v236 = vsel %vm231, %v228, 0
    %v239 = vsel %vm231, %v229, 0
    %v242 = vsel %vm231, %v230, 0
    %244 = vmatprep.subr.mxu0 0.0
    %245 = vmatpush1.msra.mxu0 %v216
    %246 = vmatprep.subr.mxu0 0.0
    %247 = vmatpush1.msra.mxu0 %v217
    %248 = vmatprep.subr.mxu0 0.0
    %249 = vmatpush1.msra.mxu0 %v218
    %250 = vmatprep.subr.mxu0 0.0
    %251 = vmatpush1.msra.mxu0 %v219
    %252 = vmatprep.subr.mxu0 0.0
    %253 = vmatpush1.msra.mxu0 0.0
    %254 = vmatprep.subr.mxu0 0.0
    %255 = vmatpush1.msra.mxu0 0.0
    %256 = vmatprep.subr.mxu0 0.0
    %257 = vmatpush1.msra.mxu0 0.0
    %258 = vmatprep.subr.mxu0 0.0
    %259 = vmatpush1.msra.mxu0 0.0
    %260 = vmatprep.subr.mxu0 0.0
    %261 = vmatpush1.msra.mxu0 0.0
    %262 = vmatprep.subr.mxu0 0.0
    %263 = vmatpush1.msra.mxu0 0.0
    %264 = vmatprep.subr.mxu0 0.0
    %265 = vmatpush1.msra.mxu0 0.0
    %266 = vmatprep.subr.mxu0 0.0
    %267 = vmatpush1.msra.mxu0 0.0
    %268 = vmatprep.subr.mxu0 0.0
    %269 = vmatpush1.msra.mxu0 0.0
    %270 = vmatprep.subr.mxu0 0.0
    %271 = vmatpush1.msra.mxu0 0.0
    %272 = vmatprep.subr.mxu0 0.0
    %273 = vmatpush1.msra.mxu0 0.0
    %274 = vmatprep.subr.mxu0 0.0
    %275 = vmatpush1.msra.mxu0 0.0
    %276 = vmatprep.subr.mxu0 0.0
    %277 = vmatpush1.msra.mxu0 0.0
    %278 = vmatprep.subr.mxu0 0.0
    %279 = vmatpush1.msra.mxu0 0.0
    %280 = vmatprep.subr.mxu0 0.0
    %281 = vmatpush1.msra.mxu0 0.0
    %282 = vmatprep.subr.mxu0 0.0
    %283 = vmatpush1.msra.mxu0 0.0
    %284 = vmatprep.subr.mxu0 0.0
    %285 = vmatpush1.msra.mxu0 0.0
    %286 = vmatprep.subr.mxu0 0.0
    %287 = vmatpush1.msra.mxu0 0.0
    %288 = vmatprep.subr.mxu0 0.0
    %289 = vmatpush1.msra.mxu0 0.0
    %290 = vmatprep.subr.mxu0 0.0
    %291 = vmatpush1.msra.mxu0 0.0
    %292 = vmatprep.subr.mxu0 0.0
    %293 = vmatpush1.msra.mxu0 0.0
    %294 = vmatprep.subr.mxu0 0.0
    %295 = vmatpush1.msra.mxu0 0.0
    %296 = vmatprep.subr.mxu0 0.0
    %297 = vmatpush1.msra.mxu0 0.0
    %298 = vmatprep.subr.mxu0 0.0
    %299 = vmatpush1.msra.mxu0 0.0
    %300 = vmatprep.subr.mxu0 0.0
    %301 = vmatpush1.msra.mxu0 0.0
    %302 = vmatprep.subr.mxu0 0.0
    %303 = vmatpush1.msra.mxu0 0.0
    %304 = vmatprep.subr.mxu0 0.0
    %305 = vmatpush1.msra.mxu0 0.0
    %306 = vmatprep.subr.mxu0 0.0
    %307 = vmatpush1.msra.mxu0 0.0
    %308 = vmatprep.mubr.f32.mxu0 0.0
    %309 = vmatmul.mubr.f32.gmra.mrb[0].mxu0 %v233
    %v310 = vpop.f32.mrb[0].mxu0
    %v311 = vadd.f32 0.0, %v310
    %v312 = vpop.f32.mrb[0].mxu0
    %313 = vmatprep.mubr.f32.mxu0 0.0
    %314 = vmatmul.mubr.f32.gmra.mrb[0].mxu0 %v236
    %v315 = vpop.f32.mrb[0].mxu0
    %v316 = vadd.f32 0.0, %v315
    %v317 = vpop.f32.mrb[0].mxu0
    %318 = vmatprep.mubr.f32.mxu0 0.0
    %319 = vmatmul.mubr.f32.gmra.mrb[0].mxu0 %v239
    %v320 = vpop.f32.mrb[0].mxu0
    %v321 = vadd.f32 0.0, %v320
    %v322 = vpop.f32.mrb[0].mxu0
    %323 = vmatprep.mubr.f32.mxu0 0.0
    %324 = vmatmul.mubr.f32.gmra.mrb[0].mxu0 %v242
    %v325 = vpop.f32.mrb[0].mxu0
    %v326 = vadd.f32 0.0, %v325
    %v327 = vpop.f32.mrb[0].mxu0
    %328 = vdwg.mxu0
    %vm329 = vcmask 31744
    %v331 = vsel %vm329, %v311, 0
    %v334 = vsel %vm329, %v316, 0
    %v337 = vsel %vm329, %v321, 0
    %v340 = vsel %vm329, %v326, 0
    %vm342 = vcmask 1043456
    %v344 = vsel %vm342, %v221, 0
    %346 = vmatprep.subr.mxu0 0.0
    %347 = vmatpush1.msra.mxu0 %v344
    %348 = vmatprep.subr.mxu0 0.0
    %349 = vmatpush1.msra.mxu0 0.0
    %350 = vmatprep.subr.mxu0 0.0
    %351 = vmatpush1.msra.mxu0 0.0
    %352 = vmatprep.subr.mxu0 0.0
    %353 = vmatpush1.msra.mxu0 0.0
    %354 = vmatprep.subr.mxu0 0.0
    %355 = vmatpush1.msra.mxu0 0.0
    %356 = vmatprep.subr.mxu0 0.0
    %357 = vmatpush1.msra.mxu0 0.0
    %358 = vmatprep.subr.mxu0 0.0
    %359 = vmatpush1.msra.mxu0 0.0
    %360 = vmatprep.subr.mxu0 0.0
    %361 = vmatpush1.msra.mxu0 0.0
    %362 = vmatprep.subr.mxu0 0.0
    %363 = vmatpush1.msra.mxu0 0.0
    %364 = vmatprep.subr.mxu0 0.0
    %365 = vmatpush1.msra.mxu0 0.0
    %366 = vmatprep.subr.mxu0 0.0
    %367 = vmatpush1.msra.mxu0 0.0
    %368 = vmatprep.subr.mxu0 0.0
    %369 = vmatpush1.msra.mxu0 0.0
    %370 = vmatprep.subr.mxu0 0.0
    %371 = vmatpush1.msra.mxu0 0.0
    %372 = vmatprep.subr.mxu0 0.0
    %373 = vmatpush1.msra.mxu0 0.0
    %374 = vmatprep.subr.mxu0 0.0
    %375 = vmatpush1.msra.mxu0 0.0
    %376 = vmatprep.subr.mxu0 0.0
    %377 = vmatpush1.msra.mxu0 0.0
    %378 = vmatprep.subr.mxu0 0.0
    %379 = vmatpush1.msra.mxu0 0.0
    %380 = vmatprep.subr.mxu0 0.0
    %381 = vmatpush1.msra.mxu0 0.0
    %382 = vmatprep.subr.mxu0 0.0
    %383 = vmatpush1.msra.mxu0 0.0
    %384 = vmatprep.subr.mxu0 0.0
    %385 = vmatpush1.msra.mxu0 0.0
    %386 = vmatprep.subr.mxu0 0.0
    %387 = vmatpush1.msra.mxu0 0.0
    %388 = vmatprep.subr.mxu0 0.0
    %389 = vmatpush1.msra.mxu0 0.0
    %390 = vmatprep.subr.mxu0 0.0
    %391 = vmatpush1.msra.mxu0 0.0
    %392 = vmatprep.subr.mxu0 0.0
    %393 = vmatpush1.msra.mxu0 0.0
    %394 = vmatprep.subr.mxu0 0.0
    %395 = vmatpush1.msra.mxu0 0.0
    %396 = vmatprep.subr.mxu0 0.0
    %397 = vmatpush1.msra.mxu0 0.0
    %398 = vmatprep.subr.mxu0 0.0
    %399 = vmatpush1.msra.mxu0 0.0
    %400 = vmatprep.subr.mxu0 0.0
    %401 = vmatpush1.msra.mxu0 0.0
    %402 = vmatprep.subr.mxu0 0.0
    %403 = vmatpush1.msra.mxu0 0.0
    %404 = vmatprep.subr.mxu0 0.0
    %405 = vmatpush1.msra.mxu0 0.0
    %406 = vmatprep.subr.mxu0 0.0
    %407 = vmatpush1.msra.mxu0 0.0
    %408 = vmatprep.subr.mxu0 0.0
    %409 = vmatpush1.msra.mxu0 0.0
    %410 = vmatprep.mubr.f32.mxu0 0.0
    %411 = vmatmul.mubr.f32.gmra.mrb[0].mxu0 %v331
    %v412 = vpop.f32.mrb[0].mxu0
    %v413 = vadd.f32 0.0, %v412
    %v414 = vpop.f32.mrb[0].mxu0
    %415 = vmatprep.mubr.f32.mxu0 0.0
    %416 = vmatmul.mubr.f32.gmra.mrb[0].mxu0 %v334
    %v417 = vpop.f32.mrb[0].mxu0
    %v418 = vadd.f32 0.0, %v417
    %v419 = vpop.f32.mrb[0].mxu0
    %420 = vmatprep.mubr.f32.mxu0 0.0
    %421 = vmatmul.mubr.f32.gmra.mrb[0].mxu0 %v337
    %v422 = vpop.f32.mrb[0].mxu0
    %v423 = vadd.f32 0.0, %v422
    %v424 = vpop.f32.mrb[0].mxu0
    %425 = vmatprep.mubr.f32.mxu0 0.0
    %426 = vmatmul.mubr.f32.gmra.mrb[0].mxu0 %v340
    %v427 = vpop.f32.mrb[0].mxu0
    %v428 = vadd.f32 0.0, %v427
    %v429 = vpop.f32.mrb[0].mxu0
    %430 = vdwg.mxu0
    %v432 = vsel %vm329, %v216, 0
    %v435 = vsel %vm329, %v217, 0
    %v438 = vsel %vm329, %v218, 0
    %v441 = vsel %vm329, %v219, 0
    %v444 = vsel %vm342, %v220, 0
    %446 = vmatprep.subr.mxu0 0.0
    %447 = vmatpush1.msra.mxu0 %v444
    %448 = vmatprep.subr.mxu0 0.0
    %449 = vmatpush1.msra.mxu0 0.0
    %450 = vmatprep.subr.mxu0 0.0
    %451 = vmatpush1.msra.mxu0 0.0
    %452 = vmatprep.subr.mxu0 0.0
    %453 = vmatpush1.msra.mxu0 0.0
    %454 = vmatprep.subr.mxu0 0.0
    %455 = vmatpush1.msra.mxu0 0.0
    %456 = vmatprep.subr.mxu0 0.0
    %457 = vmatpush1.msra.mxu0 0.0
    %458 = vmatprep.subr.mxu0 0.0
    %459 = vmatpush1.msra.mxu0 0.0
    %460 = vmatprep.subr.mxu0 0.0
    %461 = vmatpush1.msra.mxu0 0.0
    %462 = vmatprep.subr.mxu0 0.0
    %463 = vmatpush1.msra.mxu0 0.0
    %464 = vmatprep.subr.mxu0 0.0
    %465 = vmatpush1.msra.mxu0 0.0
    %466 = vmatprep.subr.mxu0 0.0
    %467 = vmatpush1.msra.mxu0 0.0
    %468 = vmatprep.subr.mxu0 0.0
    %469 = vmatpush1.msra.mxu0 0.0
    %470 = vmatprep.subr.mxu0 0.0
    %471 = vmatpush1.msra.mxu0 0.0
    %472 = vmatprep.subr.mxu0 0.0
    %473 = vmatpush1.msra.mxu0 0.0
    %474 = vmatprep.subr.mxu0 0.0
    %475 = vmatpush1.msra.mxu0 0.0
    %476 = vmatprep.subr.mxu0 0.0
    %477 = vmatpush1.msra.mxu0 0.0
    %478 = vmatprep.subr.mxu0 0.0
    %479 = vmatpush1.msra.mxu0 0.0
    %480 = vmatprep.subr.mxu0 0.0
    %481 = vmatpush1.msra.mxu0 0.0
    %482 = vmatprep.subr.mxu0 0.0
    %483 = vmatpush1.msra.mxu0 0.0
    %484 = vmatprep.subr.mxu0 0.0
    %485 = vmatpush1.msra.mxu0 0.0
    %486 = vmatprep.subr.mxu0 0.0
    %487 = vmatpush1.msra.mxu0 0.0
    %488 = vmatprep.subr.mxu0 0.0
    %489 = vmatpush1.msra.mxu0 0.0
    %490 = vmatprep.subr.mxu0 0.0
    %491 = vmatpush1.msra.mxu0 0.0
    %492 = vmatprep.subr.mxu0 0.0
    %493 = vmatpush1.msra.mxu0 0.0
    %494 = vmatprep.subr.mxu0 0.0
    %495 = vmatpush1.msra.mxu0 0.0
    %496 = vmatprep.subr.mxu0 0.0
    %497 = vmatpush1.msra.mxu0 0.0
    %498 = vmatprep.subr.mxu0 0.0
    %499 = vmatpush1.msra.mxu0 0.0
    %500 = vmatprep.subr.mxu0 0.0
    %501 = vmatpush1.msra.mxu0 0.0
    %502 = vmatprep.subr.mxu0 0.0
    %503 = vmatpush1.msra.mxu0 0.0
    %504 = vmatprep.subr.mxu0 0.0
    %505 = vmatpush1.msra.mxu0 0.0
    %506 = vmatprep.subr.mxu0 0.0
    %507 = vmatpush1.msra.mxu0 0.0
    %508 = vmatprep.subr.mxu0 0.0
    %509 = vmatpush1.msra.mxu0 0.0
    %510 = vmatprep.mubr.f32.mxu0 0.0
    %511 = vmatmul.mubr.f32.gmra.mrb[0].mxu0 %v432
    %v512 = vpop.f32.mrb[0].mxu0
    %v513 = vadd.f32 %v413, %v512
    %v514 = vpop.f32.mrb[0].mxu0
    %515 = vmatprep.mubr.f32.mxu0 0.0
    %516 = vmatmul.mubr.f32.gmra.mrb[0].mxu0 %v435
    %v517 = vpop.f32.mrb[0].mxu0
    %v518 = vadd.f32 %v418, %v517
    %v519 = vpop.f32.mrb[0].mxu0
    %520 = vmatprep.mubr.f32.mxu0 0.0
    %521 = vmatmul.mubr.f32.gmra.mrb[0].mxu0 %v438
    %v522 = vpop.f32.mrb[0].mxu0
    %v523 = vadd.f32 %v423, %v522
    %v524 = vpop.f32.mrb[0].mxu0
    %525 = vmatprep.mubr.f32.mxu0 0.0
    %526 = vmatmul.mubr.f32.gmra.mrb[0].mxu0 %v441
    %v527 = vpop.f32.mrb[0].mxu0
    %v528 = vadd.f32 %v428, %v527
    %v529 = vpop.f32.mrb[0].mxu0
    %530 = vdwg.mxu0
    %v531 = vlaneseq
    %v532 = vshrl.u32 %v531, 7
    %v533 = vsub.s32 0, %v532
    %v534 = vrot.slane %v226, %v533
    %v535 = vadd.f32 %v513, %v534
    %v536 = vadd.f32 %v518, %v534
    %v537 = vadd.f32 %v523, %v534
    %v538 = vadd.f32 %v528, %v534
    %539 = vst [vmem:[#allocation2] sm:$0xff] %v535
    %540 = vst [vmem:[#allocation2 + $0x8] sm:$0xff] %v536
    %541 = vst [vmem:[#allocation2 + $0x10] sm:$0xff] %v537
    %542 = vst [vmem:[#allocation2 + $0x18] sm:$0xff] %v538
    %v543 = vld [vmem:[#allocation2] sm:$0x3]
    %v545 = vsel %vm231, 0.0, 0
    %547 = vmatprep.subr.mxu0 0.0
    %548 = vmatpush1.msra.mxu0 %v222
    %549 = vmatprep.subr.mxu0 0.0
    %550 = vmatpush1.msra.mxu0 %v223
    %551 = vmatprep.subr.mxu0 0.0
    %552 = vmatpush1.msra.mxu0 %v224
    %553 = vmatprep.subr.mxu0 0.0
    %554 = vmatpush1.msra.mxu0 %v225
    %555 = vmatprep.subr.mxu0 0.0
    %556 = vmatpush1.msra.mxu0 0.0
    %557 = vmatprep.subr.mxu0 0.0
    %558 = vmatpush1.msra.mxu0 0.0
    %559 = vmatprep.subr.mxu0 0.0
    %560 = vmatpush1.msra.mxu0 0.0
    %561 = vmatprep.subr.mxu0 0.0
    %562 = vmatpush1.msra.mxu0 0.0
    %563 = vmatprep.subr.mxu0 0.0
    %564 = vmatpush1.msra.mxu0 0.0
    %565 = vmatprep.subr.mxu0 0.0
    %566 = vmatpush1.msra.mxu0 0.0
    %567 = vmatprep.subr.mxu0 0.0
    %568 = vmatpush1.msra.mxu0 0.0
    %569 = vmatprep.subr.mxu0 0.0
    %570 = vmatpush1.msra.mxu0 0.0
    %571 = vmatprep.subr.mxu0 0.0
    %572 = vmatpush1.msra.mxu0 0.0
    %573 = vmatprep.subr.mxu0 0.0
    %574 = vmatpush1.msra.mxu0 0.0
    %575 = vmatprep.subr.mxu0 0.0
    %576 = vmatpush1.msra.mxu0 0.0
    %577 = vmatprep.subr.mxu0 0.0
    %578 = vmatpush1.msra.mxu0 0.0
    %579 = vmatprep.subr.mxu0 0.0
    %580 = vmatpush1.msra.mxu0 0.0
    %581 = vmatprep.subr.mxu0 0.0
    %582 = vmatpush1.msra.mxu0 0.0
    %583 = vmatprep.subr.mxu0 0.0
    %584 = vmatpush1.msra.mxu0 0.0
    %585 = vmatprep.subr.mxu0 0.0
    %586 = vmatpush1.msra.mxu0 0.0
    %587 = vmatprep.subr.mxu0 0.0
    %588 = vmatpush1.msra.mxu0 0.0
    %589 = vmatprep.subr.mxu0 0.0
    %590 = vmatpush1.msra.mxu0 0.0
    %591 = vmatprep.subr.mxu0 0.0
    %592 = vmatpush1.msra.mxu0 0.0
    %593 = vmatprep.subr.mxu0 0.0
    %594 = vmatpush1.msra.mxu0 0.0
    %595 = vmatprep.subr.mxu0 0.0
    %596 = vmatpush1.msra.mxu0 0.0
    %597 = vmatprep.subr.mxu0 0.0
    %598 = vmatpush1.msra.mxu0 0.0
    %599 = vmatprep.subr.mxu0 0.0
    %600 = vmatpush1.msra.mxu0 0.0
    %601 = vmatprep.subr.mxu0 0.0
    %602 = vmatpush1.msra.mxu0 0.0
    %603 = vmatprep.subr.mxu0 0.0
    %604 = vmatpush1.msra.mxu0 0.0
    %605 = vmatprep.subr.mxu0 0.0
    %606 = vmatpush1.msra.mxu0 0.0
    %607 = vmatprep.subr.mxu0 0.0
    %608 = vmatpush1.msra.mxu0 0.0
    %609 = vmatprep.subr.mxu0 0.0
    %610 = vmatpush1.msra.mxu0 0.0
    %611 = vmatprep.mubr.f32.mxu0 0.0
    %612 = vmatmul.mubr.f32.gmra.mrb[0].mxu0 %v545
    %v613 = vpop.f32.mrb[0].mxu0
    %v614 = vadd.f32 %v543, %v613
    %v615 = vpop.f32.mrb[0].mxu0
    %616 = vdwg.mxu0
    %v617 = vxor.u32 %v614, 2147483648
    %v618 = vmul.f32 %v617, 1.442695
    %v619 = vpow.pop %v618
    %v620 = vadd.f32 %v619, 1.0
    %v621 = vrcp.pop %v620
    %v622 = vmul.f32 1.0, %v621
    %v623 = vtanh.pop %v614
    %v624 = vmul.f32 %v622, 0.0
    %626 = vrot.lane.b32.xlu0 %v623, 32
    %v627 = vpop.permute.xlu0 %626
    %v629 = vmul.f32 %v622, %v627
    %631 = vrot.lane.b32.xlu0 %v629, 32
    %v632 = vpop.permute.xlu0 %631
    %v634 = vadd.f32 %v624, %v632
    %v635 = vtanh.pop %v634
    %637 = vrot.lane.b32.xlu0 %v635, 32
    %v638 = vpop.permute.xlu0 %637
    %v640 = vmul.f32 %v622, %v638
    %642 = vrot.lane.b32.xlu0 %v640, 64
    %v643 = vpop.permute.xlu0 %642
    %vm645 = vcmask 254976
    %646 = vst.msk [vmem:[#allocation3] sm:$0x3] %vm645, %v643
    %v647 = vld [vmem:[#allocation2 + $0x2] sm:$0x3]
    %v648 = vsel %vm231, %v643, 0
    %650 = vmatprep.subr.mxu0 0.0
    %651 = vmatpush1.msra.mxu0 %v222
    %652 = vmatprep.subr.mxu0 0.0
    %653 = vmatpush1.msra.mxu0 %v223
    %654 = vmatprep.subr.mxu0 0.0
    %655 = vmatpush1.msra.mxu0 %v224
    %656 = vmatprep.subr.mxu0 0.0
    %657 = vmatpush1.msra.mxu0 %v225
    %658 = vmatprep.subr.mxu0 0.0
    %659 = vmatpush1.msra.mxu0 0.0
    %660 = vmatprep.subr.mxu0 0.0
    %661 = vmatpush1.msra.mxu0 0.0
    %662 = vmatprep.subr.mxu0 0.0
    %663 = vmatpush1.msra.mxu0 0.0
    %664 = vmatprep.subr.mxu0 0.0
    %665 = vmatpush1.msra.mxu0 0.0
    %666 = vmatprep.subr.mxu0 0.0
    %667 = vmatpush1.msra.mxu0 0.0
    %668 = vmatprep.subr.mxu0 0.0
    %669 = vmatpush1.msra.mxu0 0.0
    %670 = vmatprep.subr.mxu0 0.0
    %671 = vmatpush1.msra.mxu0 0.0
    %672 = vmatprep.subr.mxu0 0.0
    %673 = vmatpush1.msra.mxu0 0.0
    %674 = vmatprep.subr.mxu0 0.0
    %675 = vmatpush1.msra.mxu0 0.0
    %676 = vmatprep.subr.mxu0 0.0
    %677 = vmatpush1.msra.mxu0 0.0
    %678 = vmatprep.subr.mxu0 0.0
    %679 = vmatpush1.msra.mxu0 0.0
    %680 = vmatprep.subr.mxu0 0.0
    %681 = vmatpush1.msra.mxu0 0.0
    %682 = vmatprep.subr.mxu0 0.0
    %683 = vmatpush1.msra.mxu0 0.0
    %684 = vmatprep.subr.mxu0 0.0
    %685 = vmatpush1.msra.mxu0 0.0
    %686 = vmatprep.subr.mxu0 0.0
    %687 = vmatpush1.msra.mxu0 0.0
    %688 = vmatprep.subr.mxu0 0.0
    %689 = vmatpush1.msra.mxu0 0.0
    %690 = vmatprep.subr.mxu0 0.0
    %691 = vmatpush1.msra.mxu0 0.0
    %692 = vmatprep.subr.mxu0 0.0
    %693 = vmatpush1.msra.mxu0 0.0
    %694 = vmatprep.subr.mxu0 0.0
    %695 = vmatpush1.msra.mxu0 0.0
    %696 = vmatprep.subr.mxu0 0.0
    %697 = vmatpush1.msra.mxu0 0.0
    %698 = vmatprep.subr.mxu0 0.0
    %699 = vmatpush1.msra.mxu0 0.0
    %700 = vmatprep.subr.mxu0 0.0
    %701 = vmatpush1.msra.mxu0 0.0
    %702 = vmatprep.subr.mxu0 0.0
    %703 = vmatpush1.msra.mxu0 0.0
    %704 = vmatprep.subr.mxu0 0.0
    %705 = vmatpush1.msra.mxu0 0.0
    %706 = vmatprep.subr.mxu0 0.0
    %707 = vmatpush1.msra.mxu0 0.0
    %708 = vmatprep.subr.mxu0 0.0
    %709 = vmatpush1.msra.mxu0 0.0
    %710 = vmatprep.subr.mxu0 0.0
    %711 = vmatpush1.msra.mxu0 0.0
    %712 = vmatprep.subr.mxu0 0.0
    %713 = vmatpush1.msra.mxu0 0.0
    %714 = vmatprep.mubr.f32.mxu0 0.0
    %715 = vmatmul.mubr.f32.gmra.mrb[0].mxu0 %v648
    %v716 = vpop.f32.mrb[0].mxu0
    %v717 = vadd.f32 %v647, %v716
    %v718 = vpop.f32.mrb[0].mxu0
    %719 = vdwg.mxu0
    %v720 = vxor.u32 %v717, 2147483648
    %v721 = vmul.f32 %v720, 1.442695
    %v722 = vpow.pop %v721
    %v723 = vadd.f32 %v722, 1.0
    %v724 = vrcp.pop %v723
    %v725 = vmul.f32 1.0, %v724
    %v726 = vtanh.pop %v717
    %v727 = vmul.f32 %v725, %v634
    %729 = vrot.lane.b32.xlu0 %v726, 32
    %v730 = vpop.permute.xlu0 %729
    %v732 = vmul.f32 %v725, %v730
    %734 = vrot.lane.b32.xlu0 %v732, 32
    %v735 = vpop.permute.xlu0 %734
    %v737 = vadd.f32 %v727, %v735
    %v738 = vtanh.pop %v737
    %740 = vrot.lane.b32.xlu0 %v738, 32
    %v741 = vpop.permute.xlu0 %740
    %v743 = vmul.f32 %v725, %v741
    %745 = vrot.lane.b32.xlu0 %v743, 64
    %v746 = vpop.permute.xlu0 %745
    %748 = vst.msk [vmem:[#allocation3 + $0x2] sm:$0x3] %vm645, %v746
    %v749 = vld [vmem:[#allocation2 + $0x4] sm:$0x3]
    %v750 = vsel %vm231, %v746, 0
    %752 = vmatprep.subr.mxu0 0.0
    %753 = vmatpush1.msra.mxu0 %v222
    %754 = vmatprep.subr.mxu0 0.0
    %755 = vmatpush1.msra.mxu0 %v223
    %756 = vmatprep.subr.mxu0 0.0
    %757 = vmatpush1.msra.mxu0 %v224
    %758 = vmatprep.subr.mxu0 0.0
    %759 = vmatpush1.msra.mxu0 %v225
    %760 = vmatprep.subr.mxu0 0.0
    %761 = vmatpush1.msra.mxu0 0.0
    %762 = vmatprep.subr.mxu0 0.0
    %763 = vmatpush1.msra.mxu0 0.0
    %764 = vmatprep.subr.mxu0 0.0
    %765 = vmatpush1.msra.mxu0 0.0
    %766 = vmatprep.subr.mxu0 0.0
    %767 = vmatpush1.msra.mxu0 0.0
    %768 = vmatprep.subr.mxu0 0.0
    %769 = vmatpush1.msra.mxu0 0.0
    %770 = vmatprep.subr.mxu0 0.0
    %771 = vmatpush1.msra.mxu0 0.0
    %772 = vmatprep.subr.mxu0 0.0
    %773 = vmatpush1.msra.mxu0 0.0
    %774 = vmatprep.subr.mxu0 0.0
    %775 = vmatpush1.msra.mxu0 0.0
    %776 = vmatprep.subr.mxu0 0.0
    %777 = vmatpush1.msra.mxu0 0.0
    %778 = vmatprep.subr.mxu0 0.0
    %779 = vmatpush1.msra.mxu0 0.0
    %780 = vmatprep.subr.mxu0 0.0
    %781 = vmatpush1.msra.mxu0 0.0
    %782 = vmatprep.subr.mxu0 0.0
    %783 = vmatpush1.msra.mxu0 0.0
    %784 = vmatprep.subr.mxu0 0.0
    %785 = vmatpush1.msra.mxu0 0.0
    %786 = vmatprep.subr.mxu0 0.0
    %787 = vmatpush1.msra.mxu0 0.0
    %788 = vmatprep.subr.mxu0 0.0
    %789 = vmatpush1.msra.mxu0 0.0
    %790 = vmatprep.subr.mxu0 0.0
    %791 = vmatpush1.msra.mxu0 0.0
    %792 = vmatprep.subr.mxu0 0.0
    %793 = vmatpush1.msra.mxu0 0.0
    %794 = vmatprep.subr.mxu0 0.0
    %795 = vmatpush1.msra.mxu0 0.0
    %796 = vmatprep.subr.mxu0 0.0
    %797 = vmatpush1.msra.mxu0 0.0
    %798 = vmatprep.subr.mxu0 0.0
    %799 = vmatpush1.msra.mxu0 0.0
    %800 = vmatprep.subr.mxu0 0.0
    %801 = vmatpush1.msra.mxu0 0.0
    %802 = vmatprep.subr.mxu0 0.0
    %803 = vmatpush1.msra.mxu0 0.0
    %804 = vmatprep.subr.mxu0 0.0
    %805 = vmatpush1.msra.mxu0 0.0
    %806 = vmatprep.subr.mxu0 0.0
    %807 = vmatpush1.msra.mxu0 0.0
    %808 = vmatprep.subr.mxu0 0.0
    %809 = vmatpush1.msra.mxu0 0.0
    %810 = vmatprep.subr.mxu0 0.0
    %811 = vmatpush1.msra.mxu0 0.0
    %812 = vmatprep.subr.mxu0 0.0
    %813 = vmatpush1.msra.mxu0 0.0
    %814 = vmatprep.subr.mxu0 0.0
    %815 = vmatpush1.msra.mxu0 0.0
    %816 = vmatprep.mubr.f32.mxu0 0.0
    %817 = vmatmul.mubr.f32.gmra.mrb[0].mxu0 %v750
    %v818 = vpop.f32.mrb[0].mxu0
    %v819 = vadd.f32 %v749, %v818
    %v820 = vpop.f32.mrb[0].mxu0
    %821 = vdwg.mxu0
    %v822 = vxor.u32 %v819, 2147483648
    %v823 = vmul.f32 %v822, 1.442695
    %v824 = vpow.pop %v823
    %v825 = vadd.f32 %v824, 1.0
    %v826 = vrcp.pop %v825
    %v827 = vmul.f32 1.0, %v826
    %v828 = vtanh.pop %v819
    %v829 = vmul.f32 %v827, %v737
    %831 = vrot.lane.b32.xlu0 %v828, 32
    %v832 = vpop.permute.xlu0 %831
    %v834 = vmul.f32 %v827, %v832
    %836 = vrot.lane.b32.xlu0 %v834, 32
    %v837 = vpop.permute.xlu0 %836
    %v839 = vadd.f32 %v829, %v837
    %v840 = vtanh.pop %v839
    %842 = vrot.lane.b32.xlu0 %v840, 32
    %v843 = vpop.permute.xlu0 %842
    %v845 = vmul.f32 %v827, %v843
    %847 = vrot.lane.b32.xlu0 %v845, 64
    %v848 = vpop.permute.xlu0 %847
    %850 = vst.msk [vmem:[#allocation3 + $0x4] sm:$0x3] %vm645, %v848
    %v851 = vld [vmem:[#allocation2 + $0x6] sm:$0x3]
    %v852 = vsel %vm231, %v848, 0
    %854 = vmatprep.subr.mxu0 0.0
    %855 = vmatpush1.msra.mxu0 %v222
    %856 = vmatprep.subr.mxu0 0.0
    %857 = vmatpush1.msra.mxu0 %v223
    %858 = vmatprep.subr.mxu0 0.0
    %859 = vmatpush1.msra.mxu0 %v224
    %860 = vmatprep.subr.mxu0 0.0
    %861 = vmatpush1.msra.mxu0 %v225
    %862 = vmatprep.subr.mxu0 0.0
    %863 = vmatpush1.msra.mxu0 0.0
    %864 = vmatprep.subr.mxu0 0.0
    %865 = vmatpush1.msra.mxu0 0.0
    %866 = vmatprep.subr.mxu0 0.0
    %867 = vmatpush1.msra.mxu0 0.0
    %868 = vmatprep.subr.mxu0 0.0
    %869 = vmatpush1.msra.mxu0 0.0
    %870 = vmatprep.subr.mxu0 0.0
    %871 = vmatpush1.msra.mxu0 0.0
    %872 = vmatprep.subr.mxu0 0.0
    %873 = vmatpush1.msra.mxu0 0.0
    %874 = vmatprep.subr.mxu0 0.0
    %875 = vmatpush1.msra.mxu0 0.0
    %876 = vmatprep.subr.mxu0 0.0
    %877 = vmatpush1.msra.mxu0 0.0
    %878 = vmatprep.subr.mxu0 0.0
    %879 = vmatpush1.msra.mxu0 0.0
    %880 = vmatprep.subr.mxu0 0.0
    %881 = vmatpush1.msra.mxu0 0.0
    %882 = vmatprep.subr.mxu0 0.0
    %883 = vmatpush1.msra.mxu0 0.0
    %884 = vmatprep.subr.mxu0 0.0
    %885 = vmatpush1.msra.mxu0 0.0
    %886 = vmatprep.subr.mxu0 0.0
    %887 = vmatpush1.msra.mxu0 0.0
    %888 = vmatprep.subr.mxu0 0.0
    %889 = vmatpush1.msra.mxu0 0.0
    %890 = vmatprep.subr.mxu0 0.0
    %891 = vmatpush1.msra.mxu0 0.0
    %892 = vmatprep.subr.mxu0 0.0
    %893 = vmatpush1.msra.mxu0 0.0
    %894 = vmatprep.subr.mxu0 0.0
    %895 = vmatpush1.msra.mxu0 0.0
    %896 = vmatprep.subr.mxu0 0.0
    %897 = vmatpush1.msra.mxu0 0.0
    %898 = vmatprep.subr.mxu0 0.0
    %899 = vmatpush1.msra.mxu0 0.0
    %900 = vmatprep.subr.mxu0 0.0
    %901 = vmatpush1.msra.mxu0 0.0
    %902 = vmatprep.subr.mxu0 0.0
    %903 = vmatpush1.msra.mxu0 0.0
    %904 = vmatprep.subr.mxu0 0.0
    %905 = vmatpush1.msra.mxu0 0.0
    %906 = vmatprep.subr.mxu0 0.0
    %907 = vmatpush1.msra.mxu0 0.0
    %908 = vmatprep.subr.mxu0 0.0
    %909 = vmatpush1.msra.mxu0 0.0
    %910 = vmatprep.subr.mxu0 0.0
    %911 = vmatpush1.msra.mxu0 0.0
    %912 = vmatprep.subr.mxu0 0.0
    %913 = vmatpush1.msra.mxu0 0.0
    %914 = vmatprep.subr.mxu0 0.0
    %915 = vmatpush1.msra.mxu0 0.0
    %916 = vmatprep.subr.mxu0 0.0
    %917 = vmatpush1.msra.mxu0 0.0
    %918 = vmatprep.mubr.f32.mxu0 0.0
    %919 = vmatmul.mubr.f32.gmra.mrb[0].mxu0 %v852
    %v920 = vpop.f32.mrb[0].mxu0
    %v921 = vadd.f32 %v851, %v920
    %v922 = vpop.f32.mrb[0].mxu0
    %923 = vdwg.mxu0
    %v924 = vxor.u32 %v921, 2147483648
    %v925 = vmul.f32 %v924, 1.442695
    %v926 = vpow.pop %v925
    %v927 = vadd.f32 %v926, 1.0
    %v928 = vrcp.pop %v927
    %v929 = vmul.f32 1.0, %v928
    %v930 = vtanh.pop %v921
    %v931 = vmul.f32 %v929, %v839
    %933 = vrot.lane.b32.xlu0 %v930, 32
    %v934 = vpop.permute.xlu0 %933
    %v936 = vmul.f32 %v929, %v934
    %938 = vrot.lane.b32.xlu0 %v936, 32
    %v939 = vpop.permute.xlu0 %938
    %v941 = vadd.f32 %v931, %v939
    %v942 = vtanh.pop %v941
    %944 = vrot.lane.b32.xlu0 %v942, 32
    %v945 = vpop.permute.xlu0 %944
    %v947 = vmul.f32 %v929, %v945
    %949 = vrot.lane.b32.xlu0 %v947, 64
    %v950 = vpop.permute.xlu0 %949
    %952 = vst.msk [vmem:[#allocation3 + $0x6] sm:$0x3] %vm645, %v950
    %v953 = vld [vmem:[#allocation2 + $0x8] sm:$0x3]
    %v954 = vsel %vm231, %v950, 0
    %956 = vmatprep.subr.mxu0 0.0
    %957 = vmatpush1.msra.mxu0 %v222
    %958 = vmatprep.subr.mxu0 0.0
    %959 = vmatpush1.msra.mxu0 %v223
    %960 = vmatprep.subr.mxu0 0.0
    %961 = vmatpush1.msra.mxu0 %v224
    %962 = vmatprep.subr.mxu0 0.0
    %963 = vmatpush1.msra.mxu0 %v225
    %964 = vmatprep.subr.mxu0 0.0
    %965 = vmatpush1.msra.mxu0 0.0
    %966 = vmatprep.subr.mxu0 0.0
    %967 = vmatpush1.msra.mxu0 0.0
    %968 = vmatprep.subr.mxu0 0.0
    %969 = vmatpush1.msra.mxu0 0.0
    %970 = vmatprep.subr.mxu0 0.0
    %971 = vmatpush1.msra.mxu0 0.0
    %972 = vmatprep.subr.mxu0 0.0
    %973 = vmatpush1.msra.mxu0 0.0
    %974 = vmatprep.subr.mxu0 0.0
    %975 = vmatpush1.msra.mxu0 0.0
    %976 = vmatprep.subr.mxu0 0.0
    %977 = vmatpush1.msra.mxu0 0.0
    %978 = vmatprep.subr.mxu0 0.0
    %979 = vmatpush1.msra.mxu0 0.0
    %980 = vmatprep.subr.mxu0 0.0
    %981 = vmatpush1.msra.mxu0 0.0
    %982 = vmatprep.subr.mxu0 0.0
    %983 = vmatpush1.msra.mxu0 0.0
    %984 = vmatprep.subr.mxu0 0.0
    %985 = vmatpush1.msra.mxu0 0.0
    %986 = vmatprep.subr.mxu0 0.0
    %987 = vmatpush1.msra.mxu0 0.0
    %988 = vmatprep.subr.mxu0 0.0
    %989 = vmatpush1.msra.mxu0 0.0
    %990 = vmatprep.subr.mxu0 0.0
    %991 = vmatpush1.msra.mxu0 0.0
    %992 = vmatprep.subr.mxu0 0.0
    %993 = vmatpush1.msra.mxu0 0.0
    %994 = vmatprep.subr.mxu0 0.0
    %995 = vmatpush1.msra.mxu0 0.0
    %996 = vmatprep.subr.mxu0 0.0
    %997 = vmatpush1.msra.mxu0 0.0
    %998 = vmatprep.subr.mxu0 0.0
    %999 = vmatpush1.msra.mxu0 0.0
    %1000 = vmatprep.subr.mxu0 0.0
    %1001 = vmatpush1.msra.mxu0 0.0
    %1002 = vmatprep.subr.mxu0 0.0
    %1003 = vmatpush1.msra.mxu0 0.0
    %1004 = vmatprep.subr.mxu0 0.0
    %1005 = vmatpush1.msra.mxu0 0.0
    %1006 = vmatprep.subr.mxu0 0.0
    %1007 = vmatpush1.msra.mxu0 0.0
    %1008 = vmatprep.subr.mxu0 0.0
    %1009 = vmatpush1.msra.mxu0 0.0
    %1010 = vmatprep.subr.mxu0 0.0
    %1011 = vmatpush1.msra.mxu0 0.0
    %1012 = vmatprep.subr.mxu0 0.0
    %1013 = vmatpush1.msra.mxu0 0.0
    %1014 = vmatprep.subr.mxu0 0.0
    %1015 = vmatpush1.msra.mxu0 0.0
    %1016 = vmatprep.subr.mxu0 0.0
    %1017 = vmatpush1.msra.mxu0 0.0
    %1018 = vmatprep.subr.mxu0 0.0
    %1019 = vmatpush1.msra.mxu0 0.0
    %1020 = vmatprep.mubr.f32.mxu0 0.0
    %1021 = vmatmul.mubr.f32.gmra.mrb[0].mxu0 %v954
    %v1022 = vpop.f32.mrb[0].mxu0
    %v1023 = vadd.f32 %v953, %v1022
    %v1024 = vpop.f32.mrb[0].mxu0
    %1025 = vdwg.mxu0
    %v1026 = vxor.u32 %v1023, 2147483648
    %v1027 = vmul.f32 %v1026, 1.442695
    %v1028 = vpow.pop %v1027
    %v1029 = vadd.f32 %v1028, 1.0
    %v1030 = vrcp.pop %v1029
    %v1031 = vmul.f32 1.0, %v1030
    %v1032 = vtanh.pop %v1023
    %v1033 = vmul.f32 %v1031, %v941
    %1035 = vrot.lane.b32.xlu0 %v1032, 32
    %v1036 = vpop.permute.xlu0 %1035
    %v1038 = vmul.f32 %v1031, %v1036
    %1040 = vrot.lane.b32.xlu0 %v1038, 32
    %v1041 = vpop.permute.xlu0 %1040
    %v1043 = vadd.f32 %v1033, %v1041
    %v1044 = vtanh.pop %v1043
    %1046 = vrot.lane.b32.xlu0 %v1044, 32
    %v1047 = vpop.permute.xlu0 %1046
    %v1049 = vmul.f32 %v1031, %v1047
    %1051 = vrot.lane.b32.xlu0 %v1049, 64
    %v1052 = vpop.permute.xlu0 %1051
    %1054 = vst.msk [vmem:[#allocation3 + $0x8] sm:$0x3] %vm645, %v1052
    %v1055 = vld [vmem:[#allocation2 + $0xa] sm:$0x3]
    %v1056 = vsel %vm231, %v1052, 0
    %1058 = vmatprep.subr.mxu0 0.0
    %1059 = vmatpush1.msra.mxu0 %v222
    %1060 = vmatprep.subr.mxu0 0.0
    %1061 = vmatpush1.msra.mxu0 %v223
    %1062 = vmatprep.subr.mxu0 0.0
    %1063 = vmatpush1.msra.mxu0 %v224
    %1064 = vmatprep.subr.mxu0 0.0
    %1065 = vmatpush1.msra.mxu0 %v225
    %1066 = vmatprep.subr.mxu0 0.0
    %1067 = vmatpush1.msra.mxu0 0.0
    %1068 = vmatprep.subr.mxu0 0.0
    %1069 = vmatpush1.msra.mxu0 0.0
    %1070 = vmatprep.subr.mxu0 0.0
    %1071 = vmatpush1.msra.mxu0 0.0
    %1072 = vmatprep.subr.mxu0 0.0
    %1073 = vmatpush1.msra.mxu0 0.0
    %1074 = vmatprep.subr.mxu0 0.0
    %1075 = vmatpush1.msra.mxu0 0.0
    %1076 = vmatprep.subr.mxu0 0.0
    %1077 = vmatpush1.msra.mxu0 0.0
    %1078 = vmatprep.subr.mxu0 0.0
    %1079 = vmatpush1.msra.mxu0 0.0
    %1080 = vmatprep.subr.mxu0 0.0
    %1081 = vmatpush1.msra.mxu0 0.0
    %1082 = vmatprep.subr.mxu0 0.0
    %1083 = vmatpush1.msra.mxu0 0.0
    %1084 = vmatprep.subr.mxu0 0.0
    %1085 = vmatpush1.msra.mxu0 0.0
    %1086 = vmatprep.subr.mxu0 0.0
    %1087 = vmatpush1.msra.mxu0 0.0
    %1088 = vmatprep.subr.mxu0 0.0
    %1089 = vmatpush1.msra.mxu0 0.0
    %1090 = vmatprep.subr.mxu0 0.0
    %1091 = vmatpush1.msra.mxu0 0.0
    %1092 = vmatprep.subr.mxu0 0.0
    %1093 = vmatpush1.msra.mxu0 0.0
    %1094 = vmatprep.subr.mxu0 0.0
    %1095 = vmatpush1.msra.mxu0 0.0
    %1096 = vmatprep.subr.mxu0 0.0
    %1097 = vmatpush1.msra.mxu0 0.0
    %1098 = vmatprep.subr.mxu0 0.0
    %1099 = vmatpush1.msra.mxu0 0.0
    %1100 = vmatprep.subr.mxu0 0.0
    %1101 = vmatpush1.msra.mxu0 0.0
    %1102 = vmatprep.subr.mxu0 0.0
    %1103 = vmatpush1.msra.mxu0 0.0
    %1104 = vmatprep.subr.mxu0 0.0
    %1105 = vmatpush1.msra.mxu0 0.0
    %1106 = vmatprep.subr.mxu0 0.0
    %1107 = vmatpush1.msra.mxu0 0.0
    %1108 = vmatprep.subr.mxu0 0.0
    %1109 = vmatpush1.msra.mxu0 0.0
    %1110 = vmatprep.subr.mxu0 0.0
    %1111 = vmatpush1.msra.mxu0 0.0
    %1112 = vmatprep.subr.mxu0 0.0
    %1113 = vmatpush1.msra.mxu0 0.0
    %1114 = vmatprep.subr.mxu0 0.0
    %1115 = vmatpush1.msra.mxu0 0.0
    %1116 = vmatprep.subr.mxu0 0.0
    %1117 = vmatpush1.msra.mxu0 0.0
    %1118 = vmatprep.subr.mxu0 0.0
    %1119 = vmatpush1.msra.mxu0 0.0
    %1120 = vmatprep.subr.mxu0 0.0
    %1121 = vmatpush1.msra.mxu0 0.0
    %1122 = vmatprep.mubr.f32.mxu0 0.0
    %1123 = vmatmul.mubr.f32.gmra.mrb[0].mxu0 %v1056
    %v1124 = vpop.f32.mrb[0].mxu0
    %v1125 = vadd.f32 %v1055, %v1124
    %v1126 = vpop.f32.mrb[0].mxu0
    %1127 = vdwg.mxu0
    %v1128 = vxor.u32 %v1125, 2147483648
    %v1129 = vmul.f32 %v1128, 1.442695
    %v1130 = vpow.pop %v1129
    %v1131 = vadd.f32 %v1130, 1.0
    %v1132 = vrcp.pop %v1131
    %v1133 = vmul.f32 1.0, %v1132
    %v1134 = vtanh.pop %v1125
    %v1135 = vmul.f32 %v1133, %v1043
    %1137 = vrot.lane.b32.xlu0 %v1134, 32
    %v1138 = vpop.permute.xlu0 %1137
    %v1140 = vmul.f32 %v1133, %v1138
    %1142 = vrot.lane.b32.xlu0 %v1140, 32
    %v1143 = vpop.permute.xlu0 %1142
    %v1145 = vadd.f32 %v1135, %v1143
    %v1146 = vtanh.pop %v1145
    %1148 = vrot.lane.b32.xlu0 %v1146, 32
    %v1149 = vpop.permute.xlu0 %1148
    %v1151 = vmul.f32 %v1133, %v1149
    %1153 = vrot.lane.b32.xlu0 %v1151, 64
    %v1154 = vpop.permute.xlu0 %1153
    %1156 = vst.msk [vmem:[#allocation3 + $0xa] sm:$0x3] %vm645, %v1154
    %v1157 = vld [vmem:[#allocation2 + $0xc] sm:$0x3]
    %v1158 = vsel %vm231, %v1154, 0
    %1160 = vmatprep.subr.mxu0 0.0
    %1161 = vmatpush1.msra.mxu0 %v222
    %1162 = vmatprep.subr.mxu0 0.0
    %1163 = vmatpush1.msra.mxu0 %v223
    %1164 = vmatprep.subr.mxu0 0.0
    %1165 = vmatpush1.msra.mxu0 %v224
    %1166 = vmatprep.subr.mxu0 0.0
    %1167 = vmatpush1.msra.mxu0 %v225
    %1168 = vmatprep.subr.mxu0 0.0
    %1169 = vmatpush1.msra.mxu0 0.0
    %1170 = vmatprep.subr.mxu0 0.0
    %1171 = vmatpush1.msra.mxu0 0.0
    %1172 = vmatprep.subr.mxu0 0.0
    %1173 = vmatpush1.msra.mxu0 0.0
    %1174 = vmatprep.subr.mxu0 0.0
    %1175 = vmatpush1.msra.mxu0 0.0
    %1176 = vmatprep.subr.mxu0 0.0
    %1177 = vmatpush1.msra.mxu0 0.0
    %1178 = vmatprep.subr.mxu0 0.0
    %1179 = vmatpush1.msra.mxu0 0.0
    %1180 = vmatprep.subr.mxu0 0.0
    %1181 = vmatpush1.msra.mxu0 0.0
    %1182 = vmatprep.subr.mxu0 0.0
    %1183 = vmatpush1.msra.mxu0 0.0
    %1184 = vmatprep.subr.mxu0 0.0
    %1185 = vmatpush1.msra.mxu0 0.0
    %1186 = vmatprep.subr.mxu0 0.0
    %1187 = vmatpush1.msra.mxu0 0.0
    %1188 = vmatprep.subr.mxu0 0.0
    %1189 = vmatpush1.msra.mxu0 0.0
    %1190 = vmatprep.subr.mxu0 0.0
    %1191 = vmatpush1.msra.mxu0 0.0
    %1192 = vmatprep.subr.mxu0 0.0
    %1193 = vmatpush1.msra.mxu0 0.0
    %1194 = vmatprep.subr.mxu0 0.0
    %1195 = vmatpush1.msra.mxu0 0.0
    %1196 = vmatprep.subr.mxu0 0.0
    %1197 = vmatpush1.msra.mxu0 0.0
    %1198 = vmatprep.subr.mxu0 0.0
    %1199 = vmatpush1.msra.mxu0 0.0
    %1200 = vmatprep.subr.mxu0 0.0
    %1201 = vmatpush1.msra.mxu0 0.0
    %1202 = vmatprep.subr.mxu0 0.0
    %1203 = vmatpush1.msra.mxu0 0.0
    %1204 = vmatprep.subr.mxu0 0.0
    %1205 = vmatpush1.msra.mxu0 0.0
    %1206 = vmatprep.subr.mxu0 0.0
    %1207 = vmatpush1.msra.mxu0 0.0
    %1208 = vmatprep.subr.mxu0 0.0
    %1209 = vmatpush1.msra.mxu0 0.0
    %1210 = vmatprep.subr.mxu0 0.0
    %1211 = vmatpush1.msra.mxu0 0.0
    %1212 = vmatprep.subr.mxu0 0.0
    %1213 = vmatpush1.msra.mxu0 0.0
    %1214 = vmatprep.subr.mxu0 0.0
    %1215 = vmatpush1.msra.mxu0 0.0
    %1216 = vmatprep.subr.mxu0 0.0
    %1217 = vmatpush1.msra.mxu0 0.0
    %1218 = vmatprep.subr.mxu0 0.0
    %1219 = vmatpush1.msra.mxu0 0.0
    %1220 = vmatprep.subr.mxu0 0.0
    %1221 = vmatpush1.msra.mxu0 0.0
    %1222 = vmatprep.subr.mxu0 0.0
    %1223 = vmatpush1.msra.mxu0 0.0
    %1224 = vmatprep.mubr.f32.mxu0 0.0
    %1225 = vmatmul.mubr.f32.gmra.mrb[0].mxu0 %v1158
    %v1226 = vpop.f32.mrb[0].mxu0
    %v1227 = vadd.f32 %v1157, %v1226
    %v1228 = vpop.f32.mrb[0].mxu0
    %1229 = vdwg.mxu0
    %v1230 = vxor.u32 %v1227, 2147483648
    %v1231 = vmul.f32 %v1230, 1.442695
    %v1232 = vpow.pop %v1231
    %v1233 = vadd.f32 %v1232, 1.0
    %v1234 = vrcp.pop %v1233
    %v1235 = vmul.f32 1.0, %v1234
    %v1236 = vtanh.pop %v1227
    %v1237 = vmul.f32 %v1235, %v1145
    %1239 = vrot.lane.b32.xlu0 %v1236, 32
    %v1240 = vpop.permute.xlu0 %1239
    %v1242 = vmul.f32 %v1235, %v1240
    %1244 = vrot.lane.b32.xlu0 %v1242, 32
    %v1245 = vpop.permute.xlu0 %1244
    %v1247 = vadd.f32 %v1237, %v1245
    %v1248 = vtanh.pop %v1247
    %1250 = vrot.lane.b32.xlu0 %v1248, 32
    %v1251 = vpop.permute.xlu0 %1250
    %v1253 = vmul.f32 %v1235, %v1251
    %1255 = vrot.lane.b32.xlu0 %v1253, 64
    %v1256 = vpop.permute.xlu0 %1255
    %1258 = vst.msk [vmem:[#allocation3 + $0xc] sm:$0x3] %vm645, %v1256
    %v1259 = vld [vmem:[#allocation2 + $0xe] sm:$0x3]
    %v1260 = vsel %vm231, %v1256, 0
    %1262 = vmatprep.subr.mxu0 0.0
    %1263 = vmatpush1.msra.mxu0 %v222
    %1264 = vmatprep.subr.mxu0 0.0
    %1265 = vmatpush1.msra.mxu0 %v223
    %1266 = vmatprep.subr.mxu0 0.0
    %1267 = vmatpush1.msra.mxu0 %v224
    %1268 = vmatprep.subr.mxu0 0.0
    %1269 = vmatpush1.msra.mxu0 %v225
    %1270 = vmatprep.subr.mxu0 0.0
    %1271 = vmatpush1.msra.mxu0 0.0
    %1272 = vmatprep.subr.mxu0 0.0
    %1273 = vmatpush1.msra.mxu0 0.0
    %1274 = vmatprep.subr.mxu0 0.0
    %1275 = vmatpush1.msra.mxu0 0.0
    %1276 = vmatprep.subr.mxu0 0.0
    %1277 = vmatpush1.msra.mxu0 0.0
    %1278 = vmatprep.subr.mxu0 0.0
    %1279 = vmatpush1.msra.mxu0 0.0
    %1280 = vmatprep.subr.mxu0 0.0
    %1281 = vmatpush1.msra.mxu0 0.0
    %1282 = vmatprep.subr.mxu0 0.0
    %1283 = vmatpush1.msra.mxu0 0.0
    %1284 = vmatprep.subr.mxu0 0.0
    %1285 = vmatpush1.msra.mxu0 0.0
    %1286 = vmatprep.subr.mxu0 0.0
    %1287 = vmatpush1.msra.mxu0 0.0
    %1288 = vmatprep.subr.mxu0 0.0
    %1289 = vmatpush1.msra.mxu0 0.0
    %1290 = vmatprep.subr.mxu0 0.0
    %1291 = vmatpush1.msra.mxu0 0.0
    %1292 = vmatprep.subr.mxu0 0.0
    %1293 = vmatpush1.msra.mxu0 0.0
    %1294 = vmatprep.subr.mxu0 0.0
    %1295 = vmatpush1.msra.mxu0 0.0
    %1296 = vmatprep.subr.mxu0 0.0
    %1297 = vmatpush1.msra.mxu0 0.0
    %1298 = vmatprep.subr.mxu0 0.0
    %1299 = vmatpush1.msra.mxu0 0.0
    %1300 = vmatprep.subr.mxu0 0.0
    %1301 = vmatpush1.msra.mxu0 0.0
    %1302 = vmatprep.subr.mxu0 0.0
    %1303 = vmatpush1.msra.mxu0 0.0
    %1304 = vmatprep.subr.mxu0 0.0
    %1305 = vmatpush1.msra.mxu0 0.0
    %1306 = vmatprep.subr.mxu0 0.0
    %1307 = vmatpush1.msra.mxu0 0.0
    %1308 = vmatprep.subr.mxu0 0.0
    %1309 = vmatpush1.msra.mxu0 0.0
    %1310 = vmatprep.subr.mxu0 0.0
    %1311 = vmatpush1.msra.mxu0 0.0
    %1312 = vmatprep.subr.mxu0 0.0
    %1313 = vmatpush1.msra.mxu0 0.0
    %1314 = vmatprep.subr.mxu0 0.0
    %1315 = vmatpush1.msra.mxu0 0.0
    %1316 = vmatprep.subr.mxu0 0.0
    %1317 = vmatpush1.msra.mxu0 0.0
    %1318 = vmatprep.subr.mxu0 0.0
    %1319 = vmatpush1.msra.mxu0 0.0
    %1320 = vmatprep.subr.mxu0 0.0
    %1321 = vmatpush1.msra.mxu0 0.0
    %1322 = vmatprep.subr.mxu0 0.0
    %1323 = vmatpush1.msra.mxu0 0.0
    %1324 = vmatprep.subr.mxu0 0.0
    %1325 = vmatpush1.msra.mxu0 0.0
    %1326 = vmatprep.mubr.f32.mxu0 0.0
    %1327 = vmatmul.mubr.f32.gmra.mrb[0].mxu0 %v1260
    %v1328 = vpop.f32.mrb[0].mxu0
    %v1329 = vadd.f32 %v1259, %v1328
    %v1330 = vpop.f32.mrb[0].mxu0
    %1331 = vdwg.mxu0
    %v1332 = vxor.u32 %v1329, 2147483648
    %v1333 = vmul.f32 %v1332, 1.442695
    %v1334 = vpow.pop %v1333
    %v1335 = vadd.f32 %v1334, 1.0
    %v1336 = vrcp.pop %v1335
    %v1337 = vmul.f32 1.0, %v1336
    %v1338 = vtanh.pop %v1329
    %v1339 = vmul.f32 %v1337, %v1247
    %1341 = vrot.lane.b32.xlu0 %v1338, 32
    %v1342 = vpop.permute.xlu0 %1341
    %v1344 = vmul.f32 %v1337, %v1342
    %1346 = vrot.lane.b32.xlu0 %v1344, 32
    %v1347 = vpop.permute.xlu0 %1346
    %v1349 = vadd.f32 %v1339, %v1347
    %v1350 = vtanh.pop %v1349
    %1352 = vrot.lane.b32.xlu0 %v1350, 32
    %v1353 = vpop.permute.xlu0 %1352
    %v1355 = vmul.f32 %v1337, %v1353
    %1357 = vrot.lane.b32.xlu0 %v1355, 64
    %v1358 = vpop.permute.xlu0 %1357
    %1360 = vst.msk [vmem:[#allocation3 + $0xe] sm:$0x3] %vm645, %v1358
    %v1361 = vld [vmem:[#allocation2 + $0x10] sm:$0x3]
    %v1362 = vsel %vm231, %v1358, 0
    %1364 = vmatprep.subr.mxu0 0.0
    %1365 = vmatpush1.msra.mxu0 %v222
    %1366 = vmatprep.subr.mxu0 0.0
    %1367 = vmatpush1.msra.mxu0 %v223
    %1368 = vmatprep.subr.mxu0 0.0
    %1369 = vmatpush1.msra.mxu0 %v224
    %1370 = vmatprep.subr.mxu0 0.0
    %1371 = vmatpush1.msra.mxu0 %v225
    %1372 = vmatprep.subr.mxu0 0.0
    %1373 = vmatpush1.msra.mxu0 0.0
    %1374 = vmatprep.subr.mxu0 0.0
    %1375 = vmatpush1.msra.mxu0 0.0
    %1376 = vmatprep.subr.mxu0 0.0
    %1377 = vmatpush1.msra.mxu0 0.0
    %1378 = vmatprep.subr.mxu0 0.0
    %1379 = vmatpush1.msra.mxu0 0.0
    %1380 = vmatprep.subr.mxu0 0.0
    %1381 = vmatpush1.msra.mxu0 0.0
    %1382 = vmatprep.subr.mxu0 0.0
    %1383 = vmatpush1.msra.mxu0 0.0
    %1384 = vmatprep.subr.mxu0 0.0
    %1385 = vmatpush1.msra.mxu0 0.0
    %1386 = vmatprep.subr.mxu0 0.0
    %1387 = vmatpush1.msra.mxu0 0.0
    %1388 = vmatprep.subr.mxu0 0.0
    %1389 = vmatpush1.msra.mxu0 0.0
    %1390 = vmatprep.subr.mxu0 0.0
    %1391 = vmatpush1.msra.mxu0 0.0
    %1392 = vmatprep.subr.mxu0 0.0
    %1393 = vmatpush1.msra.mxu0 0.0
    %1394 = vmatprep.subr.mxu0 0.0
    %1395 = vmatpush1.msra.mxu0 0.0
    %1396 = vmatprep.subr.mxu0 0.0
    %1397 = vmatpush1.msra.mxu0 0.0
    %1398 = vmatprep.subr.mxu0 0.0
    %1399 = vmatpush1.msra.mxu0 0.0
    %1400 = vmatprep.subr.mxu0 0.0
    %1401 = vmatpush1.msra.mxu0 0.0
    %1402 = vmatprep.subr.mxu0 0.0
    %1403 = vmatpush1.msra.mxu0 0.0
    %1404 = vmatprep.subr.mxu0 0.0
    %1405 = vmatpush1.msra.mxu0 0.0
    %1406 = vmatprep.subr.mxu0 0.0
    %1407 = vmatpush1.msra.mxu0 0.0
    %1408 = vmatprep.subr.mxu0 0.0
    %1409 = vmatpush1.msra.mxu0 0.0
    %1410 = vmatprep.subr.mxu0 0.0
    %1411 = vmatpush1.msra.mxu0 0.0
    %1412 = vmatprep.subr.mxu0 0.0
    %1413 = vmatpush1.msra.mxu0 0.0
    %1414 = vmatprep.subr.mxu0 0.0
    %1415 = vmatpush1.msra.mxu0 0.0
    %1416 = vmatprep.subr.mxu0 0.0
    %1417 = vmatpush1.msra.mxu0 0.0
    %1418 = vmatprep.subr.mxu0 0.0
    %1419 = vmatpush1.msra.mxu0 0.0
    %1420 = vmatprep.subr.mxu0 0.0
    %1421 = vmatpush1.msra.mxu0 0.0
    %1422 = vmatprep.subr.mxu0 0.0
    %1423 = vmatpush1.msra.mxu0 0.0
    %1424 = vmatprep.subr.mxu0 0.0
    %1425 = vmatpush1.msra.mxu0 0.0
    %1426 = vmatprep.subr.mxu0 0.0
    %1427 = vmatpush1.msra.mxu0 0.0
    %1428 = vmatprep.mubr.f32.mxu0 0.0
    %1429 = vmatmul.mubr.f32.gmra.mrb[0].mxu0 %v1362
    %v1430 = vpop.f32.mrb[0].mxu0
    %v1431 = vadd.f32 %v1361, %v1430
    %v1432 = vpop.f32.mrb[0].mxu0
    %1433 = vdwg.mxu0
    %v1434 = vxor.u32 %v1431, 2147483648
    %v1435 = vmul.f32 %v1434, 1.442695
    %v1436 = vpow.pop %v1435
    %v1437 = vadd.f32 %v1436, 1.0
    %v1438 = vrcp.pop %v1437
    %v1439 = vmul.f32 1.0, %v1438
    %v1440 = vtanh.pop %v1431
    %v1441 = vmul.f32 %v1439, %v1349
    %1443 = vrot.lane.b32.xlu0 %v1440, 32
    %v1444 = vpop.permute.xlu0 %1443
    %v1446 = vmul.f32 %v1439, %v1444
    %1448 = vrot.lane.b32.xlu0 %v1446, 32
    %v1449 = vpop.permute.xlu0 %1448
    %v1451 = vadd.f32 %v1441, %v1449
    %v1452 = vtanh.pop %v1451
    %1454 = vrot.lane.b32.xlu0 %v1452, 32
    %v1455 = vpop.permute.xlu0 %1454
    %v1457 = vmul.f32 %v1439, %v1455
    %1459 = vrot.lane.b32.xlu0 %v1457, 64
    %v1460 = vpop.permute.xlu0 %1459
    %1462 = vst.msk [vmem:[#allocation3 + $0x10] sm:$0x3] %vm645, %v1460
    %v1463 = vld [vmem:[#allocation2 + $0x12] sm:$0x3]
    %v1464 = vsel %vm231, %v1460, 0
    %1466 = vmatprep.subr.mxu0 0.0
    %1467 = vmatpush1.msra.mxu0 %v222
    %1468 = vmatprep.subr.mxu0 0.0
    %1469 = vmatpush1.msra.mxu0 %v223
    %1470 = vmatprep.subr.mxu0 0.0
    %1471 = vmatpush1.msra.mxu0 %v224
    %1472 = vmatprep.subr.mxu0 0.0
    %1473 = vmatpush1.msra.mxu0 %v225
    %1474 = vmatprep.subr.mxu0 0.0
    %1475 = vmatpush1.msra.mxu0 0.0
    %1476 = vmatprep.subr.mxu0 0.0
    %1477 = vmatpush1.msra.mxu0 0.0
    %1478 = vmatprep.subr.mxu0 0.0
    %1479 = vmatpush1.msra.mxu0 0.0
    %1480 = vmatprep.subr.mxu0 0.0
    %1481 = vmatpush1.msra.mxu0 0.0
    %1482 = vmatprep.subr.mxu0 0.0
    %1483 = vmatpush1.msra.mxu0 0.0
    %1484 = vmatprep.subr.mxu0 0.0
    %1485 = vmatpush1.msra.mxu0 0.0
    %1486 = vmatprep.subr.mxu0 0.0
    %1487 = vmatpush1.msra.mxu0 0.0
    %1488 = vmatprep.subr.mxu0 0.0
    %1489 = vmatpush1.msra.mxu0 0.0
    %1490 = vmatprep.subr.mxu0 0.0
    %1491 = vmatpush1.msra.mxu0 0.0
    %1492 = vmatprep.subr.mxu0 0.0
    %1493 = vmatpush1.msra.mxu0 0.0
    %1494 = vmatprep.subr.mxu0 0.0
    %1495 = vmatpush1.msra.mxu0 0.0
    %1496 = vmatprep.subr.mxu0 0.0
    %1497 = vmatpush1.msra.mxu0 0.0
    %1498 = vmatprep.subr.mxu0 0.0
    %1499 = vmatpush1.msra.mxu0 0.0
    %1500 = vmatprep.subr.mxu0 0.0
    %1501 = vmatpush1.msra.mxu0 0.0
    %1502 = vmatprep.subr.mxu0 0.0
    %1503 = vmatpush1.msra.mxu0 0.0
    %1504 = vmatprep.subr.mxu0 0.0
    %1505 = vmatpush1.msra.mxu0 0.0
    %1506 = vmatprep.subr.mxu0 0.0
    %1507 = vmatpush1.msra.mxu0 0.0
    %1508 = vmatprep.subr.mxu0 0.0
    %1509 = vmatpush1.msra.mxu0 0.0
    %1510 = vmatprep.subr.mxu0 0.0
    %1511 = vmatpush1.msra.mxu0 0.0
    %1512 = vmatprep.subr.mxu0 0.0
    %1513 = vmatpush1.msra.mxu0 0.0
    %1514 = vmatprep.subr.mxu0 0.0
    %1515 = vmatpush1.msra.mxu0 0.0
    %1516 = vmatprep.subr.mxu0 0.0
    %1517 = vmatpush1.msra.mxu0 0.0
    %1518 = vmatprep.subr.mxu0 0.0
    %1519 = vmatpush1.msra.mxu0 0.0
    %1520 = vmatprep.subr.mxu0 0.0
    %1521 = vmatpush1.msra.mxu0 0.0
    %1522 = vmatprep.subr.mxu0 0.0
    %1523 = vmatpush1.msra.mxu0 0.0
    %1524 = vmatprep.subr.mxu0 0.0
    %1525 = vmatpush1.msra.mxu0 0.0
    %1526 = vmatprep.subr.mxu0 0.0
    %1527 = vmatpush1.msra.mxu0 0.0
    %1528 = vmatprep.subr.mxu0 0.0
    %1529 = vmatpush1.msra.mxu0 0.0
    %1530 = vmatprep.mubr.f32.mxu0 0.0
    %1531 = vmatmul.mubr.f32.gmra.mrb[0].mxu0 %v1464
    %v1532 = vpop.f32.mrb[0].mxu0
    %v1533 = vadd.f32 %v1463, %v1532
    %v1534 = vpop.f32.mrb[0].mxu0
    %1535 = vdwg.mxu0
    %v1536 = vxor.u32 %v1533, 2147483648
    %v1537 = vmul.f32 %v1536, 1.442695
    %v1538 = vpow.pop %v1537
    %v1539 = vadd.f32 %v1538, 1.0
    %v1540 = vrcp.pop %v1539
    %v1541 = vmul.f32 1.0, %v1540
    %v1542 = vtanh.pop %v1533
    %v1543 = vmul.f32 %v1541, %v1451
    %1545 = vrot.lane.b32.xlu0 %v1542, 32
    %v1546 = vpop.permute.xlu0 %1545
    %v1548 = vmul.f32 %v1541, %v1546
    %1550 = vrot.lane.b32.xlu0 %v1548, 32
    %v1551 = vpop.permute.xlu0 %1550
    %v1553 = vadd.f32 %v1543, %v1551
    %v1554 = vtanh.pop %v1553
    %1556 = vrot.lane.b32.xlu0 %v1554, 32
    %v1557 = vpop.permute.xlu0 %1556
    %v1559 = vmul.f32 %v1541, %v1557
    %1561 = vrot.lane.b32.xlu0 %v1559, 64
    %v1562 = vpop.permute.xlu0 %1561
    %1564 = vst.msk [vmem:[#allocation3 + $0x12] sm:$0x3] %vm645, %v1562
    %v1565 = vld [vmem:[#allocation2 + $0x14] sm:$0x3]
    %v1566 = vsel %vm231, %v1562, 0
    %1568 = vmatprep.subr.mxu0 0.0
    %1569 = vmatpush1.msra.mxu0 %v222
    %1570 = vmatprep.subr.mxu0 0.0
    %1571 = vmatpush1.msra.mxu0 %v223
    %1572 = vmatprep.subr.mxu0 0.0
    %1573 = vmatpush1.msra.mxu0 %v224
    %1574 = vmatprep.subr.mxu0 0.0
    %1575 = vmatpush1.msra.mxu0 %v225
    %1576 = vmatprep.subr.mxu0 0.0
    %1577 = vmatpush1.msra.mxu0 0.0
    %1578 = vmatprep.subr.mxu0 0.0
    %1579 = vmatpush1.msra.mxu0 0.0
    %1580 = vmatprep.subr.mxu0 0.0
    %1581 = vmatpush1.msra.mxu0 0.0
    %1582 = vmatprep.subr.mxu0 0.0
    %1583 = vmatpush1.msra.mxu0 0.0
    %1584 = vmatprep.subr.mxu0 0.0
    %1585 = vmatpush1.msra.mxu0 0.0
    %1586 = vmatprep.subr.mxu0 0.0
    %1587 = vmatpush1.msra.mxu0 0.0
    %1588 = vmatprep.subr.mxu0 0.0
    %1589 = vmatpush1.msra.mxu0 0.0
    %1590 = vmatprep.subr.mxu0 0.0
    %1591 = vmatpush1.msra.mxu0 0.0
    %1592 = vmatprep.subr.mxu0 0.0
    %1593 = vmatpush1.msra.mxu0 0.0
    %1594 = vmatprep.subr.mxu0 0.0
    %1595 = vmatpush1.msra.mxu0 0.0
    %1596 = vmatprep.subr.mxu0 0.0
    %1597 = vmatpush1.msra.mxu0 0.0
    %1598 = vmatprep.subr.mxu0 0.0
    %1599 = vmatpush1.msra.mxu0 0.0
    %1600 = vmatprep.subr.mxu0 0.0
    %1601 = vmatpush1.msra.mxu0 0.0
    %1602 = vmatprep.subr.mxu0 0.0
    %1603 = vmatpush1.msra.mxu0 0.0
    %1604 = vmatprep.subr.mxu0 0.0
    %1605 = vmatpush1.msra.mxu0 0.0
    %1606 = vmatprep.subr.mxu0 0.0
    %1607 = vmatpush1.msra.mxu0 0.0
    %1608 = vmatprep.subr.mxu0 0.0
    %1609 = vmatpush1.msra.mxu0 0.0
    %1610 = vmatprep.subr.mxu0 0.0
    %1611 = vmatpush1.msra.mxu0 0.0
    %1612 = vmatprep.subr.mxu0 0.0
    %1613 = vmatpush1.msra.mxu0 0.0
    %1614 = vmatprep.subr.mxu0 0.0
    %1615 = vmatpush1.msra.mxu0 0.0
    %1616 = vmatprep.subr.mxu0 0.0
    %1617 = vmatpush1.msra.mxu0 0.0
    %1618 = vmatprep.subr.mxu0 0.0
    %1619 = vmatpush1.msra.mxu0 0.0
    %1620 = vmatprep.subr.mxu0 0.0
    %1621 = vmatpush1.msra.mxu0 0.0
    %1622 = vmatprep.subr.mxu0 0.0
    %1623 = vmatpush1.msra.mxu0 0.0
    %1624 = vmatprep.subr.mxu0 0.0
    %1625 = vmatpush1.msra.mxu0 0.0
    %1626 = vmatprep.subr.mxu0 0.0
    %1627 = vmatpush1.msra.mxu0 0.0
    %1628 = vmatprep.subr.mxu0 0.0
    %1629 = vmatpush1.msra.mxu0 0.0
    %1630 = vmatprep.subr.mxu0 0.0
    %1631 = vmatpush1.msra.mxu0 0.0
    %1632 = vmatprep.mubr.f32.mxu0 0.0
    %1633 = vmatmul.mubr.f32.gmra.mrb[0].mxu0 %v1566
    %v1634 = vpop.f32.mrb[0].mxu0
    %v1635 = vadd.f32 %v1565, %v1634
    %v1636 = vpop.f32.mrb[0].mxu0
    %1637 = vdwg.mxu0
    %v1638 = vxor.u32 %v1635, 2147483648
    %v1639 = vmul.f32 %v1638, 1.442695
    %v1640 = vpow.pop %v1639
    %v1641 = vadd.f32 %v1640, 1.0
    %v1642 = vrcp.pop %v1641
    %v1643 = vmul.f32 1.0, %v1642
    %v1644 = vtanh.pop %v1635
    %v1645 = vmul.f32 %v1643, %v1553
    %1647 = vrot.lane.b32.xlu0 %v1644, 32
    %v1648 = vpop.permute.xlu0 %1647
    %v1650 = vmul.f32 %v1643, %v1648
    %1652 = vrot.lane.b32.xlu0 %v1650, 32
    %v1653 = vpop.permute.xlu0 %1652
    %v1655 = vadd.f32 %v1645, %v1653
    %v1656 = vtanh.pop %v1655
    %1658 = vrot.lane.b32.xlu0 %v1656, 32
    %v1659 = vpop.permute.xlu0 %1658
    %v1661 = vmul.f32 %v1643, %v1659
    %1663 = vrot.lane.b32.xlu0 %v1661, 64
    %v1664 = vpop.permute.xlu0 %1663
    %1666 = vst.msk [vmem:[#allocation3 + $0x14] sm:$0x3] %vm645, %v1664
    %v1667 = vld [vmem:[#allocation2 + $0x16] sm:$0x3]
    %v1668 = vsel %vm231, %v1664, 0
    %1670 = vmatprep.subr.mxu0 0.0
    %1671 = vmatpush1.msra.mxu0 %v222
    %1672 = vmatprep.subr.mxu0 0.0
    %1673 = vmatpush1.msra.mxu0 %v223
    %1674 = vmatprep.subr.mxu0 0.0
    %1675 = vmatpush1.msra.mxu0 %v224
    %1676 = vmatprep.subr.mxu0 0.0
    %1677 = vmatpush1.msra.mxu0 %v225
    %1678 = vmatprep.subr.mxu0 0.0
    %1679 = vmatpush1.msra.mxu0 0.0
    %1680 = vmatprep.subr.mxu0 0.0
    %1681 = vmatpush1.msra.mxu0 0.0
    %1682 = vmatprep.subr.mxu0 0.0
    %1683 = vmatpush1.msra.mxu0 0.0
    %1684 = vmatprep.subr.mxu0 0.0
    %1685 = vmatpush1.msra.mxu0 0.0
    %1686 = vmatprep.subr.mxu0 0.0
    %1687 = vmatpush1.msra.mxu0 0.0
    %1688 = vmatprep.subr.mxu0 0.0
    %1689 = vmatpush1.msra.mxu0 0.0
    %1690 = vmatprep.subr.mxu0 0.0
    %1691 = vmatpush1.msra.mxu0 0.0
    %1692 = vmatprep.subr.mxu0 0.0
    %1693 = vmatpush1.msra.mxu0 0.0
    %1694 = vmatprep.subr.mxu0 0.0
    %1695 = vmatpush1.msra.mxu0 0.0
    %1696 = vmatprep.subr.mxu0 0.0
    %1697 = vmatpush1.msra.mxu0 0.0
    %1698 = vmatprep.subr.mxu0 0.0
    %1699 = vmatpush1.msra.mxu0 0.0
    %1700 = vmatprep.subr.mxu0 0.0
    %1701 = vmatpush1.msra.mxu0 0.0
    %1702 = vmatprep.subr.mxu0 0.0
    %1703 = vmatpush1.msra.mxu0 0.0
    %1704 = vmatprep.subr.mxu0 0.0
    %1705 = vmatpush1.msra.mxu0 0.0
    %1706 = vmatprep.subr.mxu0 0.0
    %1707 = vmatpush1.msra.mxu0 0.0
    %1708 = vmatprep.subr.mxu0 0.0
    %1709 = vmatpush1.msra.mxu0 0.0
    %1710 = vmatprep.subr.mxu0 0.0
    %1711 = vmatpush1.msra.mxu0 0.0
    %1712 = vmatprep.subr.mxu0 0.0
    %1713 = vmatpush1.msra.mxu0 0.0
    %1714 = vmatprep.subr.mxu0 0.0
    %1715 = vmatpush1.msra.mxu0 0.0
    %1716 = vmatprep.subr.mxu0 0.0
    %1717 = vmatpush1.msra.mxu0 0.0
    %1718 = vmatprep.subr.mxu0 0.0
    %1719 = vmatpush1.msra.mxu0 0.0
    %1720 = vmatprep.subr.mxu0 0.0
    %1721 = vmatpush1.msra.mxu0 0.0
    %1722 = vmatprep.subr.mxu0 0.0
    %1723 = vmatpush1.msra.mxu0 0.0
    %1724 = vmatprep.subr.mxu0 0.0
    %1725 = vmatpush1.msra.mxu0 0.0
    %1726 = vmatprep.subr.mxu0 0.0
    %1727 = vmatpush1.msra.mxu0 0.0
    %1728 = vmatprep.subr.mxu0 0.0
    %1729 = vmatpush1.msra.mxu0 0.0
    %1730 = vmatprep.subr.mxu0 0.0
    %1731 = vmatpush1.msra.mxu0 0.0
    %1732 = vmatprep.subr.mxu0 0.0
    %1733 = vmatpush1.msra.mxu0 0.0
    %1734 = vmatprep.mubr.f32.mxu0 0.0
    %1735 = vmatmul.mubr.f32.gmra.mrb[0].mxu0 %v1668
    %v1736 = vpop.f32.mrb[0].mxu0
    %v1737 = vadd.f32 %v1667, %v1736
    %v1738 = vpop.f32.mrb[0].mxu0
    %1739 = vdwg.mxu0
    %v1740 = vxor.u32 %v1737, 2147483648
    %v1741 = vmul.f32 %v1740, 1.442695
    %v1742 = vpow.pop %v1741
    %v1743 = vadd.f32 %v1742, 1.0
    %v1744 = vrcp.pop %v1743
    %v1745 = vmul.f32 1.0, %v1744
    %v1746 = vtanh.pop %v1737
    %v1747 = vmul.f32 %v1745, %v1655
    %1749 = vrot.lane.b32.xlu0 %v1746, 32
    %v1750 = vpop.permute.xlu0 %1749
    %v1752 = vmul.f32 %v1745, %v1750
    %1754 = vrot.lane.b32.xlu0 %v1752, 32
    %v1755 = vpop.permute.xlu0 %1754
    %v1757 = vadd.f32 %v1747, %v1755
    %v1758 = vtanh.pop %v1757
    %1760 = vrot.lane.b32.xlu0 %v1758, 32
    %v1761 = vpop.permute.xlu0 %1760
    %v1763 = vmul.f32 %v1745, %v1761
    %1765 = vrot.lane.b32.xlu0 %v1763, 64
    %v1766 = vpop.permute.xlu0 %1765
    %1768 = vst.msk [vmem:[#allocation3 + $0x16] sm:$0x3] %vm645, %v1766
    %v1769 = vld [vmem:[#allocation2 + $0x18] sm:$0x3]
    %v1770 = vsel %vm231, %v1766, 0
    %1772 = vmatprep.subr.mxu0 0.0
    %1773 = vmatpush1.msra.mxu0 %v222
    %1774 = vmatprep.subr.mxu0 0.0
    %1775 = vmatpush1.msra.mxu0 %v223
    %1776 = vmatprep.subr.mxu0 0.0
    %1777 = vmatpush1.msra.mxu0 %v224
    %1778 = vmatprep.subr.mxu0 0.0
    %1779 = vmatpush1.msra.mxu0 %v225
    %1780 = vmatprep.subr.mxu0 0.0
    %1781 = vmatpush1.msra.mxu0 0.0
    %1782 = vmatprep.subr.mxu0 0.0
    %1783 = vmatpush1.msra.mxu0 0.0
    %1784 = vmatprep.subr.mxu0 0.0
    %1785 = vmatpush1.msra.mxu0 0.0
    %1786 = vmatprep.subr.mxu0 0.0
    %1787 = vmatpush1.msra.mxu0 0.0
    %1788 = vmatprep.subr.mxu0 0.0
    %1789 = vmatpush1.msra.mxu0 0.0
    %1790 = vmatprep.subr.mxu0 0.0
    %1791 = vmatpush1.msra.mxu0 0.0
    %1792 = vmatprep.subr.mxu0 0.0
    %1793 = vmatpush1.msra.mxu0 0.0
    %1794 = vmatprep.subr.mxu0 0.0
    %1795 = vmatpush1.msra.mxu0 0.0
    %1796 = vmatprep.subr.mxu0 0.0
    %1797 = vmatpush1.msra.mxu0 0.0
    %1798 = vmatprep.subr.mxu0 0.0
    %1799 = vmatpush1.msra.mxu0 0.0
    %1800 = vmatprep.subr.mxu0 0.0
    %1801 = vmatpush1.msra.mxu0 0.0
    %1802 = vmatprep.subr.mxu0 0.0
    %1803 = vmatpush1.msra.mxu0 0.0
    %1804 = vmatprep.subr.mxu0 0.0
    %1805 = vmatpush1.msra.mxu0 0.0
    %1806 = vmatprep.subr.mxu0 0.0
    %1807 = vmatpush1.msra.mxu0 0.0
    %1808 = vmatprep.subr.mxu0 0.0
    %1809 = vmatpush1.msra.mxu0 0.0
    %1810 = vmatprep.subr.mxu0 0.0
    %1811 = vmatpush1.msra.mxu0 0.0
    %1812 = vmatprep.subr.mxu0 0.0
    %1813 = vmatpush1.msra.mxu0 0.0
    %1814 = vmatprep.subr.mxu0 0.0
    %1815 = vmatpush1.msra.mxu0 0.0
    %1816 = vmatprep.subr.mxu0 0.0
    %1817 = vmatpush1.msra.mxu0 0.0
    %1818 = vmatprep.subr.mxu0 0.0
    %1819 = vmatpush1.msra.mxu0 0.0
    %1820 = vmatprep.subr.mxu0 0.0
    %1821 = vmatpush1.msra.mxu0 0.0
    %1822 = vmatprep.subr.mxu0 0.0
    %1823 = vmatpush1.msra.mxu0 0.0
    %1824 = vmatprep.subr.mxu0 0.0
    %1825 = vmatpush1.msra.mxu0 0.0
    %1826 = vmatprep.subr.mxu0 0.0
    %1827 = vmatpush1.msra.mxu0 0.0
    %1828 = vmatprep.subr.mxu0 0.0
    %1829 = vmatpush1.msra.mxu0 0.0
    %1830 = vmatprep.subr.mxu0 0.0
    %1831 = vmatpush1.msra.mxu0 0.0
    %1832 = vmatprep.subr.mxu0 0.0
    %1833 = vmatpush1.msra.mxu0 0.0
    %1834 = vmatprep.subr.mxu0 0.0
    %1835 = vmatpush1.msra.mxu0 0.0
    %1836 = vmatprep.mubr.f32.mxu0 0.0
    %1837 = vmatmul.mubr.f32.gmra.mrb[0].mxu0 %v1770
    %v1838 = vpop.f32.mrb[0].mxu0
    %v1839 = vadd.f32 %v1769, %v1838
    %v1840 = vpop.f32.mrb[0].mxu0
    %1841 = vdwg.mxu0
    %v1842 = vxor.u32 %v1839, 2147483648
    %v1843 = vmul.f32 %v1842, 1.442695
    %v1844 = vpow.pop %v1843
    %v1845 = vadd.f32 %v1844, 1.0
    %v1846 = vrcp.pop %v1845
    %v1847 = vmul.f32 1.0, %v1846
    %v1848 = vtanh.pop %v1839
    %v1849 = vmul.f32 %v1847, %v1757
    %1851 = vrot.lane.b32.xlu0 %v1848, 32
    %v1852 = vpop.permute.xlu0 %1851
    %v1854 = vmul.f32 %v1847, %v1852
    %1856 = vrot.lane.b32.xlu0 %v1854, 32
    %v1857 = vpop.permute.xlu0 %1856
    %v1859 = vadd.f32 %v1849, %v1857
    %v1860 = vtanh.pop %v1859
    %1862 = vrot.lane.b32.xlu0 %v1860, 32
    %v1863 = vpop.permute.xlu0 %1862
    %v1865 = vmul.f32 %v1847, %v1863
    %1867 = vrot.lane.b32.xlu0 %v1865, 64
    %v1868 = vpop.permute.xlu0 %1867
    %1870 = vst.msk [vmem:[#allocation3 + $0x18] sm:$0x3] %vm645, %v1868
    %v1871 = vld [vmem:[#allocation2 + $0x1a] sm:$0x3]
    %v1872 = vsel %vm231, %v1868, 0
    %1874 = vmatprep.subr.mxu0 0.0
    %1875 = vmatpush1.msra.mxu0 %v222
    %1876 = vmatprep.subr.mxu0 0.0
    %1877 = vmatpush1.msra.mxu0 %v223
    %1878 = vmatprep.subr.mxu0 0.0
    %1879 = vmatpush1.msra.mxu0 %v224
    %1880 = vmatprep.subr.mxu0 0.0
    %1881 = vmatpush1.msra.mxu0 %v225
    %1882 = vmatprep.subr.mxu0 0.0
    %1883 = vmatpush1.msra.mxu0 0.0
    %1884 = vmatprep.subr.mxu0 0.0
    %1885 = vmatpush1.msra.mxu0 0.0
    %1886 = vmatprep.subr.mxu0 0.0
    %1887 = vmatpush1.msra.mxu0 0.0
    %1888 = vmatprep.subr.mxu0 0.0
    %1889 = vmatpush1.msra.mxu0 0.0
    %1890 = vmatprep.subr.mxu0 0.0
    %1891 = vmatpush1.msra.mxu0 0.0
    %1892 = vmatprep.subr.mxu0 0.0
    %1893 = vmatpush1.msra.mxu0 0.0
    %1894 = vmatprep.subr.mxu0 0.0
    %1895 = vmatpush1.msra.mxu0 0.0
    %1896 = vmatprep.subr.mxu0 0.0
    %1897 = vmatpush1.msra.mxu0 0.0
    %1898 = vmatprep.subr.mxu0 0.0
    %1899 = vmatpush1.msra.mxu0 0.0
    %1900 = vmatprep.subr.mxu0 0.0
    %1901 = vmatpush1.msra.mxu0 0.0
    %1902 = vmatprep.subr.mxu0 0.0
    %1903 = vmatpush1.msra.mxu0 0.0
    %1904 = vmatprep.subr.mxu0 0.0
    %1905 = vmatpush1.msra.mxu0 0.0
    %1906 = vmatprep.subr.mxu0 0.0
    %1907 = vmatpush1.msra.mxu0 0.0
    %1908 = vmatprep.subr.mxu0 0.0
    %1909 = vmatpush1.msra.mxu0 0.0
    %1910 = vmatprep.subr.mxu0 0.0
    %1911 = vmatpush1.msra.mxu0 0.0
    %1912 = vmatprep.subr.mxu0 0.0
    %1913 = vmatpush1.msra.mxu0 0.0
    %1914 = vmatprep.subr.mxu0 0.0
    %1915 = vmatpush1.msra.mxu0 0.0
    %1916 = vmatprep.subr.mxu0 0.0
    %1917 = vmatpush1.msra.mxu0 0.0
    %1918 = vmatprep.subr.mxu0 0.0
    %1919 = vmatpush1.msra.mxu0 0.0
    %1920 = vmatprep.subr.mxu0 0.0
    %1921 = vmatpush1.msra.mxu0 0.0
    %1922 = vmatprep.subr.mxu0 0.0
    %1923 = vmatpush1.msra.mxu0 0.0
    %1924 = vmatprep.subr.mxu0 0.0
    %1925 = vmatpush1.msra.mxu0 0.0
    %1926 = vmatprep.subr.mxu0 0.0
    %1927 = vmatpush1.msra.mxu0 0.0
    %1928 = vmatprep.subr.mxu0 0.0
    %1929 = vmatpush1.msra.mxu0 0.0
    %1930 = vmatprep.subr.mxu0 0.0
    %1931 = vmatpush1.msra.mxu0 0.0
    %1932 = vmatprep.subr.mxu0 0.0
    %1933 = vmatpush1.msra.mxu0 0.0
    %1934 = vmatprep.subr.mxu0 0.0
    %1935 = vmatpush1.msra.mxu0 0.0
    %1936 = vmatprep.subr.mxu0 0.0
    %1937 = vmatpush1.msra.mxu0 0.0
    %1938 = vmatprep.mubr.f32.mxu0 0.0
    %1939 = vmatmul.mubr.f32.gmra.mrb[0].mxu0 %v1872
    %v1940 = vpop.f32.mrb[0].mxu0
    %v1941 = vadd.f32 %v1871, %v1940
    %v1942 = vpop.f32.mrb[0].mxu0
    %1943 = vdwg.mxu0
    %v1944 = vxor.u32 %v1941, 2147483648
    %v1945 = vmul.f32 %v1944, 1.442695
    %v1946 = vpow.pop %v1945
    %v1947 = vadd.f32 %v1946, 1.0
    %v1948 = vrcp.pop %v1947
    %v1949 = vmul.f32 1.0, %v1948
    %v1950 = vtanh.pop %v1941
    %v1951 = vmul.f32 %v1949, %v1859
    %1953 = vrot.lane.b32.xlu0 %v1950, 32
    %v1954 = vpop.permute.xlu0 %1953
    %v1956 = vmul.f32 %v1949, %v1954
    %1958 = vrot.lane.b32.xlu0 %v1956, 32
    %v1959 = vpop.permute.xlu0 %1958
    %v1961 = vadd.f32 %v1951, %v1959
    %v1962 = vtanh.pop %v1961
    %1964 = vrot.lane.b32.xlu0 %v1962, 32
    %v1965 = vpop.permute.xlu0 %1964
    %v1967 = vmul.f32 %v1949, %v1965
    %1969 = vrot.lane.b32.xlu0 %v1967, 64
    %v1970 = vpop.permute.xlu0 %1969
    %1972 = vst.msk [vmem:[#allocation3 + $0x1a] sm:$0x3] %vm645, %v1970
    %v1973 = vld [vmem:[#allocation2 + $0x1c] sm:$0x3]
    %v1974 = vsel %vm231, %v1970, 0
    %1976 = vmatprep.subr.mxu0 0.0
    %1977 = vmatpush1.msra.mxu0 %v222
    %1978 = vmatprep.subr.mxu0 0.0
    %1979 = vmatpush1.msra.mxu0 %v223
    %1980 = vmatprep.subr.mxu0 0.0
    %1981 = vmatpush1.msra.mxu0 %v224
    %1982 = vmatprep.subr.mxu0 0.0
    %1983 = vmatpush1.msra.mxu0 %v225
    %1984 = vmatprep.subr.mxu0 0.0
    %1985 = vmatpush1.msra.mxu0 0.0
    %1986 = vmatprep.subr.mxu0 0.0
    %1987 = vmatpush1.msra.mxu0 0.0
    %1988 = vmatprep.subr.mxu0 0.0
    %1989 = vmatpush1.msra.mxu0 0.0
    %1990 = vmatprep.subr.mxu0 0.0
    %1991 = vmatpush1.msra.mxu0 0.0
    %1992 = vmatprep.subr.mxu0 0.0
    %1993 = vmatpush1.msra.mxu0 0.0
    %1994 = vmatprep.subr.mxu0 0.0
    %1995 = vmatpush1.msra.mxu0 0.0
    %1996 = vmatprep.subr.mxu0 0.0
    %1997 = vmatpush1.msra.mxu0 0.0
    %1998 = vmatprep.subr.mxu0 0.0
    %1999 = vmatpush1.msra.mxu0 0.0
    %2000 = vmatprep.subr.mxu0 0.0
    %2001 = vmatpush1.msra.mxu0 0.0
    %2002 = vmatprep.subr.mxu0 0.0
    %2003 = vmatpush1.msra.mxu0 0.0
    %2004 = vmatprep.subr.mxu0 0.0
    %2005 = vmatpush1.msra.mxu0 0.0
    %2006 = vmatprep.subr.mxu0 0.0
    %2007 = vmatpush1.msra.mxu0 0.0
    %2008 = vmatprep.subr.mxu0 0.0
    %2009 = vmatpush1.msra.mxu0 0.0
    %2010 = vmatprep.subr.mxu0 0.0
    %2011 = vmatpush1.msra.mxu0 0.0
    %2012 = vmatprep.subr.mxu0 0.0
    %2013 = vmatpush1.msra.mxu0 0.0
    %2014 = vmatprep.subr.mxu0 0.0
    %2015 = vmatpush1.msra.mxu0 0.0
    %2016 = vmatprep.subr.mxu0 0.0
    %2017 = vmatpush1.msra.mxu0 0.0
    %2018 = vmatprep.subr.mxu0 0.0
    %2019 = vmatpush1.msra.mxu0 0.0
    %2020 = vmatprep.subr.mxu0 0.0
    %2021 = vmatpush1.msra.mxu0 0.0
    %2022 = vmatprep.subr.mxu0 0.0
    %2023 = vmatpush1.msra.mxu0 0.0
    %2024 = vmatprep.subr.mxu0 0.0
    %2025 = vmatpush1.msra.mxu0 0.0
    %2026 = vmatprep.subr.mxu0 0.0
    %2027 = vmatpush1.msra.mxu0 0.0
    %2028 = vmatprep.subr.mxu0 0.0
    %2029 = vmatpush1.msra.mxu0 0.0
    %2030 = vmatprep.subr.mxu0 0.0
    %2031 = vmatpush1.msra.mxu0 0.0
    %2032 = vmatprep.subr.mxu0 0.0
    %2033 = vmatpush1.msra.mxu0 0.0
    %2034 = vmatprep.subr.mxu0 0.0
    %2035 = vmatpush1.msra.mxu0 0.0
    %2036 = vmatprep.subr.mxu0 0.0
    %2037 = vmatpush1.msra.mxu0 0.0
    %2038 = vmatprep.subr.mxu0 0.0
    %2039 = vmatpush1.msra.mxu0 0.0
    %2040 = vmatprep.mubr.f32.mxu0 0.0
    %2041 = vmatmul.mubr.f32.gmra.mrb[0].mxu0 %v1974
    %v2042 = vpop.f32.mrb[0].mxu0
    %v2043 = vadd.f32 %v1973, %v2042
    %v2044 = vpop.f32.mrb[0].mxu0
    %2045 = vdwg.mxu0
    %v2046 = vxor.u32 %v2043, 2147483648
    %v2047 = vmul.f32 %v2046, 1.442695
    %v2048 = vpow.pop %v2047
    %v2049 = vadd.f32 %v2048, 1.0
    %v2050 = vrcp.pop %v2049
    %v2051 = vmul.f32 1.0, %v2050
    %v2052 = vtanh.pop %v2043
    %v2053 = vmul.f32 %v2051, %v1961
    %2055 = vrot.lane.b32.xlu0 %v2052, 32
    %v2056 = vpop.permute.xlu0 %2055
    %v2058 = vmul.f32 %v2051, %v2056
    %2060 = vrot.lane.b32.xlu0 %v2058, 32
    %v2061 = vpop.permute.xlu0 %2060
    %v2063 = vadd.f32 %v2053, %v2061
    %v2064 = vtanh.pop %v2063
    %2066 = vrot.lane.b32.xlu0 %v2064, 32
    %v2067 = vpop.permute.xlu0 %2066
    %v2069 = vmul.f32 %v2051, %v2067
    %2071 = vrot.lane.b32.xlu0 %v2069, 64
    %v2072 = vpop.permute.xlu0 %2071
    %2074 = vst.msk [vmem:[#allocation3 + $0x1c] sm:$0x3] %vm645, %v2072
    %v2075 = vld [vmem:[#allocation2 + $0x1e] sm:$0x3]
    %v2076 = vsel %vm231, %v2072, 0
    %2078 = vmatprep.subr.mxu0 0.0
    %2079 = vmatpush1.msra.mxu0 %v222
    %2080 = vmatprep.subr.mxu0 0.0
    %2081 = vmatpush1.msra.mxu0 %v223
    %2082 = vmatprep.subr.mxu0 0.0
    %2083 = vmatpush1.msra.mxu0 %v224
    %2084 = vmatprep.subr.mxu0 0.0
    %2085 = vmatpush1.msra.mxu0 %v225
    %2086 = vmatprep.subr.mxu0 0.0
    %2087 = vmatpush1.msra.mxu0 0.0
    %2088 = vmatprep.subr.mxu0 0.0
    %2089 = vmatpush1.msra.mxu0 0.0
    %2090 = vmatprep.subr.mxu0 0.0
    %2091 = vmatpush1.msra.mxu0 0.0
    %2092 = vmatprep.subr.mxu0 0.0
    %2093 = vmatpush1.msra.mxu0 0.0
    %2094 = vmatprep.subr.mxu0 0.0
    %2095 = vmatpush1.msra.mxu0 0.0
    %2096 = vmatprep.subr.mxu0 0.0
    %2097 = vmatpush1.msra.mxu0 0.0
    %2098 = vmatprep.subr.mxu0 0.0
    %2099 = vmatpush1.msra.mxu0 0.0
    %2100 = vmatprep.subr.mxu0 0.0
    %2101 = vmatpush1.msra.mxu0 0.0
    %2102 = vmatprep.subr.mxu0 0.0
    %2103 = vmatpush1.msra.mxu0 0.0
    %2104 = vmatprep.subr.mxu0 0.0
    %2105 = vmatpush1.msra.mxu0 0.0
    %2106 = vmatprep.subr.mxu0 0.0
    %2107 = vmatpush1.msra.mxu0 0.0
    %2108 = vmatprep.subr.mxu0 0.0
    %2109 = vmatpush1.msra.mxu0 0.0
    %2110 = vmatprep.subr.mxu0 0.0
    %2111 = vmatpush1.msra.mxu0 0.0
    %2112 = vmatprep.subr.mxu0 0.0
    %2113 = vmatpush1.msra.mxu0 0.0
    %2114 = vmatprep.subr.mxu0 0.0
    %2115 = vmatpush1.msra.mxu0 0.0
    %2116 = vmatprep.subr.mxu0 0.0
    %2117 = vmatpush1.msra.mxu0 0.0
    %2118 = vmatprep.subr.mxu0 0.0
    %2119 = vmatpush1.msra.mxu0 0.0
    %2120 = vmatprep.subr.mxu0 0.0
    %2121 = vmatpush1.msra.mxu0 0.0
    %2122 = vmatprep.subr.mxu0 0.0
    %2123 = vmatpush1.msra.mxu0 0.0
    %2124 = vmatprep.subr.mxu0 0.0
    %2125 = vmatpush1.msra.mxu0 0.0
    %2126 = vmatprep.subr.mxu0 0.0
    %2127 = vmatpush1.msra.mxu0 0.0
    %2128 = vmatprep.subr.mxu0 0.0
    %2129 = vmatpush1.msra.mxu0 0.0
    %2130 = vmatprep.subr.mxu0 0.0
    %2131 = vmatpush1.msra.mxu0 0.0
    %2132 = vmatprep.subr.mxu0 0.0
    %2133 = vmatpush1.msra.mxu0 0.0
    %2134 = vmatprep.subr.mxu0 0.0
    %2135 = vmatpush1.msra.mxu0 0.0
    %2136 = vmatprep.subr.mxu0 0.0
    %2137 = vmatpush1.msra.mxu0 0.0
    %2138 = vmatprep.subr.mxu0 0.0
    %2139 = vmatpush1.msra.mxu0 0.0
    %2140 = vmatprep.subr.mxu0 0.0
    %2141 = vmatpush1.msra.mxu0 0.0
    %2142 = vmatprep.mubr.f32.mxu0 0.0
    %2143 = vmatmul.mubr.f32.gmra.mrb[0].mxu0 %v2076
    %v2144 = vpop.f32.mrb[0].mxu0
    %v2145 = vadd.f32 %v2075, %v2144
    %v2146 = vpop.f32.mrb[0].mxu0
    %2147 = vdwg.mxu0
    %v2148 = vxor.u32 %v2145, 2147483648
    %v2149 = vmul.f32 %v2148, 1.442695
    %v2150 = vpow.pop %v2149
    %v2151 = vadd.f32 %v2150, 1.0
    %v2152 = vrcp.pop %v2151
    %v2153 = vmul.f32 1.0, %v2152
    %v2154 = vtanh.pop %v2145
    %v2155 = vmul.f32 %v2153, %v2063
    %2157 = vrot.lane.b32.xlu0 %v2154, 32
    %v2158 = vpop.permute.xlu0 %2157
    %v2160 = vmul.f32 %v2153, %v2158
    %2162 = vrot.lane.b32.xlu0 %v2160, 32
    %v2163 = vpop.permute.xlu0 %2162
    %v2165 = vadd.f32 %v2155, %v2163
    %v2166 = vtanh.pop %v2165
    %2168 = vrot.lane.b32.xlu0 %v2166, 32
    %v2169 = vpop.permute.xlu0 %2168
    %v2171 = vmul.f32 %v2153, %v2169
    %2173 = vrot.lane.b32.xlu0 %v2171, 64
    %v2174 = vpop.permute.xlu0 %2173
    %2176 = vst.msk [vmem:[#allocation3 + $0x1e] sm:$0x3] %vm645, %v2174
    %v2177 = vld [vmem:[#allocation3] sm:$0xff]
    %v2178 = vld [vmem:[#allocation3 + $0x8] sm:$0xff]
    %v2179 = vld [vmem:[#allocation3 + $0x10] sm:$0xff]
    %v2180 = vld [vmem:[#allocation3 + $0x18] sm:$0xff]
    %s2181 = scalar_lea.vmem [#allocation6], 32
    %v2182 = vld [vmem:[%s2181] sm:$0xff]
    %v2183 = vld [vmem:[%s2181 + $0x8] sm:$0xff]
    %v2184 = vld [vmem:[%s2181 + $0x10] sm:$0xff]
    %v2185 = vld [vmem:[%s2181 + $0x18] sm:$0xff]
    %v2187 = vsel %vm231, %v2182, 0
    %v2190 = vsel %vm231, %v2183, 0
    %v2193 = vsel %vm231, %v2184, 0
    %v2196 = vsel %vm231, %v2185, 0
    %2198 = vmatprep.subr.mxu0 0.0
    %2199 = vmatpush1.msra.mxu0 %v2177
    %2200 = vmatprep.subr.mxu0 0.0
    %2201 = vmatpush1.msra.mxu0 %v2178
    %2202 = vmatprep.subr.mxu0 0.0
    %2203 = vmatpush1.msra.mxu0 %v2179
    %2204 = vmatprep.subr.mxu0 0.0
    %2205 = vmatpush1.msra.mxu0 %v2180
    %2206 = vmatprep.subr.mxu0 0.0
    %2207 = vmatpush1.msra.mxu0 0.0
    %2208 = vmatprep.subr.mxu0 0.0
    %2209 = vmatpush1.msra.mxu0 0.0
    %2210 = vmatprep.subr.mxu0 0.0
    %2211 = vmatpush1.msra.mxu0 0.0
    %2212 = vmatprep.subr.mxu0 0.0
    %2213 = vmatpush1.msra.mxu0 0.0
    %2214 = vmatprep.subr.mxu0 0.0
    %2215 = vmatpush1.msra.mxu0 0.0
    %2216 = vmatprep.subr.mxu0 0.0
    %2217 = vmatpush1.msra.mxu0 0.0
    %2218 = vmatprep.subr.mxu0 0.0
    %2219 = vmatpush1.msra.mxu0 0.0
    %2220 = vmatprep.subr.mxu0 0.0
    %2221 = vmatpush1.msra.mxu0 0.0
    %2222 = vmatprep.subr.mxu0 0.0
    %2223 = vmatpush1.msra.mxu0 0.0
    %2224 = vmatprep.subr.mxu0 0.0
    %2225 = vmatpush1.msra.mxu0 0.0
    %2226 = vmatprep.subr.mxu0 0.0
    %2227 = vmatpush1.msra.mxu0 0.0
    %2228 = vmatprep.subr.mxu0 0.0
    %2229 = vmatpush1.msra.mxu0 0.0
    %2230 = vmatprep.subr.mxu0 0.0
    %2231 = vmatpush1.msra.mxu0 0.0
    %2232 = vmatprep.subr.mxu0 0.0
    %2233 = vmatpush1.msra.mxu0 0.0
    %2234 = vmatprep.subr.mxu0 0.0
    %2235 = vmatpush1.msra.mxu0 0.0
    %2236 = vmatprep.subr.mxu0 0.0
    %2237 = vmatpush1.msra.mxu0 0.0
    %2238 = vmatprep.subr.mxu0 0.0
    %2239 = vmatpush1.msra.mxu0 0.0
    %2240 = vmatprep.subr.mxu0 0.0
    %2241 = vmatpush1.msra.mxu0 0.0
    %2242 = vmatprep.subr.mxu0 0.0
    %2243 = vmatpush1.msra.mxu0 0.0
    %2244 = vmatprep.subr.mxu0 0.0
    %2245 = vmatpush1.msra.mxu0 0.0
    %2246 = vmatprep.subr.mxu0 0.0
    %2247 = vmatpush1.msra.mxu0 0.0
    %2248 = vmatprep.subr.mxu0 0.0
    %2249 = vmatpush1.msra.mxu0 0.0
    %2250 = vmatprep.subr.mxu0 0.0
    %2251 = vmatpush1.msra.mxu0 0.0
    %2252 = vmatprep.subr.mxu0 0.0
    %2253 = vmatpush1.msra.mxu0 0.0
    %2254 = vmatprep.subr.mxu0 0.0
    %2255 = vmatpush1.msra.mxu0 0.0
    %2256 = vmatprep.subr.mxu0 0.0
    %2257 = vmatpush1.msra.mxu0 0.0
    %2258 = vmatprep.subr.mxu0 0.0
    %2259 = vmatpush1.msra.mxu0 0.0
    %2260 = vmatprep.subr.mxu0 0.0
    %2261 = vmatpush1.msra.mxu0 0.0
    %2262 = vmatprep.mubr.f32.mxu0 0.0
    %2263 = vmatmul.mubr.f32.gmra.mrb[0].mxu0 %v2187
    %v2264 = vpop.f32.mrb[0].mxu0
    %v2265 = vadd.f32 0.0, %v2264
    %v2266 = vpop.f32.mrb[0].mxu0
    %2267 = vmatprep.mubr.f32.mxu0 0.0
    %2268 = vmatmul.mubr.f32.gmra.mrb[0].mxu0 %v2190
    %v2269 = vpop.f32.mrb[0].mxu0
    %v2270 = vadd.f32 0.0, %v2269
    %v2271 = vpop.f32.mrb[0].mxu0
    %2272 = vmatprep.mubr.f32.mxu0 0.0
    %2273 = vmatmul.mubr.f32.gmra.mrb[0].mxu0 %v2193
    %v2274 = vpop.f32.mrb[0].mxu0
    %v2275 = vadd.f32 0.0, %v2274
    %v2276 = vpop.f32.mrb[0].mxu0
    %2277 = vmatprep.mubr.f32.mxu0 0.0
    %2278 = vmatmul.mubr.f32.gmra.mrb[0].mxu0 %v2196
    %v2279 = vpop.f32.mrb[0].mxu0
    %v2280 = vadd.f32 0.0, %v2279
    %v2281 = vpop.f32.mrb[0].mxu0
    %2282 = vdwg.mxu0
    %s2283 = scalar_lea.vmem [#allocation6], 64
    %v2284 = vld [vmem:[%s2283] sm:$0xff]
    %v2285 = vld [vmem:[%s2283 + $0x8] sm:$0xff]
    %v2286 = vld [vmem:[%s2283 + $0x10] sm:$0xff]
    %v2287 = vld [vmem:[%s2283 + $0x18] sm:$0xff]
    %v2289 = vsel %vm231, %v2284, 0
    %v2292 = vsel %vm231, %v2285, 0
    %v2295 = vsel %vm231, %v2286, 0
    %v2298 = vsel %vm231, %v2287, 0
    %2300 = vmatprep.subr.mxu0 0.0
    %2301 = vmatpush1.msra.mxu0 %v2177
    %2302 = vmatprep.subr.mxu0 0.0
    %2303 = vmatpush1.msra.mxu0 %v2178
    %2304 = vmatprep.subr.mxu0 0.0
    %2305 = vmatpush1.msra.mxu0 %v2179
    %2306 = vmatprep.subr.mxu0 0.0
    %2307 = vmatpush1.msra.mxu0 %v2180
    %2308 = vmatprep.subr.mxu0 0.0
    %2309 = vmatpush1.msra.mxu0 0.0
    %2310 = vmatprep.subr.mxu0 0.0
    %2311 = vmatpush1.msra.mxu0 0.0
    %2312 = vmatprep.subr.mxu0 0.0
    %2313 = vmatpush1.msra.mxu0 0.0
    %2314 = vmatprep.subr.mxu0 0.0
    %2315 = vmatpush1.msra.mxu0 0.0
    %2316 = vmatprep.subr.mxu0 0.0
    %2317 = vmatpush1.msra.mxu0 0.0
    %2318 = vmatprep.subr.mxu0 0.0
    %2319 = vmatpush1.msra.mxu0 0.0
    %2320 = vmatprep.subr.mxu0 0.0
    %2321 = vmatpush1.msra.mxu0 0.0
    %2322 = vmatprep.subr.mxu0 0.0
    %2323 = vmatpush1.msra.mxu0 0.0
    %2324 = vmatprep.subr.mxu0 0.0
    %2325 = vmatpush1.msra.mxu0 0.0
    %2326 = vmatprep.subr.mxu0 0.0
    %2327 = vmatpush1.msra.mxu0 0.0
    %2328 = vmatprep.subr.mxu0 0.0
    %2329 = vmatpush1.msra.mxu0 0.0
    %2330 = vmatprep.subr.mxu0 0.0
    %2331 = vmatpush1.msra.mxu0 0.0
    %2332 = vmatprep.subr.mxu0 0.0
    %2333 = vmatpush1.msra.mxu0 0.0
    %2334 = vmatprep.subr.mxu0 0.0
    %2335 = vmatpush1.msra.mxu0 0.0
    %2336 = vmatprep.subr.mxu0 0.0
    %2337 = vmatpush1.msra.mxu0 0.0
    %2338 = vmatprep.subr.mxu0 0.0
    %2339 = vmatpush1.msra.mxu0 0.0
    %2340 = vmatprep.subr.mxu0 0.0
    %2341 = vmatpush1.msra.mxu0 0.0
    %2342 = vmatprep.subr.mxu0 0.0
    %2343 = vmatpush1.msra.mxu0 0.0
    %2344 = vmatprep.subr.mxu0 0.0
    %2345 = vmatpush1.msra.mxu0 0.0
    %2346 = vmatprep.subr.mxu0 0.0
    %2347 = vmatpush1.msra.mxu0 0.0
    %2348 = vmatprep.subr.mxu0 0.0
    %2349 = vmatpush1.msra.mxu0 0.0
    %2350 = vmatprep.subr.mxu0 0.0
    %2351 = vmatpush1.msra.mxu0 0.0
    %2352 = vmatprep.subr.mxu0 0.0
    %2353 = vmatpush1.msra.mxu0 0.0
    %2354 = vmatprep.subr.mxu0 0.0
    %2355 = vmatpush1.msra.mxu0 0.0
    %2356 = vmatprep.subr.mxu0 0.0
    %2357 = vmatpush1.msra.mxu0 0.0
    %2358 = vmatprep.subr.mxu0 0.0
    %2359 = vmatpush1.msra.mxu0 0.0
    %2360 = vmatprep.subr.mxu0 0.0
    %2361 = vmatpush1.msra.mxu0 0.0
    %2362 = vmatprep.subr.mxu0 0.0
    %2363 = vmatpush1.msra.mxu0 0.0
    %2364 = vmatprep.mubr.f32.mxu0 0.0
    %2365 = vmatmul.mubr.f32.gmra.mrb[0].mxu0 %v2289
    %v2366 = vpop.f32.mrb[0].mxu0
    %v2367 = vadd.f32 0.0, %v2366
    %v2368 = vpop.f32.mrb[0].mxu0
    %2369 = vmatprep.mubr.f32.mxu0 0.0
    %2370 = vmatmul.mubr.f32.gmra.mrb[0].mxu0 %v2292
    %v2371 = vpop.f32.mrb[0].mxu0
    %v2372 = vadd.f32 0.0, %v2371
    %v2373 = vpop.f32.mrb[0].mxu0
    %2374 = vmatprep.mubr.f32.mxu0 0.0
    %2375 = vmatmul.mubr.f32.gmra.mrb[0].mxu0 %v2295
    %v2376 = vpop.f32.mrb[0].mxu0
    %v2377 = vadd.f32 0.0, %v2376
    %v2378 = vpop.f32.mrb[0].mxu0
    %2379 = vmatprep.mubr.f32.mxu0 0.0
    %2380 = vmatmul.mubr.f32.gmra.mrb[0].mxu0 %v2298
    %v2381 = vpop.f32.mrb[0].mxu0
    %v2382 = vadd.f32 0.0, %v2381
    %v2383 = vpop.f32.mrb[0].mxu0
    %2384 = vdwg.mxu0
    %v2385 = vlaneseq
    %v2386 = vand.u32 %v2385, 127
    %vm2387 = vcmp.lt.s32.totalorder %v2386, 16
    %v2388 = vsel %vm2387, %v2265, %v2367
    %v2389 = vsel %vm2387, %v2270, %v2372
    %v2390 = vsel %vm2387, %v2275, %v2377
    %v2391 = vsel %vm2387, %v2280, %v2382
    %v2392 = vld [vmem:[#allocation8] sm:$0xff]
    %v2393 = vld [vmem:[#allocation8 + $0x8] sm:$0x3]
    %v2394 = vsel %vm231, %v2388, 0.0
    %2395 = vadd.xlane.f32.xlu0 %v2394
    %v2396 = vpop.xlane.xlu0 %2395
    %v2397 = vsel %vm231, %v2389, 0.0
    %2398 = vadd.xlane.f32.xlu0 %v2397
    %v2399 = vpop.xlane.xlu0 %2398
    %v2400 = vsel %vm231, %v2390, 0.0
    %2401 = vadd.xlane.f32.xlu0 %v2400
    %v2402 = vpop.xlane.xlu0 %2401
    %v2403 = vsel %vm231, %v2391, 0.0
    %2404 = vadd.xlane.f32.xlu0 %v2403
    %v2405 = vpop.xlane.xlu0 %2404
    %v2406 = vrcp.pop 32.0
    %v2407 = vmul.f32 %v2396, %v2406
    %v2408 = vmul.f32 %v2399, %v2406
    %v2409 = vmul.f32 %v2402, %v2406
    %v2410 = vmul.f32 %v2405, %v2406
    %v2411 = vsub.f32 %v2388, %v2407
    %v2412 = vsub.f32 %v2389, %v2408
    %v2413 = vsub.f32 %v2390, %v2409
    %v2414 = vsub.f32 %v2391, %v2410
    %v2415 = vmul.f32 %v2411, %v2411
    %v2416 = vmul.f32 %v2412, %v2412
    %v2417 = vmul.f32 %v2413, %v2413
    %v2418 = vmul.f32 %v2414, %v2414
    %v2419 = vsel %vm231, %v2415, 0.0
    %2420 = vadd.xlane.f32.xlu0 %v2419
    %v2421 = vpop.xlane.xlu0 %2420
    %v2422 = vsel %vm231, %v2416, 0.0
    %2423 = vadd.xlane.f32.xlu0 %v2422
    %v2424 = vpop.xlane.xlu0 %2423
    %v2425 = vsel %vm231, %v2417, 0.0
    %2426 = vadd.xlane.f32.xlu0 %v2425
    %v2427 = vpop.xlane.xlu0 %2426
    %v2428 = vsel %vm231, %v2418, 0.0
    %2429 = vadd.xlane.f32.xlu0 %v2428
    %v2430 = vpop.xlane.xlu0 %2429
    %v2431 = vmul.f32 %v2421, %v2406
    %v2432 = vmul.f32 %v2424, %v2406
    %v2433 = vmul.f32 %v2427, %v2406
    %v2434 = vmul.f32 %v2430, %v2406
    %v2435 = vadd.f32 %v2431, 1e-05
    %v2436 = vadd.f32 %v2432, 1e-05
    %v2437 = vadd.f32 %v2433, 1e-05
    %v2438 = vadd.f32 %v2434, 1e-05
    %v2439 = vrsqrt.pop %v2435
    %v2440 = vrsqrt.pop %v2436
    %v2441 = vrsqrt.pop %v2437
    %v2442 = vrsqrt.pop %v2438
    %v2443 = vmul.f32 %v2411, %v2439
    %v2444 = vmul.f32 %v2412, %v2440
    %v2445 = vmul.f32 %v2413, %v2441
    %v2446 = vmul.f32 %v2414, %v2442
    %v2447 = vlaneseq
    %v2448 = vshrl.u32 %v2447, 7
    %v2449 = vsub.s32 0, %v2448
    %v2450 = vrot.slane %v2392, %v2449
    %v2451 = vmul.f32 %v2443, %v2450
    %v2452 = vmul.f32 %v2444, %v2450
    %v2453 = vmul.f32 %v2445, %v2450
    %v2454 = vmul.f32 %v2446, %v2450
    %v2455 = vlaneseq
    %v2456 = vshrl.u32 %v2455, 7
    %v2457 = vsub.s32 1, %v2456
    %v2458 = vrot.slane %v2392, %v2457
    %v2459 = vadd.f32 %v2451, %v2458
    %v2460 = vadd.f32 %v2452, %v2458
    %v2461 = vadd.f32 %v2453, %v2458
    %v2462 = vadd.f32 %v2454, %v2458
    %v2463 = vld [vmem:[#allocation9] sm:$0xff]
    %v2464 = vld [vmem:[#allocation9 + $0x8] sm:$0xff]
    %2467 = vrot.lane.b32.xlu0 %v2463, 96
    %v2468 = vpop.permute.xlu0 %2467
    %2469 = vrot.lane.b32.xlu0 %v2464, 96
    %v2470 = vpop.permute.xlu0 %2469
    %v2473 = vsel %vm231, %v2463, 0
    %v2475 = vsel %vm231, %v2464, 0
    %2477 = vmatprep.subr.mxu0 0.0
    %2478 = vmatpush1.msra.mxu0 %v2459
    %2479 = vmatprep.subr.mxu0 0.0
    %2480 = vmatpush1.msra.mxu0 %v2460
    %2481 = vmatprep.subr.mxu0 0.0
    %2482 = vmatpush1.msra.mxu0 %v2461
    %2483 = vmatprep.subr.mxu0 0.0
    %2484 = vmatpush1.msra.mxu0 %v2462
    %2485 = vmatprep.subr.mxu0 0.0
    %2486 = vmatpush1.msra.mxu0 0.0
    %2487 = vmatprep.subr.mxu0 0.0
    %2488 = vmatpush1.msra.mxu0 0.0
    %2489 = vmatprep.subr.mxu0 0.0
    %2490 = vmatpush1.msra.mxu0 0.0
    %2491 = vmatprep.subr.mxu0 0.0
    %2492 = vmatpush1.msra.mxu0 0.0
    %2493 = vmatprep.subr.mxu0 0.0
    %2494 = vmatpush1.msra.mxu0 0.0
    %2495 = vmatprep.subr.mxu0 0.0
    %2496 = vmatpush1.msra.mxu0 0.0
    %2497 = vmatprep.subr.mxu0 0.0
    %2498 = vmatpush1.msra.mxu0 0.0
    %2499 = vmatprep.subr.mxu0 0.0
    %2500 = vmatpush1.msra.mxu0 0.0
    %2501 = vmatprep.subr.mxu0 0.0
    %2502 = vmatpush1.msra.mxu0 0.0
    %2503 = vmatprep.subr.mxu0 0.0
    %2504 = vmatpush1.msra.mxu0 0.0
    %2505 = vmatprep.subr.mxu0 0.0
    %2506 = vmatpush1.msra.mxu0 0.0
    %2507 = vmatprep.subr.mxu0 0.0
    %2508 = vmatpush1.msra.mxu0 0.0
    %2509 = vmatprep.subr.mxu0 0.0
    %2510 = vmatpush1.msra.mxu0 0.0
    %2511 = vmatprep.subr.mxu0 0.0
    %2512 = vmatpush1.msra.mxu0 0.0
    %2513 = vmatprep.subr.mxu0 0.0
    %2514 = vmatpush1.msra.mxu0 0.0
    %2515 = vmatprep.subr.mxu0 0.0
    %2516 = vmatpush1.msra.mxu0 0.0
    %2517 = vmatprep.subr.mxu0 0.0
    %2518 = vmatpush1.msra.mxu0 0.0
    %2519 = vmatprep.subr.mxu0 0.0
    %2520 = vmatpush1.msra.mxu0 0.0
    %2521 = vmatprep.subr.mxu0 0.0
    %2522 = vmatpush1.msra.mxu0 0.0
    %2523 = vmatprep.subr.mxu0 0.0
    %2524 = vmatpush1.msra.mxu0 0.0
    %2525 = vmatprep.subr.mxu0 0.0
    %2526 = vmatpush1.msra.mxu0 0.0
    %2527 = vmatprep.subr.mxu0 0.0
    %2528 = vmatpush1.msra.mxu0 0.0
    %2529 = vmatprep.subr.mxu0 0.0
    %2530 = vmatpush1.msra.mxu0 0.0
    %2531 = vmatprep.subr.mxu0 0.0
    %2532 = vmatpush1.msra.mxu0 0.0
    %2533 = vmatprep.subr.mxu0 0.0
    %2534 = vmatpush1.msra.mxu0 0.0
    %2535 = vmatprep.subr.mxu0 0.0
    %2536 = vmatpush1.msra.mxu0 0.0
    %2537 = vmatprep.subr.mxu0 0.0
    %2538 = vmatpush1.msra.mxu0 0.0
    %2539 = vmatprep.subr.mxu0 0.0
    %2540 = vmatpush1.msra.mxu0 0.0
    %2541 = vmatprep.mubr.f32.mxu0 0.0
    %2542 = vmatmul.mubr.f32.gmra.mrb[0].mxu0 %v2473
    %v2543 = vpop.f32.mrb[0].mxu0
    %v2544 = vadd.f32 %v2468, %v2543
    %v2545 = vpop.f32.mrb[0].mxu0
    %2546 = vmatprep.mubr.f32.mxu0 0.0
    %2547 = vmatmul.mubr.f32.gmra.mrb[0].mxu0 %v2475
    %v2548 = vpop.f32.mrb[0].mxu0
    %v2549 = vadd.f32 %v2470, %v2548
    %v2550 = vpop.f32.mrb[0].mxu0
    %2551 = vdwg.mxu0
    %v2552 = vmul.f32 %v2544, 0.5
    %v2553 = vmul.f32 %v2549, 0.5
    %v2554 = vmul.f32 %v2544, 0.70710677
    %v2555 = vmul.f32 %v2549, 0.70710677
    %vm2556 = vcmp.ge.f32.partialorder %v2554, 0.0
    %vm2557 = vcmp.ge.f32.partialorder %v2555, 0.0
    %v2558 = vsel %vm2556, 1.0, -1.0
    %v2559 = vsel %vm2557, 1.0, -1.0
    %v2560 = vand.u32 2147483647, %v2554
    %v2561 = vand.u32 2147483647, %v2555
    %v2562 = vmul.f32 %v2560, 0.3275911
    %v2563 = vmul.f32 %v2561, 0.3275911
    %v2564 = vadd.f32 %v2562, 1.0
    %v2565 = vadd.f32 %v2563, 1.0
    %v2566 = vrcp.pop %v2564
    %v2567 = vrcp.pop %v2565
    %v2568 = vmul.f32 %v2566, 1.0614054
    %v2569 = vmul.f32 %v2567, 1.0614054
    %v2570 = vadd.f32 %v2568, -1.4531521
    %v2571 = vadd.f32 %v2569, -1.4531521
    %v2572 = vmul.f32 %v2570, %v2566
    %v2573 = vmul.f32 %v2571, %v2567
    %v2574 = vadd.f32 %v2572, 1.4214138
    %v2575 = vadd.f32 %v2573, 1.4214138
    %v2576 = vmul.f32 %v2574, %v2566
    %v2577 = vmul.f32 %v2575, %v2567
    %v2578 = vadd.f32 %v2576, -0.28449672
    %v2579 = vadd.f32 %v2577, -0.28449672
    %v2580 = vmul.f32 %v2578, %v2566
    %v2581 = vmul.f32 %v2579, %v2567
    %v2582 = vadd.f32 %v2580, 0.2548296
    %v2583 = vadd.f32 %v2581, 0.2548296
    %v2584 = vmul.f32 %v2582, %v2566
    %v2585 = vmul.f32 %v2583, %v2567
    %v2586 = vsub.f32 0.0, %v2560
    %v2587 = vsub.f32 0.0, %v2561
    %v2588 = vmul.f32 %v2586, %v2560
    %v2589 = vmul.f32 %v2587, %v2561
    %v2590 = vmul.f32 %v2588, 1.442695
    %v2591 = vpow.pop %v2590
    %v2592 = vmul.f32 %v2589, 1.442695
    %v2593 = vpow.pop %v2592
    %v2594 = vmul.f32 %v2584, %v2591
    %v2595 = vmul.f32 %v2585, %v2593
    %v2596 = vsub.f32 1.0, %v2594
    %v2597 = vsub.f32 1.0, %v2595
    %v2598 = vmul.f32 %v2558, %v2596
    %v2599 = vmul.f32 %v2559, %v2597
    %v2600 = vadd.f32 %v2598, 1.0
    %v2601 = vadd.f32 %v2599, 1.0
    %v2602 = vmul.f32 %v2552, %v2600
    %v2603 = vmul.f32 %v2553, %v2601
    %v2604 = vld [vmem:[#allocation11] sm:$0xff]
    %v2605 = vld [vmem:[#allocation11 + $0x8] sm:$0xff]
    %v2606 = vld [vmem:[#allocation11 + $0x10] sm:$0xff]
    %v2607 = vld [vmem:[#allocation11 + $0x18] sm:$0xff]
    %2612 = vrot.lane.b32.xlu0 %v2604, 112
    %v2613 = vpop.permute.xlu0 %2612
    %2614 = vrot.lane.b32.xlu0 %v2605, 112
    %v2615 = vpop.permute.xlu0 %2614
    %2616 = vrot.lane.b32.xlu0 %v2606, 112
    %v2617 = vpop.permute.xlu0 %2616
    %2618 = vrot.lane.b32.xlu0 %v2607, 112
    %v2619 = vpop.permute.xlu0 %2618
    %vm2624 = vcmask 130048
    %v2625 = vsel %vm2624, %v2604, 0
    %v2627 = vsel %vm2624, %v2605, 0
    %v2629 = vsel %vm2624, %v2606, 0
    %v2631 = vsel %vm2624, %v2607, 0
    %2633 = vmatprep.subr.mxu0 0.0
    %2634 = vmatpush1.msra.mxu0 %v2602
    %2635 = vmatprep.subr.mxu0 0.0
    %2636 = vmatpush1.msra.mxu0 %v2603
    %2637 = vmatprep.subr.mxu0 0.0
    %2638 = vmatpush1.msra.mxu0 0.0
    %2639 = vmatprep.subr.mxu0 0.0
    %2640 = vmatpush1.msra.mxu0 0.0
    %2641 = vmatprep.subr.mxu0 0.0
    %2642 = vmatpush1.msra.mxu0 0.0
    %2643 = vmatprep.subr.mxu0 0.0
    %2644 = vmatpush1.msra.mxu0 0.0
    %2645 = vmatprep.subr.mxu0 0.0
    %2646 = vmatpush1.msra.mxu0 0.0
    %2647 = vmatprep.subr.mxu0 0.0
    %2648 = vmatpush1.msra.mxu0 0.0
    %2649 = vmatprep.subr.mxu0 0.0
    %2650 = vmatpush1.msra.mxu0 0.0
    %2651 = vmatprep.subr.mxu0 0.0
    %2652 = vmatpush1.msra.mxu0 0.0
    %2653 = vmatprep.subr.mxu0 0.0
    %2654 = vmatpush1.msra.mxu0 0.0
    %2655 = vmatprep.subr.mxu0 0.0
    %2656 = vmatpush1.msra.mxu0 0.0
    %2657 = vmatprep.subr.mxu0 0.0
    %2658 = vmatpush1.msra.mxu0 0.0
    %2659 = vmatprep.subr.mxu0 0.0
    %2660 = vmatpush1.msra.mxu0 0.0
    %2661 = vmatprep.subr.mxu0 0.0
    %2662 = vmatpush1.msra.mxu0 0.0
    %2663 = vmatprep.subr.mxu0 0.0
    %2664 = vmatpush1.msra.mxu0 0.0
    %2665 = vmatprep.subr.mxu0 0.0
    %2666 = vmatpush1.msra.mxu0 0.0
    %2667 = vmatprep.subr.mxu0 0.0
    %2668 = vmatpush1.msra.mxu0 0.0
    %2669 = vmatprep.subr.mxu0 0.0
    %2670 = vmatpush1.msra.mxu0 0.0
    %2671 = vmatprep.subr.mxu0 0.0
    %2672 = vmatpush1.msra.mxu0 0.0
    %2673 = vmatprep.subr.mxu0 0.0
    %2674 = vmatpush1.msra.mxu0 0.0
    %2675 = vmatprep.subr.mxu0 0.0
    %2676 = vmatpush1.msra.mxu0 0.0
    %2677 = vmatprep.subr.mxu0 0.0
    %2678 = vmatpush1.msra.mxu0 0.0
    %2679 = vmatprep.subr.mxu0 0.0
    %2680 = vmatpush1.msra.mxu0 0.0
    %2681 = vmatprep.subr.mxu0 0.0
    %2682 = vmatpush1.msra.mxu0 0.0
    %2683 = vmatprep.subr.mxu0 0.0
    %2684 = vmatpush1.msra.mxu0 0.0
    %2685 = vmatprep.subr.mxu0 0.0
    %2686 = vmatpush1.msra.mxu0 0.0
    %2687 = vmatprep.subr.mxu0 0.0
    %2688 = vmatpush1.msra.mxu0 0.0
    %2689 = vmatprep.subr.mxu0 0.0
    %2690 = vmatpush1.msra.mxu0 0.0
    %2691 = vmatprep.subr.mxu0 0.0
    %2692 = vmatpush1.msra.mxu0 0.0
    %2693 = vmatprep.subr.mxu0 0.0
    %2694 = vmatpush1.msra.mxu0 0.0
    %2695 = vmatprep.subr.mxu0 0.0
    %2696 = vmatpush1.msra.mxu0 0.0
    %2697 = vmatprep.mubr.f32.mxu0 0.0
    %2698 = vmatmul.mubr.f32.gmra.mrb[0].mxu0 %v2625
    %v2699 = vpop.f32.mrb[0].mxu0
    %v2700 = vadd.f32 %v2613, %v2699
    %v2701 = vpop.f32.mrb[0].mxu0
    %2702 = vmatprep.mubr.f32.mxu0 0.0
    %2703 = vmatmul.mubr.f32.gmra.mrb[0].mxu0 %v2627
    %v2704 = vpop.f32.mrb[0].mxu0
    %v2705 = vadd.f32 %v2615, %v2704
    %v2706 = vpop.f32.mrb[0].mxu0
    %2707 = vmatprep.mubr.f32.mxu0 0.0
    %2708 = vmatmul.mubr.f32.gmra.mrb[0].mxu0 %v2629
    %v2709 = vpop.f32.mrb[0].mxu0
    %v2710 = vadd.f32 %v2617, %v2709
    %v2711 = vpop.f32.mrb[0].mxu0
    %2712 = vmatprep.mubr.f32.mxu0 0.0
    %2713 = vmatmul.mubr.f32.gmra.mrb[0].mxu0 %v2631
    %v2714 = vpop.f32.mrb[0].mxu0
    %v2715 = vadd.f32 %v2619, %v2714
    %v2716 = vpop.f32.mrb[0].mxu0
    %2717 = vdwg.mxu0
    %v2718 = vadd.f32 %v2388, %v2700
    %v2719 = vadd.f32 %v2389, %v2705
    %v2720 = vadd.f32 %v2390, %v2710
    %v2721 = vadd.f32 %v2391, %v2715
    %v2722 = vsel %vm231, %v2718, 0.0
    %2723 = vadd.xlane.f32.xlu0 %v2722
    %v2724 = vpop.xlane.xlu0 %2723
    %v2725 = vsel %vm231, %v2719, 0.0
    %2726 = vadd.xlane.f32.xlu0 %v2725
    %v2727 = vpop.xlane.xlu0 %2726
    %v2728 = vsel %vm231, %v2720, 0.0
    %2729 = vadd.xlane.f32.xlu0 %v2728
    %v2730 = vpop.xlane.xlu0 %2729
    %v2731 = vsel %vm231, %v2721, 0.0
    %2732 = vadd.xlane.f32.xlu0 %v2731
    %v2733 = vpop.xlane.xlu0 %2732
    %v2734 = vmul.f32 %v2724, %v2406
    %v2735 = vmul.f32 %v2727, %v2406
    %v2736 = vmul.f32 %v2730, %v2406
    %v2737 = vmul.f32 %v2733, %v2406
    %v2738 = vsub.f32 %v2718, %v2734
    %v2739 = vsub.f32 %v2719, %v2735
    %v2740 = vsub.f32 %v2720, %v2736
    %v2741 = vsub.f32 %v2721, %v2737
    %v2742 = vmul.f32 %v2738, %v2738
    %v2743 = vmul.f32 %v2739, %v2739
    %v2744 = vmul.f32 %v2740, %v2740
    %v2745 = vmul.f32 %v2741, %v2741
    %v2746 = vsel %vm231, %v2742, 0.0
    %2747 = vadd.xlane.f32.xlu0 %v2746
    %v2748 = vpop.xlane.xlu0 %2747
    %v2749 = vsel %vm231, %v2743, 0.0
    %2750 = vadd.xlane.f32.xlu0 %v2749
    %v2751 = vpop.xlane.xlu0 %2750
    %v2752 = vsel %vm231, %v2744, 0.0
    %2753 = vadd.xlane.f32.xlu0 %v2752
    %v2754 = vpop.xlane.xlu0 %2753
    %v2755 = vsel %vm231, %v2745, 0.0
    %2756 = vadd.xlane.f32.xlu0 %v2755
    %v2757 = vpop.xlane.xlu0 %2756
    %v2758 = vmul.f32 %v2748, %v2406
    %v2759 = vmul.f32 %v2751, %v2406
    %v2760 = vmul.f32 %v2754, %v2406
    %v2761 = vmul.f32 %v2757, %v2406
    %v2762 = vadd.f32 %v2758, 1e-05
    %v2763 = vadd.f32 %v2759, 1e-05
    %v2764 = vadd.f32 %v2760, 1e-05
    %v2765 = vadd.f32 %v2761, 1e-05
    %v2766 = vrsqrt.pop %v2762
    %v2767 = vrsqrt.pop %v2763
    %v2768 = vrsqrt.pop %v2764
    %v2769 = vrsqrt.pop %v2765
    %v2770 = vmul.f32 %v2738, %v2766
    %v2771 = vmul.f32 %v2739, %v2767
    %v2772 = vmul.f32 %v2740, %v2768
    %v2773 = vmul.f32 %v2741, %v2769
    %v2774 = vlaneseq
    %v2775 = vshrl.u32 %v2774, 7
    %v2776 = vsub.s32 2, %v2775
    %v2777 = vrot.slane %v2392, %v2776
    %v2778 = vmul.f32 %v2770, %v2777
    %v2779 = vmul.f32 %v2771, %v2777
    %v2780 = vmul.f32 %v2772, %v2777
    %v2781 = vmul.f32 %v2773, %v2777
    %v2782 = vlaneseq
    %v2783 = vshrl.u32 %v2782, 7
    %v2784 = vsub.s32 3, %v2783
    %v2785 = vrot.slane %v2392, %v2784
    %v2786 = vadd.f32 %v2778, %v2785
    %v2787 = vadd.f32 %v2779, %v2785
    %v2788 = vadd.f32 %v2780, %v2785
    %v2789 = vadd.f32 %v2781, %v2785
    %v2790 = vld [vmem:[#allocation12] sm:$0xff]
    %v2791 = vld [vmem:[#allocation12 + $0x8] sm:$0xff]
    %v2792 = vld [vmem:[#allocation12 + $0x10] sm:$0xff]
    %v2793 = vld [vmem:[#allocation12 + $0x18] sm:$0xff]
    %v2794 = vld [vmem:[#allocation12 + $0x20] sm:$0x1]
    %v2795 = vlaneseq
    %v2796 = vshrl.u32 %v2795, 7
    %v2797 = vsub.s32 0, %v2796
    %v2798 = vrot.slane %v2794, %v2797
    %v2800 = vsel %vm231, %v2786, 0
    %v2803 = vsel %vm231, %v2787, 0
    %v2806 = vsel %vm231, %v2788, 0
    %v2809 = vsel %vm231, %v2789, 0
    %2811 = vmatprep.subr.mxu0 0.0
    %2812 = vmatpush1.msra.mxu0 %v2790
    %2813 = vmatprep.subr.mxu0 0.0
    %2814 = vmatpush1.msra.mxu0 %v2791
    %2815 = vmatprep.subr.mxu0 0.0
    %2816 = vmatpush1.msra.mxu0 %v2792
    %2817 = vmatprep.subr.mxu0 0.0
    %2818 = vmatpush1.msra.mxu0 %v2793
    %2819 = vmatprep.subr.mxu0 0.0
    %2820 = vmatpush1.msra.mxu0 0.0
    %2821 = vmatprep.subr.mxu0 0.0
    %2822 = vmatpush1.msra.mxu0 0.0
    %2823 = vmatprep.subr.mxu0 0.0
    %2824 = vmatpush1.msra.mxu0 0.0
    %2825 = vmatprep.subr.mxu0 0.0
    %2826 = vmatpush1.msra.mxu0 0.0
    %2827 = vmatprep.subr.mxu0 0.0
    %2828 = vmatpush1.msra.mxu0 0.0
    %2829 = vmatprep.subr.mxu0 0.0
    %2830 = vmatpush1.msra.mxu0 0.0
    %2831 = vmatprep.subr.mxu0 0.0
    %2832 = vmatpush1.msra.mxu0 0.0
    %2833 = vmatprep.subr.mxu0 0.0
    %2834 = vmatpush1.msra.mxu0 0.0
    %2835 = vmatprep.subr.mxu0 0.0
    %2836 = vmatpush1.msra.mxu0 0.0
    %2837 = vmatprep.subr.mxu0 0.0
    %2838 = vmatpush1.msra.mxu0 0.0
    %2839 = vmatprep.subr.mxu0 0.0
    %2840 = vmatpush1.msra.mxu0 0.0
    %2841 = vmatprep.subr.mxu0 0.0
    %2842 = vmatpush1.msra.mxu0 0.0
    %2843 = vmatprep.subr.mxu0 0.0
    %2844 = vmatpush1.msra.mxu0 0.0
    %2845 = vmatprep.subr.mxu0 0.0
    %2846 = vmatpush1.msra.mxu0 0.0
    %2847 = vmatprep.subr.mxu0 0.0
    %2848 = vmatpush1.msra.mxu0 0.0
    %2849 = vmatprep.subr.mxu0 0.0
    %2850 = vmatpush1.msra.mxu0 0.0
    %2851 = vmatprep.subr.mxu0 0.0
    %2852 = vmatpush1.msra.mxu0 0.0
    %2853 = vmatprep.subr.mxu0 0.0
    %2854 = vmatpush1.msra.mxu0 0.0
    %2855 = vmatprep.subr.mxu0 0.0
    %2856 = vmatpush1.msra.mxu0 0.0
    %2857 = vmatprep.subr.mxu0 0.0
    %2858 = vmatpush1.msra.mxu0 0.0
    %2859 = vmatprep.subr.mxu0 0.0
    %2860 = vmatpush1.msra.mxu0 0.0
    %2861 = vmatprep.subr.mxu0 0.0
    %2862 = vmatpush1.msra.mxu0 0.0
    %2863 = vmatprep.subr.mxu0 0.0
    %2864 = vmatpush1.msra.mxu0 0.0
    %2865 = vmatprep.subr.mxu0 0.0
    %2866 = vmatpush1.msra.mxu0 0.0
    %2867 = vmatprep.subr.mxu0 0.0
    %2868 = vmatpush1.msra.mxu0 0.0
    %2869 = vmatprep.subr.mxu0 0.0
    %2870 = vmatpush1.msra.mxu0 0.0
    %2871 = vmatprep.subr.mxu0 0.0
    %2872 = vmatpush1.msra.mxu0 0.0
    %2873 = vmatprep.subr.mxu0 0.0
    %2874 = vmatpush1.msra.mxu0 0.0
    %2875 = vmatprep.mubr.f32.mxu0 0.0
    %2876 = vmatmul.mubr.f32.gmra.mrb[0].mxu0 %v2800
    %v2877 = vpop.f32.mrb[0].mxu0
    %v2878 = vadd.f32 %v2798, %v2877
    %v2879 = vpop.f32.mrb[0].mxu0
    %2880 = vmatprep.mubr.f32.mxu0 0.0
    %2881 = vmatmul.mubr.f32.gmra.mrb[0].mxu0 %v2803
    %v2882 = vpop.f32.mrb[0].mxu0
    %v2883 = vadd.f32 %v2798, %v2882
    %v2884 = vpop.f32.mrb[0].mxu0
    %2885 = vmatprep.mubr.f32.mxu0 0.0
    %2886 = vmatmul.mubr.f32.gmra.mrb[0].mxu0 %v2806
    %v2887 = vpop.f32.mrb[0].mxu0
    %v2888 = vadd.f32 %v2798, %v2887
    %v2889 = vpop.f32.mrb[0].mxu0
    %2890 = vmatprep.mubr.f32.mxu0 0.0
    %2891 = vmatmul.mubr.f32.gmra.mrb[0].mxu0 %v2809
    %v2892 = vpop.f32.mrb[0].mxu0
    %v2893 = vadd.f32 %v2798, %v2892
    %v2894 = vpop.f32.mrb[0].mxu0
    %2895 = vdwg.mxu0
    %v2896 = vmul.f32 %v2878, 0.5
    %v2897 = vmul.f32 %v2883, 0.5
    %v2898 = vmul.f32 %v2888, 0.5
    %v2899 = vmul.f32 %v2893, 0.5
    %v2900 = vmul.f32 %v2878, 0.70710677
    %v2901 = vmul.f32 %v2883, 0.70710677
    %v2902 = vmul.f32 %v2888, 0.70710677
    %v2903 = vmul.f32 %v2893, 0.70710677
    %vm2904 = vcmp.ge.f32.partialorder %v2900, 0.0
    %vm2905 = vcmp.ge.f32.partialorder %v2901, 0.0
    %vm2906 = vcmp.ge.f32.partialorder %v2902, 0.0
    %vm2907 = vcmp.ge.f32.partialorder %v2903, 0.0
    %v2908 = vsel %vm2904, 1.0, -1.0
    %v2909 = vsel %vm2905, 1.0, -1.0
    %v2910 = vsel %vm2906, 1.0, -1.0
    %v2911 = vsel %vm2907, 1.0, -1.0
    %v2912 = vand.u32 2147483647, %v2900
    %v2913 = vand.u32 2147483647, %v2901
    %v2914 = vand.u32 2147483647, %v2902
    %v2915 = vand.u32 2147483647, %v2903
    %v2916 = vmul.f32 %v2912, 0.3275911
    %v2917 = vmul.f32 %v2913, 0.3275911
    %v2918 = vmul.f32 %v2914, 0.3275911
    %v2919 = vmul.f32 %v2915, 0.3275911
    %v2920 = vadd.f32 %v2916, 1.0
    %v2921 = vadd.f32 %v2917, 1.0
    %v2922 = vadd.f32 %v2918, 1.0
    %v2923 = vadd.f32 %v2919, 1.0
    %v2924 = vrcp.pop %v2920
    %v2925 = vrcp.pop %v2921
    %v2926 = vrcp.pop %v2922
    %v2927 = vrcp.pop %v2923
    %v2928 = vmul.f32 %v2924, 1.0614054
    %v2929 = vmul.f32 %v2925, 1.0614054
    %v2930 = vmul.f32 %v2926, 1.0614054
    %v2931 = vmul.f32 %v2927, 1.0614054
    %v2932 = vadd.f32 %v2928, -1.4531521
    %v2933 = vadd.f32 %v2929, -1.4531521
    %v2934 = vadd.f32 %v2930, -1.4531521
    %v2935 = vadd.f32 %v2931, -1.4531521
    %v2936 = vmul.f32 %v2932, %v2924
    %v2937 = vmul.f32 %v2933, %v2925
    %v2938 = vmul.f32 %v2934, %v2926
    %v2939 = vmul.f32 %v2935, %v2927
    %v2940 = vadd.f32 %v2936, 1.4214138
    %v2941 = vadd.f32 %v2937, 1.4214138
    %v2942 = vadd.f32 %v2938, 1.4214138
    %v2943 = vadd.f32 %v2939, 1.4214138
    %v2944 = vmul.f32 %v2940, %v2924
    %v2945 = vmul.f32 %v2941, %v2925
    %v2946 = vmul.f32 %v2942, %v2926
    %v2947 = vmul.f32 %v2943, %v2927
    %v2948 = vadd.f32 %v2944, -0.28449672
    %v2949 = vadd.f32 %v2945, -0.28449672
    %v2950 = vadd.f32 %v2946, -0.28449672
    %v2951 = vadd.f32 %v2947, -0.28449672
    %v2952 = vmul.f32 %v2948, %v2924
    %v2953 = vmul.f32 %v2949, %v2925
    %v2954 = vmul.f32 %v2950, %v2926
    %v2955 = vmul.f32 %v2951, %v2927
    %v2956 = vadd.f32 %v2952, 0.2548296
    %v2957 = vadd.f32 %v2953, 0.2548296
    %v2958 = vadd.f32 %v2954, 0.2548296
    %v2959 = vadd.f32 %v2955, 0.2548296
    %v2960 = vmul.f32 %v2956, %v2924
    %v2961 = vmul.f32 %v2957, %v2925
    %v2962 = vmul.f32 %v2958, %v2926
    %v2963 = vmul.f32 %v2959, %v2927
    %v2964 = vsub.f32 0.0, %v2912
    %v2965 = vsub.f32 0.0, %v2913
    %v2966 = vsub.f32 0.0, %v2914
    %v2967 = vsub.f32 0.0, %v2915
    %v2968 = vmul.f32 %v2964, %v2912
    %v2969 = vmul.f32 %v2965, %v2913
    %v2970 = vmul.f32 %v2966, %v2914
    %v2971 = vmul.f32 %v2967, %v2915
    %v2972 = vmul.f32 %v2968, 1.442695
    %v2973 = vpow.pop %v2972
    %v2974 = vmul.f32 %v2969, 1.442695
    %v2975 = vpow.pop %v2974
    %v2976 = vmul.f32 %v2970, 1.442695
    %v2977 = vpow.pop %v2976
    %v2978 = vmul.f32 %v2971, 1.442695
    %v2979 = vpow.pop %v2978
    %v2980 = vmul.f32 %v2960, %v2973
    %v2981 = vmul.f32 %v2961, %v2975
    %v2982 = vmul.f32 %v2962, %v2977
    %v2983 = vmul.f32 %v2963, %v2979
    %v2984 = vsub.f32 1.0, %v2980
    %v2985 = vsub.f32 1.0, %v2981
    %v2986 = vsub.f32 1.0, %v2982
    %v2987 = vsub.f32 1.0, %v2983
    %v2988 = vmul.f32 %v2908, %v2984
    %v2989 = vmul.f32 %v2909, %v2985
    %v2990 = vmul.f32 %v2910, %v2986
    %v2991 = vmul.f32 %v2911, %v2987
    %v2992 = vadd.f32 %v2988, 1.0
    %v2993 = vadd.f32 %v2989, 1.0
    %v2994 = vadd.f32 %v2990, 1.0
    %v2995 = vadd.f32 %v2991, 1.0
    %v2996 = vmul.f32 %v2896, %v2992
    %v2997 = vmul.f32 %v2897, %v2993
    %v2998 = vmul.f32 %v2898, %v2994
    %v2999 = vmul.f32 %v2899, %v2995
    %v3000 = vld [vmem:[#allocation14] sm:$0xff]
    %v3001 = vld [vmem:[#allocation14 + $0x8] sm:$0xff]
    %v3002 = vld [vmem:[#allocation14 + $0x10] sm:$0xff]
    %v3003 = vld [vmem:[#allocation14 + $0x18] sm:$0xff]
    %v3004 = vld [vmem:[#allocation14 + $0x20] sm:$0xff]
    %v3005 = vld [vmem:[#allocation14 + $0x28] sm:$0xff]
    %v3006 = vld [vmem:[#allocation14 + $0x30] sm:$0xff]
    %v3007 = vld [vmem:[#allocation14 + $0x38] sm:$0xff]
    %v3008 = vld [vmem:[#allocation14 + $0x40] sm:$0x1]
    %vm3009 = vcmask 523264
    %v3011 = vsel %vm3009, %v2996, 0
    %v3014 = vsel %vm3009, %v2997, 0
    %v3017 = vsel %vm3009, %v2998, 0
    %v3020 = vsel %vm3009, %v2999, 0
    %3022 = vmatprep.subr.mxu0 0.0
    %3023 = vmatpush1.msra.mxu0 %v3000
    %3024 = vmatprep.subr.mxu0 0.0
    %3025 = vmatpush1.msra.mxu0 %v3001
    %3026 = vmatprep.subr.mxu0 0.0
    %3027 = vmatpush1.msra.mxu0 %v3002
    %3028 = vmatprep.subr.mxu0 0.0
    %3029 = vmatpush1.msra.mxu0 %v3003
    %3030 = vmatprep.subr.mxu0 0.0
    %3031 = vmatpush1.msra.mxu0 %v3004
    %3032 = vmatprep.subr.mxu0 0.0
    %3033 = vmatpush1.msra.mxu0 %v3005
    %3034 = vmatprep.subr.mxu0 0.0
    %3035 = vmatpush1.msra.mxu0 %v3006
    %3036 = vmatprep.subr.mxu0 0.0
    %3037 = vmatpush1.msra.mxu0 %v3007
    %3038 = vmatprep.subr.mxu0 0.0
    %3039 = vmatpush1.msra.mxu0 0.0
    %3040 = vmatprep.subr.mxu0 0.0
    %3041 = vmatpush1.msra.mxu0 0.0
    %3042 = vmatprep.subr.mxu0 0.0
    %3043 = vmatpush1.msra.mxu0 0.0
    %3044 = vmatprep.subr.mxu0 0.0
    %3045 = vmatpush1.msra.mxu0 0.0
    %3046 = vmatprep.subr.mxu0 0.0
    %3047 = vmatpush1.msra.mxu0 0.0
    %3048 = vmatprep.subr.mxu0 0.0
    %3049 = vmatpush1.msra.mxu0 0.0
    %3050 = vmatprep.subr.mxu0 0.0
    %3051 = vmatpush1.msra.mxu0 0.0
    %3052 = vmatprep.subr.mxu0 0.0
    %3053 = vmatpush1.msra.mxu0 0.0
    %3054 = vmatprep.subr.mxu0 0.0
    %3055 = vmatpush1.msra.mxu0 0.0
    %3056 = vmatprep.subr.mxu0 0.0
    %3057 = vmatpush1.msra.mxu0 0.0
    %3058 = vmatprep.subr.mxu0 0.0
    %3059 = vmatpush1.msra.mxu0 0.0
    %3060 = vmatprep.subr.mxu0 0.0
    %3061 = vmatpush1.msra.mxu0 0.0
    %3062 = vmatprep.subr.mxu0 0.0
    %3063 = vmatpush1.msra.mxu0 0.0
    %3064 = vmatprep.subr.mxu0 0.0
    %3065 = vmatpush1.msra.mxu0 0.0
    %3066 = vmatprep.subr.mxu0 0.0
    %3067 = vmatpush1.msra.mxu0 0.0
    %3068 = vmatprep.subr.mxu0 0.0
    %3069 = vmatpush1.msra.mxu0 0.0
    %3070 = vmatprep.subr.mxu0 0.0
    %3071 = vmatpush1.msra.mxu0 0.0
    %3072 = vmatprep.subr.mxu0 0.0
    %3073 = vmatpush1.msra.mxu0 0.0
    %3074 = vmatprep.subr.mxu0 0.0
    %3075 = vmatpush1.msra.mxu0 0.0
    %3076 = vmatprep.subr.mxu0 0.0
    %3077 = vmatpush1.msra.mxu0 0.0
    %3078 = vmatprep.subr.mxu0 0.0
    %3079 = vmatpush1.msra.mxu0 0.0
    %3080 = vmatprep.subr.mxu0 0.0
    %3081 = vmatpush1.msra.mxu0 0.0
    %3082 = vmatprep.subr.mxu0 0.0
    %3083 = vmatpush1.msra.mxu0 0.0
    %3084 = vmatprep.subr.mxu0 0.0
    %3085 = vmatpush1.msra.mxu0 0.0
    %3086 = vmatprep.mubr.f32.mxu0 0.0
    %3087 = vmatmul.mubr.f32.gmra.mrb[0].mxu0 %v3011
    %v3088 = vpop.f32.mrb[0].mxu0
    %v3089 = vadd.f32 0.0, %v3088
    %v3090 = vpop.f32.mrb[0].mxu0
    %3091 = vmatprep.mubr.f32.mxu0 0.0
    %3092 = vmatmul.mubr.f32.gmra.mrb[0].mxu0 %v3014
    %v3093 = vpop.f32.mrb[0].mxu0
    %v3094 = vadd.f32 0.0, %v3093
    %v3095 = vpop.f32.mrb[0].mxu0
    %3096 = vmatprep.mubr.f32.mxu0 0.0
    %3097 = vmatmul.mubr.f32.gmra.mrb[0].mxu0 %v3017
    %v3098 = vpop.f32.mrb[0].mxu0
    %v3099 = vadd.f32 0.0, %v3098
    %v3100 = vpop.f32.mrb[0].mxu0
    %3101 = vmatprep.mubr.f32.mxu0 0.0
    %3102 = vmatmul.mubr.f32.gmra.mrb[0].mxu0 %v3020
    %v3103 = vpop.f32.mrb[0].mxu0
    %v3104 = vadd.f32 0.0, %v3103
    %v3105 = vpop.f32.mrb[0].mxu0
    %3106 = vdwg.mxu0
    %v3107 = vadd.f32 %v2718, %v3089
    %v3108 = vadd.f32 %v2719, %v3094
    %v3109 = vadd.f32 %v2720, %v3099
    %v3110 = vadd.f32 %v2721, %v3104
    %v3111 = vlaneseq
    %v3112 = vshrl.u32 %v3111, 7
    %v3113 = vsub.s32 0, %v3112
    %v3114 = vrot.slane %v3008, %v3113
    %v3115 = vadd.f32 %v3107, %v3114
    %v3116 = vadd.f32 %v3108, %v3114
    %v3117 = vadd.f32 %v3109, %v3114
    %v3118 = vadd.f32 %v3110, %v3114
    %v3119 = vsel %vm231, %v3115, 0.0
    %3120 = vadd.xlane.f32.xlu0 %v3119
    %v3121 = vpop.xlane.xlu0 %3120
    %v3122 = vsel %vm231, %v3116, 0.0
    %3123 = vadd.xlane.f32.xlu0 %v3122
    %v3124 = vpop.xlane.xlu0 %3123
    %v3125 = vsel %vm231, %v3117, 0.0
    %3126 = vadd.xlane.f32.xlu0 %v3125
    %v3127 = vpop.xlane.xlu0 %3126
    %v3128 = vsel %vm231, %v3118, 0.0
    %3129 = vadd.xlane.f32.xlu0 %v3128
    %v3130 = vpop.xlane.xlu0 %3129
    %v3131 = vmul.f32 %v3121, %v2406
    %v3132 = vmul.f32 %v3124, %v2406
    %v3133 = vmul.f32 %v3127, %v2406
    %v3134 = vmul.f32 %v3130, %v2406
    %v3135 = vsub.f32 %v3115, %v3131
    %v3136 = vsub.f32 %v3116, %v3132
    %v3137 = vsub.f32 %v3117, %v3133
    %v3138 = vsub.f32 %v3118, %v3134
    %v3139 = vmul.f32 %v3135, %v3135
    %v3140 = vmul.f32 %v3136, %v3136
    %v3141 = vmul.f32 %v3137, %v3137
    %v3142 = vmul.f32 %v3138, %v3138
    %v3143 = vsel %vm231, %v3139, 0.0
    %3144 = vadd.xlane.f32.xlu0 %v3143
    %v3145 = vpop.xlane.xlu0 %3144
    %v3146 = vsel %vm231, %v3140, 0.0
    %3147 = vadd.xlane.f32.xlu0 %v3146
    %v3148 = vpop.xlane.xlu0 %3147
    %v3149 = vsel %vm231, %v3141, 0.0
    %3150 = vadd.xlane.f32.xlu0 %v3149
    %v3151 = vpop.xlane.xlu0 %3150
    %v3152 = vsel %vm231, %v3142, 0.0
    %3153 = vadd.xlane.f32.xlu0 %v3152
    %v3154 = vpop.xlane.xlu0 %3153
    %v3155 = vmul.f32 %v3145, %v2406
    %v3156 = vmul.f32 %v3148, %v2406
    %v3157 = vmul.f32 %v3151, %v2406
    %v3158 = vmul.f32 %v3154, %v2406
    %v3159 = vadd.f32 %v3155, 1e-05
    %v3160 = vadd.f32 %v3156, 1e-05
    %v3161 = vadd.f32 %v3157, 1e-05
    %v3162 = vadd.f32 %v3158, 1e-05
    %v3163 = vrsqrt.pop %v3159
    %v3164 = vrsqrt.pop %v3160
    %v3165 = vrsqrt.pop %v3161
    %v3166 = vrsqrt.pop %v3162
    %v3167 = vmul.f32 %v3135, %v3163
    %v3168 = vmul.f32 %v3136, %v3164
    %v3169 = vmul.f32 %v3137, %v3165
    %v3170 = vmul.f32 %v3138, %v3166
    %v3171 = vlaneseq
    %v3172 = vshrl.u32 %v3171, 7
    %v3173 = vsub.s32 4, %v3172
    %v3174 = vrot.slane %v2392, %v3173
    %v3175 = vmul.f32 %v3167, %v3174
    %v3176 = vmul.f32 %v3168, %v3174
    %v3177 = vmul.f32 %v3169, %v3174
    %v3178 = vmul.f32 %v3170, %v3174
    %v3179 = vlaneseq
    %v3180 = vshrl.u32 %v3179, 7
    %v3181 = vsub.s32 5, %v3180
    %v3182 = vrot.slane %v2392, %v3181
    %v3183 = vadd.f32 %v3175, %v3182
    %v3184 = vadd.f32 %v3176, %v3182
    %v3185 = vadd.f32 %v3177, %v3182
    %v3186 = vadd.f32 %v3178, %v3182
    %s3187 = scalar_lea.vmem [#allocation9], 16
    %v3188 = vld [vmem:[%s3187] sm:$0xff]
    %v3189 = vld [vmem:[%s3187 + $0x8] sm:$0xff]
    %3192 = vrot.lane.b32.xlu0 %v3188, 96
    %v3193 = vpop.permute.xlu0 %3192
    %3194 = vrot.lane.b32.xlu0 %v3189, 96
    %v3195 = vpop.permute.xlu0 %3194
    %v3198 = vsel %vm231, %v3188, 0
    %v3200 = vsel %vm231, %v3189, 0
    %3202 = vmatprep.subr.mxu0 0.0
    %3203 = vmatpush1.msra.mxu0 %v3183
    %3204 = vmatprep.subr.mxu0 0.0
    %3205 = vmatpush1.msra.mxu0 %v3184
    %3206 = vmatprep.subr.mxu0 0.0
    %3207 = vmatpush1.msra.mxu0 %v3185
    %3208 = vmatprep.subr.mxu0 0.0
    %3209 = vmatpush1.msra.mxu0 %v3186
    %3210 = vmatprep.subr.mxu0 0.0
    %3211 = vmatpush1.msra.mxu0 0.0
    %3212 = vmatprep.subr.mxu0 0.0
    %3213 = vmatpush1.msra.mxu0 0.0
    %3214 = vmatprep.subr.mxu0 0.0
    %3215 = vmatpush1.msra.mxu0 0.0
    %3216 = vmatprep.subr.mxu0 0.0
    %3217 = vmatpush1.msra.mxu0 0.0
    %3218 = vmatprep.subr.mxu0 0.0
    %3219 = vmatpush1.msra.mxu0 0.0
    %3220 = vmatprep.subr.mxu0 0.0
    %3221 = vmatpush1.msra.mxu0 0.0
    %3222 = vmatprep.subr.mxu0 0.0
    %3223 = vmatpush1.msra.mxu0 0.0
    %3224 = vmatprep.subr.mxu0 0.0
    %3225 = vmatpush1.msra.mxu0 0.0
    %3226 = vmatprep.subr.mxu0 0.0
    %3227 = vmatpush1.msra.mxu0 0.0
    %3228 = vmatprep.subr.mxu0 0.0
    %3229 = vmatpush1.msra.mxu0 0.0
    %3230 = vmatprep.subr.mxu0 0.0
    %3231 = vmatpush1.msra.mxu0 0.0
    %3232 = vmatprep.subr.mxu0 0.0
    %3233 = vmatpush1.msra.mxu0 0.0
    %3234 = vmatprep.subr.mxu0 0.0
    %3235 = vmatpush1.msra.mxu0 0.0
    %3236 = vmatprep.subr.mxu0 0.0
    %3237 = vmatpush1.msra.mxu0 0.0
    %3238 = vmatprep.subr.mxu0 0.0
    %3239 = vmatpush1.msra.mxu0 0.0
    %3240 = vmatprep.subr.mxu0 0.0
    %3241 = vmatpush1.msra.mxu0 0.0
    %3242 = vmatprep.subr.mxu0 0.0
    %3243 = vmatpush1.msra.mxu0 0.0
    %3244 = vmatprep.subr.mxu0 0.0
    %3245 = vmatpush1.msra.mxu0 0.0
    %3246 = vmatprep.subr.mxu0 0.0
    %3247 = vmatpush1.msra.mxu0 0.0
    %3248 = vmatprep.subr.mxu0 0.0
    %3249 = vmatpush1.msra.mxu0 0.0
    %3250 = vmatprep.subr.mxu0 0.0
    %3251 = vmatpush1.msra.mxu0 0.0
    %3252 = vmatprep.subr.mxu0 0.0
    %3253 = vmatpush1.msra.mxu0 0.0
    %3254 = vmatprep.subr.mxu0 0.0
    %3255 = vmatpush1.msra.mxu0 0.0
    %3256 = vmatprep.subr.mxu0 0.0
    %3257 = vmatpush1.msra.mxu0 0.0
    %3258 = vmatprep.subr.mxu0 0.0
    %3259 = vmatpush1.msra.mxu0 0.0
    %3260 = vmatprep.subr.mxu0 0.0
    %3261 = vmatpush1.msra.mxu0 0.0
    %3262 = vmatprep.subr.mxu0 0.0
    %3263 = vmatpush1.msra.mxu0 0.0
    %3264 = vmatprep.subr.mxu0 0.0
    %3265 = vmatpush1.msra.mxu0 0.0
    %3266 = vmatprep.mubr.f32.mxu0 0.0
    %3267 = vmatmul.mubr.f32.gmra.mrb[0].mxu0 %v3198
    %v3268 = vpop.f32.mrb[0].mxu0
    %v3269 = vadd.f32 %v3193, %v3268
    %v3270 = vpop.f32.mrb[0].mxu0
    %3271 = vmatprep.mubr.f32.mxu0 0.0
    %3272 = vmatmul.mubr.f32.gmra.mrb[0].mxu0 %v3200
    %v3273 = vpop.f32.mrb[0].mxu0
    %v3274 = vadd.f32 %v3195, %v3273
    %v3275 = vpop.f32.mrb[0].mxu0
    %3276 = vdwg.mxu0
    %v3277 = vmul.f32 %v3269, 0.5
    %v3278 = vmul.f32 %v3274, 0.5
    %v3279 = vmul.f32 %v3269, 0.70710677
    %v3280 = vmul.f32 %v3274, 0.70710677
    %vm3281 = vcmp.ge.f32.partialorder %v3279, 0.0
    %vm3282 = vcmp.ge.f32.partialorder %v3280, 0.0
    %v3283 = vsel %vm3281, 1.0, -1.0
    %v3284 = vsel %vm3282, 1.0, -1.0
    %v3285 = vand.u32 2147483647, %v3279
    %v3286 = vand.u32 2147483647, %v3280
    %v3287 = vmul.f32 %v3285, 0.3275911
    %v3288 = vmul.f32 %v3286, 0.3275911
    %v3289 = vadd.f32 %v3287, 1.0
    %v3290 = vadd.f32 %v3288, 1.0
    %v3291 = vrcp.pop %v3289
    %v3292 = vrcp.pop %v3290
    %v3293 = vmul.f32 %v3291, 1.0614054
    %v3294 = vmul.f32 %v3292, 1.0614054
    %v3295 = vadd.f32 %v3293, -1.4531521
    %v3296 = vadd.f32 %v3294, -1.4531521
    %v3297 = vmul.f32 %v3295, %v3291
    %v3298 = vmul.f32 %v3296, %v3292
    %v3299 = vadd.f32 %v3297, 1.4214138
    %v3300 = vadd.f32 %v3298, 1.4214138
    %v3301 = vmul.f32 %v3299, %v3291
    %v3302 = vmul.f32 %v3300, %v3292
    %v3303 = vadd.f32 %v3301, -0.28449672
    %v3304 = vadd.f32 %v3302, -0.28449672
    %v3305 = vmul.f32 %v3303, %v3291
    %v3306 = vmul.f32 %v3304, %v3292
    %v3307 = vadd.f32 %v3305, 0.2548296
    %v3308 = vadd.f32 %v3306, 0.2548296
    %v3309 = vmul.f32 %v3307, %v3291
    %v3310 = vmul.f32 %v3308, %v3292
    %v3311 = vsub.f32 0.0, %v3285
    %v3312 = vsub.f32 0.0, %v3286
    %v3313 = vmul.f32 %v3311, %v3285
    %v3314 = vmul.f32 %v3312, %v3286
    %v3315 = vmul.f32 %v3313, 1.442695
    %v3316 = vpow.pop %v3315
    %v3317 = vmul.f32 %v3314, 1.442695
    %v3318 = vpow.pop %v3317
    %v3319 = vmul.f32 %v3309, %v3316
    %v3320 = vmul.f32 %v3310, %v3318
    %v3321 = vsub.f32 1.0, %v3319
    %v3322 = vsub.f32 1.0, %v3320
    %v3323 = vmul.f32 %v3283, %v3321
    %v3324 = vmul.f32 %v3284, %v3322
    %v3325 = vadd.f32 %v3323, 1.0
    %v3326 = vadd.f32 %v3324, 1.0
    %v3327 = vmul.f32 %v3277, %v3325
    %v3328 = vmul.f32 %v3278, %v3326
    %s3329 = scalar_lea.vmem [#allocation11], 32
    %v3330 = vld [vmem:[%s3329] sm:$0xff]
    %v3331 = vld [vmem:[%s3329 + $0x8] sm:$0xff]
    %v3332 = vld [vmem:[%s3329 + $0x10] sm:$0xff]
    %v3333 = vld [vmem:[%s3329 + $0x18] sm:$0xff]
    %3338 = vrot.lane.b32.xlu0 %v3330, 112
    %v3339 = vpop.permute.xlu0 %3338
    %3340 = vrot.lane.b32.xlu0 %v3331, 112
    %v3341 = vpop.permute.xlu0 %3340
    %3342 = vrot.lane.b32.xlu0 %v3332, 112
    %v3343 = vpop.permute.xlu0 %3342
    %3344 = vrot.lane.b32.xlu0 %v3333, 112
    %v3345 = vpop.permute.xlu0 %3344
    %v3350 = vsel %vm2624, %v3330, 0
    %v3352 = vsel %vm2624, %v3331, 0
    %v3354 = vsel %vm2624, %v3332, 0
    %v3356 = vsel %vm2624, %v3333, 0
    %3358 = vmatprep.subr.mxu0 0.0
    %3359 = vmatpush1.msra.mxu0 %v3327
    %3360 = vmatprep.subr.mxu0 0.0
    %3361 = vmatpush1.msra.mxu0 %v3328
    %3362 = vmatprep.subr.mxu0 0.0
    %3363 = vmatpush1.msra.mxu0 0.0
    %3364 = vmatprep.subr.mxu0 0.0
    %3365 = vmatpush1.msra.mxu0 0.0
    %3366 = vmatprep.subr.mxu0 0.0
    %3367 = vmatpush1.msra.mxu0 0.0
    %3368 = vmatprep.subr.mxu0 0.0
    %3369 = vmatpush1.msra.mxu0 0.0
    %3370 = vmatprep.subr.mxu0 0.0
    %3371 = vmatpush1.msra.mxu0 0.0
    %3372 = vmatprep.subr.mxu0 0.0
    %3373 = vmatpush1.msra.mxu0 0.0
    %3374 = vmatprep.subr.mxu0 0.0
    %3375 = vmatpush1.msra.mxu0 0.0
    %3376 = vmatprep.subr.mxu0 0.0
    %3377 = vmatpush1.msra.mxu0 0.0
    %3378 = vmatprep.subr.mxu0 0.0
    %3379 = vmatpush1.msra.mxu0 0.0
    %3380 = vmatprep.subr.mxu0 0.0
    %3381 = vmatpush1.msra.mxu0 0.0
    %3382 = vmatprep.subr.mxu0 0.0
    %3383 = vmatpush1.msra.mxu0 0.0
    %3384 = vmatprep.subr.mxu0 0.0
    %3385 = vmatpush1.msra.mxu0 0.0
    %3386 = vmatprep.subr.mxu0 0.0
    %3387 = vmatpush1.msra.mxu0 0.0
    %3388 = vmatprep.subr.mxu0 0.0
    %3389 = vmatpush1.msra.mxu0 0.0
    %3390 = vmatprep.subr.mxu0 0.0
    %3391 = vmatpush1.msra.mxu0 0.0
    %3392 = vmatprep.subr.mxu0 0.0
    %3393 = vmatpush1.msra.mxu0 0.0
    %3394 = vmatprep.subr.mxu0 0.0
    %3395 = vmatpush1.msra.mxu0 0.0
    %3396 = vmatprep.subr.mxu0 0.0
    %3397 = vmatpush1.msra.mxu0 0.0
    %3398 = vmatprep.subr.mxu0 0.0
    %3399 = vmatpush1.msra.mxu0 0.0
    %3400 = vmatprep.subr.mxu0 0.0
    %3401 = vmatpush1.msra.mxu0 0.0
    %3402 = vmatprep.subr.mxu0 0.0
    %3403 = vmatpush1.msra.mxu0 0.0
    %3404 = vmatprep.subr.mxu0 0.0
    %3405 = vmatpush1.msra.mxu0 0.0
    %3406 = vmatprep.subr.mxu0 0.0
    %3407 = vmatpush1.msra.mxu0 0.0
    %3408 = vmatprep.subr.mxu0 0.0
    %3409 = vmatpush1.msra.mxu0 0.0
    %3410 = vmatprep.subr.mxu0 0.0
    %3411 = vmatpush1.msra.mxu0 0.0
    %3412 = vmatprep.subr.mxu0 0.0
    %3413 = vmatpush1.msra.mxu0 0.0
    %3414 = vmatprep.subr.mxu0 0.0
    %3415 = vmatpush1.msra.mxu0 0.0
    %3416 = vmatprep.subr.mxu0 0.0
    %3417 = vmatpush1.msra.mxu0 0.0
    %3418 = vmatprep.subr.mxu0 0.0
    %3419 = vmatpush1.msra.mxu0 0.0
    %3420 = vmatprep.subr.mxu0 0.0
    %3421 = vmatpush1.msra.mxu0 0.0
    %3422 = vmatprep.mubr.f32.mxu0 0.0
    %3423 = vmatmul.mubr.f32.gmra.mrb[0].mxu0 %v3350
    %v3424 = vpop.f32.mrb[0].mxu0
    %v3425 = vadd.f32 %v3339, %v3424
    %v3426 = vpop.f32.mrb[0].mxu0
    %3427 = vmatprep.mubr.f32.mxu0 0.0
    %3428 = vmatmul.mubr.f32.gmra.mrb[0].mxu0 %v3352
    %v3429 = vpop.f32.mrb[0].mxu0
    %v3430 = vadd.f32 %v3341, %v3429
    %v3431 = vpop.f32.mrb[0].mxu0
    %3432 = vmatprep.mubr.f32.mxu0 0.0
    %3433 = vmatmul.mubr.f32.gmra.mrb[0].mxu0 %v3354
    %v3434 = vpop.f32.mrb[0].mxu0
    %v3435 = vadd.f32 %v3343, %v3434
    %v3436 = vpop.f32.mrb[0].mxu0
    %3437 = vmatprep.mubr.f32.mxu0 0.0
    %3438 = vmatmul.mubr.f32.gmra.mrb[0].mxu0 %v3356
    %v3439 = vpop.f32.mrb[0].mxu0
    %v3440 = vadd.f32 %v3345, %v3439
    %v3441 = vpop.f32.mrb[0].mxu0
    %3442 = vdwg.mxu0
    %v3443 = vadd.f32 %v3115, %v3425
    %v3444 = vadd.f32 %v3116, %v3430
    %v3445 = vadd.f32 %v3117, %v3435
    %v3446 = vadd.f32 %v3118, %v3440
    %v3447 = vsel %vm231, %v3443, 0.0
    %3448 = vadd.xlane.f32.xlu0 %v3447
    %v3449 = vpop.xlane.xlu0 %3448
    %v3450 = vsel %vm231, %v3444, 0.0
    %3451 = vadd.xlane.f32.xlu0 %v3450
    %v3452 = vpop.xlane.xlu0 %3451
    %v3453 = vsel %vm231, %v3445, 0.0
    %3454 = vadd.xlane.f32.xlu0 %v3453
    %v3455 = vpop.xlane.xlu0 %3454
    %v3456 = vsel %vm231, %v3446, 0.0
    %3457 = vadd.xlane.f32.xlu0 %v3456
    %v3458 = vpop.xlane.xlu0 %3457
    %v3459 = vmul.f32 %v3449, %v2406
    %v3460 = vmul.f32 %v3452, %v2406
    %v3461 = vmul.f32 %v3455, %v2406
    %v3462 = vmul.f32 %v3458, %v2406
    %v3463 = vsub.f32 %v3443, %v3459
    %v3464 = vsub.f32 %v3444, %v3460
    %v3465 = vsub.f32 %v3445, %v3461
    %v3466 = vsub.f32 %v3446, %v3462
    %v3467 = vmul.f32 %v3463, %v3463
    %v3468 = vmul.f32 %v3464, %v3464
    %v3469 = vmul.f32 %v3465, %v3465
    %v3470 = vmul.f32 %v3466, %v3466
    %v3471 = vsel %vm231, %v3467, 0.0
    %3472 = vadd.xlane.f32.xlu0 %v3471
    %v3473 = vpop.xlane.xlu0 %3472
    %v3474 = vsel %vm231, %v3468, 0.0
    %3475 = vadd.xlane.f32.xlu0 %v3474
    %v3476 = vpop.xlane.xlu0 %3475
    %v3477 = vsel %vm231, %v3469, 0.0
    %3478 = vadd.xlane.f32.xlu0 %v3477
    %v3479 = vpop.xlane.xlu0 %3478
    %v3480 = vsel %vm231, %v3470, 0.0
    %3481 = vadd.xlane.f32.xlu0 %v3480
    %v3482 = vpop.xlane.xlu0 %3481
    %v3483 = vmul.f32 %v3473, %v2406
    %v3484 = vmul.f32 %v3476, %v2406
    %v3485 = vmul.f32 %v3479, %v2406
    %v3486 = vmul.f32 %v3482, %v2406
    %v3487 = vadd.f32 %v3483, 1e-05
    %v3488 = vadd.f32 %v3484, 1e-05
    %v3489 = vadd.f32 %v3485, 1e-05
    %v3490 = vadd.f32 %v3486, 1e-05
    %v3491 = vrsqrt.pop %v3487
    %v3492 = vrsqrt.pop %v3488
    %v3493 = vrsqrt.pop %v3489
    %v3494 = vrsqrt.pop %v3490
    %v3495 = vmul.f32 %v3463, %v3491
    %v3496 = vmul.f32 %v3464, %v3492
    %v3497 = vmul.f32 %v3465, %v3493
    %v3498 = vmul.f32 %v3466, %v3494
    %v3499 = vlaneseq
    %v3500 = vshrl.u32 %v3499, 7
    %v3501 = vsub.s32 6, %v3500
    %v3502 = vrot.slane %v2392, %v3501
    %v3503 = vmul.f32 %v3495, %v3502
    %v3504 = vmul.f32 %v3496, %v3502
    %v3505 = vmul.f32 %v3497, %v3502
    %v3506 = vmul.f32 %v3498, %v3502
    %v3507 = vlaneseq
    %v3508 = vshrl.u32 %v3507, 7
    %v3509 = vsub.s32 7, %v3508
    %v3510 = vrot.slane %v2392, %v3509
    %v3511 = vadd.f32 %v3503, %v3510
    %v3512 = vadd.f32 %v3504, %v3510
    %v3513 = vadd.f32 %v3505, %v3510
    %v3514 = vadd.f32 %v3506, %v3510
    %s3515 = scalar_lea.vmem [#allocation12], 40
    %v3516 = vld [vmem:[%s3515] sm:$0xff]
    %v3517 = vld [vmem:[%s3515 + $0x8] sm:$0xff]
    %v3518 = vld [vmem:[%s3515 + $0x10] sm:$0xff]
    %v3519 = vld [vmem:[%s3515 + $0x18] sm:$0xff]
    %v3520 = vld [vmem:[%s3515 + $0x20] sm:$0x1]
    %v3521 = vlaneseq
    %v3522 = vshrl.u32 %v3521, 7
    %v3523 = vsub.s32 0, %v3522
    %v3524 = vrot.slane %v3520, %v3523
    %v3526 = vsel %vm231, %v3511, 0
    %v3529 = vsel %vm231, %v3512, 0
    %v3532 = vsel %vm231, %v3513, 0
    %v3535 = vsel %vm231, %v3514, 0
    %3537 = vmatprep.subr.mxu0 0.0
    %3538 = vmatpush1.msra.mxu0 %v3516
    %3539 = vmatprep.subr.mxu0 0.0
    %3540 = vmatpush1.msra.mxu0 %v3517
    %3541 = vmatprep.subr.mxu0 0.0
    %3542 = vmatpush1.msra.mxu0 %v3518
    %3543 = vmatprep.subr.mxu0 0.0
    %3544 = vmatpush1.msra.mxu0 %v3519
    %3545 = vmatprep.subr.mxu0 0.0
    %3546 = vmatpush1.msra.mxu0 0.0
    %3547 = vmatprep.subr.mxu0 0.0
    %3548 = vmatpush1.msra.mxu0 0.0
    %3549 = vmatprep.subr.mxu0 0.0
    %3550 = vmatpush1.msra.mxu0 0.0
    %3551 = vmatprep.subr.mxu0 0.0
    %3552 = vmatpush1.msra.mxu0 0.0
    %3553 = vmatprep.subr.mxu0 0.0
    %3554 = vmatpush1.msra.mxu0 0.0
    %3555 = vmatprep.subr.mxu0 0.0
    %3556 = vmatpush1.msra.mxu0 0.0
    %3557 = vmatprep.subr.mxu0 0.0
    %3558 = vmatpush1.msra.mxu0 0.0
    %3559 = vmatprep.subr.mxu0 0.0
    %3560 = vmatpush1.msra.mxu0 0.0
    %3561 = vmatprep.subr.mxu0 0.0
    %3562 = vmatpush1.msra.mxu0 0.0
    %3563 = vmatprep.subr.mxu0 0.0
    %3564 = vmatpush1.msra.mxu0 0.0
    %3565 = vmatprep.subr.mxu0 0.0
    %3566 = vmatpush1.msra.mxu0 0.0
    %3567 = vmatprep.subr.mxu0 0.0
    %3568 = vmatpush1.msra.mxu0 0.0
    %3569 = vmatprep.subr.mxu0 0.0
    %3570 = vmatpush1.msra.mxu0 0.0
    %3571 = vmatprep.subr.mxu0 0.0
    %3572 = vmatpush1.msra.mxu0 0.0
    %3573 = vmatprep.subr.mxu0 0.0
    %3574 = vmatpush1.msra.mxu0 0.0
    %3575 = vmatprep.subr.mxu0 0.0
    %3576 = vmatpush1.msra.mxu0 0.0
    %3577 = vmatprep.subr.mxu0 0.0
    %3578 = vmatpush1.msra.mxu0 0.0
    %3579 = vmatprep.subr.mxu0 0.0
    %3580 = vmatpush1.msra.mxu0 0.0
    %3581 = vmatprep.subr.mxu0 0.0
    %3582 = vmatpush1.msra.mxu0 0.0
    %3583 = vmatprep.subr.mxu0 0.0
    %3584 = vmatpush1.msra.mxu0 0.0
    %3585 = vmatprep.subr.mxu0 0.0
    %3586 = vmatpush1.msra.mxu0 0.0
    %3587 = vmatprep.subr.mxu0 0.0
    %3588 = vmatpush1.msra.mxu0 0.0
    %3589 = vmatprep.subr.mxu0 0.0
    %3590 = vmatpush1.msra.mxu0 0.0
    %3591 = vmatprep.subr.mxu0 0.0
    %3592 = vmatpush1.msra.mxu0 0.0
    %3593 = vmatprep.subr.mxu0 0.0
    %3594 = vmatpush1.msra.mxu0 0.0
    %3595 = vmatprep.subr.mxu0 0.0
    %3596 = vmatpush1.msra.mxu0 0.0
    %3597 = vmatprep.subr.mxu0 0.0
    %3598 = vmatpush1.msra.mxu0 0.0
    %3599 = vmatprep.subr.mxu0 0.0
    %3600 = vmatpush1.msra.mxu0 0.0
    %3601 = vmatprep.mubr.f32.mxu0 0.0
    %3602 = vmatmul.mubr.f32.gmra.mrb[0].mxu0 %v3526
    %v3603 = vpop.f32.mrb[0].mxu0
    %v3604 = vadd.f32 %v3524, %v3603
    %v3605 = vpop.f32.mrb[0].mxu0
    %3606 = vmatprep.mubr.f32.mxu0 0.0
    %3607 = vmatmul.mubr.f32.gmra.mrb[0].mxu0 %v3529
    %v3608 = vpop.f32.mrb[0].mxu0
    %v3609 = vadd.f32 %v3524, %v3608
    %v3610 = vpop.f32.mrb[0].mxu0
    %3611 = vmatprep.mubr.f32.mxu0 0.0
    %3612 = vmatmul.mubr.f32.gmra.mrb[0].mxu0 %v3532
    %v3613 = vpop.f32.mrb[0].mxu0
    %v3614 = vadd.f32 %v3524, %v3613
    %v3615 = vpop.f32.mrb[0].mxu0
    %3616 = vmatprep.mubr.f32.mxu0 0.0
    %3617 = vmatmul.mubr.f32.gmra.mrb[0].mxu0 %v3535
    %v3618 = vpop.f32.mrb[0].mxu0
    %v3619 = vadd.f32 %v3524, %v3618
    %v3620 = vpop.f32.mrb[0].mxu0
    %3621 = vdwg.mxu0
    %v3622 = vmul.f32 %v3604, 0.5
    %v3623 = vmul.f32 %v3609, 0.5
    %v3624 = vmul.f32 %v3614, 0.5
    %v3625 = vmul.f32 %v3619, 0.5
    %v3626 = vmul.f32 %v3604, 0.70710677
    %v3627 = vmul.f32 %v3609, 0.70710677
    %v3628 = vmul.f32 %v3614, 0.70710677
    %v3629 = vmul.f32 %v3619, 0.70710677
    %vm3630 = vcmp.ge.f32.partialorder %v3626, 0.0
    %vm3631 = vcmp.ge.f32.partialorder %v3627, 0.0
    %vm3632 = vcmp.ge.f32.partialorder %v3628, 0.0
    %vm3633 = vcmp.ge.f32.partialorder %v3629, 0.0
    %v3634 = vsel %vm3630, 1.0, -1.0
    %v3635 = vsel %vm3631, 1.0, -1.0
    %v3636 = vsel %vm3632, 1.0, -1.0
    %v3637 = vsel %vm3633, 1.0, -1.0
    %v3638 = vand.u32 2147483647, %v3626
    %v3639 = vand.u32 2147483647, %v3627
    %v3640 = vand.u32 2147483647, %v3628
    %v3641 = vand.u32 2147483647, %v3629
    %v3642 = vmul.f32 %v3638, 0.3275911
    %v3643 = vmul.f32 %v3639, 0.3275911
    %v3644 = vmul.f32 %v3640, 0.3275911
    %v3645 = vmul.f32 %v3641, 0.3275911
    %v3646 = vadd.f32 %v3642, 1.0
    %v3647 = vadd.f32 %v3643, 1.0
    %v3648 = vadd.f32 %v3644, 1.0
    %v3649 = vadd.f32 %v3645, 1.0
    %v3650 = vrcp.pop %v3646
    %v3651 = vrcp.pop %v3647
    %v3652 = vrcp.pop %v3648
    %v3653 = vrcp.pop %v3649
    %v3654 = vmul.f32 %v3650, 1.0614054
    %v3655 = vmul.f32 %v3651, 1.0614054
    %v3656 = vmul.f32 %v3652, 1.0614054
    %v3657 = vmul.f32 %v3653, 1.0614054
    %v3658 = vadd.f32 %v3654, -1.4531521
    %v3659 = vadd.f32 %v3655, -1.4531521
    %v3660 = vadd.f32 %v3656, -1.4531521
    %v3661 = vadd.f32 %v3657, -1.4531521
    %v3662 = vmul.f32 %v3658, %v3650
    %v3663 = vmul.f32 %v3659, %v3651
    %v3664 = vmul.f32 %v3660, %v3652
    %v3665 = vmul.f32 %v3661, %v3653
    %v3666 = vadd.f32 %v3662, 1.4214138
    %v3667 = vadd.f32 %v3663, 1.4214138
    %v3668 = vadd.f32 %v3664, 1.4214138
    %v3669 = vadd.f32 %v3665, 1.4214138
    %v3670 = vmul.f32 %v3666, %v3650
    %v3671 = vmul.f32 %v3667, %v3651
    %v3672 = vmul.f32 %v3668, %v3652
    %v3673 = vmul.f32 %v3669, %v3653
    %v3674 = vadd.f32 %v3670, -0.28449672
    %v3675 = vadd.f32 %v3671, -0.28449672
    %v3676 = vadd.f32 %v3672, -0.28449672
    %v3677 = vadd.f32 %v3673, -0.28449672
    %v3678 = vmul.f32 %v3674, %v3650
    %v3679 = vmul.f32 %v3675, %v3651
    %v3680 = vmul.f32 %v3676, %v3652
    %v3681 = vmul.f32 %v3677, %v3653
    %v3682 = vadd.f32 %v3678, 0.2548296
    %v3683 = vadd.f32 %v3679, 0.2548296
    %v3684 = vadd.f32 %v3680, 0.2548296
    %v3685 = vadd.f32 %v3681, 0.2548296
    %v3686 = vmul.f32 %v3682, %v3650
    %v3687 = vmul.f32 %v3683, %v3651
    %v3688 = vmul.f32 %v3684, %v3652
    %v3689 = vmul.f32 %v3685, %v3653
    %v3690 = vsub.f32 0.0, %v3638
    %v3691 = vsub.f32 0.0, %v3639
    %v3692 = vsub.f32 0.0, %v3640
    %v3693 = vsub.f32 0.0, %v3641
    %v3694 = vmul.f32 %v3690, %v3638
    %v3695 = vmul.f32 %v3691, %v3639
    %v3696 = vmul.f32 %v3692, %v3640
    %v3697 = vmul.f32 %v3693, %v3641
    %v3698 = vmul.f32 %v3694, 1.442695
    %v3699 = vpow.pop %v3698
    %v3700 = vmul.f32 %v3695, 1.442695
    %v3701 = vpow.pop %v3700
    %v3702 = vmul.f32 %v3696, 1.442695
    %v3703 = vpow.pop %v3702
    %v3704 = vmul.f32 %v3697, 1.442695
    %v3705 = vpow.pop %v3704
    %v3706 = vmul.f32 %v3686, %v3699
    %v3707 = vmul.f32 %v3687, %v3701
    %v3708 = vmul.f32 %v3688, %v3703
    %v3709 = vmul.f32 %v3689, %v3705
    %v3710 = vsub.f32 1.0, %v3706
    %v3711 = vsub.f32 1.0, %v3707
    %v3712 = vsub.f32 1.0, %v3708
    %v3713 = vsub.f32 1.0, %v3709
    %v3714 = vmul.f32 %v3634, %v3710
    %v3715 = vmul.f32 %v3635, %v3711
    %v3716 = vmul.f32 %v3636, %v3712
    %v3717 = vmul.f32 %v3637, %v3713
    %v3718 = vadd.f32 %v3714, 1.0
    %v3719 = vadd.f32 %v3715, 1.0
    %v3720 = vadd.f32 %v3716, 1.0
    %v3721 = vadd.f32 %v3717, 1.0
    %v3722 = vmul.f32 %v3622, %v3718
    %v3723 = vmul.f32 %v3623, %v3719
    %v3724 = vmul.f32 %v3624, %v3720
    %v3725 = vmul.f32 %v3625, %v3721
    %s3726 = scalar_lea.vmem [#allocation14], 72
    %v3727 = vld [vmem:[%s3726] sm:$0xff]
    %v3728 = vld [vmem:[%s3726 + $0x8] sm:$0xff]
    %v3729 = vld [vmem:[%s3726 + $0x10] sm:$0xff]
    %v3730 = vld [vmem:[%s3726 + $0x18] sm:$0xff]
    %v3731 = vld [vmem:[%s3726 + $0x20] sm:$0xff]
    %v3732 = vld [vmem:[%s3726 + $0x28] sm:$0xff]
    %v3733 = vld [vmem:[%s3726 + $0x30] sm:$0xff]
    %v3734 = vld [vmem:[%s3726 + $0x38] sm:$0xff]
    %v3735 = vld [vmem:[%s3726 + $0x40] sm:$0x1]
    %v3737 = vsel %vm3009, %v3722, 0
    %v3740 = vsel %vm3009, %v3723, 0
    %v3743 = vsel %vm3009, %v3724, 0
    %v3746 = vsel %vm3009, %v3725, 0
    %3748 = vmatprep.subr.mxu0 0.0
    %3749 = vmatpush1.msra.mxu0 %v3727
    %3750 = vmatprep.subr.mxu0 0.0
    %3751 = vmatpush1.msra.mxu0 %v3728
    %3752 = vmatprep.subr.mxu0 0.0
    %3753 = vmatpush1.msra.mxu0 %v3729
    %3754 = vmatprep.subr.mxu0 0.0
    %3755 = vmatpush1.msra.mxu0 %v3730
    %3756 = vmatprep.subr.mxu0 0.0
    %3757 = vmatpush1.msra.mxu0 %v3731
    %3758 = vmatprep.subr.mxu0 0.0
    %3759 = vmatpush1.msra.mxu0 %v3732
    %3760 = vmatprep.subr.mxu0 0.0
    %3761 = vmatpush1.msra.mxu0 %v3733
    %3762 = vmatprep.subr.mxu0 0.0
    %3763 = vmatpush1.msra.mxu0 %v3734
    %3764 = vmatprep.subr.mxu0 0.0
    %3765 = vmatpush1.msra.mxu0 0.0
    %3766 = vmatprep.subr.mxu0 0.0
    %3767 = vmatpush1.msra.mxu0 0.0
    %3768 = vmatprep.subr.mxu0 0.0
    %3769 = vmatpush1.msra.mxu0 0.0
    %3770 = vmatprep.subr.mxu0 0.0
    %3771 = vmatpush1.msra.mxu0 0.0
    %3772 = vmatprep.subr.mxu0 0.0
    %3773 = vmatpush1.msra.mxu0 0.0
    %3774 = vmatprep.subr.mxu0 0.0
    %3775 = vmatpush1.msra.mxu0 0.0
    %3776 = vmatprep.subr.mxu0 0.0
    %3777 = vmatpush1.msra.mxu0 0.0
    %3778 = vmatprep.subr.mxu0 0.0
    %3779 = vmatpush1.msra.mxu0 0.0
    %3780 = vmatprep.subr.mxu0 0.0
    %3781 = vmatpush1.msra.mxu0 0.0
    %3782 = vmatprep.subr.mxu0 0.0
    %3783 = vmatpush1.msra.mxu0 0.0
    %3784 = vmatprep.subr.mxu0 0.0
    %3785 = vmatpush1.msra.mxu0 0.0
    %3786 = vmatprep.subr.mxu0 0.0
    %3787 = vmatpush1.msra.mxu0 0.0
    %3788 = vmatprep.subr.mxu0 0.0
    %3789 = vmatpush1.msra.mxu0 0.0
    %3790 = vmatprep.subr.mxu0 0.0
    %3791 = vmatpush1.msra.mxu0 0.0
    %3792 = vmatprep.subr.mxu0 0.0
    %3793 = vmatpush1.msra.mxu0 0.0
    %3794 = vmatprep.subr.mxu0 0.0
    %3795 = vmatpush1.msra.mxu0 0.0
    %3796 = vmatprep.subr.mxu0 0.0
    %3797 = vmatpush1.msra.mxu0 0.0
    %3798 = vmatprep.subr.mxu0 0.0
    %3799 = vmatpush1.msra.mxu0 0.0
    %3800 = vmatprep.subr.mxu0 0.0
    %3801 = vmatpush1.msra.mxu0 0.0
    %3802 = vmatprep.subr.mxu0 0.0
    %3803 = vmatpush1.msra.mxu0 0.0
    %3804 = vmatprep.subr.mxu0 0.0
    %3805 = vmatpush1.msra.mxu0 0.0
    %3806 = vmatprep.subr.mxu0 0.0
    %3807 = vmatpush1.msra.mxu0 0.0
    %3808 = vmatprep.subr.mxu0 0.0
    %3809 = vmatpush1.msra.mxu0 0.0
    %3810 = vmatprep.subr.mxu0 0.0
    %3811 = vmatpush1.msra.mxu0 0.0
    %3812 = vmatprep.mubr.f32.mxu0 0.0
    %3813 = vmatmul.mubr.f32.gmra.mrb[0].mxu0 %v3737
    %v3814 = vpop.f32.mrb[0].mxu0
    %v3815 = vadd.f32 0.0, %v3814
    %v3816 = vpop.f32.mrb[0].mxu0
    %3817 = vmatprep.mubr.f32.mxu0 0.0
    %3818 = vmatmul.mubr.f32.gmra.mrb[0].mxu0 %v3740
    %v3819 = vpop.f32.mrb[0].mxu0
    %v3820 = vadd.f32 0.0, %v3819
    %v3821 = vpop.f32.mrb[0].mxu0
    %3822 = vmatprep.mubr.f32.mxu0 0.0
    %3823 = vmatmul.mubr.f32.gmra.mrb[0].mxu0 %v3743
    %v3824 = vpop.f32.mrb[0].mxu0
    %v3825 = vadd.f32 0.0, %v3824
    %v3826 = vpop.f32.mrb[0].mxu0
    %3827 = vmatprep.mubr.f32.mxu0 0.0
    %3828 = vmatmul.mubr.f32.gmra.mrb[0].mxu0 %v3746
    %v3829 = vpop.f32.mrb[0].mxu0
    %v3830 = vadd.f32 0.0, %v3829
    %v3831 = vpop.f32.mrb[0].mxu0
    %3832 = vdwg.mxu0
    %v3833 = vadd.f32 %v3443, %v3815
    %v3834 = vadd.f32 %v3444, %v3820
    %v3835 = vadd.f32 %v3445, %v3825
    %v3836 = vadd.f32 %v3446, %v3830
    %v3837 = vlaneseq
    %v3838 = vshrl.u32 %v3837, 7
    %v3839 = vsub.s32 0, %v3838
    %v3840 = vrot.slane %v3735, %v3839
    %v3841 = vadd.f32 %v3833, %v3840
    %v3842 = vadd.f32 %v3834, %v3840
    %v3843 = vadd.f32 %v3835, %v3840
    %v3844 = vadd.f32 %v3836, %v3840
    %v3845 = vsel %vm231, %v3841, 0.0
    %3846 = vadd.xlane.f32.xlu0 %v3845
    %v3847 = vpop.xlane.xlu0 %3846
    %v3848 = vsel %vm231, %v3842, 0.0
    %3849 = vadd.xlane.f32.xlu0 %v3848
    %v3850 = vpop.xlane.xlu0 %3849
    %v3851 = vsel %vm231, %v3843, 0.0
    %3852 = vadd.xlane.f32.xlu0 %v3851
    %v3853 = vpop.xlane.xlu0 %3852
    %v3854 = vsel %vm231, %v3844, 0.0
    %3855 = vadd.xlane.f32.xlu0 %v3854
    %v3856 = vpop.xlane.xlu0 %3855
    %v3857 = vmul.f32 %v3847, %v2406
    %v3858 = vmul.f32 %v3850, %v2406
    %v3859 = vmul.f32 %v3853, %v2406
    %v3860 = vmul.f32 %v3856, %v2406
    %v3861 = vsub.f32 %v3841, %v3857
    %v3862 = vsub.f32 %v3842, %v3858
    %v3863 = vsub.f32 %v3843, %v3859
    %v3864 = vsub.f32 %v3844, %v3860
    %v3865 = vmul.f32 %v3861, %v3861
    %v3866 = vmul.f32 %v3862, %v3862
    %v3867 = vmul.f32 %v3863, %v3863
    %v3868 = vmul.f32 %v3864, %v3864
    %v3869 = vsel %vm231, %v3865, 0.0
    %3870 = vadd.xlane.f32.xlu0 %v3869
    %v3871 = vpop.xlane.xlu0 %3870
    %v3872 = vsel %vm231, %v3866, 0.0
    %3873 = vadd.xlane.f32.xlu0 %v3872
    %v3874 = vpop.xlane.xlu0 %3873
    %v3875 = vsel %vm231, %v3867, 0.0
    %3876 = vadd.xlane.f32.xlu0 %v3875
    %v3877 = vpop.xlane.xlu0 %3876
    %v3878 = vsel %vm231, %v3868, 0.0
    %3879 = vadd.xlane.f32.xlu0 %v3878
    %v3880 = vpop.xlane.xlu0 %3879
    %v3881 = vmul.f32 %v3871, %v2406
    %v3882 = vmul.f32 %v3874, %v2406
    %v3883 = vmul.f32 %v3877, %v2406
    %v3884 = vmul.f32 %v3880, %v2406
    %v3885 = vadd.f32 %v3881, 1e-05
    %v3886 = vadd.f32 %v3882, 1e-05
    %v3887 = vadd.f32 %v3883, 1e-05
    %v3888 = vadd.f32 %v3884, 1e-05
    %v3889 = vrsqrt.pop %v3885
    %v3890 = vrsqrt.pop %v3886
    %v3891 = vrsqrt.pop %v3887
    %v3892 = vrsqrt.pop %v3888
    %v3893 = vmul.f32 %v3861, %v3889
    %v3894 = vmul.f32 %v3862, %v3890
    %v3895 = vmul.f32 %v3863, %v3891
    %v3896 = vmul.f32 %v3864, %v3892
    %v3897 = vlaneseq
    %v3898 = vshrl.u32 %v3897, 7
    %v3899 = vsub.s32 0, %v3898
    %v3900 = vrot.slane %v2393, %v3899
    %v3901 = vmul.f32 %v3893, %v3900
    %v3902 = vmul.f32 %v3894, %v3900
    %v3903 = vmul.f32 %v3895, %v3900
    %v3904 = vmul.f32 %v3896, %v3900
    %v3905 = vlaneseq
    %v3906 = vshrl.u32 %v3905, 7
    %v3907 = vsub.s32 1, %v3906
    %v3908 = vrot.slane %v2393, %v3907
    %v3909 = vadd.f32 %v3901, %v3908
    %v3910 = vadd.f32 %v3902, %v3908
    %v3911 = vadd.f32 %v3903, %v3908
    %v3912 = vadd.f32 %v3904, %v3908
    %v3913 = vld [vmem:[#allocation17] sm:$0xff]
    %v3914 = vld [vmem:[#allocation17 + $0x8] sm:$0xff]
    %v3915 = vld [vmem:[#allocation17 + $0x10] sm:$0xff]
    %v3916 = vld [vmem:[#allocation17 + $0x18] sm:$0xff]
    %v3918 = vsel %vm231, %v3909, 0
    %v3921 = vsel %vm231, %v3910, 0
    %v3924 = vsel %vm231, %v3911, 0
    %v3927 = vsel %vm231, %v3912, 0
    %3929 = vmatprep.subr.mxu0 0.0
    %3930 = vmatpush1.msra.mxu0 %v3913
    %3931 = vmatprep.subr.mxu0 0.0
    %3932 = vmatpush1.msra.mxu0 %v3914
    %3933 = vmatprep.subr.mxu0 0.0
    %3934 = vmatpush1.msra.mxu0 %v3915
    %3935 = vmatprep.subr.mxu0 0.0
    %3936 = vmatpush1.msra.mxu0 %v3916
    %3937 = vmatprep.subr.mxu0 0.0
    %3938 = vmatpush1.msra.mxu0 0.0
    %3939 = vmatprep.subr.mxu0 0.0
    %3940 = vmatpush1.msra.mxu0 0.0
    %3941 = vmatprep.subr.mxu0 0.0
    %3942 = vmatpush1.msra.mxu0 0.0
    %3943 = vmatprep.subr.mxu0 0.0
    %3944 = vmatpush1.msra.mxu0 0.0
    %3945 = vmatprep.subr.mxu0 0.0
    %3946 = vmatpush1.msra.mxu0 0.0
    %3947 = vmatprep.subr.mxu0 0.0
    %3948 = vmatpush1.msra.mxu0 0.0
    %3949 = vmatprep.subr.mxu0 0.0
    %3950 = vmatpush1.msra.mxu0 0.0
    %3951 = vmatprep.subr.mxu0 0.0
    %3952 = vmatpush1.msra.mxu0 0.0
    %3953 = vmatprep.subr.mxu0 0.0
    %3954 = vmatpush1.msra.mxu0 0.0
    %3955 = vmatprep.subr.mxu0 0.0
    %3956 = vmatpush1.msra.mxu0 0.0
    %3957 = vmatprep.subr.mxu0 0.0
    %3958 = vmatpush1.msra.mxu0 0.0
    %3959 = vmatprep.subr.mxu0 0.0
    %3960 = vmatpush1.msra.mxu0 0.0
    %3961 = vmatprep.subr.mxu0 0.0
    %3962 = vmatpush1.msra.mxu0 0.0
    %3963 = vmatprep.subr.mxu0 0.0
    %3964 = vmatpush1.msra.mxu0 0.0
    %3965 = vmatprep.subr.mxu0 0.0
    %3966 = vmatpush1.msra.mxu0 0.0
    %3967 = vmatprep.subr.mxu0 0.0
    %3968 = vmatpush1.msra.mxu0 0.0
    %3969 = vmatprep.subr.mxu0 0.0
    %3970 = vmatpush1.msra.mxu0 0.0
    %3971 = vmatprep.subr.mxu0 0.0
    %3972 = vmatpush1.msra.mxu0 0.0
    %3973 = vmatprep.subr.mxu0 0.0
    %3974 = vmatpush1.msra.mxu0 0.0
    %3975 = vmatprep.subr.mxu0 0.0
    %3976 = vmatpush1.msra.mxu0 0.0
    %3977 = vmatprep.subr.mxu0 0.0
    %3978 = vmatpush1.msra.mxu0 0.0
    %3979 = vmatprep.subr.mxu0 0.0
    %3980 = vmatpush1.msra.mxu0 0.0
    %3981 = vmatprep.subr.mxu0 0.0
    %3982 = vmatpush1.msra.mxu0 0.0
    %3983 = vmatprep.subr.mxu0 0.0
    %3984 = vmatpush1.msra.mxu0 0.0
    %3985 = vmatprep.subr.mxu0 0.0
    %3986 = vmatpush1.msra.mxu0 0.0
    %3987 = vmatprep.subr.mxu0 0.0
    %3988 = vmatpush1.msra.mxu0 0.0
    %3989 = vmatprep.subr.mxu0 0.0
    %3990 = vmatpush1.msra.mxu0 0.0
    %3991 = vmatprep.subr.mxu0 0.0
    %3992 = vmatpush1.msra.mxu0 0.0
    %3993 = vmatprep.mubr.f32.mxu0 0.0
    %3994 = vmatmul.mubr.f32.gmra.mrb[0].mxu0 %v3918
    %v3995 = vpop.f32.mrb[0].mxu0
    %v3996 = vadd.f32 0.0, %v3995
    %v3997 = vpop.f32.mrb[0].mxu0
    %3998 = vmatprep.mubr.f32.mxu0 0.0
    %3999 = vmatmul.mubr.f32.gmra.mrb[0].mxu0 %v3921
    %v4000 = vpop.f32.mrb[0].mxu0
    %v4001 = vadd.f32 0.0, %v4000
    %v4002 = vpop.f32.mrb[0].mxu0
    %4003 = vmatprep.mubr.f32.mxu0 0.0
    %4004 = vmatmul.mubr.f32.gmra.mrb[0].mxu0 %v3924
    %v4005 = vpop.f32.mrb[0].mxu0
    %v4006 = vadd.f32 0.0, %v4005
    %v4007 = vpop.f32.mrb[0].mxu0
    %4008 = vmatprep.mubr.f32.mxu0 0.0
    %4009 = vmatmul.mubr.f32.gmra.mrb[0].mxu0 %v3927
    %v4010 = vpop.f32.mrb[0].mxu0
    %v4011 = vadd.f32 0.0, %v4010
    %v4012 = vpop.f32.mrb[0].mxu0
    %4013 = vdwg.mxu0
    %v4014 = vld [vmem:[#allocation15] sm:$0xff]
    %v4015 = vld [vmem:[#allocation15 + $0x8] sm:$0xff]
    %v4016 = vld [vmem:[#allocation15 + $0x10] sm:$0xff]
    %v4017 = vld [vmem:[#allocation15 + $0x18] sm:$0xff]
    %v4018 = vld [vmem:[#allocation15 + $0x20] sm:$0xff]
    %v4019 = vld [vmem:[#allocation15 + $0x28] sm:$0xff]
    %v4020 = vld [vmem:[#allocation15 + $0x30] sm:$0xff]
    %v4021 = vld [vmem:[#allocation15 + $0x38] sm:$0xff]
    %v4022 = vld [vmem:[#allocation15 + $0x40] sm:$0xff]
    %v4023 = vld [vmem:[#allocation15 + $0x48] sm:$0xff]
    %v4024 = vld [vmem:[#allocation15 + $0x50] sm:$0xff]
    %v4025 = vld [vmem:[#allocation15 + $0x58] sm:$0xff]
    %v4026 = vld [vmem:[#allocation15 + $0x60] sm:$0xff]
    %v4027 = vld [vmem:[#allocation15 + $0x68] sm:$0xff]
    %v4028 = vld [vmem:[#allocation15 + $0x70] sm:$0xff]
    %v4029 = vld [vmem:[#allocation15 + $0x78] sm:$0xff]
    %v4030 = vld [vmem:[#allocation15 + $0x80] sm:$0xff]
    %v4031 = vld [vmem:[#allocation15 + $0x88] sm:$0xff]
    %v4032 = vld [vmem:[#allocation15 + $0x90] sm:$0xff]
    %v4033 = vld [vmem:[#allocation15 + $0x98] sm:$0xff]
    %v4034 = vld [vmem:[#allocation15 + $0xa0] sm:$0xff]
    %v4035 = vld [vmem:[#allocation15 + $0xa8] sm:$0xff]
    %v4036 = vld [vmem:[#allocation15 + $0xb0] sm:$0xff]
    %v4037 = vld [vmem:[#allocation15 + $0xb8] sm:$0xff]
    %v4038 = vld [vmem:[#allocation15 + $0xc0] sm:$0xff]
    %v4039 = vld [vmem:[#allocation15 + $0xc8] sm:$0xff]
    %v4040 = vld [vmem:[#allocation15 + $0xd0] sm:$0xff]
    %v4041 = vld [vmem:[#allocation15 + $0xd8] sm:$0xff]
    %v4042 = vld [vmem:[#allocation15 + $0xe0] sm:$0xff]
    %v4043 = vld [vmem:[#allocation15 + $0xe8] sm:$0xff]
    %v4044 = vld [vmem:[#allocation15 + $0xf0] sm:$0xff]
    %v4045 = vld [vmem:[#allocation15 + $0xf8] sm:$0xff]
    %v4046 = vld [vmem:[#allocation15 + $0x100] sm:$0xff]
    %v4047 = vld [vmem:[#allocation15 + $0x108] sm:$0xff]
    %v4048 = vld [vmem:[#allocation15 + $0x110] sm:$0xff]
    %v4049 = vld [vmem:[#allocation15 + $0x118] sm:$0xff]
    %v4050 = vld [vmem:[#allocation15 + $0x120] sm:$0xff]
    %v4051 = vld [vmem:[#allocation15 + $0x128] sm:$0xff]
    %v4052 = vld [vmem:[#allocation15 + $0x130] sm:$0xff]
    %v4053 = vld [vmem:[#allocation15 + $0x138] sm:$0xff]
    %v4054 = vld [vmem:[#allocation15 + $0x140] sm:$0xff]
    %v4055 = vld [vmem:[#allocation15 + $0x148] sm:$0xff]
    %v4056 = vld [vmem:[#allocation15 + $0x150] sm:$0xff]
    %v4057 = vld [vmem:[#allocation15 + $0x158] sm:$0xff]
    %v4058 = vld [vmem:[#allocation15 + $0x160] sm:$0xff]
    %v4059 = vld [vmem:[#allocation15 + $0x168] sm:$0xff]
    %v4060 = vld [vmem:[#allocation15 + $0x170] sm:$0xff]
    %v4061 = vld [vmem:[#allocation15 + $0x178] sm:$0xff]
    %v4063 = vsel %vm231, %v4014, 0
    %v4066 = vsel %vm231, %v4015, 0
    %v4069 = vsel %vm231, %v4016, 0
    %v4072 = vsel %vm231, %v4017, 0
    %v4075 = vsel %vm231, %v4018, 0
    %v4078 = vsel %vm231, %v4019, 0
    %v4081 = vsel %vm231, %v4020, 0
    %v4084 = vsel %vm231, %v4021, 0
    %v4087 = vsel %vm231, %v4022, 0
    %v4090 = vsel %vm231, %v4023, 0
    %v4093 = vsel %vm231, %v4024, 0
    %v4096 = vsel %vm231, %v4025, 0
    %v4099 = vsel %vm231, %v4026, 0
    %v4102 = vsel %vm231, %v4027, 0
    %v4105 = vsel %vm231, %v4028, 0
    %v4108 = vsel %vm231, %v4029, 0
    %v4111 = vsel %vm231, %v4030, 0
    %v4114 = vsel %vm231, %v4031, 0
    %v4117 = vsel %vm231, %v4032, 0
    %v4120 = vsel %vm231, %v4033, 0
    %v4123 = vsel %vm231, %v4034, 0
    %v4126 = vsel %vm231, %v4035, 0
    %v4129 = vsel %vm231, %v4036, 0
    %v4132 = vsel %vm231, %v4037, 0
    %v4135 = vsel %vm231, %v4038, 0
    %v4138 = vsel %vm231, %v4039, 0
    %v4141 = vsel %vm231, %v4040, 0
    %v4144 = vsel %vm231, %v4041, 0
    %v4147 = vsel %vm231, %v4042, 0
    %v4150 = vsel %vm231, %v4043, 0
    %v4153 = vsel %vm231, %v4044, 0
    %v4156 = vsel %vm231, %v4045, 0
    %v4159 = vsel %vm231, %v4046, 0
    %v4162 = vsel %vm231, %v4047, 0
    %v4165 = vsel %vm231, %v4048, 0
    %v4168 = vsel %vm231, %v4049, 0
    %v4171 = vsel %vm231, %v4050, 0
    %v4174 = vsel %vm231, %v4051, 0
    %v4177 = vsel %vm231, %v4052, 0
    %v4180 = vsel %vm231, %v4053, 0
    %v4183 = vsel %vm231, %v4054, 0
    %v4186 = vsel %vm231, %v4055, 0
    %v4189 = vsel %vm231, %v4056, 0
    %v4192 = vsel %vm231, %v4057, 0
    %v4195 = vsel %vm231, %v4058, 0
    %v4198 = vsel %vm231, %v4059, 0
    %v4201 = vsel %vm231, %v4060, 0
    %v4204 = vsel %vm231, %v4061, 0
    %4206 = vmatprep.subr.mxu0 0.0
    %4207 = vmatpush1.msra.mxu0 %v3996
    %4208 = vmatprep.subr.mxu0 0.0
    %4209 = vmatpush1.msra.mxu0 %v4001
    %4210 = vmatprep.subr.mxu0 0.0
    %4211 = vmatpush1.msra.mxu0 %v4006
    %4212 = vmatprep.subr.mxu0 0.0
    %4213 = vmatpush1.msra.mxu0 %v4011
    %4214 = vmatprep.subr.mxu0 0.0
    %4215 = vmatpush1.msra.mxu0 0.0
    %4216 = vmatprep.subr.mxu0 0.0
    %4217 = vmatpush1.msra.mxu0 0.0
    %4218 = vmatprep.subr.mxu0 0.0
    %4219 = vmatpush1.msra.mxu0 0.0
    %4220 = vmatprep.subr.mxu0 0.0
    %4221 = vmatpush1.msra.mxu0 0.0
    %4222 = vmatprep.subr.mxu0 0.0
    %4223 = vmatpush1.msra.mxu0 0.0
    %4224 = vmatprep.subr.mxu0 0.0
    %4225 = vmatpush1.msra.mxu0 0.0
    %4226 = vmatprep.subr.mxu0 0.0
    %4227 = vmatpush1.msra.mxu0 0.0
    %4228 = vmatprep.subr.mxu0 0.0
    %4229 = vmatpush1.msra.mxu0 0.0
    %4230 = vmatprep.subr.mxu0 0.0
    %4231 = vmatpush1.msra.mxu0 0.0
    %4232 = vmatprep.subr.mxu0 0.0
    %4233 = vmatpush1.msra.mxu0 0.0
    %4234 = vmatprep.subr.mxu0 0.0
    %4235 = vmatpush1.msra.mxu0 0.0
    %4236 = vmatprep.subr.mxu0 0.0
    %4237 = vmatpush1.msra.mxu0 0.0
    %4238 = vmatprep.subr.mxu0 0.0
    %4239 = vmatpush1.msra.mxu0 0.0
    %4240 = vmatprep.subr.mxu0 0.0
    %4241 = vmatpush1.msra.mxu0 0.0
    %4242 = vmatprep.subr.mxu0 0.0
    %4243 = vmatpush1.msra.mxu0 0.0
    %4244 = vmatprep.subr.mxu0 0.0
    %4245 = vmatpush1.msra.mxu0 0.0
    %4246 = vmatprep.subr.mxu0 0.0
    %4247 = vmatpush1.msra.mxu0 0.0
    %4248 = vmatprep.subr.mxu0 0.0
    %4249 = vmatpush1.msra.mxu0 0.0
    %4250 = vmatprep.subr.mxu0 0.0
    %4251 = vmatpush1.msra.mxu0 0.0
    %4252 = vmatprep.subr.mxu0 0.0
    %4253 = vmatpush1.msra.mxu0 0.0
    %4254 = vmatprep.subr.mxu0 0.0
    %4255 = vmatpush1.msra.mxu0 0.0
    %4256 = vmatprep.subr.mxu0 0.0
    %4257 = vmatpush1.msra.mxu0 0.0
    %4258 = vmatprep.subr.mxu0 0.0
    %4259 = vmatpush1.msra.mxu0 0.0
    %4260 = vmatprep.subr.mxu0 0.0
    %4261 = vmatpush1.msra.mxu0 0.0
    %4262 = vmatprep.subr.mxu0 0.0
    %4263 = vmatpush1.msra.mxu0 0.0
    %4264 = vmatprep.subr.mxu0 0.0
    %4265 = vmatpush1.msra.mxu0 0.0
    %4266 = vmatprep.subr.mxu0 0.0
    %4267 = vmatpush1.msra.mxu0 0.0
    %4268 = vmatprep.subr.mxu0 0.0
    %4269 = vmatpush1.msra.mxu0 0.0
    %4270 = vmatprep.mubr.f32.mxu0 0.0
    %4271 = vmatmul.mubr.f32.gmra.mrb[0].mxu0 %v4063
    %v4272 = vpop.f32.mrb[0].mxu0
    %v4273 = vadd.f32 0.0, %v4272
    %v4274 = vpop.f32.mrb[0].mxu0
    %4275 = vmatprep.mubr.f32.mxu0 0.0
    %4276 = vmatmul.mubr.f32.gmra.mrb[0].mxu0 %v4066
    %v4277 = vpop.f32.mrb[0].mxu0
    %v4278 = vadd.f32 0.0, %v4277
    %v4279 = vpop.f32.mrb[0].mxu0
    %4280 = vmatprep.mubr.f32.mxu0 0.0
    %4281 = vmatmul.mubr.f32.gmra.mrb[0].mxu0 %v4069
    %v4282 = vpop.f32.mrb[0].mxu0
    %v4283 = vadd.f32 0.0, %v4282
    %v4284 = vpop.f32.mrb[0].mxu0
    %4285 = vmatprep.mubr.f32.mxu0 0.0
    %4286 = vmatmul.mubr.f32.gmra.mrb[0].mxu0 %v4072
    %v4287 = vpop.f32.mrb[0].mxu0
    %v4288 = vadd.f32 0.0, %v4287
    %v4289 = vpop.f32.mrb[0].mxu0
    %4290 = vmatprep.mubr.f32.mxu0 0.0
    %4291 = vmatmul.mubr.f32.gmra.mrb[0].mxu0 %v4075
    %v4292 = vpop.f32.mrb[0].mxu0
    %v4293 = vadd.f32 0.0, %v4292
    %v4294 = vpop.f32.mrb[0].mxu0
    %4295 = vmatprep.mubr.f32.mxu0 0.0
    %4296 = vmatmul.mubr.f32.gmra.mrb[0].mxu0 %v4078
    %v4297 = vpop.f32.mrb[0].mxu0
    %v4298 = vadd.f32 0.0, %v4297
    %v4299 = vpop.f32.mrb[0].mxu0
    %4300 = vmatprep.mubr.f32.mxu0 0.0
    %4301 = vmatmul.mubr.f32.gmra.mrb[0].mxu0 %v4081
    %v4302 = vpop.f32.mrb[0].mxu0
    %v4303 = vadd.f32 0.0, %v4302
    %v4304 = vpop.f32.mrb[0].mxu0
    %4305 = vmatprep.mubr.f32.mxu0 0.0
    %4306 = vmatmul.mubr.f32.gmra.mrb[0].mxu0 %v4084
    %v4307 = vpop.f32.mrb[0].mxu0
    %v4308 = vadd.f32 0.0, %v4307
    %v4309 = vpop.f32.mrb[0].mxu0
    %4310 = vmatprep.mubr.f32.mxu0 0.0
    %4311 = vmatmul.mubr.f32.gmra.mrb[0].mxu0 %v4087
    %v4312 = vpop.f32.mrb[0].mxu0
    %v4313 = vadd.f32 0.0, %v4312
    %v4314 = vpop.f32.mrb[0].mxu0
    %4315 = vmatprep.mubr.f32.mxu0 0.0
    %4316 = vmatmul.mubr.f32.gmra.mrb[0].mxu0 %v4090
    %v4317 = vpop.f32.mrb[0].mxu0
    %v4318 = vadd.f32 0.0, %v4317
    %v4319 = vpop.f32.mrb[0].mxu0
    %4320 = vmatprep.mubr.f32.mxu0 0.0
    %4321 = vmatmul.mubr.f32.gmra.mrb[0].mxu0 %v4093
    %v4322 = vpop.f32.mrb[0].mxu0
    %v4323 = vadd.f32 0.0, %v4322
    %v4324 = vpop.f32.mrb[0].mxu0
    %4325 = vmatprep.mubr.f32.mxu0 0.0
    %4326 = vmatmul.mubr.f32.gmra.mrb[0].mxu0 %v4096
    %v4327 = vpop.f32.mrb[0].mxu0
    %v4328 = vadd.f32 0.0, %v4327
    %v4329 = vpop.f32.mrb[0].mxu0
    %4330 = vmatprep.mubr.f32.mxu0 0.0
    %4331 = vmatmul.mubr.f32.gmra.mrb[0].mxu0 %v4099
    %v4332 = vpop.f32.mrb[0].mxu0
    %v4333 = vadd.f32 0.0, %v4332
    %v4334 = vpop.f32.mrb[0].mxu0
    %4335 = vmatprep.mubr.f32.mxu0 0.0
    %4336 = vmatmul.mubr.f32.gmra.mrb[0].mxu0 %v4102
    %v4337 = vpop.f32.mrb[0].mxu0
    %v4338 = vadd.f32 0.0, %v4337
    %v4339 = vpop.f32.mrb[0].mxu0
    %4340 = vmatprep.mubr.f32.mxu0 0.0
    %4341 = vmatmul.mubr.f32.gmra.mrb[0].mxu0 %v4105
    %v4342 = vpop.f32.mrb[0].mxu0
    %v4343 = vadd.f32 0.0, %v4342
    %v4344 = vpop.f32.mrb[0].mxu0
    %4345 = vmatprep.mubr.f32.mxu0 0.0
    %4346 = vmatmul.mubr.f32.gmra.mrb[0].mxu0 %v4108
    %v4347 = vpop.f32.mrb[0].mxu0
    %v4348 = vadd.f32 0.0, %v4347
    %v4349 = vpop.f32.mrb[0].mxu0
    %4350 = vmatprep.mubr.f32.mxu0 0.0
    %4351 = vmatmul.mubr.f32.gmra.mrb[0].mxu0 %v4111
    %v4352 = vpop.f32.mrb[0].mxu0
    %v4353 = vadd.f32 0.0, %v4352
    %v4354 = vpop.f32.mrb[0].mxu0
    %4355 = vmatprep.mubr.f32.mxu0 0.0
    %4356 = vmatmul.mubr.f32.gmra.mrb[0].mxu0 %v4114
    %v4357 = vpop.f32.mrb[0].mxu0
    %v4358 = vadd.f32 0.0, %v4357
    %v4359 = vpop.f32.mrb[0].mxu0
    %4360 = vmatprep.mubr.f32.mxu0 0.0
    %4361 = vmatmul.mubr.f32.gmra.mrb[0].mxu0 %v4117
    %v4362 = vpop.f32.mrb[0].mxu0
    %v4363 = vadd.f32 0.0, %v4362
    %v4364 = vpop.f32.mrb[0].mxu0
    %4365 = vmatprep.mubr.f32.mxu0 0.0
    %4366 = vmatmul.mubr.f32.gmra.mrb[0].mxu0 %v4120
    %v4367 = vpop.f32.mrb[0].mxu0
    %v4368 = vadd.f32 0.0, %v4367
    %v4369 = vpop.f32.mrb[0].mxu0
    %4370 = vmatprep.mubr.f32.mxu0 0.0
    %4371 = vmatmul.mubr.f32.gmra.mrb[0].mxu0 %v4123
    %v4372 = vpop.f32.mrb[0].mxu0
    %v4373 = vadd.f32 0.0, %v4372
    %v4374 = vpop.f32.mrb[0].mxu0
    %4375 = vmatprep.mubr.f32.mxu0 0.0
    %4376 = vmatmul.mubr.f32.gmra.mrb[0].mxu0 %v4126
    %v4377 = vpop.f32.mrb[0].mxu0
    %v4378 = vadd.f32 0.0, %v4377
    %v4379 = vpop.f32.mrb[0].mxu0
    %4380 = vmatprep.mubr.f32.mxu0 0.0
    %4381 = vmatmul.mubr.f32.gmra.mrb[0].mxu0 %v4129
    %v4382 = vpop.f32.mrb[0].mxu0
    %v4383 = vadd.f32 0.0, %v4382
    %v4384 = vpop.f32.mrb[0].mxu0
    %4385 = vmatprep.mubr.f32.mxu0 0.0
    %4386 = vmatmul.mubr.f32.gmra.mrb[0].mxu0 %v4132
    %v4387 = vpop.f32.mrb[0].mxu0
    %v4388 = vadd.f32 0.0, %v4387
    %v4389 = vpop.f32.mrb[0].mxu0
    %4390 = vmatprep.mubr.f32.mxu0 0.0
    %4391 = vmatmul.mubr.f32.gmra.mrb[0].mxu0 %v4135
    %v4392 = vpop.f32.mrb[0].mxu0
    %v4393 = vadd.f32 0.0, %v4392
    %v4394 = vpop.f32.mrb[0].mxu0
    %4395 = vmatprep.mubr.f32.mxu0 0.0
    %4396 = vmatmul.mubr.f32.gmra.mrb[0].mxu0 %v4138
    %v4397 = vpop.f32.mrb[0].mxu0
    %v4398 = vadd.f32 0.0, %v4397
    %v4399 = vpop.f32.mrb[0].mxu0
    %4400 = vmatprep.mubr.f32.mxu0 0.0
    %4401 = vmatmul.mubr.f32.gmra.mrb[0].mxu0 %v4141
    %v4402 = vpop.f32.mrb[0].mxu0
    %v4403 = vadd.f32 0.0, %v4402
    %v4404 = vpop.f32.mrb[0].mxu0
    %4405 = vmatprep.mubr.f32.mxu0 0.0
    %4406 = vmatmul.mubr.f32.gmra.mrb[0].mxu0 %v4144
    %v4407 = vpop.f32.mrb[0].mxu0
    %v4408 = vadd.f32 0.0, %v4407
    %v4409 = vpop.f32.mrb[0].mxu0
    %4410 = vmatprep.mubr.f32.mxu0 0.0
    %4411 = vmatmul.mubr.f32.gmra.mrb[0].mxu0 %v4147
    %v4412 = vpop.f32.mrb[0].mxu0
    %v4413 = vadd.f32 0.0, %v4412
    %v4414 = vpop.f32.mrb[0].mxu0
    %4415 = vmatprep.mubr.f32.mxu0 0.0
    %4416 = vmatmul.mubr.f32.gmra.mrb[0].mxu0 %v4150
    %v4417 = vpop.f32.mrb[0].mxu0
    %v4418 = vadd.f32 0.0, %v4417
    %v4419 = vpop.f32.mrb[0].mxu0
    %4420 = vmatprep.mubr.f32.mxu0 0.0
    %4421 = vmatmul.mubr.f32.gmra.mrb[0].mxu0 %v4153
    %v4422 = vpop.f32.mrb[0].mxu0
    %v4423 = vadd.f32 0.0, %v4422
    %v4424 = vpop.f32.mrb[0].mxu0
    %4425 = vmatprep.mubr.f32.mxu0 0.0
    %4426 = vmatmul.mubr.f32.gmra.mrb[0].mxu0 %v4156
    %v4427 = vpop.f32.mrb[0].mxu0
    %v4428 = vadd.f32 0.0, %v4427
    %v4429 = vpop.f32.mrb[0].mxu0
    %4430 = vmatprep.mubr.f32.mxu0 0.0
    %4431 = vmatmul.mubr.f32.gmra.mrb[0].mxu0 %v4159
    %v4432 = vpop.f32.mrb[0].mxu0
    %v4433 = vadd.f32 0.0, %v4432
    %v4434 = vpop.f32.mrb[0].mxu0
    %4435 = vmatprep.mubr.f32.mxu0 0.0
    %4436 = vmatmul.mubr.f32.gmra.mrb[0].mxu0 %v4162
    %v4437 = vpop.f32.mrb[0].mxu0
    %v4438 = vadd.f32 0.0, %v4437
    %v4439 = vpop.f32.mrb[0].mxu0
    %4440 = vmatprep.mubr.f32.mxu0 0.0
    %4441 = vmatmul.mubr.f32.gmra.mrb[0].mxu0 %v4165
    %v4442 = vpop.f32.mrb[0].mxu0
    %v4443 = vadd.f32 0.0, %v4442
    %v4444 = vpop.f32.mrb[0].mxu0
    %4445 = vmatprep.mubr.f32.mxu0 0.0
    %4446 = vmatmul.mubr.f32.gmra.mrb[0].mxu0 %v4168
    %v4447 = vpop.f32.mrb[0].mxu0
    %v4448 = vadd.f32 0.0, %v4447
    %v4449 = vpop.f32.mrb[0].mxu0
    %4450 = vmatprep.mubr.f32.mxu0 0.0
    %4451 = vmatmul.mubr.f32.gmra.mrb[0].mxu0 %v4171
    %v4452 = vpop.f32.mrb[0].mxu0
    %v4453 = vadd.f32 0.0, %v4452
    %v4454 = vpop.f32.mrb[0].mxu0
    %4455 = vmatprep.mubr.f32.mxu0 0.0
    %4456 = vmatmul.mubr.f32.gmra.mrb[0].mxu0 %v4174
    %v4457 = vpop.f32.mrb[0].mxu0
    %v4458 = vadd.f32 0.0, %v4457
    %v4459 = vpop.f32.mrb[0].mxu0
    %4460 = vmatprep.mubr.f32.mxu0 0.0
    %4461 = vmatmul.mubr.f32.gmra.mrb[0].mxu0 %v4177
    %v4462 = vpop.f32.mrb[0].mxu0
    %v4463 = vadd.f32 0.0, %v4462
    %v4464 = vpop.f32.mrb[0].mxu0
    %4465 = vmatprep.mubr.f32.mxu0 0.0
    %4466 = vmatmul.mubr.f32.gmra.mrb[0].mxu0 %v4180
    %v4467 = vpop.f32.mrb[0].mxu0
    %v4468 = vadd.f32 0.0, %v4467
    %v4469 = vpop.f32.mrb[0].mxu0
    %4470 = vmatprep.mubr.f32.mxu0 0.0
    %4471 = vmatmul.mubr.f32.gmra.mrb[0].mxu0 %v4183
    %v4472 = vpop.f32.mrb[0].mxu0
    %v4473 = vadd.f32 0.0, %v4472
    %v4474 = vpop.f32.mrb[0].mxu0
    %4475 = vmatprep.mubr.f32.mxu0 0.0
    %4476 = vmatmul.mubr.f32.gmra.mrb[0].mxu0 %v4186
    %v4477 = vpop.f32.mrb[0].mxu0
    %v4478 = vadd.f32 0.0, %v4477
    %v4479 = vpop.f32.mrb[0].mxu0
    %4480 = vmatprep.mubr.f32.mxu0 0.0
    %4481 = vmatmul.mubr.f32.gmra.mrb[0].mxu0 %v4189
    %v4482 = vpop.f32.mrb[0].mxu0
    %v4483 = vadd.f32 0.0, %v4482
    %v4484 = vpop.f32.mrb[0].mxu0
    %4485 = vmatprep.mubr.f32.mxu0 0.0
    %4486 = vmatmul.mubr.f32.gmra.mrb[0].mxu0 %v4192
    %v4487 = vpop.f32.mrb[0].mxu0
    %v4488 = vadd.f32 0.0, %v4487
    %v4489 = vpop.f32.mrb[0].mxu0
    %4490 = vmatprep.mubr.f32.mxu0 0.0
    %4491 = vmatmul.mubr.f32.gmra.mrb[0].mxu0 %v4195
    %v4492 = vpop.f32.mrb[0].mxu0
    %v4493 = vadd.f32 0.0, %v4492
    %v4494 = vpop.f32.mrb[0].mxu0
    %4495 = vmatprep.mubr.f32.mxu0 0.0
    %4496 = vmatmul.mubr.f32.gmra.mrb[0].mxu0 %v4198
    %v4497 = vpop.f32.mrb[0].mxu0
    %v4498 = vadd.f32 0.0, %v4497
    %v4499 = vpop.f32.mrb[0].mxu0
    %4500 = vmatprep.mubr.f32.mxu0 0.0
    %4501 = vmatmul.mubr.f32.gmra.mrb[0].mxu0 %v4201
    %v4502 = vpop.f32.mrb[0].mxu0
    %v4503 = vadd.f32 0.0, %v4502
    %v4504 = vpop.f32.mrb[0].mxu0
    %4505 = vmatprep.mubr.f32.mxu0 0.0
    %4506 = vmatmul.mubr.f32.gmra.mrb[0].mxu0 %v4204
    %v4507 = vpop.f32.mrb[0].mxu0
    %v4508 = vadd.f32 0.0, %v4507
    %v4509 = vpop.f32.mrb[0].mxu0
    %4510 = vdwg.mxu0
    %v4511 = vld [vmem:[%s10] sm:$0xff]
    %v4512 = vld [vmem:[%s10 + $0x8] sm:$0xff]
    %v4513 = vld [vmem:[%s10 + $0x10] sm:$0xff]
    %v4514 = vld [vmem:[%s10 + $0x18] sm:$0xff]
    %v4515 = vld [vmem:[%s10 + $0x20] sm:$0xff]
    %v4516 = vld [vmem:[%s10 + $0x28] sm:$0xff]
    %v4517 = vld [vmem:[%s10 + $0x30] sm:$0xff]
    %v4518 = vld [vmem:[%s10 + $0x38] sm:$0xff]
    %v4519 = vadd.f32 %v4511, %v4273
    %v4520 = vadd.f32 %v4512, %v4278
    %v4521 = vadd.f32 %v4513, %v4283
    %v4522 = vadd.f32 %v4514, %v4288
    %v4523 = vadd.f32 %v4515, %v4293
    %v4524 = vadd.f32 %v4516, %v4298
    %v4525 = vadd.f32 %v4517, %v4303
    %v4526 = vadd.f32 %v4518, %v4308
    %4535 = vrot.lane.b32.xlu0 %v4313, 120
    %v4536 = vpop.permute.xlu0 %4535
    %4537 = vrot.lane.b32.xlu0 %v4318, 120
    %v4538 = vpop.permute.xlu0 %4537
    %4539 = vrot.lane.b32.xlu0 %v4323, 120
    %v4540 = vpop.permute.xlu0 %4539
    %4541 = vrot.lane.b32.xlu0 %v4328, 120
    %v4542 = vpop.permute.xlu0 %4541
    %4543 = vrot.lane.b32.xlu0 %v4333, 120
    %v4544 = vpop.permute.xlu0 %4543
    %4545 = vrot.lane.b32.xlu0 %v4338, 120
    %v4546 = vpop.permute.xlu0 %4545
    %4547 = vrot.lane.b32.xlu0 %v4343, 120
    %v4548 = vpop.permute.xlu0 %4547
    %4549 = vrot.lane.b32.xlu0 %v4348, 120
    %v4550 = vpop.permute.xlu0 %4549
    %v4559 = vadd.f32 %v4519, %v4536
    %v4560 = vadd.f32 %v4520, %v4538
    %v4561 = vadd.f32 %v4521, %v4540
    %v4562 = vadd.f32 %v4522, %v4542
    %v4563 = vadd.f32 %v4523, %v4544
    %v4564 = vadd.f32 %v4524, %v4546
    %v4565 = vadd.f32 %v4525, %v4548
    %v4566 = vadd.f32 %v4526, %v4550
    %4575 = vrot.lane.b32.xlu0 %v4353, 112
    %v4576 = vpop.permute.xlu0 %4575
    %4577 = vrot.lane.b32.xlu0 %v4358, 112
    %v4578 = vpop.permute.xlu0 %4577
    %4579 = vrot.lane.b32.xlu0 %v4363, 112
    %v4580 = vpop.permute.xlu0 %4579
    %4581 = vrot.lane.b32.xlu0 %v4368, 112
    %v4582 = vpop.permute.xlu0 %4581
    %4583 = vrot.lane.b32.xlu0 %v4373, 112
    %v4584 = vpop.permute.xlu0 %4583
    %4585 = vrot.lane.b32.xlu0 %v4378, 112
    %v4586 = vpop.permute.xlu0 %4585
    %4587 = vrot.lane.b32.xlu0 %v4383, 112
    %v4588 = vpop.permute.xlu0 %4587
    %4589 = vrot.lane.b32.xlu0 %v4388, 112
    %v4590 = vpop.permute.xlu0 %4589
    %v4599 = vadd.f32 %v4559, %v4576
    %v4600 = vadd.f32 %v4560, %v4578
    %v4601 = vadd.f32 %v4561, %v4580
    %v4602 = vadd.f32 %v4562, %v4582
    %v4603 = vadd.f32 %v4563, %v4584
    %v4604 = vadd.f32 %v4564, %v4586
    %v4605 = vadd.f32 %v4565, %v4588
    %v4606 = vadd.f32 %v4566, %v4590
    %4615 = vrot.lane.b32.xlu0 %v4393, 104
    %v4616 = vpop.permute.xlu0 %4615
    %4617 = vrot.lane.b32.xlu0 %v4398, 104
    %v4618 = vpop.permute.xlu0 %4617
    %4619 = vrot.lane.b32.xlu0 %v4403, 104
    %v4620 = vpop.permute.xlu0 %4619
    %4621 = vrot.lane.b32.xlu0 %v4408, 104
    %v4622 = vpop.permute.xlu0 %4621
    %4623 = vrot.lane.b32.xlu0 %v4413, 104
    %v4624 = vpop.permute.xlu0 %4623
    %4625 = vrot.lane.b32.xlu0 %v4418, 104
    %v4626 = vpop.permute.xlu0 %4625
    %4627 = vrot.lane.b32.xlu0 %v4423, 104
    %v4628 = vpop.permute.xlu0 %4627
    %4629 = vrot.lane.b32.xlu0 %v4428, 104
    %v4630 = vpop.permute.xlu0 %4629
    %v4639 = vadd.f32 %v4599, %v4616
    %v4640 = vadd.f32 %v4600, %v4618
    %v4641 = vadd.f32 %v4601, %v4620
    %v4642 = vadd.f32 %v4602, %v4622
    %v4643 = vadd.f32 %v4603, %v4624
    %v4644 = vadd.f32 %v4604, %v4626
    %v4645 = vadd.f32 %v4605, %v4628
    %v4646 = vadd.f32 %v4606, %v4630
    %4655 = vrot.lane.b32.xlu0 %v4433, 96
    %v4656 = vpop.permute.xlu0 %4655
    %4657 = vrot.lane.b32.xlu0 %v4438, 96
    %v4658 = vpop.permute.xlu0 %4657
    %4659 = vrot.lane.b32.xlu0 %v4443, 96
    %v4660 = vpop.permute.xlu0 %4659
    %4661 = vrot.lane.b32.xlu0 %v4448, 96
    %v4662 = vpop.permute.xlu0 %4661
    %4663 = vrot.lane.b32.xlu0 %v4453, 96
    %v4664 = vpop.permute.xlu0 %4663
    %4665 = vrot.lane.b32.xlu0 %v4458, 96
    %v4666 = vpop.permute.xlu0 %4665
    %4667 = vrot.lane.b32.xlu0 %v4463, 96
    %v4668 = vpop.permute.xlu0 %4667
    %4669 = vrot.lane.b32.xlu0 %v4468, 96
    %v4670 = vpop.permute.xlu0 %4669
    %v4679 = vadd.f32 %v4639, %v4656
    %v4680 = vadd.f32 %v4640, %v4658
    %v4681 = vadd.f32 %v4641, %v4660
    %v4682 = vadd.f32 %v4642, %v4662
    %v4683 = vadd.f32 %v4643, %v4664
    %v4684 = vadd.f32 %v4644, %v4666
    %v4685 = vadd.f32 %v4645, %v4668
    %v4686 = vadd.f32 %v4646, %v4670
    %4695 = vrot.lane.b32.xlu0 %v4473, 88
    %v4696 = vpop.permute.xlu0 %4695
    %4697 = vrot.lane.b32.xlu0 %v4478, 88
    %v4698 = vpop.permute.xlu0 %4697
    %4699 = vrot.lane.b32.xlu0 %v4483, 88
    %v4700 = vpop.permute.xlu0 %4699
    %4701 = vrot.lane.b32.xlu0 %v4488, 88
    %v4702 = vpop.permute.xlu0 %4701
    %4703 = vrot.lane.b32.xlu0 %v4493, 88
    %v4704 = vpop.permute.xlu0 %4703
    %4705 = vrot.lane.b32.xlu0 %v4498, 88
    %v4706 = vpop.permute.xlu0 %4705
    %4707 = vrot.lane.b32.xlu0 %v4503, 88
    %v4708 = vpop.permute.xlu0 %4707
    %4709 = vrot.lane.b32.xlu0 %v4508, 88
    %v4710 = vpop.permute.xlu0 %4709
    %v4719 = vadd.f32 %v4679, %v4696
    %v4720 = vadd.f32 %v4680, %v4698
    %v4721 = vadd.f32 %v4681, %v4700
    %v4722 = vadd.f32 %v4682, %v4702
    %v4723 = vadd.f32 %v4683, %v4704
    %v4724 = vadd.f32 %v4684, %v4706
    %v4725 = vadd.f32 %v4685, %v4708
    %v4726 = vadd.f32 %v4686, %v4710
    %v4727 = vmax.f32 %v4719, 0.0
    %v4728 = vmax.f32 %v4720, 0.0
    %v4729 = vmax.f32 %v4721, 0.0
    %v4730 = vmax.f32 %v4722, 0.0
    %v4731 = vmax.f32 %v4723, 0.0
    %v4732 = vmax.f32 %v4724, 0.0
    %v4733 = vmax.f32 %v4725, 0.0
    %v4734 = vmax.f32 %v4726, 0.0
    %v4735 = vld [vmem:[%s12] sm:$0xff]
    %vm4736 = vcmask 64512
    %v4738 = vsel %vm4736, %v4727, 0
    %v4741 = vsel %vm4736, %v4728, 0
    %v4744 = vsel %vm4736, %v4729, 0
    %v4747 = vsel %vm4736, %v4730, 0
    %v4750 = vsel %vm4736, %v4731, 0
    %v4753 = vsel %vm4736, %v4732, 0
    %v4756 = vsel %vm4736, %v4733, 0
    %v4759 = vsel %vm4736, %v4734, 0
    %4761 = vmatprep.subr.mxu0 0.0
    %4762 = vmatpush1.msra.mxu0 %v4735
    %4763 = vmatprep.subr.mxu0 0.0
    %4764 = vmatpush1.msra.mxu0 0.0
    %4765 = vmatprep.subr.mxu0 0.0
    %4766 = vmatpush1.msra.mxu0 0.0
    %4767 = vmatprep.subr.mxu0 0.0
    %4768 = vmatpush1.msra.mxu0 0.0
    %4769 = vmatprep.subr.mxu0 0.0
    %4770 = vmatpush1.msra.mxu0 0.0
    %4771 = vmatprep.subr.mxu0 0.0
    %4772 = vmatpush1.msra.mxu0 0.0
    %4773 = vmatprep.subr.mxu0 0.0
    %4774 = vmatpush1.msra.mxu0 0.0
    %4775 = vmatprep.subr.mxu0 0.0
    %4776 = vmatpush1.msra.mxu0 0.0
    %4777 = vmatprep.subr.mxu0 0.0
    %4778 = vmatpush1.msra.mxu0 0.0
    %4779 = vmatprep.subr.mxu0 0.0
    %4780 = vmatpush1.msra.mxu0 0.0
    %4781 = vmatprep.subr.mxu0 0.0
    %4782 = vmatpush1.msra.mxu0 0.0
    %4783 = vmatprep.subr.mxu0 0.0
    %4784 = vmatpush1.msra.mxu0 0.0
    %4785 = vmatprep.subr.mxu0 0.0
    %4786 = vmatpush1.msra.mxu0 0.0
    %4787 = vmatprep.subr.mxu0 0.0
    %4788 = vmatpush1.msra.mxu0 0.0
    %4789 = vmatprep.subr.mxu0 0.0
    %4790 = vmatpush1.msra.mxu0 0.0
    %4791 = vmatprep.subr.mxu0 0.0
    %4792 = vmatpush1.msra.mxu0 0.0
    %4793 = vmatprep.subr.mxu0 0.0
    %4794 = vmatpush1.msra.mxu0 0.0
    %4795 = vmatprep.subr.mxu0 0.0
    %4796 = vmatpush1.msra.mxu0 0.0
    %4797 = vmatprep.subr.mxu0 0.0
    %4798 = vmatpush1.msra.mxu0 0.0
    %4799 = vmatprep.subr.mxu0 0.0
    %4800 = vmatpush1.msra.mxu0 0.0
    %4801 = vmatprep.subr.mxu0 0.0
    %4802 = vmatpush1.msra.mxu0 0.0
    %4803 = vmatprep.subr.mxu0 0.0
    %4804 = vmatpush1.msra.mxu0 0.0
    %4805 = vmatprep.subr.mxu0 0.0
    %4806 = vmatpush1.msra.mxu0 0.0
    %4807 = vmatprep.subr.mxu0 0.0
    %4808 = vmatpush1.msra.mxu0 0.0
    %4809 = vmatprep.subr.mxu0 0.0
    %4810 = vmatpush1.msra.mxu0 0.0
    %4811 = vmatprep.subr.mxu0 0.0
    %4812 = vmatpush1.msra.mxu0 0.0
    %4813 = vmatprep.subr.mxu0 0.0
    %4814 = vmatpush1.msra.mxu0 0.0
    %4815 = vmatprep.subr.mxu0 0.0
    %4816 = vmatpush1.msra.mxu0 0.0
    %4817 = vmatprep.subr.mxu0 0.0
    %4818 = vmatpush1.msra.mxu0 0.0
    %4819 = vmatprep.subr.mxu0 0.0
    %4820 = vmatpush1.msra.mxu0 0.0
    %4821 = vmatprep.subr.mxu0 0.0
    %4822 = vmatpush1.msra.mxu0 0.0
    %4823 = vmatprep.subr.mxu0 0.0
    %4824 = vmatpush1.msra.mxu0 0.0
    %4825 = vmatprep.mubr.f32.mxu0 0.0
    %4826 = vmatmul.mubr.f32.gmra.mrb[0].mxu0 %v4738
    %v4827 = vpop.f32.mrb[0].mxu0
    %v4828 = vadd.f32 0.0, %v4827
    %v4829 = vpop.f32.mrb[0].mxu0
    %4830 = vmatprep.mubr.f32.mxu0 0.0
    %4831 = vmatmul.mubr.f32.gmra.mrb[0].mxu0 %v4741
    %v4832 = vpop.f32.mrb[0].mxu0
    %v4833 = vadd.f32 0.0, %v4832
    %v4834 = vpop.f32.mrb[0].mxu0
    %4835 = vmatprep.mubr.f32.mxu0 0.0
    %4836 = vmatmul.mubr.f32.gmra.mrb[0].mxu0 %v4744
    %v4837 = vpop.f32.mrb[0].mxu0
    %v4838 = vadd.f32 0.0, %v4837
    %v4839 = vpop.f32.mrb[0].mxu0
    %4840 = vmatprep.mubr.f32.mxu0 0.0
    %4841 = vmatmul.mubr.f32.gmra.mrb[0].mxu0 %v4747
    %v4842 = vpop.f32.mrb[0].mxu0
    %v4843 = vadd.f32 0.0, %v4842
    %v4844 = vpop.f32.mrb[0].mxu0
    %4845 = vmatprep.mubr.f32.mxu0 0.0
    %4846 = vmatmul.mubr.f32.gmra.mrb[0].mxu0 %v4750
    %v4847 = vpop.f32.mrb[0].mxu0
    %v4848 = vadd.f32 0.0, %v4847
    %v4849 = vpop.f32.mrb[0].mxu0
    %4850 = vmatprep.mubr.f32.mxu0 0.0
    %4851 = vmatmul.mubr.f32.gmra.mrb[0].mxu0 %v4753
    %v4852 = vpop.f32.mrb[0].mxu0
    %v4853 = vadd.f32 0.0, %v4852
    %v4854 = vpop.f32.mrb[0].mxu0
    %4855 = vmatprep.mubr.f32.mxu0 0.0
    %4856 = vmatmul.mubr.f32.gmra.mrb[0].mxu0 %v4756
    %v4857 = vpop.f32.mrb[0].mxu0
    %v4858 = vadd.f32 0.0, %v4857
    %v4859 = vpop.f32.mrb[0].mxu0
    %4860 = vmatprep.mubr.f32.mxu0 0.0
    %4861 = vmatmul.mubr.f32.gmra.mrb[0].mxu0 %v4759
    %v4862 = vpop.f32.mrb[0].mxu0
    %v4863 = vadd.f32 0.0, %v4862
    %v4864 = vpop.f32.mrb[0].mxu0
    %4865 = vdwg.mxu0
    %v4866 = vld [vmem:[#allocation18] sm:$0xff]
    %v4867 = vld [vmem:[#allocation18 + $0x8] sm:$0xff]
    %v4868 = vld [vmem:[#allocation18 + $0x10] sm:$0xff]
    %v4869 = vld [vmem:[#allocation18 + $0x18] sm:$0xff]
    %v4870 = vld [vmem:[#allocation18 + $0x20] sm:$0xff]
    %v4871 = vld [vmem:[#allocation18 + $0x28] sm:$0xff]
    %v4872 = vld [vmem:[#allocation18 + $0x30] sm:$0xff]
    %v4873 = vld [vmem:[#allocation18 + $0x38] sm:$0xff]
    %v4874 = vld [vmem:[#allocation18 + $0x40] sm:$0xff]
    %v4875 = vld [vmem:[#allocation18 + $0x48] sm:$0xff]
    %v4876 = vld [vmem:[#allocation18 + $0x50] sm:$0xff]
    %v4877 = vld [vmem:[#allocation18 + $0x58] sm:$0xff]
    %v4878 = vld [vmem:[#allocation18 + $0x60] sm:$0xff]
    %v4879 = vld [vmem:[#allocation18 + $0x68] sm:$0xff]
    %v4880 = vld [vmem:[#allocation18 + $0x70] sm:$0xff]
    %v4881 = vld [vmem:[#allocation18 + $0x78] sm:$0xff]
    %v4882 = vld [vmem:[#allocation18 + $0x80] sm:$0xff]
    %v4883 = vld [vmem:[#allocation18 + $0x88] sm:$0xff]
    %v4884 = vld [vmem:[#allocation18 + $0x90] sm:$0xff]
    %v4885 = vld [vmem:[#allocation18 + $0x98] sm:$0xff]
    %v4886 = vld [vmem:[#allocation18 + $0xa0] sm:$0xff]
    %v4887 = vld [vmem:[#allocation18 + $0xa8] sm:$0xff]
    %v4888 = vld [vmem:[#allocation18 + $0xb0] sm:$0xff]
    %v4889 = vld [vmem:[#allocation18 + $0xb8] sm:$0xff]
    %v4890 = vld [vmem:[#allocation18 + $0xc0] sm:$0xff]
    %v4891 = vld [vmem:[#allocation18 + $0xc8] sm:$0xff]
    %v4892 = vld [vmem:[#allocation18 + $0xd0] sm:$0xff]
    %v4893 = vld [vmem:[#allocation18 + $0xd8] sm:$0xff]
    %v4894 = vld [vmem:[#allocation18 + $0xe0] sm:$0xff]
    %v4895 = vld [vmem:[#allocation18 + $0xe8] sm:$0xff]
    %v4896 = vld [vmem:[#allocation18 + $0xf0] sm:$0xff]
    %v4897 = vld [vmem:[#allocation18 + $0xf8] sm:$0xff]
    %v4898 = vld [vmem:[#allocation18 + $0x100] sm:$0xff]
    %v4899 = vld [vmem:[#allocation18 + $0x108] sm:$0xff]
    %v4900 = vld [vmem:[#allocation18 + $0x110] sm:$0xff]
    %v4901 = vld [vmem:[#allocation18 + $0x118] sm:$0xff]
    %v4902 = vld [vmem:[#allocation18 + $0x120] sm:$0xff]
    %v4903 = vld [vmem:[#allocation18 + $0x128] sm:$0xff]
    %v4904 = vld [vmem:[#allocation18 + $0x130] sm:$0xff]
    %v4905 = vld [vmem:[#allocation18 + $0x138] sm:$0xff]
    %v4906 = vld [vmem:[#allocation18 + $0x140] sm:$0xff]
    %v4907 = vld [vmem:[#allocation18 + $0x148] sm:$0xff]
    %v4908 = vld [vmem:[#allocation18 + $0x150] sm:$0xff]
    %v4909 = vld [vmem:[#allocation18 + $0x158] sm:$0xff]
    %v4910 = vld [vmem:[#allocation18 + $0x160] sm:$0xff]
    %v4911 = vld [vmem:[#allocation18 + $0x168] sm:$0xff]
    %v4912 = vld [vmem:[#allocation18 + $0x170] sm:$0xff]
    %v4913 = vld [vmem:[#allocation18 + $0x178] sm:$0xff]
    %v4914 = vld [vmem:[#allocation18 + $0x180] sm:$0xff]
    %v4915 = vld [vmem:[#allocation18 + $0x188] sm:$0xff]
    %v4916 = vld [vmem:[#allocation18 + $0x190] sm:$0xff]
    %v4917 = vld [vmem:[#allocation18 + $0x198] sm:$0xff]
    %v4918 = vld [vmem:[#allocation18 + $0x1a0] sm:$0xff]
    %v4919 = vld [vmem:[#allocation18 + $0x1a8] sm:$0xff]
    %v4920 = vld [vmem:[#allocation18 + $0x1b0] sm:$0xff]
    %v4921 = vld [vmem:[#allocation18 + $0x1b8] sm:$0xff]
    %v4922 = vld [vmem:[#allocation18 + $0x1c0] sm:$0xff]
    %v4923 = vld [vmem:[#allocation18 + $0x1c8] sm:$0xff]
    %v4924 = vld [vmem:[#allocation18 + $0x1d0] sm:$0xff]
    %v4925 = vld [vmem:[#allocation18 + $0x1d8] sm:$0xff]
    %v4926 = vld [vmem:[#allocation18 + $0x1e0] sm:$0xff]
    %v4927 = vld [vmem:[#allocation18 + $0x1e8] sm:$0xff]
    %v4928 = vld [vmem:[#allocation18 + $0x1f0] sm:$0xff]
    %v4929 = vld [vmem:[#allocation18 + $0x1f8] sm:$0xff]
    %v4930 = vld [vmem:[#allocation18 + $0x200] sm:$0xff]
    %v4931 = vld [vmem:[#allocation18 + $0x208] sm:$0xff]
    %v4932 = vld [vmem:[#allocation18 + $0x210] sm:$0xff]
    %v4933 = vld [vmem:[#allocation18 + $0x218] sm:$0xff]
    %v4934 = vld [vmem:[#allocation18 + $0x220] sm:$0xff]
    %v4935 = vld [vmem:[#allocation18 + $0x228] sm:$0xff]
    %v4936 = vld [vmem:[#allocation18 + $0x230] sm:$0xff]
    %v4937 = vld [vmem:[#allocation18 + $0x238] sm:$0xff]
    %v4938 = vld [vmem:[#allocation18 + $0x240] sm:$0xff]
    %v4939 = vld [vmem:[#allocation18 + $0x248] sm:$0xff]
    %v4940 = vld [vmem:[#allocation18 + $0x250] sm:$0xff]
    %v4941 = vld [vmem:[#allocation18 + $0x258] sm:$0xff]
    %v4942 = vld [vmem:[#allocation18 + $0x260] sm:$0xff]
    %v4943 = vld [vmem:[#allocation18 + $0x268] sm:$0xff]
    %v4944 = vld [vmem:[#allocation18 + $0x270] sm:$0xff]
    %v4945 = vld [vmem:[#allocation18 + $0x278] sm:$0xff]
    %v4946 = vld [vmem:[#allocation18 + $0x280] sm:$0xff]
    %v4947 = vld [vmem:[#allocation18 + $0x288] sm:$0xff]
    %v4948 = vld [vmem:[#allocation18 + $0x290] sm:$0xff]
    %v4949 = vld [vmem:[#allocation18 + $0x298] sm:$0xff]
    %v4950 = vld [vmem:[#allocation18 + $0x2a0] sm:$0xff]
    %v4951 = vld [vmem:[#allocation18 + $0x2a8] sm:$0xff]
    %v4952 = vld [vmem:[#allocation18 + $0x2b0] sm:$0xff]
    %v4953 = vld [vmem:[#allocation18 + $0x2b8] sm:$0xff]
    %v4954 = vld [vmem:[#allocation18 + $0x2c0] sm:$0xff]
    %v4955 = vld [vmem:[#allocation18 + $0x2c8] sm:$0xff]
    %v4956 = vld [vmem:[#allocation18 + $0x2d0] sm:$0xff]
    %v4957 = vld [vmem:[#allocation18 + $0x2d8] sm:$0xff]
    %v4958 = vld [vmem:[#allocation18 + $0x2e0] sm:$0xff]
    %v4959 = vld [vmem:[#allocation18 + $0x2e8] sm:$0xff]
    %v4960 = vld [vmem:[#allocation18 + $0x2f0] sm:$0xff]
    %v4961 = vld [vmem:[#allocation18 + $0x2f8] sm:$0xff]
    %v4963 = vsel %vm3009, %v4866, 0
    %v4966 = vsel %vm3009, %v4867, 0
    %v4969 = vsel %vm3009, %v4868, 0
    %v4972 = vsel %vm3009, %v4869, 0
    %v4975 = vsel %vm3009, %v4870, 0
    %v4978 = vsel %vm3009, %v4871, 0
    %v4981 = vsel %vm3009, %v4872, 0
    %v4984 = vsel %vm3009, %v4873, 0
    %v4987 = vsel %vm3009, %v4874, 0
    %v4990 = vsel %vm3009, %v4875, 0
    %v4993 = vsel %vm3009, %v4876, 0
    %v4996 = vsel %vm3009, %v4877, 0
    %v4999 = vsel %vm3009, %v4878, 0
    %v5002 = vsel %vm3009, %v4879, 0
    %v5005 = vsel %vm3009, %v4880, 0
    %v5008 = vsel %vm3009, %v4881, 0
    %v5011 = vsel %vm3009, %v4882, 0
    %v5014 = vsel %vm3009, %v4883, 0
    %v5017 = vsel %vm3009, %v4884, 0
    %v5020 = vsel %vm3009, %v4885, 0
    %v5023 = vsel %vm3009, %v4886, 0
    %v5026 = vsel %vm3009, %v4887, 0
    %v5029 = vsel %vm3009, %v4888, 0
    %v5032 = vsel %vm3009, %v4889, 0
    %v5035 = vsel %vm3009, %v4890, 0
    %v5038 = vsel %vm3009, %v4891, 0
    %v5041 = vsel %vm3009, %v4892, 0
    %v5044 = vsel %vm3009, %v4893, 0
    %v5047 = vsel %vm3009, %v4894, 0
    %v5050 = vsel %vm3009, %v4895, 0
    %v5053 = vsel %vm3009, %v4896, 0
    %v5056 = vsel %vm3009, %v4897, 0
    %v5059 = vsel %vm3009, %v4898, 0
    %v5062 = vsel %vm3009, %v4899, 0
    %v5065 = vsel %vm3009, %v4900, 0
    %v5068 = vsel %vm3009, %v4901, 0
    %v5071 = vsel %vm3009, %v4902, 0
    %v5074 = vsel %vm3009, %v4903, 0
    %v5077 = vsel %vm3009, %v4904, 0
    %v5080 = vsel %vm3009, %v4905, 0
    %v5083 = vsel %vm3009, %v4906, 0
    %v5086 = vsel %vm3009, %v4907, 0
    %v5089 = vsel %vm3009, %v4908, 0
    %v5092 = vsel %vm3009, %v4909, 0
    %v5095 = vsel %vm3009, %v4910, 0
    %v5098 = vsel %vm3009, %v4911, 0
    %v5101 = vsel %vm3009, %v4912, 0
    %v5104 = vsel %vm3009, %v4913, 0
    %v5107 = vsel %vm3009, %v4914, 0
    %v5110 = vsel %vm3009, %v4915, 0
    %v5113 = vsel %vm3009, %v4916, 0
    %v5116 = vsel %vm3009, %v4917, 0
    %v5119 = vsel %vm3009, %v4918, 0
    %v5122 = vsel %vm3009, %v4919, 0
    %v5125 = vsel %vm3009, %v4920, 0
    %v5128 = vsel %vm3009, %v4921, 0
    %v5131 = vsel %vm3009, %v4922, 0
    %v5134 = vsel %vm3009, %v4923, 0
    %v5137 = vsel %vm3009, %v4924, 0
    %v5140 = vsel %vm3009, %v4925, 0
    %v5143 = vsel %vm3009, %v4926, 0
    %v5146 = vsel %vm3009, %v4927, 0
    %v5149 = vsel %vm3009, %v4928, 0
    %v5152 = vsel %vm3009, %v4929, 0
    %v5155 = vsel %vm3009, %v4930, 0
    %v5158 = vsel %vm3009, %v4931, 0
    %v5161 = vsel %vm3009, %v4932, 0
    %v5164 = vsel %vm3009, %v4933, 0
    %v5167 = vsel %vm3009, %v4934, 0
    %v5170 = vsel %vm3009, %v4935, 0
    %v5173 = vsel %vm3009, %v4936, 0
    %v5176 = vsel %vm3009, %v4937, 0
    %v5179 = vsel %vm3009, %v4938, 0
    %v5182 = vsel %vm3009, %v4939, 0
    %v5185 = vsel %vm3009, %v4940, 0
    %v5188 = vsel %vm3009, %v4941, 0
    %v5191 = vsel %vm3009, %v4942, 0
    %v5194 = vsel %vm3009, %v4943, 0
    %v5197 = vsel %vm3009, %v4944, 0
    %v5200 = vsel %vm3009, %v4945, 0
    %v5203 = vsel %vm3009, %v4946, 0
    %v5206 = vsel %vm3009, %v4947, 0
    %v5209 = vsel %vm3009, %v4948, 0
    %v5212 = vsel %vm3009, %v4949, 0
    %v5215 = vsel %vm3009, %v4950, 0
    %v5218 = vsel %vm3009, %v4951, 0
    %v5221 = vsel %vm3009, %v4952, 0
    %v5224 = vsel %vm3009, %v4953, 0
    %v5227 = vsel %vm3009, %v4954, 0
    %v5230 = vsel %vm3009, %v4955, 0
    %v5233 = vsel %vm3009, %v4956, 0
    %v5236 = vsel %vm3009, %v4957, 0
    %v5239 = vsel %vm3009, %v4958, 0
    %v5242 = vsel %vm3009, %v4959, 0
    %v5245 = vsel %vm3009, %v4960, 0
    %v5248 = vsel %vm3009, %v4961, 0
    %5250 = vmatprep.subr.mxu0 0.0
    %5251 = vmatpush1.msra.mxu0 %v4828
    %5252 = vmatprep.subr.mxu0 0.0
    %5253 = vmatpush1.msra.mxu0 %v4833
    %5254 = vmatprep.subr.mxu0 0.0
    %5255 = vmatpush1.msra.mxu0 %v4838
    %5256 = vmatprep.subr.mxu0 0.0
    %5257 = vmatpush1.msra.mxu0 %v4843
    %5258 = vmatprep.subr.mxu0 0.0
    %5259 = vmatpush1.msra.mxu0 %v4848
    %5260 = vmatprep.subr.mxu0 0.0
    %5261 = vmatpush1.msra.mxu0 %v4853
    %5262 = vmatprep.subr.mxu0 0.0
    %5263 = vmatpush1.msra.mxu0 %v4858
    %5264 = vmatprep.subr.mxu0 0.0
    %5265 = vmatpush1.msra.mxu0 %v4863
    %5266 = vmatprep.subr.mxu0 0.0
    %5267 = vmatpush1.msra.mxu0 0.0
    %5268 = vmatprep.subr.mxu0 0.0
    %5269 = vmatpush1.msra.mxu0 0.0
    %5270 = vmatprep.subr.mxu0 0.0
    %5271 = vmatpush1.msra.mxu0 0.0
    %5272 = vmatprep.subr.mxu0 0.0
    %5273 = vmatpush1.msra.mxu0 0.0
    %5274 = vmatprep.subr.mxu0 0.0
    %5275 = vmatpush1.msra.mxu0 0.0
    %5276 = vmatprep.subr.mxu0 0.0
    %5277 = vmatpush1.msra.mxu0 0.0
    %5278 = vmatprep.subr.mxu0 0.0
    %5279 = vmatpush1.msra.mxu0 0.0
    %5280 = vmatprep.subr.mxu0 0.0
    %5281 = vmatpush1.msra.mxu0 0.0
    %5282 = vmatprep.subr.mxu0 0.0
    %5283 = vmatpush1.msra.mxu0 0.0
    %5284 = vmatprep.subr.mxu0 0.0
    %5285 = vmatpush1.msra.mxu0 0.0
    %5286 = vmatprep.subr.mxu0 0.0
    %5287 = vmatpush1.msra.mxu0 0.0
    %5288 = vmatprep.subr.mxu0 0.0
    %5289 = vmatpush1.msra.mxu0 0.0
    %5290 = vmatprep.subr.mxu0 0.0
    %5291 = vmatpush1.msra.mxu0 0.0
    %5292 = vmatprep.subr.mxu0 0.0
    %5293 = vmatpush1.msra.mxu0 0.0
    %5294 = vmatprep.subr.mxu0 0.0
    %5295 = vmatpush1.msra.mxu0 0.0
    %5296 = vmatprep.subr.mxu0 0.0
    %5297 = vmatpush1.msra.mxu0 0.0
    %5298 = vmatprep.subr.mxu0 0.0
    %5299 = vmatpush1.msra.mxu0 0.0
    %5300 = vmatprep.subr.mxu0 0.0
    %5301 = vmatpush1.msra.mxu0 0.0
    %5302 = vmatprep.subr.mxu0 0.0
    %5303 = vmatpush1.msra.mxu0 0.0
    %5304 = vmatprep.subr.mxu0 0.0
    %5305 = vmatpush1.msra.mxu0 0.0
    %5306 = vmatprep.subr.mxu0 0.0
    %5307 = vmatpush1.msra.mxu0 0.0
    %5308 = vmatprep.subr.mxu0 0.0
    %5309 = vmatpush1.msra.mxu0 0.0
    %5310 = vmatprep.subr.mxu0 0.0
    %5311 = vmatpush1.msra.mxu0 0.0
    %5312 = vmatprep.subr.mxu0 0.0
    %5313 = vmatpush1.msra.mxu0 0.0
    %5314 = vmatprep.mubr.f32.mxu0 0.0
    %5315 = vmatmul.mubr.f32.gmra.mrb[0].mxu0 %v4963
    %v5316 = vpop.f32.mrb[0].mxu0
    %v5317 = vadd.f32 0.0, %v5316
    %v5318 = vpop.f32.mrb[0].mxu0
    %5319 = vmatprep.mubr.f32.mxu0 0.0
    %5320 = vmatmul.mubr.f32.gmra.mrb[0].mxu0 %v4966
    %v5321 = vpop.f32.mrb[0].mxu0
    %v5322 = vadd.f32 0.0, %v5321
    %v5323 = vpop.f32.mrb[0].mxu0
    %5324 = vmatprep.mubr.f32.mxu0 0.0
    %5325 = vmatmul.mubr.f32.gmra.mrb[0].mxu0 %v4969
    %v5326 = vpop.f32.mrb[0].mxu0
    %v5327 = vadd.f32 0.0, %v5326
    %v5328 = vpop.f32.mrb[0].mxu0
    %5329 = vmatprep.mubr.f32.mxu0 0.0
    %5330 = vmatmul.mubr.f32.gmra.mrb[0].mxu0 %v4972
    %v5331 = vpop.f32.mrb[0].mxu0
    %v5332 = vadd.f32 0.0, %v5331
    %v5333 = vpop.f32.mrb[0].mxu0
    %5334 = vmatprep.mubr.f32.mxu0 0.0
    %5335 = vmatmul.mubr.f32.gmra.mrb[0].mxu0 %v4975
    %v5336 = vpop.f32.mrb[0].mxu0
    %v5337 = vadd.f32 0.0, %v5336
    %v5338 = vpop.f32.mrb[0].mxu0
    %5339 = vmatprep.mubr.f32.mxu0 0.0
    %5340 = vmatmul.mubr.f32.gmra.mrb[0].mxu0 %v4978
    %v5341 = vpop.f32.mrb[0].mxu0
    %v5342 = vadd.f32 0.0, %v5341
    %v5343 = vpop.f32.mrb[0].mxu0
    %5344 = vmatprep.mubr.f32.mxu0 0.0
    %5345 = vmatmul.mubr.f32.gmra.mrb[0].mxu0 %v4981
    %v5346 = vpop.f32.mrb[0].mxu0
    %v5347 = vadd.f32 0.0, %v5346
    %v5348 = vpop.f32.mrb[0].mxu0
    %5349 = vmatprep.mubr.f32.mxu0 0.0
    %5350 = vmatmul.mubr.f32.gmra.mrb[0].mxu0 %v4984
    %v5351 = vpop.f32.mrb[0].mxu0
    %v5352 = vadd.f32 0.0, %v5351
    %v5353 = vpop.f32.mrb[0].mxu0
    %5354 = vmatprep.mubr.f32.mxu0 0.0
    %5355 = vmatmul.mubr.f32.gmra.mrb[0].mxu0 %v4987
    %v5356 = vpop.f32.mrb[0].mxu0
    %v5357 = vadd.f32 0.0, %v5356
    %v5358 = vpop.f32.mrb[0].mxu0
    %5359 = vmatprep.mubr.f32.mxu0 0.0
    %5360 = vmatmul.mubr.f32.gmra.mrb[0].mxu0 %v4990
    %v5361 = vpop.f32.mrb[0].mxu0
    %v5362 = vadd.f32 0.0, %v5361
    %v5363 = vpop.f32.mrb[0].mxu0
    %5364 = vmatprep.mubr.f32.mxu0 0.0
    %5365 = vmatmul.mubr.f32.gmra.mrb[0].mxu0 %v4993
    %v5366 = vpop.f32.mrb[0].mxu0
    %v5367 = vadd.f32 0.0, %v5366
    %v5368 = vpop.f32.mrb[0].mxu0
    %5369 = vmatprep.mubr.f32.mxu0 0.0
    %5370 = vmatmul.mubr.f32.gmra.mrb[0].mxu0 %v4996
    %v5371 = vpop.f32.mrb[0].mxu0
    %v5372 = vadd.f32 0.0, %v5371
    %v5373 = vpop.f32.mrb[0].mxu0
    %5374 = vmatprep.mubr.f32.mxu0 0.0
    %5375 = vmatmul.mubr.f32.gmra.mrb[0].mxu0 %v4999
    %v5376 = vpop.f32.mrb[0].mxu0
    %v5377 = vadd.f32 0.0, %v5376
    %v5378 = vpop.f32.mrb[0].mxu0
    %5379 = vmatprep.mubr.f32.mxu0 0.0
    %5380 = vmatmul.mubr.f32.gmra.mrb[0].mxu0 %v5002
    %v5381 = vpop.f32.mrb[0].mxu0
    %v5382 = vadd.f32 0.0, %v5381
    %v5383 = vpop.f32.mrb[0].mxu0
    %5384 = vmatprep.mubr.f32.mxu0 0.0
    %5385 = vmatmul.mubr.f32.gmra.mrb[0].mxu0 %v5005
    %v5386 = vpop.f32.mrb[0].mxu0
    %v5387 = vadd.f32 0.0, %v5386
    %v5388 = vpop.f32.mrb[0].mxu0
    %5389 = vmatprep.mubr.f32.mxu0 0.0
    %5390 = vmatmul.mubr.f32.gmra.mrb[0].mxu0 %v5008
    %v5391 = vpop.f32.mrb[0].mxu0
    %v5392 = vadd.f32 0.0, %v5391
    %v5393 = vpop.f32.mrb[0].mxu0
    %5394 = vmatprep.mubr.f32.mxu0 0.0
    %5395 = vmatmul.mubr.f32.gmra.mrb[0].mxu0 %v5011
    %v5396 = vpop.f32.mrb[0].mxu0
    %v5397 = vadd.f32 0.0, %v5396
    %v5398 = vpop.f32.mrb[0].mxu0
    %5399 = vmatprep.mubr.f32.mxu0 0.0
    %5400 = vmatmul.mubr.f32.gmra.mrb[0].mxu0 %v5014
    %v5401 = vpop.f32.mrb[0].mxu0
    %v5402 = vadd.f32 0.0, %v5401
    %v5403 = vpop.f32.mrb[0].mxu0
    %5404 = vmatprep.mubr.f32.mxu0 0.0
    %5405 = vmatmul.mubr.f32.gmra.mrb[0].mxu0 %v5017
    %v5406 = vpop.f32.mrb[0].mxu0
    %v5407 = vadd.f32 0.0, %v5406
    %v5408 = vpop.f32.mrb[0].mxu0
    %5409 = vmatprep.mubr.f32.mxu0 0.0
    %5410 = vmatmul.mubr.f32.gmra.mrb[0].mxu0 %v5020
    %v5411 = vpop.f32.mrb[0].mxu0
    %v5412 = vadd.f32 0.0, %v5411
    %v5413 = vpop.f32.mrb[0].mxu0
    %5414 = vmatprep.mubr.f32.mxu0 0.0
    %5415 = vmatmul.mubr.f32.gmra.mrb[0].mxu0 %v5023
    %v5416 = vpop.f32.mrb[0].mxu0
    %v5417 = vadd.f32 0.0, %v5416
    %v5418 = vpop.f32.mrb[0].mxu0
    %5419 = vmatprep.mubr.f32.mxu0 0.0
    %5420 = vmatmul.mubr.f32.gmra.mrb[0].mxu0 %v5026
    %v5421 = vpop.f32.mrb[0].mxu0
    %v5422 = vadd.f32 0.0, %v5421
    %v5423 = vpop.f32.mrb[0].mxu0
    %5424 = vmatprep.mubr.f32.mxu0 0.0
    %5425 = vmatmul.mubr.f32.gmra.mrb[0].mxu0 %v5029
    %v5426 = vpop.f32.mrb[0].mxu0
    %v5427 = vadd.f32 0.0, %v5426
    %v5428 = vpop.f32.mrb[0].mxu0
    %5429 = vmatprep.mubr.f32.mxu0 0.0
    %5430 = vmatmul.mubr.f32.gmra.mrb[0].mxu0 %v5032
    %v5431 = vpop.f32.mrb[0].mxu0
    %v5432 = vadd.f32 0.0, %v5431
    %v5433 = vpop.f32.mrb[0].mxu0
    %5434 = vmatprep.mubr.f32.mxu0 0.0
    %5435 = vmatmul.mubr.f32.gmra.mrb[0].mxu0 %v5035
    %v5436 = vpop.f32.mrb[0].mxu0
    %v5437 = vadd.f32 0.0, %v5436
    %v5438 = vpop.f32.mrb[0].mxu0
    %5439 = vmatprep.mubr.f32.mxu0 0.0
    %5440 = vmatmul.mubr.f32.gmra.mrb[0].mxu0 %v5038
    %v5441 = vpop.f32.mrb[0].mxu0
    %v5442 = vadd.f32 0.0, %v5441
    %v5443 = vpop.f32.mrb[0].mxu0
    %5444 = vmatprep.mubr.f32.mxu0 0.0
    %5445 = vmatmul.mubr.f32.gmra.mrb[0].mxu0 %v5041
    %v5446 = vpop.f32.mrb[0].mxu0
    %v5447 = vadd.f32 0.0, %v5446
    %v5448 = vpop.f32.mrb[0].mxu0
    %5449 = vmatprep.mubr.f32.mxu0 0.0
    %5450 = vmatmul.mubr.f32.gmra.mrb[0].mxu0 %v5044
    %v5451 = vpop.f32.mrb[0].mxu0
    %v5452 = vadd.f32 0.0, %v5451
    %v5453 = vpop.f32.mrb[0].mxu0
    %5454 = vmatprep.mubr.f32.mxu0 0.0
    %5455 = vmatmul.mubr.f32.gmra.mrb[0].mxu0 %v5047
    %v5456 = vpop.f32.mrb[0].mxu0
    %v5457 = vadd.f32 0.0, %v5456
    %v5458 = vpop.f32.mrb[0].mxu0
    %5459 = vmatprep.mubr.f32.mxu0 0.0
    %5460 = vmatmul.mubr.f32.gmra.mrb[0].mxu0 %v5050
    %v5461 = vpop.f32.mrb[0].mxu0
    %v5462 = vadd.f32 0.0, %v5461
    %v5463 = vpop.f32.mrb[0].mxu0
    %5464 = vmatprep.mubr.f32.mxu0 0.0
    %5465 = vmatmul.mubr.f32.gmra.mrb[0].mxu0 %v5053
    %v5466 = vpop.f32.mrb[0].mxu0
    %v5467 = vadd.f32 0.0, %v5466
    %v5468 = vpop.f32.mrb[0].mxu0
    %5469 = vmatprep.mubr.f32.mxu0 0.0
    %5470 = vmatmul.mubr.f32.gmra.mrb[0].mxu0 %v5056
    %v5471 = vpop.f32.mrb[0].mxu0
    %v5472 = vadd.f32 0.0, %v5471
    %v5473 = vpop.f32.mrb[0].mxu0
    %5474 = vmatprep.mubr.f32.mxu0 0.0
    %5475 = vmatmul.mubr.f32.gmra.mrb[0].mxu0 %v5059
    %v5476 = vpop.f32.mrb[0].mxu0
    %v5477 = vadd.f32 0.0, %v5476
    %v5478 = vpop.f32.mrb[0].mxu0
    %5479 = vmatprep.mubr.f32.mxu0 0.0
    %5480 = vmatmul.mubr.f32.gmra.mrb[0].mxu0 %v5062
    %v5481 = vpop.f32.mrb[0].mxu0
    %v5482 = vadd.f32 0.0, %v5481
    %v5483 = vpop.f32.mrb[0].mxu0
    %5484 = vmatprep.mubr.f32.mxu0 0.0
    %5485 = vmatmul.mubr.f32.gmra.mrb[0].mxu0 %v5065
    %v5486 = vpop.f32.mrb[0].mxu0
    %v5487 = vadd.f32 0.0, %v5486
    %v5488 = vpop.f32.mrb[0].mxu0
    %5489 = vmatprep.mubr.f32.mxu0 0.0
    %5490 = vmatmul.mubr.f32.gmra.mrb[0].mxu0 %v5068
    %v5491 = vpop.f32.mrb[0].mxu0
    %v5492 = vadd.f32 0.0, %v5491
    %v5493 = vpop.f32.mrb[0].mxu0
    %5494 = vmatprep.mubr.f32.mxu0 0.0
    %5495 = vmatmul.mubr.f32.gmra.mrb[0].mxu0 %v5071
    %v5496 = vpop.f32.mrb[0].mxu0
    %v5497 = vadd.f32 0.0, %v5496
    %v5498 = vpop.f32.mrb[0].mxu0
    %5499 = vmatprep.mubr.f32.mxu0 0.0
    %5500 = vmatmul.mubr.f32.gmra.mrb[0].mxu0 %v5074
    %v5501 = vpop.f32.mrb[0].mxu0
    %v5502 = vadd.f32 0.0, %v5501
    %v5503 = vpop.f32.mrb[0].mxu0
    %5504 = vmatprep.mubr.f32.mxu0 0.0
    %5505 = vmatmul.mubr.f32.gmra.mrb[0].mxu0 %v5077
    %v5506 = vpop.f32.mrb[0].mxu0
    %v5507 = vadd.f32 0.0, %v5506
    %v5508 = vpop.f32.mrb[0].mxu0
    %5509 = vmatprep.mubr.f32.mxu0 0.0
    %5510 = vmatmul.mubr.f32.gmra.mrb[0].mxu0 %v5080
    %v5511 = vpop.f32.mrb[0].mxu0
    %v5512 = vadd.f32 0.0, %v5511
    %v5513 = vpop.f32.mrb[0].mxu0
    %5514 = vmatprep.mubr.f32.mxu0 0.0
    %5515 = vmatmul.mubr.f32.gmra.mrb[0].mxu0 %v5083
    %v5516 = vpop.f32.mrb[0].mxu0
    %v5517 = vadd.f32 0.0, %v5516
    %v5518 = vpop.f32.mrb[0].mxu0
    %5519 = vmatprep.mubr.f32.mxu0 0.0
    %5520 = vmatmul.mubr.f32.gmra.mrb[0].mxu0 %v5086
    %v5521 = vpop.f32.mrb[0].mxu0
    %v5522 = vadd.f32 0.0, %v5521
    %v5523 = vpop.f32.mrb[0].mxu0
    %5524 = vmatprep.mubr.f32.mxu0 0.0
    %5525 = vmatmul.mubr.f32.gmra.mrb[0].mxu0 %v5089
    %v5526 = vpop.f32.mrb[0].mxu0
    %v5527 = vadd.f32 0.0, %v5526
    %v5528 = vpop.f32.mrb[0].mxu0
    %5529 = vmatprep.mubr.f32.mxu0 0.0
    %5530 = vmatmul.mubr.f32.gmra.mrb[0].mxu0 %v5092
    %v5531 = vpop.f32.mrb[0].mxu0
    %v5532 = vadd.f32 0.0, %v5531
    %v5533 = vpop.f32.mrb[0].mxu0
    %5534 = vmatprep.mubr.f32.mxu0 0.0
    %5535 = vmatmul.mubr.f32.gmra.mrb[0].mxu0 %v5095
    %v5536 = vpop.f32.mrb[0].mxu0
    %v5537 = vadd.f32 0.0, %v5536
    %v5538 = vpop.f32.mrb[0].mxu0
    %5539 = vmatprep.mubr.f32.mxu0 0.0
    %5540 = vmatmul.mubr.f32.gmra.mrb[0].mxu0 %v5098
    %v5541 = vpop.f32.mrb[0].mxu0
    %v5542 = vadd.f32 0.0, %v5541
    %v5543 = vpop.f32.mrb[0].mxu0
    %5544 = vmatprep.mubr.f32.mxu0 0.0
    %5545 = vmatmul.mubr.f32.gmra.mrb[0].mxu0 %v5101
    %v5546 = vpop.f32.mrb[0].mxu0
    %v5547 = vadd.f32 0.0, %v5546
    %v5548 = vpop.f32.mrb[0].mxu0
    %5549 = vmatprep.mubr.f32.mxu0 0.0
    %5550 = vmatmul.mubr.f32.gmra.mrb[0].mxu0 %v5104
    %v5551 = vpop.f32.mrb[0].mxu0
    %v5552 = vadd.f32 0.0, %v5551
    %v5553 = vpop.f32.mrb[0].mxu0
    %5554 = vmatprep.mubr.f32.mxu0 0.0
    %5555 = vmatmul.mubr.f32.gmra.mrb[0].mxu0 %v5107
    %v5556 = vpop.f32.mrb[0].mxu0
    %v5557 = vadd.f32 0.0, %v5556
    %v5558 = vpop.f32.mrb[0].mxu0
    %5559 = vmatprep.mubr.f32.mxu0 0.0
    %5560 = vmatmul.mubr.f32.gmra.mrb[0].mxu0 %v5110
    %v5561 = vpop.f32.mrb[0].mxu0
    %v5562 = vadd.f32 0.0, %v5561
    %v5563 = vpop.f32.mrb[0].mxu0
    %5564 = vmatprep.mubr.f32.mxu0 0.0
    %5565 = vmatmul.mubr.f32.gmra.mrb[0].mxu0 %v5113
    %v5566 = vpop.f32.mrb[0].mxu0
    %v5567 = vadd.f32 0.0, %v5566
    %v5568 = vpop.f32.mrb[0].mxu0
    %5569 = vmatprep.mubr.f32.mxu0 0.0
    %5570 = vmatmul.mubr.f32.gmra.mrb[0].mxu0 %v5116
    %v5571 = vpop.f32.mrb[0].mxu0
    %v5572 = vadd.f32 0.0, %v5571
    %v5573 = vpop.f32.mrb[0].mxu0
    %5574 = vmatprep.mubr.f32.mxu0 0.0
    %5575 = vmatmul.mubr.f32.gmra.mrb[0].mxu0 %v5119
    %v5576 = vpop.f32.mrb[0].mxu0
    %v5577 = vadd.f32 0.0, %v5576
    %v5578 = vpop.f32.mrb[0].mxu0
    %5579 = vmatprep.mubr.f32.mxu0 0.0
    %5580 = vmatmul.mubr.f32.gmra.mrb[0].mxu0 %v5122
    %v5581 = vpop.f32.mrb[0].mxu0
    %v5582 = vadd.f32 0.0, %v5581
    %v5583 = vpop.f32.mrb[0].mxu0
    %5584 = vmatprep.mubr.f32.mxu0 0.0
    %5585 = vmatmul.mubr.f32.gmra.mrb[0].mxu0 %v5125
    %v5586 = vpop.f32.mrb[0].mxu0
    %v5587 = vadd.f32 0.0, %v5586
    %v5588 = vpop.f32.mrb[0].mxu0
    %5589 = vmatprep.mubr.f32.mxu0 0.0
    %5590 = vmatmul.mubr.f32.gmra.mrb[0].mxu0 %v5128
    %v5591 = vpop.f32.mrb[0].mxu0
    %v5592 = vadd.f32 0.0, %v5591
    %v5593 = vpop.f32.mrb[0].mxu0
    %5594 = vmatprep.mubr.f32.mxu0 0.0
    %5595 = vmatmul.mubr.f32.gmra.mrb[0].mxu0 %v5131
    %v5596 = vpop.f32.mrb[0].mxu0
    %v5597 = vadd.f32 0.0, %v5596
    %v5598 = vpop.f32.mrb[0].mxu0
    %5599 = vmatprep.mubr.f32.mxu0 0.0
    %5600 = vmatmul.mubr.f32.gmra.mrb[0].mxu0 %v5134
    %v5601 = vpop.f32.mrb[0].mxu0
    %v5602 = vadd.f32 0.0, %v5601
    %v5603 = vpop.f32.mrb[0].mxu0
    %5604 = vmatprep.mubr.f32.mxu0 0.0
    %5605 = vmatmul.mubr.f32.gmra.mrb[0].mxu0 %v5137
    %v5606 = vpop.f32.mrb[0].mxu0
    %v5607 = vadd.f32 0.0, %v5606
    %v5608 = vpop.f32.mrb[0].mxu0
    %5609 = vmatprep.mubr.f32.mxu0 0.0
    %5610 = vmatmul.mubr.f32.gmra.mrb[0].mxu0 %v5140
    %v5611 = vpop.f32.mrb[0].mxu0
    %v5612 = vadd.f32 0.0, %v5611
    %v5613 = vpop.f32.mrb[0].mxu0
    %5614 = vmatprep.mubr.f32.mxu0 0.0
    %5615 = vmatmul.mubr.f32.gmra.mrb[0].mxu0 %v5143
    %v5616 = vpop.f32.mrb[0].mxu0
    %v5617 = vadd.f32 0.0, %v5616
    %v5618 = vpop.f32.mrb[0].mxu0
    %5619 = vmatprep.mubr.f32.mxu0 0.0
    %5620 = vmatmul.mubr.f32.gmra.mrb[0].mxu0 %v5146
    %v5621 = vpop.f32.mrb[0].mxu0
    %v5622 = vadd.f32 0.0, %v5621
    %v5623 = vpop.f32.mrb[0].mxu0
    %5624 = vmatprep.mubr.f32.mxu0 0.0
    %5625 = vmatmul.mubr.f32.gmra.mrb[0].mxu0 %v5149
    %v5626 = vpop.f32.mrb[0].mxu0
    %v5627 = vadd.f32 0.0, %v5626
    %v5628 = vpop.f32.mrb[0].mxu0
    %5629 = vmatprep.mubr.f32.mxu0 0.0
    %5630 = vmatmul.mubr.f32.gmra.mrb[0].mxu0 %v5152
    %v5631 = vpop.f32.mrb[0].mxu0
    %v5632 = vadd.f32 0.0, %v5631
    %v5633 = vpop.f32.mrb[0].mxu0
    %5634 = vmatprep.mubr.f32.mxu0 0.0
    %5635 = vmatmul.mubr.f32.gmra.mrb[0].mxu0 %v5155
    %v5636 = vpop.f32.mrb[0].mxu0
    %v5637 = vadd.f32 0.0, %v5636
    %v5638 = vpop.f32.mrb[0].mxu0
    %5639 = vmatprep.mubr.f32.mxu0 0.0
    %5640 = vmatmul.mubr.f32.gmra.mrb[0].mxu0 %v5158
    %v5641 = vpop.f32.mrb[0].mxu0
    %v5642 = vadd.f32 0.0, %v5641
    %v5643 = vpop.f32.mrb[0].mxu0
    %5644 = vmatprep.mubr.f32.mxu0 0.0
    %5645 = vmatmul.mubr.f32.gmra.mrb[0].mxu0 %v5161
    %v5646 = vpop.f32.mrb[0].mxu0
    %v5647 = vadd.f32 0.0, %v5646
    %v5648 = vpop.f32.mrb[0].mxu0
    %5649 = vmatprep.mubr.f32.mxu0 0.0
    %5650 = vmatmul.mubr.f32.gmra.mrb[0].mxu0 %v5164
    %v5651 = vpop.f32.mrb[0].mxu0
    %v5652 = vadd.f32 0.0, %v5651
    %v5653 = vpop.f32.mrb[0].mxu0
    %5654 = vmatprep.mubr.f32.mxu0 0.0
    %5655 = vmatmul.mubr.f32.gmra.mrb[0].mxu0 %v5167
    %v5656 = vpop.f32.mrb[0].mxu0
    %v5657 = vadd.f32 0.0, %v5656
    %v5658 = vpop.f32.mrb[0].mxu0
    %5659 = vmatprep.mubr.f32.mxu0 0.0
    %5660 = vmatmul.mubr.f32.gmra.mrb[0].mxu0 %v5170
    %v5661 = vpop.f32.mrb[0].mxu0
    %v5662 = vadd.f32 0.0, %v5661
    %v5663 = vpop.f32.mrb[0].mxu0
    %5664 = vmatprep.mubr.f32.mxu0 0.0
    %5665 = vmatmul.mubr.f32.gmra.mrb[0].mxu0 %v5173
    %v5666 = vpop.f32.mrb[0].mxu0
    %v5667 = vadd.f32 0.0, %v5666
    %v5668 = vpop.f32.mrb[0].mxu0
    %5669 = vmatprep.mubr.f32.mxu0 0.0
    %5670 = vmatmul.mubr.f32.gmra.mrb[0].mxu0 %v5176
    %v5671 = vpop.f32.mrb[0].mxu0
    %v5672 = vadd.f32 0.0, %v5671
    %v5673 = vpop.f32.mrb[0].mxu0
    %5674 = vmatprep.mubr.f32.mxu0 0.0
    %5675 = vmatmul.mubr.f32.gmra.mrb[0].mxu0 %v5179
    %v5676 = vpop.f32.mrb[0].mxu0
    %v5677 = vadd.f32 0.0, %v5676
    %v5678 = vpop.f32.mrb[0].mxu0
    %5679 = vmatprep.mubr.f32.mxu0 0.0
    %5680 = vmatmul.mubr.f32.gmra.mrb[0].mxu0 %v5182
    %v5681 = vpop.f32.mrb[0].mxu0
    %v5682 = vadd.f32 0.0, %v5681
    %v5683 = vpop.f32.mrb[0].mxu0
    %5684 = vmatprep.mubr.f32.mxu0 0.0
    %5685 = vmatmul.mubr.f32.gmra.mrb[0].mxu0 %v5185
    %v5686 = vpop.f32.mrb[0].mxu0
    %v5687 = vadd.f32 0.0, %v5686
    %v5688 = vpop.f32.mrb[0].mxu0
    %5689 = vmatprep.mubr.f32.mxu0 0.0
    %5690 = vmatmul.mubr.f32.gmra.mrb[0].mxu0 %v5188
    %v5691 = vpop.f32.mrb[0].mxu0
    %v5692 = vadd.f32 0.0, %v5691
    %v5693 = vpop.f32.mrb[0].mxu0
    %5694 = vmatprep.mubr.f32.mxu0 0.0
    %5695 = vmatmul.mubr.f32.gmra.mrb[0].mxu0 %v5191
    %v5696 = vpop.f32.mrb[0].mxu0
    %v5697 = vadd.f32 0.0, %v5696
    %v5698 = vpop.f32.mrb[0].mxu0
    %5699 = vmatprep.mubr.f32.mxu0 0.0
    %5700 = vmatmul.mubr.f32.gmra.mrb[0].mxu0 %v5194
    %v5701 = vpop.f32.mrb[0].mxu0
    %v5702 = vadd.f32 0.0, %v5701
    %v5703 = vpop.f32.mrb[0].mxu0
    %5704 = vmatprep.mubr.f32.mxu0 0.0
    %5705 = vmatmul.mubr.f32.gmra.mrb[0].mxu0 %v5197
    %v5706 = vpop.f32.mrb[0].mxu0
    %v5707 = vadd.f32 0.0, %v5706
    %v5708 = vpop.f32.mrb[0].mxu0
    %5709 = vmatprep.mubr.f32.mxu0 0.0
    %5710 = vmatmul.mubr.f32.gmra.mrb[0].mxu0 %v5200
    %v5711 = vpop.f32.mrb[0].mxu0
    %v5712 = vadd.f32 0.0, %v5711
    %v5713 = vpop.f32.mrb[0].mxu0
    %5714 = vmatprep.mubr.f32.mxu0 0.0
    %5715 = vmatmul.mubr.f32.gmra.mrb[0].mxu0 %v5203
    %v5716 = vpop.f32.mrb[0].mxu0
    %v5717 = vadd.f32 0.0, %v5716
    %v5718 = vpop.f32.mrb[0].mxu0
    %5719 = vmatprep.mubr.f32.mxu0 0.0
    %5720 = vmatmul.mubr.f32.gmra.mrb[0].mxu0 %v5206
    %v5721 = vpop.f32.mrb[0].mxu0
    %v5722 = vadd.f32 0.0, %v5721
    %v5723 = vpop.f32.mrb[0].mxu0
    %5724 = vmatprep.mubr.f32.mxu0 0.0
    %5725 = vmatmul.mubr.f32.gmra.mrb[0].mxu0 %v5209
    %v5726 = vpop.f32.mrb[0].mxu0
    %v5727 = vadd.f32 0.0, %v5726
    %v5728 = vpop.f32.mrb[0].mxu0
    %5729 = vmatprep.mubr.f32.mxu0 0.0
    %5730 = vmatmul.mubr.f32.gmra.mrb[0].mxu0 %v5212
    %v5731 = vpop.f32.mrb[0].mxu0
    %v5732 = vadd.f32 0.0, %v5731
    %v5733 = vpop.f32.mrb[0].mxu0
    %5734 = vmatprep.mubr.f32.mxu0 0.0
    %5735 = vmatmul.mubr.f32.gmra.mrb[0].mxu0 %v5215
    %v5736 = vpop.f32.mrb[0].mxu0
    %v5737 = vadd.f32 0.0, %v5736
    %v5738 = vpop.f32.mrb[0].mxu0
    %5739 = vmatprep.mubr.f32.mxu0 0.0
    %5740 = vmatmul.mubr.f32.gmra.mrb[0].mxu0 %v5218
    %v5741 = vpop.f32.mrb[0].mxu0
    %v5742 = vadd.f32 0.0, %v5741
    %v5743 = vpop.f32.mrb[0].mxu0
    %5744 = vmatprep.mubr.f32.mxu0 0.0
    %5745 = vmatmul.mubr.f32.gmra.mrb[0].mxu0 %v5221
    %v5746 = vpop.f32.mrb[0].mxu0
    %v5747 = vadd.f32 0.0, %v5746
    %v5748 = vpop.f32.mrb[0].mxu0
    %5749 = vmatprep.mubr.f32.mxu0 0.0
    %5750 = vmatmul.mubr.f32.gmra.mrb[0].mxu0 %v5224
    %v5751 = vpop.f32.mrb[0].mxu0
    %v5752 = vadd.f32 0.0, %v5751
    %v5753 = vpop.f32.mrb[0].mxu0
    %5754 = vmatprep.mubr.f32.mxu0 0.0
    %5755 = vmatmul.mubr.f32.gmra.mrb[0].mxu0 %v5227
    %v5756 = vpop.f32.mrb[0].mxu0
    %v5757 = vadd.f32 0.0, %v5756
    %v5758 = vpop.f32.mrb[0].mxu0
    %5759 = vmatprep.mubr.f32.mxu0 0.0
    %5760 = vmatmul.mubr.f32.gmra.mrb[0].mxu0 %v5230
    %v5761 = vpop.f32.mrb[0].mxu0
    %v5762 = vadd.f32 0.0, %v5761
    %v5763 = vpop.f32.mrb[0].mxu0
    %5764 = vmatprep.mubr.f32.mxu0 0.0
    %5765 = vmatmul.mubr.f32.gmra.mrb[0].mxu0 %v5233
    %v5766 = vpop.f32.mrb[0].mxu0
    %v5767 = vadd.f32 0.0, %v5766
    %v5768 = vpop.f32.mrb[0].mxu0
    %5769 = vmatprep.mubr.f32.mxu0 0.0
    %5770 = vmatmul.mubr.f32.gmra.mrb[0].mxu0 %v5236
    %v5771 = vpop.f32.mrb[0].mxu0
    %v5772 = vadd.f32 0.0, %v5771
    %v5773 = vpop.f32.mrb[0].mxu0
    %5774 = vmatprep.mubr.f32.mxu0 0.0
    %5775 = vmatmul.mubr.f32.gmra.mrb[0].mxu0 %v5239
    %v5776 = vpop.f32.mrb[0].mxu0
    %v5777 = vadd.f32 0.0, %v5776
    %v5778 = vpop.f32.mrb[0].mxu0
    %5779 = vmatprep.mubr.f32.mxu0 0.0
    %5780 = vmatmul.mubr.f32.gmra.mrb[0].mxu0 %v5242
    %v5781 = vpop.f32.mrb[0].mxu0
    %v5782 = vadd.f32 0.0, %v5781
    %v5783 = vpop.f32.mrb[0].mxu0
    %5784 = vmatprep.mubr.f32.mxu0 0.0
    %5785 = vmatmul.mubr.f32.gmra.mrb[0].mxu0 %v5245
    %v5786 = vpop.f32.mrb[0].mxu0
    %v5787 = vadd.f32 0.0, %v5786
    %v5788 = vpop.f32.mrb[0].mxu0
    %5789 = vmatprep.mubr.f32.mxu0 0.0
    %5790 = vmatmul.mubr.f32.gmra.mrb[0].mxu0 %v5248
    %v5791 = vpop.f32.mrb[0].mxu0
    %v5792 = vadd.f32 0.0, %v5791
    %v5793 = vpop.f32.mrb[0].mxu0
    %5794 = vdwg.mxu0
    %v5795 = vld [vmem:[#allocation20] sm:$0xff]
    %v5796 = vld [vmem:[#allocation20 + $0x8] sm:$0xff]
    %v5797 = vld [vmem:[#allocation20 + $0x10] sm:$0xff]
    %v5798 = vld [vmem:[#allocation20 + $0x18] sm:$0xff]
    %v5799 = vld [vmem:[#allocation20 + $0x20] sm:$0xff]
    %v5800 = vld [vmem:[#allocation20 + $0x28] sm:$0xff]
    %v5801 = vld [vmem:[#allocation20 + $0x30] sm:$0xff]
    %v5802 = vld [vmem:[#allocation20 + $0x38] sm:$0xff]
    %v5803 = vld [vmem:[#allocation20 + $0x40] sm:$0xff]
    %v5804 = vld [vmem:[#allocation20 + $0x48] sm:$0xff]
    %v5805 = vld [vmem:[#allocation20 + $0x50] sm:$0xff]
    %v5806 = vld [vmem:[#allocation20 + $0x58] sm:$0xff]
    %v5807 = vld [vmem:[#allocation20 + $0x60] sm:$0xff]
    %v5808 = vld [vmem:[#allocation20 + $0x68] sm:$0xff]
    %v5809 = vld [vmem:[#allocation20 + $0x70] sm:$0xff]
    %v5810 = vld [vmem:[#allocation20 + $0x78] sm:$0xff]
    %v5811 = vadd.f32 %v5795, %v5317
    %v5812 = vadd.f32 %v5796, %v5322
    %v5813 = vadd.f32 %v5797, %v5327
    %v5814 = vadd.f32 %v5798, %v5332
    %v5815 = vadd.f32 %v5799, %v5337
    %v5816 = vadd.f32 %v5800, %v5342
    %v5817 = vadd.f32 %v5801, %v5347
    %v5818 = vadd.f32 %v5802, %v5352
    %v5819 = vadd.f32 %v5803, %v5357
    %v5820 = vadd.f32 %v5804, %v5362
    %v5821 = vadd.f32 %v5805, %v5367
    %v5822 = vadd.f32 %v5806, %v5372
    %v5823 = vadd.f32 %v5807, %v5377
    %v5824 = vadd.f32 %v5808, %v5382
    %v5825 = vadd.f32 %v5809, %v5387
    %v5826 = vadd.f32 %v5810, %v5392
    %5843 = vrot.lane.b32.xlu0 %v5397, 126
    %v5844 = vpop.permute.xlu0 %5843
    %5845 = vrot.lane.b32.xlu0 %v5402, 126
    %v5846 = vpop.permute.xlu0 %5845
    %5847 = vrot.lane.b32.xlu0 %v5407, 126
    %v5848 = vpop.permute.xlu0 %5847
    %5849 = vrot.lane.b32.xlu0 %v5412, 126
    %v5850 = vpop.permute.xlu0 %5849
    %5851 = vrot.lane.b32.xlu0 %v5417, 126
    %v5852 = vpop.permute.xlu0 %5851
    %5853 = vrot.lane.b32.xlu0 %v5422, 126
    %v5854 = vpop.permute.xlu0 %5853
    %5855 = vrot.lane.b32.xlu0 %v5427, 126
    %v5856 = vpop.permute.xlu0 %5855
    %5857 = vrot.lane.b32.xlu0 %v5432, 126
    %v5858 = vpop.permute.xlu0 %5857
    %5859 = vrot.lane.b32.xlu0 %v5437, 126
    %v5860 = vpop.permute.xlu0 %5859
    %5861 = vrot.lane.b32.xlu0 %v5442, 126
    %v5862 = vpop.permute.xlu0 %5861
    %5863 = vrot.lane.b32.xlu0 %v5447, 126
    %v5864 = vpop.permute.xlu0 %5863
    %5865 = vrot.lane.b32.xlu0 %v5452, 126
    %v5866 = vpop.permute.xlu0 %5865
    %5867 = vrot.lane.b32.xlu0 %v5457, 126
    %v5868 = vpop.permute.xlu0 %5867
    %5869 = vrot.lane.b32.xlu0 %v5462, 126
    %v5870 = vpop.permute.xlu0 %5869
    %5871 = vrot.lane.b32.xlu0 %v5467, 126
    %v5872 = vpop.permute.xlu0 %5871
    %5873 = vrot.lane.b32.xlu0 %v5472, 126
    %v5874 = vpop.permute.xlu0 %5873
    %v5891 = vadd.f32 %v5811, %v5844
    %v5892 = vadd.f32 %v5812, %v5846
    %v5893 = vadd.f32 %v5813, %v5848
    %v5894 = vadd.f32 %v5814, %v5850
    %v5895 = vadd.f32 %v5815, %v5852
    %v5896 = vadd.f32 %v5816, %v5854
    %v5897 = vadd.f32 %v5817, %v5856
    %v5898 = vadd.f32 %v5818, %v5858
    %v5899 = vadd.f32 %v5819, %v5860
    %v5900 = vadd.f32 %v5820, %v5862
    %v5901 = vadd.f32 %v5821, %v5864
    %v5902 = vadd.f32 %v5822, %v5866
    %v5903 = vadd.f32 %v5823, %v5868
    %v5904 = vadd.f32 %v5824, %v5870
    %v5905 = vadd.f32 %v5825, %v5872
    %v5906 = vadd.f32 %v5826, %v5874
    %5923 = vrot.lane.b32.xlu0 %v5477, 124
    %v5924 = vpop.permute.xlu0 %5923
    %5925 = vrot.lane.b32.xlu0 %v5482, 124
    %v5926 = vpop.permute.xlu0 %5925
    %5927 = vrot.lane.b32.xlu0 %v5487, 124
    %v5928 = vpop.permute.xlu0 %5927
    %5929 = vrot.lane.b32.xlu0 %v5492, 124
    %v5930 = vpop.permute.xlu0 %5929
    %5931 = vrot.lane.b32.xlu0 %v5497, 124
    %v5932 = vpop.permute.xlu0 %5931
    %5933 = vrot.lane.b32.xlu0 %v5502, 124
    %v5934 = vpop.permute.xlu0 %5933
    %5935 = vrot.lane.b32.xlu0 %v5507, 124
    %v5936 = vpop.permute.xlu0 %5935
    %5937 = vrot.lane.b32.xlu0 %v5512, 124
    %v5938 = vpop.permute.xlu0 %5937
    %5939 = vrot.lane.b32.xlu0 %v5517, 124
    %v5940 = vpop.permute.xlu0 %5939
    %5941 = vrot.lane.b32.xlu0 %v5522, 124
    %v5942 = vpop.permute.xlu0 %5941
    %5943 = vrot.lane.b32.xlu0 %v5527, 124
    %v5944 = vpop.permute.xlu0 %5943
    %5945 = vrot.lane.b32.xlu0 %v5532, 124
    %v5946 = vpop.permute.xlu0 %5945
    %5947 = vrot.lane.b32.xlu0 %v5537, 124
    %v5948 = vpop.permute.xlu0 %5947
    %5949 = vrot.lane.b32.xlu0 %v5542, 124
    %v5950 = vpop.permute.xlu0 %5949
    %5951 = vrot.lane.b32.xlu0 %v5547, 124
    %v5952 = vpop.permute.xlu0 %5951
    %5953 = vrot.lane.b32.xlu0 %v5552, 124
    %v5954 = vpop.permute.xlu0 %5953
    %v5971 = vadd.f32 %v5891, %v5924
    %v5972 = vadd.f32 %v5892, %v5926
    %v5973 = vadd.f32 %v5893, %v5928
    %v5974 = vadd.f32 %v5894, %v5930
    %v5975 = vadd.f32 %v5895, %v5932
    %v5976 = vadd.f32 %v5896, %v5934
    %v5977 = vadd.f32 %v5897, %v5936
    %v5978 = vadd.f32 %v5898, %v5938
    %v5979 = vadd.f32 %v5899, %v5940
    %v5980 = vadd.f32 %v5900, %v5942
    %v5981 = vadd.f32 %v5901, %v5944
    %v5982 = vadd.f32 %v5902, %v5946
    %v5983 = vadd.f32 %v5903, %v5948
    %v5984 = vadd.f32 %v5904, %v5950
    %v5985 = vadd.f32 %v5905, %v5952
    %v5986 = vadd.f32 %v5906, %v5954
    %6003 = vrot.lane.b32.xlu0 %v5557, 122
    %v6004 = vpop.permute.xlu0 %6003
    %6005 = vrot.lane.b32.xlu0 %v5562, 122
    %v6006 = vpop.permute.xlu0 %6005
    %6007 = vrot.lane.b32.xlu0 %v5567, 122
    %v6008 = vpop.permute.xlu0 %6007
    %6009 = vrot.lane.b32.xlu0 %v5572, 122
    %v6010 = vpop.permute.xlu0 %6009
    %6011 = vrot.lane.b32.xlu0 %v5577, 122
    %v6012 = vpop.permute.xlu0 %6011
    %6013 = vrot.lane.b32.xlu0 %v5582, 122
    %v6014 = vpop.permute.xlu0 %6013
    %6015 = vrot.lane.b32.xlu0 %v5587, 122
    %v6016 = vpop.permute.xlu0 %6015
    %6017 = vrot.lane.b32.xlu0 %v5592, 122
    %v6018 = vpop.permute.xlu0 %6017
    %6019 = vrot.lane.b32.xlu0 %v5597, 122
    %v6020 = vpop.permute.xlu0 %6019
    %6021 = vrot.lane.b32.xlu0 %v5602, 122
    %v6022 = vpop.permute.xlu0 %6021
    %6023 = vrot.lane.b32.xlu0 %v5607, 122
    %v6024 = vpop.permute.xlu0 %6023
    %6025 = vrot.lane.b32.xlu0 %v5612, 122
    %v6026 = vpop.permute.xlu0 %6025
    %6027 = vrot.lane.b32.xlu0 %v5617, 122
    %v6028 = vpop.permute.xlu0 %6027
    %6029 = vrot.lane.b32.xlu0 %v5622, 122
    %v6030 = vpop.permute.xlu0 %6029
    %6031 = vrot.lane.b32.xlu0 %v5627, 122
    %v6032 = vpop.permute.xlu0 %6031
    %6033 = vrot.lane.b32.xlu0 %v5632, 122
    %v6034 = vpop.permute.xlu0 %6033
    %v6051 = vadd.f32 %v5971, %v6004
    %v6052 = vadd.f32 %v5972, %v6006
    %v6053 = vadd.f32 %v5973, %v6008
    %v6054 = vadd.f32 %v5974, %v6010
    %v6055 = vadd.f32 %v5975, %v6012
    %v6056 = vadd.f32 %v5976, %v6014
    %v6057 = vadd.f32 %v5977, %v6016
    %v6058 = vadd.f32 %v5978, %v6018
    %v6059 = vadd.f32 %v5979, %v6020
    %v6060 = vadd.f32 %v5980, %v6022
    %v6061 = vadd.f32 %v5981, %v6024
    %v6062 = vadd.f32 %v5982, %v6026
    %v6063 = vadd.f32 %v5983, %v6028
    %v6064 = vadd.f32 %v5984, %v6030
    %v6065 = vadd.f32 %v5985, %v6032
    %v6066 = vadd.f32 %v5986, %v6034
    %6083 = vrot.lane.b32.xlu0 %v5637, 120
    %v6084 = vpop.permute.xlu0 %6083
    %6085 = vrot.lane.b32.xlu0 %v5642, 120
    %v6086 = vpop.permute.xlu0 %6085
    %6087 = vrot.lane.b32.xlu0 %v5647, 120
    %v6088 = vpop.permute.xlu0 %6087
    %6089 = vrot.lane.b32.xlu0 %v5652, 120
    %v6090 = vpop.permute.xlu0 %6089
    %6091 = vrot.lane.b32.xlu0 %v5657, 120
    %v6092 = vpop.permute.xlu0 %6091
    %6093 = vrot.lane.b32.xlu0 %v5662, 120
    %v6094 = vpop.permute.xlu0 %6093
    %6095 = vrot.lane.b32.xlu0 %v5667, 120
    %v6096 = vpop.permute.xlu0 %6095
    %6097 = vrot.lane.b32.xlu0 %v5672, 120
    %v6098 = vpop.permute.xlu0 %6097
    %6099 = vrot.lane.b32.xlu0 %v5677, 120
    %v6100 = vpop.permute.xlu0 %6099
    %6101 = vrot.lane.b32.xlu0 %v5682, 120
    %v6102 = vpop.permute.xlu0 %6101
    %6103 = vrot.lane.b32.xlu0 %v5687, 120
    %v6104 = vpop.permute.xlu0 %6103
    %6105 = vrot.lane.b32.xlu0 %v5692, 120
    %v6106 = vpop.permute.xlu0 %6105
    %6107 = vrot.lane.b32.xlu0 %v5697, 120
    %v6108 = vpop.permute.xlu0 %6107
    %6109 = vrot.lane.b32.xlu0 %v5702, 120
    %v6110 = vpop.permute.xlu0 %6109
    %6111 = vrot.lane.b32.xlu0 %v5707, 120
    %v6112 = vpop.permute.xlu0 %6111
    %6113 = vrot.lane.b32.xlu0 %v5712, 120
    %v6114 = vpop.permute.xlu0 %6113
    %v6131 = vadd.f32 %v6051, %v6084
    %v6132 = vadd.f32 %v6052, %v6086
    %v6133 = vadd.f32 %v6053, %v6088
    %v6134 = vadd.f32 %v6054, %v6090
    %v6135 = vadd.f32 %v6055, %v6092
    %v6136 = vadd.f32 %v6056, %v6094
    %v6137 = vadd.f32 %v6057, %v6096
    %v6138 = vadd.f32 %v6058, %v6098
    %v6139 = vadd.f32 %v6059, %v6100
    %v6140 = vadd.f32 %v6060, %v6102
    %v6141 = vadd.f32 %v6061, %v6104
    %v6142 = vadd.f32 %v6062, %v6106
    %v6143 = vadd.f32 %v6063, %v6108
    %v6144 = vadd.f32 %v6064, %v6110
    %v6145 = vadd.f32 %v6065, %v6112
    %v6146 = vadd.f32 %v6066, %v6114
    %6163 = vrot.lane.b32.xlu0 %v5717, 118
    %v6164 = vpop.permute.xlu0 %6163
    %6165 = vrot.lane.b32.xlu0 %v5722, 118
    %v6166 = vpop.permute.xlu0 %6165
    %6167 = vrot.lane.b32.xlu0 %v5727, 118
    %v6168 = vpop.permute.xlu0 %6167
    %6169 = vrot.lane.b32.xlu0 %v5732, 118
    %v6170 = vpop.permute.xlu0 %6169
    %6171 = vrot.lane.b32.xlu0 %v5737, 118
    %v6172 = vpop.permute.xlu0 %6171
    %6173 = vrot.lane.b32.xlu0 %v5742, 118
    %v6174 = vpop.permute.xlu0 %6173
    %6175 = vrot.lane.b32.xlu0 %v5747, 118
    %v6176 = vpop.permute.xlu0 %6175
    %6177 = vrot.lane.b32.xlu0 %v5752, 118
    %v6178 = vpop.permute.xlu0 %6177
    %6179 = vrot.lane.b32.xlu0 %v5757, 118
    %v6180 = vpop.permute.xlu0 %6179
    %6181 = vrot.lane.b32.xlu0 %v5762, 118
    %v6182 = vpop.permute.xlu0 %6181
    %6183 = vrot.lane.b32.xlu0 %v5767, 118
    %v6184 = vpop.permute.xlu0 %6183
    %6185 = vrot.lane.b32.xlu0 %v5772, 118
    %v6186 = vpop.permute.xlu0 %6185
    %6187 = vrot.lane.b32.xlu0 %v5777, 118
    %v6188 = vpop.permute.xlu0 %6187
    %6189 = vrot.lane.b32.xlu0 %v5782, 118
    %v6190 = vpop.permute.xlu0 %6189
    %6191 = vrot.lane.b32.xlu0 %v5787, 118
    %v6192 = vpop.permute.xlu0 %6191
    %6193 = vrot.lane.b32.xlu0 %v5792, 118
    %v6194 = vpop.permute.xlu0 %6193
    %v6211 = vadd.f32 %v6131, %v6164
    %v6212 = vadd.f32 %v6132, %v6166
    %v6213 = vadd.f32 %v6133, %v6168
    %v6214 = vadd.f32 %v6134, %v6170
    %v6215 = vadd.f32 %v6135, %v6172
    %v6216 = vadd.f32 %v6136, %v6174
    %v6217 = vadd.f32 %v6137, %v6176
    %v6218 = vadd.f32 %v6138, %v6178
    %v6219 = vadd.f32 %v6139, %v6180
    %v6220 = vadd.f32 %v6140, %v6182
    %v6221 = vadd.f32 %v6141, %v6184
    %v6222 = vadd.f32 %v6142, %v6186
    %v6223 = vadd.f32 %v6143, %v6188
    %v6224 = vadd.f32 %v6144, %v6190
    %v6225 = vadd.f32 %v6145, %v6192
    %v6226 = vadd.f32 %v6146, %v6194
    %v6227 = vmax.f32 %v6211, 0.0
    %v6228 = vmax.f32 %v6212, 0.0
    %v6229 = vmax.f32 %v6213, 0.0
    %v6230 = vmax.f32 %v6214, 0.0
    %v6231 = vmax.f32 %v6215, 0.0
    %v6232 = vmax.f32 %v6216, 0.0
    %v6233 = vmax.f32 %v6217, 0.0
    %v6234 = vmax.f32 %v6218, 0.0
    %v6235 = vmax.f32 %v6219, 0.0
    %v6236 = vmax.f32 %v6220, 0.0
    %v6237 = vmax.f32 %v6221, 0.0
    %v6238 = vmax.f32 %v6222, 0.0
    %v6239 = vmax.f32 %v6223, 0.0
    %v6240 = vmax.f32 %v6224, 0.0
    %v6241 = vmax.f32 %v6225, 0.0
    %v6242 = vmax.f32 %v6226, 0.0
    %vm6243 = vcmask 15360
    %v6244 = vsel %vm6243, %v6227, 0.0
    %6245 = vadd.xlane.f32.xlu0 %v6244
    %v6246 = vpop.xlane.xlu0 %6245
    %v6247 = vsel %vm6243, %v6228, 0.0
    %6248 = vadd.xlane.f32.xlu0 %v6247
    %v6249 = vpop.xlane.xlu0 %6248
    %v6250 = vsel %vm6243, %v6229, 0.0
    %6251 = vadd.xlane.f32.xlu0 %v6250
    %v6252 = vpop.xlane.xlu0 %6251
    %v6253 = vsel %vm6243, %v6230, 0.0
    %6254 = vadd.xlane.f32.xlu0 %v6253
    %v6255 = vpop.xlane.xlu0 %6254
    %v6256 = vsel %vm6243, %v6231, 0.0
    %6257 = vadd.xlane.f32.xlu0 %v6256
    %v6258 = vpop.xlane.xlu0 %6257
    %v6259 = vsel %vm6243, %v6232, 0.0
    %6260 = vadd.xlane.f32.xlu0 %v6259
    %v6261 = vpop.xlane.xlu0 %6260
    %v6262 = vsel %vm6243, %v6233, 0.0
    %6263 = vadd.xlane.f32.xlu0 %v6262
    %v6264 = vpop.xlane.xlu0 %6263
    %v6265 = vsel %vm6243, %v6234, 0.0
    %6266 = vadd.xlane.f32.xlu0 %v6265
    %v6267 = vpop.xlane.xlu0 %6266
    %v6268 = vsel %vm6243, %v6235, 0.0
    %6269 = vadd.xlane.f32.xlu0 %v6268
    %v6270 = vpop.xlane.xlu0 %6269
    %v6271 = vsel %vm6243, %v6236, 0.0
    %6272 = vadd.xlane.f32.xlu0 %v6271
    %v6273 = vpop.xlane.xlu0 %6272
    %v6274 = vsel %vm6243, %v6237, 0.0
    %6275 = vadd.xlane.f32.xlu0 %v6274
    %v6276 = vpop.xlane.xlu0 %6275
    %v6277 = vsel %vm6243, %v6238, 0.0
    %6278 = vadd.xlane.f32.xlu0 %v6277
    %v6279 = vpop.xlane.xlu0 %6278
    %v6280 = vsel %vm6243, %v6239, 0.0
    %6281 = vadd.xlane.f32.xlu0 %v6280
    %v6282 = vpop.xlane.xlu0 %6281
    %v6283 = vsel %vm6243, %v6240, 0.0
    %6284 = vadd.xlane.f32.xlu0 %v6283
    %v6285 = vpop.xlane.xlu0 %6284
    %v6286 = vsel %vm6243, %v6241, 0.0
    %6287 = vadd.xlane.f32.xlu0 %v6286
    %v6288 = vpop.xlane.xlu0 %6287
    %v6289 = vsel %vm6243, %v6242, 0.0
    %6290 = vadd.xlane.f32.xlu0 %v6289
    %v6291 = vpop.xlane.xlu0 %6290
    %v6292 = vrcp.pop 2.0
    %v6293 = vmul.f32 %v6246, %v6292
    %v6294 = vmul.f32 %v6249, %v6292
    %v6295 = vmul.f32 %v6252, %v6292
    %v6296 = vmul.f32 %v6255, %v6292
    %v6297 = vmul.f32 %v6258, %v6292
    %v6298 = vmul.f32 %v6261, %v6292
    %v6299 = vmul.f32 %v6264, %v6292
    %v6300 = vmul.f32 %v6267, %v6292
    %v6301 = vmul.f32 %v6270, %v6292
    %v6302 = vmul.f32 %v6273, %v6292
    %v6303 = vmul.f32 %v6276, %v6292
    %v6304 = vmul.f32 %v6279, %v6292
    %v6305 = vmul.f32 %v6282, %v6292
    %v6306 = vmul.f32 %v6285, %v6292
    %v6307 = vmul.f32 %v6288, %v6292
    %v6308 = vmul.f32 %v6291, %v6292
    %v6309 = vld [vmem:[#allocation21] sm:$0xff]
    %v6310 = vld [vmem:[#allocation21 + $0x8] sm:$0xff]
    %v6311 = vld [vmem:[#allocation21 + $0x10] sm:$0xff]
    %v6312 = vld [vmem:[#allocation21 + $0x18] sm:$0xff]
    %v6313 = vld [vmem:[#allocation21 + $0x20] sm:$0xff]
    %v6314 = vld [vmem:[#allocation21 + $0x28] sm:$0xff]
    %v6315 = vld [vmem:[#allocation21 + $0x30] sm:$0xff]
    %v6316 = vld [vmem:[#allocation21 + $0x38] sm:$0xff]
    %v6317 = vld [vmem:[#allocation21 + $0x40] sm:$0xff]
    %v6318 = vld [vmem:[#allocation21 + $0x48] sm:$0xff]
    %v6319 = vld [vmem:[#allocation21 + $0x50] sm:$0xff]
    %v6320 = vld [vmem:[#allocation21 + $0x58] sm:$0xff]
    %v6321 = vld [vmem:[#allocation21 + $0x60] sm:$0xff]
    %v6322 = vld [vmem:[#allocation21 + $0x68] sm:$0xff]
    %v6323 = vld [vmem:[#allocation21 + $0x70] sm:$0xff]
    %v6324 = vld [vmem:[#allocation21 + $0x78] sm:$0xff]
    %v6325 = vld [vmem:[#allocation21 + $0x80] sm:$0xff]
    %v6326 = vld [vmem:[#allocation21 + $0x88] sm:$0xff]
    %v6327 = vld [vmem:[#allocation21 + $0x90] sm:$0xff]
    %v6328 = vld [vmem:[#allocation21 + $0x98] sm:$0xff]
    %v6329 = vld [vmem:[#allocation21 + $0xa0] sm:$0xff]
    %v6330 = vld [vmem:[#allocation21 + $0xa8] sm:$0xff]
    %v6331 = vld [vmem:[#allocation21 + $0xb0] sm:$0xff]
    %v6332 = vld [vmem:[#allocation21 + $0xb8] sm:$0xff]
    %v6333 = vld [vmem:[#allocation21 + $0xc0] sm:$0xff]
    %v6334 = vld [vmem:[#allocation21 + $0xc8] sm:$0xff]
    %v6335 = vld [vmem:[#allocation21 + $0xd0] sm:$0xff]
    %v6336 = vld [vmem:[#allocation21 + $0xd8] sm:$0xff]
    %v6337 = vld [vmem:[#allocation21 + $0xe0] sm:$0xff]
    %v6338 = vld [vmem:[#allocation21 + $0xe8] sm:$0xff]
    %v6339 = vld [vmem:[#allocation21 + $0xf0] sm:$0xff]
    %v6340 = vld [vmem:[#allocation21 + $0xf8] sm:$0xff]
    %v6341 = vld [vmem:[#allocation21 + $0x100] sm:$0xff]
    %v6342 = vld [vmem:[#allocation21 + $0x108] sm:$0xff]
    %v6343 = vld [vmem:[#allocation21 + $0x110] sm:$0xff]
    %v6344 = vld [vmem:[#allocation21 + $0x118] sm:$0xff]
    %v6345 = vld [vmem:[#allocation21 + $0x120] sm:$0xff]
    %v6346 = vld [vmem:[#allocation21 + $0x128] sm:$0xff]
    %v6347 = vld [vmem:[#allocation21 + $0x130] sm:$0xff]
    %v6348 = vld [vmem:[#allocation21 + $0x138] sm:$0xff]
    %v6349 = vld [vmem:[#allocation21 + $0x140] sm:$0xff]
    %v6350 = vld [vmem:[#allocation21 + $0x148] sm:$0xff]
    %v6351 = vld [vmem:[#allocation21 + $0x150] sm:$0xff]
    %v6352 = vld [vmem:[#allocation21 + $0x158] sm:$0xff]
    %v6353 = vld [vmem:[#allocation21 + $0x160] sm:$0xff]
    %v6354 = vld [vmem:[#allocation21 + $0x168] sm:$0xff]
    %v6355 = vld [vmem:[#allocation21 + $0x170] sm:$0xff]
    %v6356 = vld [vmem:[#allocation21 + $0x178] sm:$0xff]
    %v6357 = vld [vmem:[#allocation21 + $0x180] sm:$0xff]
    %v6358 = vld [vmem:[#allocation21 + $0x188] sm:$0xff]
    %v6359 = vld [vmem:[#allocation21 + $0x190] sm:$0xff]
    %v6360 = vld [vmem:[#allocation21 + $0x198] sm:$0xff]
    %v6361 = vld [vmem:[#allocation21 + $0x1a0] sm:$0xff]
    %v6362 = vld [vmem:[#allocation21 + $0x1a8] sm:$0xff]
    %v6363 = vld [vmem:[#allocation21 + $0x1b0] sm:$0xff]
    %v6364 = vld [vmem:[#allocation21 + $0x1b8] sm:$0xff]
    %v6365 = vld [vmem:[#allocation21 + $0x1c0] sm:$0xff]
    %v6366 = vld [vmem:[#allocation21 + $0x1c8] sm:$0xff]
    %v6367 = vld [vmem:[#allocation21 + $0x1d0] sm:$0xff]
    %v6368 = vld [vmem:[#allocation21 + $0x1d8] sm:$0xff]
    %v6369 = vld [vmem:[#allocation21 + $0x1e0] sm:$0xff]
    %v6370 = vld [vmem:[#allocation21 + $0x1e8] sm:$0xff]
    %v6371 = vld [vmem:[#allocation21 + $0x1f0] sm:$0xff]
    %v6372 = vld [vmem:[#allocation21 + $0x1f8] sm:$0xff]
    %6373 = vmatprep.subr.mxu0 0.0
    %6374 = vmatpush1.msra.mxu0 %v6293
    %6375 = vmatprep.subr.mxu0 0.0
    %6376 = vmatpush1.msra.mxu0 %v6294
    %6377 = vmatprep.subr.mxu0 0.0
    %6378 = vmatpush1.msra.mxu0 %v6295
    %6379 = vmatprep.subr.mxu0 0.0
    %6380 = vmatpush1.msra.mxu0 %v6296
    %6381 = vmatprep.subr.mxu0 0.0
    %6382 = vmatpush1.msra.mxu0 %v6297
    %6383 = vmatprep.subr.mxu0 0.0
    %6384 = vmatpush1.msra.mxu0 %v6298
    %6385 = vmatprep.subr.mxu0 0.0
    %6386 = vmatpush1.msra.mxu0 %v6299
    %6387 = vmatprep.subr.mxu0 0.0
    %6388 = vmatpush1.msra.mxu0 %v6300
    %6389 = vmatprep.subr.mxu0 0.0
    %6390 = vmatpush1.msra.mxu0 %v6301
    %6391 = vmatprep.subr.mxu0 0.0
    %6392 = vmatpush1.msra.mxu0 %v6302
    %6393 = vmatprep.subr.mxu0 0.0
    %6394 = vmatpush1.msra.mxu0 %v6303
    %6395 = vmatprep.subr.mxu0 0.0
    %6396 = vmatpush1.msra.mxu0 %v6304
    %6397 = vmatprep.subr.mxu0 0.0
    %6398 = vmatpush1.msra.mxu0 %v6305
    %6399 = vmatprep.subr.mxu0 0.0
    %6400 = vmatpush1.msra.mxu0 %v6306
    %6401 = vmatprep.subr.mxu0 0.0
    %6402 = vmatpush1.msra.mxu0 %v6307
    %6403 = vmatprep.subr.mxu0 0.0
    %6404 = vmatpush1.msra.mxu0 %v6308
    %6405 = vmatprep.subr.mxu0 0.0
    %6406 = vmatpush1.msra.mxu0 0.0
    %6407 = vmatprep.subr.mxu0 0.0
    %6408 = vmatpush1.msra.mxu0 0.0
    %6409 = vmatprep.subr.mxu0 0.0
    %6410 = vmatpush1.msra.mxu0 0.0
    %6411 = vmatprep.subr.mxu0 0.0
    %6412 = vmatpush1.msra.mxu0 0.0
    %6413 = vmatprep.subr.mxu0 0.0
    %6414 = vmatpush1.msra.mxu0 0.0
    %6415 = vmatprep.subr.mxu0 0.0
    %6416 = vmatpush1.msra.mxu0 0.0
    %6417 = vmatprep.subr.mxu0 0.0
    %6418 = vmatpush1.msra.mxu0 0.0
    %6419 = vmatprep.subr.mxu0 0.0
    %6420 = vmatpush1.msra.mxu0 0.0
    %6421 = vmatprep.subr.mxu0 0.0
    %6422 = vmatpush1.msra.mxu0 0.0
    %6423 = vmatprep.subr.mxu0 0.0
    %6424 = vmatpush1.msra.mxu0 0.0
    %6425 = vmatprep.subr.mxu0 0.0
    %6426 = vmatpush1.msra.mxu0 0.0
    %6427 = vmatprep.subr.mxu0 0.0
    %6428 = vmatpush1.msra.mxu0 0.0
    %6429 = vmatprep.subr.mxu0 0.0
    %6430 = vmatpush1.msra.mxu0 0.0
    %6431 = vmatprep.subr.mxu0 0.0
    %6432 = vmatpush1.msra.mxu0 0.0
    %6433 = vmatprep.subr.mxu0 0.0
    %6434 = vmatpush1.msra.mxu0 0.0
    %6435 = vmatprep.subr.mxu0 0.0
    %6436 = vmatpush1.msra.mxu0 0.0
    %6437 = vmatprep.mubr.f32.mxu0 0.0
    %6438 = vmatmul.mubr.f32.gmra.mrb[0].mxu0 %v6309
    %v6439 = vpop.f32.mrb[0].mxu0
    %v6440 = vadd.f32 %v6310, %v6439
    %v6441 = vpop.f32.mrb[0].mxu0
    %6442 = vmatprep.mubr.f32.mxu0 0.0
    %6443 = vmatmul.mubr.f32.gmra.mrb[0].mxu0 %v6311
    %v6444 = vpop.f32.mrb[0].mxu0
    %v6445 = vadd.f32 %v6312, %v6444
    %v6446 = vpop.f32.mrb[0].mxu0
    %6447 = vmatprep.mubr.f32.mxu0 0.0
    %6448 = vmatmul.mubr.f32.gmra.mrb[0].mxu0 %v6313
    %v6449 = vpop.f32.mrb[0].mxu0
    %v6450 = vadd.f32 %v6314, %v6449
    %v6451 = vpop.f32.mrb[0].mxu0
    %6452 = vmatprep.mubr.f32.mxu0 0.0
    %6453 = vmatmul.mubr.f32.gmra.mrb[0].mxu0 %v6315
    %v6454 = vpop.f32.mrb[0].mxu0
    %v6455 = vadd.f32 %v6316, %v6454
    %v6456 = vpop.f32.mrb[0].mxu0
    %6457 = vmatprep.mubr.f32.mxu0 0.0
    %6458 = vmatmul.mubr.f32.gmra.mrb[0].mxu0 %v6317
    %v6459 = vpop.f32.mrb[0].mxu0
    %v6460 = vadd.f32 %v6318, %v6459
    %v6461 = vpop.f32.mrb[0].mxu0
    %6462 = vmatprep.mubr.f32.mxu0 0.0
    %6463 = vmatmul.mubr.f32.gmra.mrb[0].mxu0 %v6319
    %v6464 = vpop.f32.mrb[0].mxu0
    %v6465 = vadd.f32 %v6320, %v6464
    %v6466 = vpop.f32.mrb[0].mxu0
    %6467 = vmatprep.mubr.f32.mxu0 0.0
    %6468 = vmatmul.mubr.f32.gmra.mrb[0].mxu0 %v6321
    %v6469 = vpop.f32.mrb[0].mxu0
    %v6470 = vadd.f32 %v6322, %v6469
    %v6471 = vpop.f32.mrb[0].mxu0
    %6472 = vmatprep.mubr.f32.mxu0 0.0
    %6473 = vmatmul.mubr.f32.gmra.mrb[0].mxu0 %v6323
    %v6474 = vpop.f32.mrb[0].mxu0
    %v6475 = vadd.f32 %v6324, %v6474
    %v6476 = vpop.f32.mrb[0].mxu0
    %6477 = vmatprep.mubr.f32.mxu0 0.0
    %6478 = vmatmul.mubr.f32.gmra.mrb[0].mxu0 %v6325
    %v6479 = vpop.f32.mrb[0].mxu0
    %v6480 = vadd.f32 %v6326, %v6479
    %v6481 = vpop.f32.mrb[0].mxu0
    %6482 = vmatprep.mubr.f32.mxu0 0.0
    %6483 = vmatmul.mubr.f32.gmra.mrb[0].mxu0 %v6327
    %v6484 = vpop.f32.mrb[0].mxu0
    %v6485 = vadd.f32 %v6328, %v6484
    %v6486 = vpop.f32.mrb[0].mxu0
    %6487 = vmatprep.mubr.f32.mxu0 0.0
    %6488 = vmatmul.mubr.f32.gmra.mrb[0].mxu0 %v6329
    %v6489 = vpop.f32.mrb[0].mxu0
    %v6490 = vadd.f32 %v6330, %v6489
    %v6491 = vpop.f32.mrb[0].mxu0
    %6492 = vmatprep.mubr.f32.mxu0 0.0
    %6493 = vmatmul.mubr.f32.gmra.mrb[0].mxu0 %v6331
    %v6494 = vpop.f32.mrb[0].mxu0
    %v6495 = vadd.f32 %v6332, %v6494
    %v6496 = vpop.f32.mrb[0].mxu0
    %6497 = vmatprep.mubr.f32.mxu0 0.0
    %6498 = vmatmul.mubr.f32.gmra.mrb[0].mxu0 %v6333
    %v6499 = vpop.f32.mrb[0].mxu0
    %v6500 = vadd.f32 %v6334, %v6499
    %v6501 = vpop.f32.mrb[0].mxu0
    %6502 = vmatprep.mubr.f32.mxu0 0.0
    %6503 = vmatmul.mubr.f32.gmra.mrb[0].mxu0 %v6335
    %v6504 = vpop.f32.mrb[0].mxu0
    %v6505 = vadd.f32 %v6336, %v6504
    %v6506 = vpop.f32.mrb[0].mxu0
    %6507 = vmatprep.mubr.f32.mxu0 0.0
    %6508 = vmatmul.mubr.f32.gmra.mrb[0].mxu0 %v6337
    %v6509 = vpop.f32.mrb[0].mxu0
    %v6510 = vadd.f32 %v6338, %v6509
    %v6511 = vpop.f32.mrb[0].mxu0
    %6512 = vmatprep.mubr.f32.mxu0 0.0
    %6513 = vmatmul.mubr.f32.gmra.mrb[0].mxu0 %v6339
    %v6514 = vpop.f32.mrb[0].mxu0
    %v6515 = vadd.f32 %v6340, %v6514
    %v6516 = vpop.f32.mrb[0].mxu0
    %6517 = vmatprep.mubr.f32.mxu0 0.0
    %6518 = vmatmul.mubr.f32.gmra.mrb[0].mxu0 %v6341
    %v6519 = vpop.f32.mrb[0].mxu0
    %v6520 = vadd.f32 %v6342, %v6519
    %v6521 = vpop.f32.mrb[0].mxu0
    %6522 = vmatprep.mubr.f32.mxu0 0.0
    %6523 = vmatmul.mubr.f32.gmra.mrb[0].mxu0 %v6343
    %v6524 = vpop.f32.mrb[0].mxu0
    %v6525 = vadd.f32 %v6344, %v6524
    %v6526 = vpop.f32.mrb[0].mxu0
    %6527 = vmatprep.mubr.f32.mxu0 0.0
    %6528 = vmatmul.mubr.f32.gmra.mrb[0].mxu0 %v6345
    %v6529 = vpop.f32.mrb[0].mxu0
    %v6530 = vadd.f32 %v6346, %v6529
    %v6531 = vpop.f32.mrb[0].mxu0
    %6532 = vmatprep.mubr.f32.mxu0 0.0
    %6533 = vmatmul.mubr.f32.gmra.mrb[0].mxu0 %v6347
    %v6534 = vpop.f32.mrb[0].mxu0
    %v6535 = vadd.f32 %v6348, %v6534
    %v6536 = vpop.f32.mrb[0].mxu0
    %6537 = vmatprep.mubr.f32.mxu0 0.0
    %6538 = vmatmul.mubr.f32.gmra.mrb[0].mxu0 %v6349
    %v6539 = vpop.f32.mrb[0].mxu0
    %v6540 = vadd.f32 %v6350, %v6539
    %v6541 = vpop.f32.mrb[0].mxu0
    %6542 = vmatprep.mubr.f32.mxu0 0.0
    %6543 = vmatmul.mubr.f32.gmra.mrb[0].mxu0 %v6351
    %v6544 = vpop.f32.mrb[0].mxu0
    %v6545 = vadd.f32 %v6352, %v6544
    %v6546 = vpop.f32.mrb[0].mxu0
    %6547 = vmatprep.mubr.f32.mxu0 0.0
    %6548 = vmatmul.mubr.f32.gmra.mrb[0].mxu0 %v6353
    %v6549 = vpop.f32.mrb[0].mxu0
    %v6550 = vadd.f32 %v6354, %v6549
    %v6551 = vpop.f32.mrb[0].mxu0
    %6552 = vmatprep.mubr.f32.mxu0 0.0
    %6553 = vmatmul.mubr.f32.gmra.mrb[0].mxu0 %v6355
    %v6554 = vpop.f32.mrb[0].mxu0
    %v6555 = vadd.f32 %v6356, %v6554
    %v6556 = vpop.f32.mrb[0].mxu0
    %6557 = vmatprep.mubr.f32.mxu0 0.0
    %6558 = vmatmul.mubr.f32.gmra.mrb[0].mxu0 %v6357
    %v6559 = vpop.f32.mrb[0].mxu0
    %v6560 = vadd.f32 %v6358, %v6559
    %v6561 = vpop.f32.mrb[0].mxu0
    %6562 = vmatprep.mubr.f32.mxu0 0.0
    %6563 = vmatmul.mubr.f32.gmra.mrb[0].mxu0 %v6359
    %v6564 = vpop.f32.mrb[0].mxu0
    %v6565 = vadd.f32 %v6360, %v6564
    %v6566 = vpop.f32.mrb[0].mxu0
    %6567 = vmatprep.mubr.f32.mxu0 0.0
    %6568 = vmatmul.mubr.f32.gmra.mrb[0].mxu0 %v6361
    %v6569 = vpop.f32.mrb[0].mxu0
    %v6570 = vadd.f32 %v6362, %v6569
    %v6571 = vpop.f32.mrb[0].mxu0
    %6572 = vmatprep.mubr.f32.mxu0 0.0
    %6573 = vmatmul.mubr.f32.gmra.mrb[0].mxu0 %v6363
    %v6574 = vpop.f32.mrb[0].mxu0
    %v6575 = vadd.f32 %v6364, %v6574
    %v6576 = vpop.f32.mrb[0].mxu0
    %6577 = vmatprep.mubr.f32.mxu0 0.0
    %6578 = vmatmul.mubr.f32.gmra.mrb[0].mxu0 %v6365
    %v6579 = vpop.f32.mrb[0].mxu0
    %v6580 = vadd.f32 %v6366, %v6579
    %v6581 = vpop.f32.mrb[0].mxu0
    %6582 = vmatprep.mubr.f32.mxu0 0.0
    %6583 = vmatmul.mubr.f32.gmra.mrb[0].mxu0 %v6367
    %v6584 = vpop.f32.mrb[0].mxu0
    %v6585 = vadd.f32 %v6368, %v6584
    %v6586 = vpop.f32.mrb[0].mxu0
    %6587 = vmatprep.mubr.f32.mxu0 0.0
    %6588 = vmatmul.mubr.f32.gmra.mrb[0].mxu0 %v6369
    %v6589 = vpop.f32.mrb[0].mxu0
    %v6590 = vadd.f32 %v6370, %v6589
    %v6591 = vpop.f32.mrb[0].mxu0
    %6592 = vmatprep.mubr.f32.mxu0 0.0
    %6593 = vmatmul.mubr.f32.gmra.mrb[0].mxu0 %v6371
    %v6594 = vpop.f32.mrb[0].mxu0
    %v6595 = vadd.f32 %v6372, %v6594
    %v6596 = vpop.f32.mrb[0].mxu0
    %6597 = vdwg.mxu0
    %v6598 = vmax.f32 %v6440, 0.0
    %v6599 = vmax.f32 %v6445, 0.0
    %v6600 = vmax.f32 %v6450, 0.0
    %v6601 = vmax.f32 %v6455, 0.0
    %v6602 = vmax.f32 %v6460, 0.0
    %v6603 = vmax.f32 %v6465, 0.0
    %v6604 = vmax.f32 %v6470, 0.0
    %v6605 = vmax.f32 %v6475, 0.0
    %v6606 = vmax.f32 %v6480, 0.0
    %v6607 = vmax.f32 %v6485, 0.0
    %v6608 = vmax.f32 %v6490, 0.0
    %v6609 = vmax.f32 %v6495, 0.0
    %v6610 = vmax.f32 %v6500, 0.0
    %v6611 = vmax.f32 %v6505, 0.0
    %v6612 = vmax.f32 %v6510, 0.0
    %v6613 = vmax.f32 %v6515, 0.0
    %v6614 = vmax.f32 %v6520, 0.0
    %v6615 = vmax.f32 %v6525, 0.0
    %v6616 = vmax.f32 %v6530, 0.0
    %v6617 = vmax.f32 %v6535, 0.0
    %v6618 = vmax.f32 %v6540, 0.0
    %v6619 = vmax.f32 %v6545, 0.0
    %v6620 = vmax.f32 %v6550, 0.0
    %v6621 = vmax.f32 %v6555, 0.0
    %v6622 = vmax.f32 %v6560, 0.0
    %v6623 = vmax.f32 %v6565, 0.0
    %v6624 = vmax.f32 %v6570, 0.0
    %v6625 = vmax.f32 %v6575, 0.0
    %v6626 = vmax.f32 %v6580, 0.0
    %v6627 = vmax.f32 %v6585, 0.0
    %v6628 = vmax.f32 %v6590, 0.0
    %v6629 = vmax.f32 %v6595, 0.0
    %v6630 = vld [vmem:[%s15] sm:$0x3f]
    %v6631 = vld [vmem:[%s15 + $0x8] sm:$0x3f]
    %v6632 = vld [vmem:[%s15 + $0x10] sm:$0x3f]
    %6633 = vmatprep.subr.mxu0 0.0
    %6634 = vmatpush1.msra.mxu0 %v6598
    %6635 = vmatprep.subr.mxu0 0.0
    %6636 = vmatpush1.msra.mxu0 %v6599
    %6637 = vmatprep.subr.mxu0 0.0
    %6638 = vmatpush1.msra.mxu0 %v6600
    %6639 = vmatprep.subr.mxu0 0.0
    %6640 = vmatpush1.msra.mxu0 %v6601
    %6641 = vmatprep.subr.mxu0 0.0
    %6642 = vmatpush1.msra.mxu0 %v6602
    %6643 = vmatprep.subr.mxu0 0.0
    %6644 = vmatpush1.msra.mxu0 %v6603
    %6645 = vmatprep.subr.mxu0 0.0
    %6646 = vmatpush1.msra.mxu0 %v6604
    %6647 = vmatprep.subr.mxu0 0.0
    %6648 = vmatpush1.msra.mxu0 %v6605
    %6649 = vmatprep.subr.mxu0 0.0
    %6650 = vmatpush1.msra.mxu0 %v6606
    %6651 = vmatprep.subr.mxu0 0.0
    %6652 = vmatpush1.msra.mxu0 %v6607
    %6653 = vmatprep.subr.mxu0 0.0
    %6654 = vmatpush1.msra.mxu0 %v6608
    %6655 = vmatprep.subr.mxu0 0.0
    %6656 = vmatpush1.msra.mxu0 %v6609
    %6657 = vmatprep.subr.mxu0 0.0
    %6658 = vmatpush1.msra.mxu0 %v6610
    %6659 = vmatprep.subr.mxu0 0.0
    %6660 = vmatpush1.msra.mxu0 %v6611
    %6661 = vmatprep.subr.mxu0 0.0
    %6662 = vmatpush1.msra.mxu0 %v6612
    %6663 = vmatprep.subr.mxu0 0.0
    %6664 = vmatpush1.msra.mxu0 %v6613
    %6665 = vmatprep.subr.mxu0 0.0
    %6666 = vmatpush1.msra.mxu0 %v6614
    %6667 = vmatprep.subr.mxu0 0.0
    %6668 = vmatpush1.msra.mxu0 %v6615
    %6669 = vmatprep.subr.mxu0 0.0
    %6670 = vmatpush1.msra.mxu0 %v6616
    %6671 = vmatprep.subr.mxu0 0.0
    %6672 = vmatpush1.msra.mxu0 %v6617
    %6673 = vmatprep.subr.mxu0 0.0
    %6674 = vmatpush1.msra.mxu0 %v6618
    %6675 = vmatprep.subr.mxu0 0.0
    %6676 = vmatpush1.msra.mxu0 %v6619
    %6677 = vmatprep.subr.mxu0 0.0
    %6678 = vmatpush1.msra.mxu0 %v6620
    %6679 = vmatprep.subr.mxu0 0.0
    %6680 = vmatpush1.msra.mxu0 %v6621
    %6681 = vmatprep.subr.mxu0 0.0
    %6682 = vmatpush1.msra.mxu0 %v6622
    %6683 = vmatprep.subr.mxu0 0.0
    %6684 = vmatpush1.msra.mxu0 %v6623
    %6685 = vmatprep.subr.mxu0 0.0
    %6686 = vmatpush1.msra.mxu0 %v6624
    %6687 = vmatprep.subr.mxu0 0.0
    %6688 = vmatpush1.msra.mxu0 %v6625
    %6689 = vmatprep.subr.mxu0 0.0
    %6690 = vmatpush1.msra.mxu0 %v6626
    %6691 = vmatprep.subr.mxu0 0.0
    %6692 = vmatpush1.msra.mxu0 %v6627
    %6693 = vmatprep.subr.mxu0 0.0
    %6694 = vmatpush1.msra.mxu0 %v6628
    %6695 = vmatprep.subr.mxu0 0.0
    %6696 = vmatpush1.msra.mxu0 %v6629
    %6697 = vmatprep.mubr.f32.mxu0 %v6631
    %6698 = vmatmul.mubr.f32.gmra.mrb[0].mxu0 %v6630
    %v6699 = vpop.f32.mrb[0].mxu0
    %v6700 = vadd.f32 %v6632, %v6699
    %v6701 = vpop.f32.mrb[0].mxu0
    %6702 = vdwg.mxu0
    %vm6703 = vcmask 5120
    %6704 = vst.msk [vmem:[%s16] sm:$0x3f] %vm6703, %v6700
    // Predicated region
    $region114: #{_lambda_.1} parent=1 // pred_check
      _
    $region115: #{_lambda_.1} parent=1 // pred_check_branch
      %6706 = sbr.rel (0) target = $region117
    $region116: #{_lambda_.1} parent=1 // pred_region
      _
    $region117: #{_lambda_.1} parent=1 // pred_fallthru
      _
    // Predicated region
    $region118: #{_lambda_.1} parent=1 // pred_check
      _
    $region119: #{_lambda_.1} parent=1 // pred_check_branch
      %6708 = sbr.rel (0) target = $region121
    $region120: #{_lambda_.1} parent=1 // pred_region
      _
    $region121: #{_lambda_.1} parent=1 // pred_fallthru
      _
    %6709 = vsyncpa [#allocation5], 1
    %6710 = vsyncpa [#allocation7], 1
    %6711 = vsyncpa [#allocation10], 1
    %6712 = vsyncpa [#allocation13], 1
    %6713 = vsyncpa [#allocation16], 1
    %6714 = vsyncpa [#allocation19], 1
    %6715 = vsyncpa [#allocation22], 1

</llo_original>
